<compile_context>
chip_gen: v7x
topology: tpu7x:2x2x1
jax: 0.10.0
libtpu: 0.0.40
codegen_flags: <defaults>
</compile_context>

<pallas_src>
import functools

import jax
import jax.numpy as jnp
import numpy as np
from jax import lax
from jax.experimental import pallas as pl
from jax.experimental.pallas import tpu as pltpu

EPS = 1e-5
EXPANSION = 4
LANE = 128
VMEM_LIMIT = 64 * 1024 * 1024


# --------------------------------------------------------------------------- #
# helpers
# --------------------------------------------------------------------------- #

def _rup(n, m):
    return (n + m - 1) // m * m


def _cparams(sem):
    return pltpu.CompilerParams(dimension_semantics=sem,
                                vmem_limit_bytes=VMEM_LIMIT)


def _affine_from_stats(s, q, g, b, count):
    """Instance-norm scale/shift per channel from accumulated sum / sum-sq."""
    inv = 1.0 / float(count)
    mean = s * inv
    var = q * inv - mean * mean
    scale = lax.rsqrt(var + EPS) * g
    shift = b - mean * scale
    return scale, shift


def _pad_mat(w, rows, cols):
    return jnp.pad(w, ((0, rows - w.shape[0]),
                       (0, cols - w.shape[1]))).astype(jnp.bfloat16)


def _pad_vec(v, c):
    return jnp.pad(v, (0, c - v.shape[0])).reshape(1, 1, c).astype(jnp.float32)


# --------------------------------------------------------------------------- #
# Pallas kernels
# --------------------------------------------------------------------------- #

def conv1x1_stats_kernel(x_ref, w_ref, y_ref, sum_ref, sq_ref,
                         *, block_m, valid_rows):
    """1x1 conv (matmul) + per-(batch, channel) sum / sum-sq of its output."""
    m = pl.program_id(1)

    @pl.when(m == 0)
    def _init():
        sum_ref[...] = jnp.zeros_like(sum_ref)
        sq_ref[...] = jnp.zeros_like(sq_ref)

    acc = jnp.dot(x_ref[0], w_ref[...], preferred_element_type=jnp.float32)
    if valid_rows is not None:
        row = m * block_m + lax.broadcasted_iota(jnp.int32, (block_m, 1), 0)
        acc = jnp.where(row < valid_rows, acc, 0.0)
    yb = acc.astype(y_ref.dtype)
    y_ref[0] = yb
    yf = yb.astype(jnp.float32)
    sum_ref[...] += jnp.sum(yf, axis=0)[None, None, :]
    sq_ref[...] += jnp.sum(yf * yf, axis=0)[None, None, :]


def normconv1x1_stats_kernel(x_ref, isum_ref, isq_ref, g_ref, b_ref, w_ref,
                             y_ref, sum_ref, sq_ref,
                             *, block_m, valid_rows, count):
    """Producer instance-norm apply + relu fused into a 1x1 conv, plus stats."""
    m = pl.program_id(1)

    @pl.when(m == 0)
    def _init():
        sum_ref[...] = jnp.zeros_like(sum_ref)
        sq_ref[...] = jnp.zeros_like(sq_ref)

    scale, shift = _affine_from_stats(isum_ref[0], isq_ref[0],
                                      g_ref[0], b_ref[0], count)
    xn = jnp.maximum(x_ref[0].astype(jnp.float32) * scale + shift, 0.0)
    acc = jnp.dot(xn.astype(jnp.bfloat16), w_ref[...],
                  preferred_element_type=jnp.float32)
    if valid_rows is not None:
        row = m * block_m + lax.broadcasted_iota(jnp.int32, (block_m, 1), 0)
        acc = jnp.where(row < valid_rows, acc, 0.0)
    yb = acc.astype(y_ref.dtype)
    y_ref[0] = yb
    yf = yb.astype(jnp.float32)
    sum_ref[...] += jnp.sum(yf, axis=0)[None, None, :]
    sq_ref[...] += jnp.sum(yf * yf, axis=0)[None, None, :]


def conv3x3_fused_kernel(x_ref, isum_ref, isq_ref, g_ref, b_ref, w_ref,
                         maskl_ref, maskr_ref,
                         y_ref, sum_ref, sq_ref, ext_ref, col_ref,
                         *, stride, ho, wo, ext_pad, count):
    """bn(previous) apply + relu + 3x3 conv (stride 1 or 2) + stats of output.

    The input arrives flattened in stride-parity order: s*s planes, each
    (ho*wo, C) row-major.  Every tap of the strided 3x3 conv is then a constant
    unit-stride row shift of one plane, so the 9 taps are built in VMEM with
    static slices only and contracted with a single K = 9*C matmul.
    """
    s = stride
    p = ho * wo
    e = ext_pad
    c = x_ref.shape[2]

    scale, shift = _affine_from_stats(isum_ref[0], isq_ref[0],
                                      g_ref[0], b_ref[0], count)

    # Stage the normalised, relu'd image in VMEM, one zero-extended flattened
    # buffer per stride-parity plane (the zero margins realise the conv padding).
    ext_ref[...] = jnp.zeros_like(ext_ref)
    for q in range(s * s):
        xq = x_ref[0, q * p:(q + 1) * p, :].astype(jnp.float32)
        ext_ref[q, e:e + p, :] = jnp.maximum(
            xq * scale + shift, 0.0).astype(jnp.bfloat16)

    # Build the 9 shifted taps (im2col block) in VMEM.
    for kh in range(3):
        dh, pr = divmod(kh - 1, s)
        for kw in range(3):
            dw, pc = divmod(kw - 1, s)
            plane = pr * s + pc
            off = e + dh * wo + dw
            t = ext_ref[plane, off:off + p, :]
            if dw == -1:
                t = t * maskl_ref[...]          # zero wrapped left-edge columns
            elif dw == 1:
                t = t * maskr_ref[...]          # zero wrapped right-edge columns
            idx = kh * 3 + kw
            col_ref[:, idx * c:(idx + 1) * c] = t

    # Single MXU matmul with K = 9 * C.
    acc = jnp.dot(col_ref[...], w_ref[...], preferred_element_type=jnp.float32)
    yb = acc.astype(y_ref.dtype)
    y_ref[0, :p, :] = yb
    if y_ref.shape[1] > p:
        y_ref[0, p:, :] = jnp.zeros((y_ref.shape[1] - p, yb.shape[1]),
                                    y_ref.dtype)
    yf = yb.astype(jnp.float32)
    sum_ref[...] = jnp.sum(yf, axis=0)[None, None, :]
    sq_ref[...] = jnp.sum(yf * yf, axis=0)[None, None, :]


def norm_add_relu_proj_kernel(y_ref, ysum_ref, ysq_ref, g_ref, b_ref,
                              s_ref, ssum_ref, ssq_ref, sg_ref, sb_ref,
                              o_ref, *, count):
    """bn3 apply + shortcut-norm apply + residual add + relu (projection)."""
    sc1, sh1 = _affine_from_stats(ysum_ref[0], ysq_ref[0],
                                  g_ref[0], b_ref[0], count)
    sc2, sh2 = _affine_from_stats(ssum_ref[0], ssq_ref[0],
                                  sg_ref[0], sb_ref[0], count)
    yn = y_ref[0].astype(jnp.float32) * sc1 + sh1
    sn = s_ref[0].astype(jnp.float32) * sc2 + sh2
    o_ref[0] = jnp.maximum(yn + sn, 0.0)


def norm_add_relu_id_kernel(y_ref, ysum_ref, ysq_ref, g_ref, b_ref,
                            s_ref, o_ref, *, count):
    """bn3 apply + identity residual add + relu."""
    sc1, sh1 = _affine_from_stats(ysum_ref[0], ysq_ref[0],
                                  g_ref[0], b_ref[0], count)
    yn = y_ref[0].astype(jnp.float32) * sc1 + sh1
    o_ref[0] = jnp.maximum(yn + s_ref[0].astype(jnp.float32), 0.0)


# --------------------------------------------------------------------------- #
# pallas_call wrappers
# --------------------------------------------------------------------------- #

def conv1x1_stats(x, w, *, block_m, out_rows, valid_rows=None):
    n = x.shape[0]
    cin, cout = w.shape
    grid = (n, out_rows // block_m)
    kern = functools.partial(conv1x1_stats_kernel, block_m=block_m,
                             valid_rows=valid_rows)
    return pl.pallas_call(
        kern,
        grid_spec=pltpu.PrefetchScalarGridSpec(
            num_scalar_prefetch=0, grid=grid,
            in_specs=[
                pl.BlockSpec((1, block_m, cin), lambda i, j: (i, j, 0)),
                pl.BlockSpec((cin, cout), lambda i, j: (0, 0)),
            ],
            out_specs=[
                pl.BlockSpec((1, block_m, cout), lambda i, j: (i, j, 0)),
                pl.BlockSpec((1, 1, cout), lambda i, j: (i, 0, 0)),
                pl.BlockSpec((1, 1, cout), lambda i, j: (i, 0, 0)),
            ]),
        out_shape=(jax.ShapeDtypeStruct((n, out_rows, cout), jnp.bfloat16),
                   jax.ShapeDtypeStruct((n, 1, cout), jnp.float32),
                   jax.ShapeDtypeStruct((n, 1, cout), jnp.float32)),
        compiler_params=_cparams(("parallel", "arbitrary")),
    )(x, w)


def normconv1x1_stats(x, isum, isq, g, b, w, *, block_m, valid_rows, count):
    n, rows, cin = x.shape
    cout = w.shape[1]
    grid = (n, rows // block_m)
    kern = functools.partial(normconv1x1_stats_kernel, block_m=block_m,
                             valid_rows=valid_rows, count=count)
    act = pl.BlockSpec((1, block_m, cin), lambda i, j: (i, j, 0))
    nstat = pl.BlockSpec((1, 1, cin), lambda i, j: (i, 0, 0))
    gstat = pl.BlockSpec((1, 1, cin), lambda i, j: (0, 0, 0))
    return pl.pallas_call(
        kern,
        grid_spec=pltpu.PrefetchScalarGridSpec(
            num_scalar_prefetch=0, grid=grid,
            in_specs=[act, nstat, nstat, gstat, gstat,
                      pl.BlockSpec((cin, cout), lambda i, j: (0, 0))],
            out_specs=[
                pl.BlockSpec((1, block_m, cout), lambda i, j: (i, j, 0)),
                pl.BlockSpec((1, 1, cout), lambda i, j: (i, 0, 0)),
                pl.BlockSpec((1, 1, cout), lambda i, j: (i, 0, 0)),
            ]),
        out_shape=(jax.ShapeDtypeStruct((n, rows, cout), jnp.bfloat16),
                   jax.ShapeDtypeStruct((n, 1, cout), jnp.float32),
                   jax.ShapeDtypeStruct((n, 1, cout), jnp.float32)),
        compiler_params=_cparams(("parallel", "arbitrary")),
    )(x, isum, isq, g, b, w)


def conv3x3_fused(x, isum, isq, g, b, w, maskl, maskr, *,
                  stride, ho, wo, out_rows, count):
    n, in_rows, cin = x.shape
    cout = w.shape[1]
    p = ho * wo
    e = _rup(wo + 1, 16)
    kern = functools.partial(conv3x3_fused_kernel, stride=stride, ho=ho, wo=wo,
                             ext_pad=e, count=count)
    nstat = pl.BlockSpec((1, 1, cin), lambda i: (i, 0, 0))
    gstat = pl.BlockSpec((1, 1, cin), lambda i: (0, 0, 0))
    return pl.pallas_call(
        kern,
        grid_spec=pltpu.PrefetchScalarGridSpec(
            num_scalar_prefetch=0, grid=(n,),
            in_specs=[
                pl.BlockSpec((1, in_rows, cin), lambda i: (i, 0, 0)),
                nstat, nstat, gstat, gstat,
                pl.BlockSpec((9 * cin, cout), lambda i: (0, 0)),
                pl.BlockSpec((p, 1), lambda i: (0, 0)),
                pl.BlockSpec((p, 1), lambda i: (0, 0)),
            ],
            out_specs=[
                pl.BlockSpec((1, out_rows, cout), lambda i: (i, 0, 0)),
                pl.BlockSpec((1, 1, cout), lambda i: (i, 0, 0)),
                pl.BlockSpec((1, 1, cout), lambda i: (i, 0, 0)),
            ],
            scratch_shapes=[
                pltpu.VMEM((stride * stride, p + 2 * e, cin), jnp.bfloat16),
                pltpu.VMEM((p, 9 * cin), jnp.bfloat16),
            ]),
        out_shape=(jax.ShapeDtypeStruct((n, out_rows, cout), jnp.bfloat16),
                   jax.ShapeDtypeStruct((n, 1, cout), jnp.float32),
                   jax.ShapeDtypeStruct((n, 1, cout), jnp.float32)),
        compiler_params=_cparams(("parallel",)),
    )(x, isum, isq, g, b, w, maskl, maskr)


def norm_add_relu_proj(y, ysum, ysq, g, b, sc, ssum, ssq, sg, sb,
                       *, block_m, count):
    n, rows, c = y.shape
    grid = (n, rows // block_m)
    kern = functools.partial(norm_add_relu_proj_kernel, count=count)
    act = pl.BlockSpec((1, block_m, c), lambda i, j: (i, j, 0))
    nstat = pl.BlockSpec((1, 1, c), lambda i, j: (i, 0, 0))
    gstat = pl.BlockSpec((1, 1, c), lambda i, j: (0, 0, 0))
    return pl.pallas_call(
        kern,
        grid_spec=pltpu.PrefetchScalarGridSpec(
            num_scalar_prefetch=0, grid=grid,
            in_specs=[act, nstat, nstat, gstat, gstat,
                      act, nstat, nstat, gstat, gstat],
            out_specs=pl.BlockSpec((1, block_m, c), lambda i, j: (i, j, 0))),
        out_shape=jax.ShapeDtypeStruct((n, rows, c), jnp.float32),
        compiler_params=_cparams(("parallel", "parallel")),
    )(y, ysum, ysq, g, b, sc, ssum, ssq, sg, sb)


def norm_add_relu_id(y, ysum, ysq, g, b, sc, *, block_m, count):
    n, rows, c = y.shape
    grid = (n, rows // block_m)
    kern = functools.partial(norm_add_relu_id_kernel, count=count)
    act = pl.BlockSpec((1, block_m, c), lambda i, j: (i, j, 0))
    nstat = pl.BlockSpec((1, 1, c), lambda i, j: (i, 0, 0))
    gstat = pl.BlockSpec((1, 1, c), lambda i, j: (0, 0, 0))
    return pl.pallas_call(
        kern,
        grid_spec=pltpu.PrefetchScalarGridSpec(
            num_scalar_prefetch=0, grid=grid,
            in_specs=[act, nstat, nstat, gstat, gstat, act],
            out_specs=pl.BlockSpec((1, block_m, c), lambda i, j: (i, j, 0))),
        out_shape=jax.ShapeDtypeStruct((n, rows, c), jnp.float32),
        compiler_params=_cparams(("parallel", "parallel")),
    )(y, ysum, ysq, g, b, sc)


# --------------------------------------------------------------------------- #
# module
# --------------------------------------------------------------------------- #

def init_bottleneck_params(key, in_planes, planes, stride=1):
    out_planes = EXPANSION * planes
    keys = jax.random.split(key, 4)
    p = {
        "conv1_w": jax.random.normal(keys[0], (in_planes, planes), jnp.float32) * 0.1,
        "bn1_g": jnp.ones((planes,), jnp.float32),
        "bn1_b": jnp.zeros((planes,), jnp.float32),
        "conv2_w": jax.random.normal(keys[1], (3, 3, planes, planes), jnp.float32) * 0.1,
        "bn2_g": jnp.ones((planes,), jnp.float32),
        "bn2_b": jnp.zeros((planes,), jnp.float32),
        "conv3_w": jax.random.normal(keys[2], (planes, out_planes), jnp.float32) * 0.1,
        "bn3_g": jnp.ones((out_planes,), jnp.float32),
        "bn3_b": jnp.zeros((out_planes,), jnp.float32),
    }
    if stride != 1 or in_planes != out_planes:
        p["sc_w"] = jax.random.normal(keys[3], (in_planes, out_planes), jnp.float32) * 0.1
        p["sc_g"] = jnp.ones((out_planes,), jnp.float32)
        p["sc_b"] = jnp.zeros((out_planes,), jnp.float32)
    return p


def _bottleneck_forward(params, x_nchw, stride):
    n, cin, h, w = x_nchw.shape
    planes = params["conv1_w"].shape[1]
    cout = EXPANSION * planes
    s = stride
    if h % s != 0 or w % s != 0:
        # TODO(synk): odd spatial extents with stride>1 (never used by ResNet).
        raise NotImplementedError("spatial dims must be divisible by stride")
    ho, wo = h // s, w // s
    hw, p = h * w, ho * wo

    cin_p, cmid_p, cout_p = _rup(cin, LANE), _rup(planes, LANE), _rup(cout, LANE)
    tm_in = min(512, _rup(hw, 16))
    hwp = _rup(hw, tm_in)
    tm_out = min(512, _rup(p, 16))
    owp = _rup(p, tm_out)
    assert owp <= hwp

    # NCHW -> NHWC -> stride-parity grouped + flattened spatial -> pad -> bf16.
    x = jnp.transpose(x_nchw, (0, 2, 3, 1))
    x = x.reshape(n, ho, s, wo, s, cin).transpose(0, 2, 4, 1, 3, 5)
    x = x.reshape(n, hw, cin)
    x = jnp.pad(x, ((0, 0), (0, hwp - hw), (0, cin_p - cin))).astype(jnp.bfloat16)

    w1 = _pad_mat(params["conv1_w"], cin_p, cmid_p)
    w2 = jnp.pad(params["conv2_w"],
                 ((0, 0), (0, 0), (0, cmid_p - planes), (0, cmid_p - planes)))
    w2 = w2.reshape(9 * cmid_p, cmid_p).astype(jnp.bfloat16)
    w3 = _pad_mat(params["conv3_w"], cmid_p, cout_p)
    g1, b1 = _pad_vec(params["bn1_g"], cmid_p), _pad_vec(params["bn1_b"], cmid_p)
    g2, b2 = _pad_vec(params["bn2_g"], cmid_p), _pad_vec(params["bn2_b"], cmid_p)
    g3, b3 = _pad_vec(params["bn3_g"], cout_p), _pad_vec(params["bn3_b"], cout_p)

    # column-wrap masks for the shifted taps (static -> built with numpy).
    wcol = np.arange(p) % wo
    maskl = jnp.asarray((wcol != 0).astype(np.float32).reshape(p, 1), jnp.bfloat16)
    maskr = jnp.asarray((wcol != wo - 1).astype(np.float32).reshape(p, 1), jnp.bfloat16)

    vrows = p if p < owp else None

    # 1) conv1 (1x1) + bn1 stats
    y1, s1s, s1q = conv1x1_stats(x, w1, block_m=tm_in, out_rows=hwp)
    # 2) bn1 apply+relu + conv2 (3x3, stride) + bn2 stats
    y2, s2s, s2q = conv3x3_fused(y1, s1s, s1q, g1, b1, w2, maskl, maskr,
                                 stride=s, ho=ho, wo=wo, out_rows=owp, count=hw)
    # 3) bn2 apply+relu + conv3 (1x1) + bn3 stats
    y3, s3s, s3q = normconv1x1_stats(y2, s2s, s2q, g2, b2, w3,
                                     block_m=tm_out, valid_rows=vrows, count=p)

    if "sc_w" in params:
        wsc = _pad_mat(params["sc_w"], cin_p, cout_p)
        gsc, bsc = _pad_vec(params["sc_g"], cout_p), _pad_vec(params["sc_b"], cout_p)
        # 4) shortcut conv (1x1, stride folded into parity layout) + stats
        ysc, sss, ssq = conv1x1_stats(x, wsc, block_m=tm_out, out_rows=owp,
                                      valid_rows=vrows)
        # 5) bn3 + shortcut-norm + add + relu
        out = norm_add_relu_proj(y3, s3s, s3q, g3, b3, ysc, sss, ssq, gsc, bsc,
                                 block_m=tm_out, count=p)
    else:
        assert x.shape[1] == owp and cin_p == cout_p
        out = norm_add_relu_id(y3, s3s, s3q, g3, b3, x, block_m=tm_out, count=p)

    out = out[:, :p, :cout].reshape(n, ho, wo, cout)
    out = jnp.transpose(out, (0, 3, 1, 2))          # NHWC -> NCHW
    return (out, out, out, out, out, out)


bottleneck_forward = jax.jit(_bottleneck_forward, static_argnums=2)


# --------------------------------------------------------------------------- #
# pure-JAX f32 reference
# --------------------------------------------------------------------------- #

def _ref_inorm(x, g, b):
    mean = x.mean(axis=(1, 2), keepdims=True)
    var = ((x - mean) ** 2).mean(axis=(1, 2), keepdims=True)
    return (x - mean) * lax.rsqrt(var + EPS) * g + b


def ref_forward(params, x_nchw, stride):
    dn = ("NHWC", "HWIO", "NHWC")
    x = jnp.transpose(x_nchw, (0, 2, 3, 1))

    def c1x1(x, w, s=1):
        return lax.conv_general_dilated(x, w.reshape(1, 1, *w.shape), (s, s),
                                        "VALID", dimension_numbers=dn)

    out = jax.nn.relu(_ref_inorm(c1x1(x, params["conv1_w"]),
                                 params["bn1_g"], params["bn1_b"]))
    out = lax.conv_general_dilated(out, params["conv2_w"], (stride, stride),
                                   ((1, 1), (1, 1)), dimension_numbers=dn)
    out = jax.nn.relu(_ref_inorm(out, params["bn2_g"], params["bn2_b"]))
    out = _ref_inorm(c1x1(out, params["conv3_w"]),
                     params["bn3_g"], params["bn3_b"])
    if "sc_w" in params:
        sc = _ref_inorm(c1x1(x, params["sc_w"], stride),
                        params["sc_g"], params["sc_b"])
    else:
        sc = x
    out = jax.nn.relu(out + sc)
    return jnp.transpose(out, (0, 3, 1, 2))


# --------------------------------------------------------------------------- #
# main
# --------------------------------------------------------------------------- #

if __name__ == "__main__":
    key = jax.random.PRNGKey(0)

    configs = [
        dict(in_planes=4, planes=4, stride=2, H=16, W=16),   # projection shortcut
        dict(in_planes=16, planes=4, stride=1, H=8, W=8),    # identity shortcut
    ]
    for i, cfg in enumerate(configs):
        kx, kp, key = jax.random.split(key, 3)
        x = jax.random.normal(kx, (2, cfg["in_planes"], cfg["H"], cfg["W"]),
                              jnp.float32)
        params = init_bottleneck_params(kp, cfg["in_planes"], cfg["planes"],
                                        cfg["stride"])
        outs = jax.block_until_ready(bottleneck_forward(params, x, cfg["stride"]))
        ref = ref_forward(params, x, cfg["stride"])
        err = float(jnp.max(jnp.abs(outs[0] - ref)))
        assert len(outs) == 6 and all(o.shape == ref.shape for o in outs)
        assert err < 5e-2, f"config {i}: mismatch vs reference: {err}"

    print("KERNEL_OK")
</pallas_src>

<mosaic_0001>
module attributes {stable_mosaic.version = 11 : i64} {
  func.func @conv1x1_stats_kernel(%arg0: i32, %arg1: i32, %arg2: memref<1x64x128xbf16, #tpu.memory_space<vmem>>, %arg3: memref<128x128xbf16, #tpu.memory_space<vmem>>, %arg4: memref<1x64x128xbf16, #tpu.memory_space<vmem>>, %arg5: memref<1x1x128xf32, #tpu.memory_space<vmem>>, %arg6: memref<1x1x128xf32, #tpu.memory_space<vmem>>) attributes {dimension_semantics = [#tpu.dimension_semantics<parallel>, #tpu.dimension_semantics<arbitrary>], iteration_bounds = array<i64: 2, 1>, scalar_prefetch = 0 : i64, scratch_operands = 0 : i64, tpu.core_type = #tpu.core_type<tc>, window_params = [{transform_indices = @transform_0, window_bounds = array<i64: 1, 64, 128>}, {pipeline_mode = #tpu.pipeline_mode<synchronous>, transform_indices = @transform_1, window_bounds = array<i64: 128, 128>}, {transform_indices = @transform_2, window_bounds = array<i64: 1, 64, 128>}, {transform_indices = @transform_3, window_bounds = array<i64: 1, 1, 128>}, {transform_indices = @transform_4, window_bounds = array<i64: 1, 1, 128>}]} {
    %c0_i32 = arith.constant 0 : i32
    %0 = arith.cmpi eq, %arg1, %c0_i32 : i32
    %1 = arith.extui %0 : i1 to i32
    %c0_i32_0 = arith.constant 0 : i32
    %2 = arith.cmpi ne, %1, %c0_i32_0 : i32
    scf.if %2 {
      %cst_22 = arith.constant 0.000000e+00 : f32
      %23 = vector.broadcast %cst_22 : f32 to vector<1x1x128xf32>
      %c0_23 = arith.constant 0 : index
      %c0_24 = arith.constant 0 : index
      %c0_25 = arith.constant 0 : index
      %24 = vector.load %arg5[%c0_23, %c0_24, %c0_25] : memref<1x1x128xf32, #tpu.memory_space<vmem>>, vector<1x1x128xf32>
      tpu.vector_store %arg5[%c0_23, %c0_24, %c0_25], %23 {strides = array<i32>} : memref<1x1x128xf32, #tpu.memory_space<vmem>>, vector<1x1x128xf32>,
      %cst_26 = arith.constant 0.000000e+00 : f32
      %25 = vector.broadcast %cst_26 : f32 to vector<1x1x128xf32>
      %c0_27 = arith.constant 0 : index
      %c0_28 = arith.constant 0 : index
      %c0_29 = arith.constant 0 : index
      %26 = vector.load %arg6[%c0_27, %c0_28, %c0_29] : memref<1x1x128xf32, #tpu.memory_space<vmem>>, vector<1x1x128xf32>
      tpu.vector_store %arg6[%c0_27, %c0_28, %c0_29], %25 {strides = array<i32>} : memref<1x1x128xf32, #tpu.memory_space<vmem>>, vector<1x1x128xf32>,
    } else {
    }
    %c0 = arith.constant 0 : index
    %c0_1 = arith.constant 0 : index
    %c0_2 = arith.constant 0 : index
    %3 = vector.load %arg2[%c0, %c0_1, %c0_2] : memref<1x64x128xbf16, #tpu.memory_space<vmem>>, vector<1x64x128xbf16>
    %4 = vector.shape_cast %3 : vector<1x64x128xbf16> to vector<64x128xbf16>
    %c0_3 = arith.constant 0 : index
    %c0_4 = arith.constant 0 : index
    %5 = vector.load %arg3[%c0_3, %c0_4] : memref<128x128xbf16, #tpu.memory_space<vmem>>, vector<128x128xbf16>
    %cst = arith.constant dense<0.000000e+00> : vector<64x128xf32>
    %6 = tpu.matmul %4, %5, %cst {dimension_numbers = #tpu.dot_dimension_numbers<[1], [0], [0], [1], [0, 0, 1, 1], [], []>} : vector<64x128xbf16>, vector<128x128xbf16>, vector<64x128xf32> -> vector<64x128xf32>
    %7 = arith.truncf %6 : vector<64x128xf32> to vector<64x128xbf16>
    %c0_5 = arith.constant 0 : index
    %c0_6 = arith.constant 0 : index
    %c0_7 = arith.constant 0 : index
    %8 = vector.load %arg4[%c0_5, %c0_6, %c0_7] : memref<1x64x128xbf16, #tpu.memory_space<vmem>>, vector<1x64x128xbf16>
    %9 = vector.shape_cast %8 : vector<1x64x128xbf16> to vector<64x128xbf16>
    %10 = vector.shape_cast %7 : vector<64x128xbf16> to vector<1x64x128xbf16>
    tpu.vector_store %arg4[%c0_5, %c0_6, %c0_7], %10 {strides = array<i32>} : memref<1x64x128xbf16, #tpu.memory_space<vmem>>, vector<1x64x128xbf16>,
    %11 = arith.extf %7 : vector<64x128xbf16> to vector<64x128xf32>
    %c0_8 = arith.constant 0 : index
    %c0_9 = arith.constant 0 : index
    %c0_10 = arith.constant 0 : index
    %12 = vector.load %arg5[%c0_8, %c0_9, %c0_10] : memref<1x1x128xf32, #tpu.memory_space<vmem>>, vector<1x1x128xf32>
    %cst_11 = arith.constant dense<0.000000e+00> : vector<128xf32>
    %13 = vector.multi_reduction <add>, %11, %cst_11 [0] : vector<64x128xf32> to vector<128xf32>
    %14 = vector.shape_cast %13 : vector<128xf32> to vector<1x1x128xf32>
    %15 = arith.addf %12, %14 : vector<1x1x128xf32>
    %c0_12 = arith.constant 0 : index
    %c0_13 = arith.constant 0 : index
    %c0_14 = arith.constant 0 : index
    %16 = vector.load %arg5[%c0_12, %c0_13, %c0_14] : memref<1x1x128xf32, #tpu.memory_space<vmem>>, vector<1x1x128xf32>
    tpu.vector_store %arg5[%c0_12, %c0_13, %c0_14], %15 {strides = array<i32>} : memref<1x1x128xf32, #tpu.memory_space<vmem>>, vector<1x1x128xf32>,
    %c0_15 = arith.constant 0 : index
    %c0_16 = arith.constant 0 : index
    %c0_17 = arith.constant 0 : index
    %17 = vector.load %arg6[%c0_15, %c0_16, %c0_17] : memref<1x1x128xf32, #tpu.memory_space<vmem>>, vector<1x1x128xf32>
    %18 = arith.mulf %11, %11 : vector<64x128xf32>
    %cst_18 = arith.constant dense<0.000000e+00> : vector<128xf32>
    %19 = vector.multi_reduction <add>, %18, %cst_18 [0] : vector<64x128xf32> to vector<128xf32>
    %20 = vector.shape_cast %19 : vector<128xf32> to vector<1x1x128xf32>
    %21 = arith.addf %17, %20 : vector<1x1x128xf32>
    %c0_19 = arith.constant 0 : index
    %c0_20 = arith.constant 0 : index
    %c0_21 = arith.constant 0 : index
    %22 = vector.load %arg6[%c0_19, %c0_20, %c0_21] : memref<1x1x128xf32, #tpu.memory_space<vmem>>, vector<1x1x128xf32>
    tpu.vector_store %arg6[%c0_19, %c0_20, %c0_21], %21 {strides = array<i32>} : memref<1x1x128xf32, #tpu.memory_space<vmem>>, vector<1x1x128xf32>,
    return
  }
  func.func @transform_0(%arg0: i32, %arg1: i32) -> (i32, i32, i32) {
    %c0_i32 = arith.constant 0 : i32
    %c0_i32_0 = arith.constant 0 : i32
    return %arg0, %arg1, %c0_i32 : i32, i32, i32
  }
  func.func @transform_1(%arg0: i32, %arg1: i32) -> (i32, i32) {
    %c0_i32 = arith.constant 0 : i32
    %c0_i32_0 = arith.constant 0 : i32
    %c0_i32_1 = arith.constant 0 : i32
    return %c0_i32, %c0_i32_0 : i32, i32
  }
  func.func @transform_2(%arg0: i32, %arg1: i32) -> (i32, i32, i32) {
    %c0_i32 = arith.constant 0 : i32
    %c0_i32_0 = arith.constant 0 : i32
    return %arg0, %arg1, %c0_i32 : i32, i32, i32
  }
  func.func @transform_3(%arg0: i32, %arg1: i32) -> (i32, i32, i32) {
    %c0_i32 = arith.constant 0 : i32
    %c0_i32_0 = arith.constant 0 : i32
    %c0_i32_1 = arith.constant 0 : i32
    return %arg0, %c0_i32, %c0_i32_0 : i32, i32, i32
  }
  func.func @transform_4(%arg0: i32, %arg1: i32) -> (i32, i32, i32) {
    %c0_i32 = arith.constant 0 : i32
    %c0_i32_0 = arith.constant 0 : i32
    %c0_i32_1 = arith.constant 0 : i32
    return %arg0, %c0_i32, %c0_i32_0 : i32, i32, i32
  }
}

module attributes {stable_mosaic.version = 11 : i64} {
  func.func @conv1x1_stats_kernel(%arg0: i32, %arg1: i32, %arg2: memref<1x256x128xbf16, #tpu.memory_space<vmem>>, %arg3: memref<128x128xbf16, #tpu.memory_space<vmem>>, %arg4: memref<1x256x128xbf16, #tpu.memory_space<vmem>>, %arg5: memref<1x1x128xf32, #tpu.memory_space<vmem>>, %arg6: memref<1x1x128xf32, #tpu.memory_space<vmem>>) attributes {dimension_semantics = [#tpu.dimension_semantics<parallel>, #tpu.dimension_semantics<arbitrary>], iteration_bounds = array<i64: 2, 1>, scalar_prefetch = 0 : i64, scratch_operands = 0 : i64, tpu.core_type = #tpu.core_type<tc>, window_params = [{transform_indices = @transform_0, window_bounds = array<i64: 1, 256, 128>}, {pipeline_mode = #tpu.pipeline_mode<synchronous>, transform_indices = @transform_1, window_bounds = array<i64: 128, 128>}, {transform_indices = @transform_2, window_bounds = array<i64: 1, 256, 128>}, {transform_indices = @transform_3, window_bounds = array<i64: 1, 1, 128>}, {transform_indices = @transform_4, window_bounds = array<i64: 1, 1, 128>}]} {
    %c0_i32 = arith.constant 0 : i32
    %0 = arith.cmpi eq, %arg1, %c0_i32 : i32
    %1 = arith.extui %0 : i1 to i32
    %c0_i32_0 = arith.constant 0 : i32
    %2 = arith.cmpi ne, %1, %c0_i32_0 : i32
    scf.if %2 {
      %cst_22 = arith.constant 0.000000e+00 : f32
      %23 = vector.broadcast %cst_22 : f32 to vector<1x1x128xf32>
      %c0_23 = arith.constant 0 : index
      %c0_24 = arith.constant 0 : index
      %c0_25 = arith.constant 0 : index
      %24 = vector.load %arg5[%c0_23, %c0_24, %c0_25] : memref<1x1x128xf32, #tpu.memory_space<vmem>>, vector<1x1x128xf32>
      tpu.vector_store %arg5[%c0_23, %c0_24, %c0_25], %23 {strides = array<i32>} : memref<1x1x128xf32, #tpu.memory_space<vmem>>, vector<1x1x128xf32>,
      %cst_26 = arith.constant 0.000000e+00 : f32
      %25 = vector.broadcast %cst_26 : f32 to vector<1x1x128xf32>
      %c0_27 = arith.constant 0 : index
      %c0_28 = arith.constant 0 : index
      %c0_29 = arith.constant 0 : index
      %26 = vector.load %arg6[%c0_27, %c0_28, %c0_29] : memref<1x1x128xf32, #tpu.memory_space<vmem>>, vector<1x1x128xf32>
      tpu.vector_store %arg6[%c0_27, %c0_28, %c0_29], %25 {strides = array<i32>} : memref<1x1x128xf32, #tpu.memory_space<vmem>>, vector<1x1x128xf32>,
    } else {
    }
    %c0 = arith.constant 0 : index
    %c0_1 = arith.constant 0 : index
    %c0_2 = arith.constant 0 : index
    %3 = vector.load %arg2[%c0, %c0_1, %c0_2] : memref<1x256x128xbf16, #tpu.memory_space<vmem>>, vector<1x256x128xbf16>
    %4 = vector.shape_cast %3 : vector<1x256x128xbf16> to vector<256x128xbf16>
    %c0_3 = arith.constant 0 : index
    %c0_4 = arith.constant 0 : index
    %5 = vector.load %arg3[%c0_3, %c0_4] : memref<128x128xbf16, #tpu.memory_space<vmem>>, vector<128x128xbf16>
    %cst = arith.constant dense<0.000000e+00> : vector<256x128xf32>
    %6 = tpu.matmul %4, %5, %cst {dimension_numbers = #tpu.dot_dimension_numbers<[1], [0], [0], [1], [0, 0, 1, 1], [], []>} : vector<256x128xbf16>, vector<128x128xbf16>, vector<256x128xf32> -> vector<256x128xf32>
    %7 = arith.truncf %6 : vector<256x128xf32> to vector<256x128xbf16>
    %c0_5 = arith.constant 0 : index
    %c0_6 = arith.constant 0 : index
    %c0_7 = arith.constant 0 : index
    %8 = vector.load %arg4[%c0_5, %c0_6, %c0_7] : memref<1x256x128xbf16, #tpu.memory_space<vmem>>, vector<1x256x128xbf16>
    %9 = vector.shape_cast %8 : vector<1x256x128xbf16> to vector<256x128xbf16>
    %10 = vector.shape_cast %7 : vector<256x128xbf16> to vector<1x256x128xbf16>
    tpu.vector_store %arg4[%c0_5, %c0_6, %c0_7], %10 {strides = array<i32>} : memref<1x256x128xbf16, #tpu.memory_space<vmem>>, vector<1x256x128xbf16>,
    %11 = arith.extf %7 : vector<256x128xbf16> to vector<256x128xf32>
    %c0_8 = arith.constant 0 : index
    %c0_9 = arith.constant 0 : index
    %c0_10 = arith.constant 0 : index
    %12 = vector.load %arg5[%c0_8, %c0_9, %c0_10] : memref<1x1x128xf32, #tpu.memory_space<vmem>>, vector<1x1x128xf32>
    %cst_11 = arith.constant dense<0.000000e+00> : vector<128xf32>
    %13 = vector.multi_reduction <add>, %11, %cst_11 [0] : vector<256x128xf32> to vector<128xf32>
    %14 = vector.shape_cast %13 : vector<128xf32> to vector<1x1x128xf32>
    %15 = arith.addf %12, %14 : vector<1x1x128xf32>
    %c0_12 = arith.constant 0 : index
    %c0_13 = arith.constant 0 : index
    %c0_14 = arith.constant 0 : index
    %16 = vector.load %arg5[%c0_12, %c0_13, %c0_14] : memref<1x1x128xf32, #tpu.memory_space<vmem>>, vector<1x1x128xf32>
    tpu.vector_store %arg5[%c0_12, %c0_13, %c0_14], %15 {strides = array<i32>} : memref<1x1x128xf32, #tpu.memory_space<vmem>>, vector<1x1x128xf32>,
    %c0_15 = arith.constant 0 : index
    %c0_16 = arith.constant 0 : index
    %c0_17 = arith.constant 0 : index
    %17 = vector.load %arg6[%c0_15, %c0_16, %c0_17] : memref<1x1x128xf32, #tpu.memory_space<vmem>>, vector<1x1x128xf32>
    %18 = arith.mulf %11, %11 : vector<256x128xf32>
    %cst_18 = arith.constant dense<0.000000e+00> : vector<128xf32>
    %19 = vector.multi_reduction <add>, %18, %cst_18 [0] : vector<256x128xf32> to vector<128xf32>
    %20 = vector.shape_cast %19 : vector<128xf32> to vector<1x1x128xf32>
    %21 = arith.addf %17, %20 : vector<1x1x128xf32>
    %c0_19 = arith.constant 0 : index
    %c0_20 = arith.constant 0 : index
    %c0_21 = arith.constant 0 : index
    %22 = vector.load %arg6[%c0_19, %c0_20, %c0_21] : memref<1x1x128xf32, #tpu.memory_space<vmem>>, vector<1x1x128xf32>
    tpu.vector_store %arg6[%c0_19, %c0_20, %c0_21], %21 {strides = array<i32>} : memref<1x1x128xf32, #tpu.memory_space<vmem>>, vector<1x1x128xf32>,
    return
  }
  func.func @transform_0(%arg0: i32, %arg1: i32) -> (i32, i32, i32) {
    %c0_i32 = arith.constant 0 : i32
    %c0_i32_0 = arith.constant 0 : i32
    return %arg0, %arg1, %c0_i32 : i32, i32, i32
  }
  func.func @transform_1(%arg0: i32, %arg1: i32) -> (i32, i32) {
    %c0_i32 = arith.constant 0 : i32
    %c0_i32_0 = arith.constant 0 : i32
    %c0_i32_1 = arith.constant 0 : i32
    return %c0_i32, %c0_i32_0 : i32, i32
  }
  func.func @transform_2(%arg0: i32, %arg1: i32) -> (i32, i32, i32) {
    %c0_i32 = arith.constant 0 : i32
    %c0_i32_0 = arith.constant 0 : i32
    return %arg0, %arg1, %c0_i32 : i32, i32, i32
  }
  func.func @transform_3(%arg0: i32, %arg1: i32) -> (i32, i32, i32) {
    %c0_i32 = arith.constant 0 : i32
    %c0_i32_0 = arith.constant 0 : i32
    %c0_i32_1 = arith.constant 0 : i32
    return %arg0, %c0_i32, %c0_i32_0 : i32, i32, i32
  }
  func.func @transform_4(%arg0: i32, %arg1: i32) -> (i32, i32, i32) {
    %c0_i32 = arith.constant 0 : i32
    %c0_i32_0 = arith.constant 0 : i32
    %c0_i32_1 = arith.constant 0 : i32
    return %arg0, %c0_i32, %c0_i32_0 : i32, i32, i32
  }
}

module attributes {stable_mosaic.version = 11 : i64} {
  func.func @conv3x3_fused_kernel(%arg0: i32, %arg1: memref<1x256x128xbf16, #tpu.memory_space<vmem>>, %arg2: memref<1x1x128xf32, #tpu.memory_space<vmem>>, %arg3: memref<1x1x128xf32, #tpu.memory_space<vmem>>, %arg4: memref<1x1x128xf32, #tpu.memory_space<vmem>>, %arg5: memref<1x1x128xf32, #tpu.memory_space<vmem>>, %arg6: memref<1152x128xbf16, #tpu.memory_space<vmem>>, %arg7: memref<64x1xbf16, #tpu.memory_space<vmem>>, %arg8: memref<64x1xbf16, #tpu.memory_space<vmem>>, %arg9: memref<1x64x128xbf16, #tpu.memory_space<vmem>>, %arg10: memref<1x1x128xf32, #tpu.memory_space<vmem>>, %arg11: memref<1x1x128xf32, #tpu.memory_space<vmem>>, %arg12: memref<4x96x128xbf16, #tpu.memory_space<vmem>>, %arg13: memref<64x1152xbf16, #tpu.memory_space<vmem>>) attributes {dimension_semantics = [#tpu.dimension_semantics<parallel>], iteration_bounds = array<i64: 2>, scalar_prefetch = 0 : i64, scratch_operands = 2 : i64, tpu.core_type = #tpu.core_type<tc>, window_params = [{transform_indices = @transform_0, window_bounds = array<i64: 1, 256, 128>}, {transform_indices = @transform_1, window_bounds = array<i64: 1, 1, 128>}, {transform_indices = @transform_2, window_bounds = array<i64: 1, 1, 128>}, {pipeline_mode = #tpu.pipeline_mode<synchronous>, transform_indices = @transform_3, window_bounds = array<i64: 1, 1, 128>}, {pipeline_mode = #tpu.pipeline_mode<synchronous>, transform_indices = @transform_4, window_bounds = array<i64: 1, 1, 128>}, {pipeline_mode = #tpu.pipeline_mode<synchronous>, transform_indices = @transform_5, window_bounds = array<i64: 1152, 128>}, {pipeline_mode = #tpu.pipeline_mode<synchronous>, transform_indices = @transform_6, window_bounds = array<i64: 64, 1>}, {pipeline_mode = #tpu.pipeline_mode<synchronous>, transform_indices = @transform_7, window_bounds = array<i64: 64, 1>}, {transform_indices = @transform_8, window_bounds = array<i64: 1, 64, 128>}, {transform_indices = @transform_9, window_bounds = array<i64: 1, 1, 128>}, {transform_indices = @transform_10, window_bounds = array<i64: 1, 1, 128>}]} {
    %c0 = arith.constant 0 : index
    %c0_0 = arith.constant 0 : index
    %c0_1 = arith.constant 0 : index
    %0 = vector.load %arg2[%c0, %c0_0, %c0_1] : memref<1x1x128xf32, #tpu.memory_space<vmem>>, vector<1x1x128xf32>
    %1 = vector.shape_cast %0 : vector<1x1x128xf32> to vector<1x128xf32>
    %c0_2 = arith.constant 0 : index
    %c0_3 = arith.constant 0 : index
    %c0_4 = arith.constant 0 : index
    %2 = vector.load %arg3[%c0_2, %c0_3, %c0_4] : memref<1x1x128xf32, #tpu.memory_space<vmem>>, vector<1x1x128xf32>
    %3 = vector.shape_cast %2 : vector<1x1x128xf32> to vector<1x128xf32>
    %c0_5 = arith.constant 0 : index
    %c0_6 = arith.constant 0 : index
    %c0_7 = arith.constant 0 : index
    %4 = vector.load %arg4[%c0_5, %c0_6, %c0_7] : memref<1x1x128xf32, #tpu.memory_space<vmem>>, vector<1x1x128xf32>
    %5 = vector.shape_cast %4 : vector<1x1x128xf32> to vector<1x128xf32>
    %c0_8 = arith.constant 0 : index
    %c0_9 = arith.constant 0 : index
    %c0_10 = arith.constant 0 : index
    %6 = vector.load %arg5[%c0_8, %c0_9, %c0_10] : memref<1x1x128xf32, #tpu.memory_space<vmem>>, vector<1x1x128xf32>
    %7 = vector.shape_cast %6 : vector<1x1x128xf32> to vector<1x128xf32>
    %cst = arith.constant 3.906250e-03 : f32
    %8 = vector.broadcast %cst : f32 to vector<1x128xf32>
    %9 = arith.mulf %1, %8 : vector<1x128xf32>
    %cst_11 = arith.constant 3.906250e-03 : f32
    %10 = vector.broadcast %cst_11 : f32 to vector<1x128xf32>
    %11 = arith.mulf %3, %10 : vector<1x128xf32>
    %12 = arith.mulf %9, %9 : vector<1x128xf32>
    %13 = arith.subf %11, %12 : vector<1x128xf32>
    %cst_12 = arith.constant 9.99999974E-6 : f32
    %14 = vector.broadcast %cst_12 : f32 to vector<1x128xf32>
    %15 = arith.addf %13, %14 : vector<1x128xf32>
    %16 = math.rsqrt %15 : vector<1x128xf32>
    %17 = arith.mulf %16, %5 : vector<1x128xf32>
    %18 = arith.mulf %9, %17 : vector<1x128xf32>
    %19 = arith.subf %7, %18 : vector<1x128xf32>
    %cst_13 = arith.constant 0.000000e+00 : bf16
    %20 = vector.broadcast %cst_13 : bf16 to vector<4x96x128xbf16>
    %c0_14 = arith.constant 0 : index
    %c0_15 = arith.constant 0 : index
    %c0_16 = arith.constant 0 : index
    %21 = vector.load %arg12[%c0_14, %c0_15, %c0_16] : memref<4x96x128xbf16, #tpu.memory_space<vmem>>, vector<4x96x128xbf16>
    tpu.vector_store %arg12[%c0_14, %c0_15, %c0_16], %20 {strides = array<i32>} : memref<4x96x128xbf16, #tpu.memory_space<vmem>>, vector<4x96x128xbf16>,
    %c0_17 = arith.constant 0 : index
    %c0_18 = arith.constant 0 : index
    %c0_19 = arith.constant 0 : index
    %22 = vector.load %arg1[%c0_17, %c0_18, %c0_19] : memref<1x256x128xbf16, #tpu.memory_space<vmem>>, vector<1x64x128xbf16>
    %23 = vector.shape_cast %22 : vector<1x64x128xbf16> to vector<64x128xbf16>
    %24 = arith.extf %23 : vector<64x128xbf16> to vector<64x128xf32>
    %25 = vector.broadcast %17 : vector<1x128xf32> to vector<64x128xf32>
    %26 = arith.mulf %24, %25 : vector<64x128xf32>
    %27 = vector.broadcast %19 : vector<1x128xf32> to vector<64x128xf32>
    %28 = arith.addf %26, %27 : vector<64x128xf32>
    %cst_20 = arith.constant 0.000000e+00 : f32
    %29 = vector.broadcast %cst_20 : f32 to vector<64x128xf32>
    %30 = arith.maximumf %28, %29 : vector<64x128xf32>
    %31 = arith.truncf %30 : vector<64x128xf32> to vector<64x128xbf16>
    %c0_21 = arith.constant 0 : index
    %c16 = arith.constant 16 : index
    %c0_22 = arith.constant 0 : index
    %32 = vector.load %arg12[%c0_21, %c16, %c0_22] : memref<4x96x128xbf16, #tpu.memory_space<vmem>>, vector<1x64x128xbf16>
    %33 = vector.shape_cast %32 : vector<1x64x128xbf16> to vector<64x128xbf16>
    %34 = vector.shape_cast %31 : vector<64x128xbf16> to vector<1x64x128xbf16>
    tpu.vector_store %arg12[%c0_21, %c16, %c0_22], %34 {strides = array<i32>} : memref<4x96x128xbf16, #tpu.memory_space<vmem>>, vector<1x64x128xbf16>,
    %c0_23 = arith.constant 0 : index
    %c64 = arith.constant 64 : index
    %c0_24 = arith.constant 0 : index
    %35 = vector.load %arg1[%c0_23, %c64, %c0_24] : memref<1x256x128xbf16, #tpu.memory_space<vmem>>, vector<1x64x128xbf16>
    %36 = vector.shape_cast %35 : vector<1x64x128xbf16> to vector<64x128xbf16>
    %37 = arith.extf %36 : vector<64x128xbf16> to vector<64x128xf32>
    %38 = vector.broadcast %17 : vector<1x128xf32> to vector<64x128xf32>
    %39 = arith.mulf %37, %38 : vector<64x128xf32>
    %40 = vector.broadcast %19 : vector<1x128xf32> to vector<64x128xf32>
    %41 = arith.addf %39, %40 : vector<64x128xf32>
    %cst_25 = arith.constant 0.000000e+00 : f32
    %42 = vector.broadcast %cst_25 : f32 to vector<64x128xf32>
    %43 = arith.maximumf %41, %42 : vector<64x128xf32>
    %44 = arith.truncf %43 : vector<64x128xf32> to vector<64x128xbf16>
    %c1 = arith.constant 1 : index
    %c16_26 = arith.constant 16 : index
    %c0_27 = arith.constant 0 : index
    %45 = vector.load %arg12[%c1, %c16_26, %c0_27] : memref<4x96x128xbf16, #tpu.memory_space<vmem>>, vector<1x64x128xbf16>
    %46 = vector.shape_cast %45 : vector<1x64x128xbf16> to vector<64x128xbf16>
    %47 = vector.shape_cast %44 : vector<64x128xbf16> to vector<1x64x128xbf16>
    tpu.vector_store %arg12[%c1, %c16_26, %c0_27], %47 {strides = array<i32>} : memref<4x96x128xbf16, #tpu.memory_space<vmem>>, vector<1x64x128xbf16>,
    %c0_28 = arith.constant 0 : index
    %c128 = arith.constant 128 : index
    %c0_29 = arith.constant 0 : index
    %48 = vector.load %arg1[%c0_28, %c128, %c0_29] : memref<1x256x128xbf16, #tpu.memory_space<vmem>>, vector<1x64x128xbf16>
    %49 = vector.shape_cast %48 : vector<1x64x128xbf16> to vector<64x128xbf16>
    %50 = arith.extf %49 : vector<64x128xbf16> to vector<64x128xf32>
    %51 = vector.broadcast %17 : vector<1x128xf32> to vector<64x128xf32>
    %52 = arith.mulf %50, %51 : vector<64x128xf32>
    %53 = vector.broadcast %19 : vector<1x128xf32> to vector<64x128xf32>
    %54 = arith.addf %52, %53 : vector<64x128xf32>
    %cst_30 = arith.constant 0.000000e+00 : f32
    %55 = vector.broadcast %cst_30 : f32 to vector<64x128xf32>
    %56 = arith.maximumf %54, %55 : vector<64x128xf32>
    %57 = arith.truncf %56 : vector<64x128xf32> to vector<64x128xbf16>
    %c2 = arith.constant 2 : index
    %c16_31 = arith.constant 16 : index
    %c0_32 = arith.constant 0 : index
    %58 = vector.load %arg12[%c2, %c16_31, %c0_32] : memref<4x96x128xbf16, #tpu.memory_space<vmem>>, vector<1x64x128xbf16>
    %59 = vector.shape_cast %58 : vector<1x64x128xbf16> to vector<64x128xbf16>
    %60 = vector.shape_cast %57 : vector<64x128xbf16> to vector<1x64x128xbf16>
    tpu.vector_store %arg12[%c2, %c16_31, %c0_32], %60 {strides = array<i32>} : memref<4x96x128xbf16, #tpu.memory_space<vmem>>, vector<1x64x128xbf16>,
    %c0_33 = arith.constant 0 : index
    %c192 = arith.constant 192 : index
    %c0_34 = arith.constant 0 : index
    %61 = vector.load %arg1[%c0_33, %c192, %c0_34] : memref<1x256x128xbf16, #tpu.memory_space<vmem>>, vector<1x64x128xbf16>
    %62 = vector.shape_cast %61 : vector<1x64x128xbf16> to vector<64x128xbf16>
    %63 = arith.extf %62 : vector<64x128xbf16> to vector<64x128xf32>
    %64 = vector.broadcast %17 : vector<1x128xf32> to vector<64x128xf32>
    %65 = arith.mulf %63, %64 : vector<64x128xf32>
    %66 = vector.broadcast %19 : vector<1x128xf32> to vector<64x128xf32>
    %67 = arith.addf %65, %66 : vector<64x128xf32>
    %cst_35 = arith.constant 0.000000e+00 : f32
    %68 = vector.broadcast %cst_35 : f32 to vector<64x128xf32>
    %69 = arith.maximumf %67, %68 : vector<64x128xf32>
    %70 = arith.truncf %69 : vector<64x128xf32> to vector<64x128xbf16>
    %c3 = arith.constant 3 : index
    %c16_36 = arith.constant 16 : index
    %c0_37 = arith.constant 0 : index
    %71 = vector.load %arg12[%c3, %c16_36, %c0_37] : memref<4x96x128xbf16, #tpu.memory_space<vmem>>, vector<1x64x128xbf16>
    %72 = vector.shape_cast %71 : vector<1x64x128xbf16> to vector<64x128xbf16>
    %73 = vector.shape_cast %70 : vector<64x128xbf16> to vector<1x64x128xbf16>
    tpu.vector_store %arg12[%c3, %c16_36, %c0_37], %73 {strides = array<i32>} : memref<4x96x128xbf16, #tpu.memory_space<vmem>>, vector<1x64x128xbf16>,
    %c3_38 = arith.constant 3 : index
    %c7 = arith.constant 7 : index
    %c0_39 = arith.constant 0 : index
    %74 = vector.load %arg12[%c3_38, %c7, %c0_39] : memref<4x96x128xbf16, #tpu.memory_space<vmem>>, vector<1x64x128xbf16>
    %75 = vector.shape_cast %74 : vector<1x64x128xbf16> to vector<64x128xbf16>
    %c0_40 = arith.constant 0 : index
    %c0_41 = arith.constant 0 : index
    %76 = vector.load %arg7[%c0_40, %c0_41] : memref<64x1xbf16, #tpu.memory_space<vmem>>, vector<64x1xbf16>
    %77 = vector.broadcast %76 : vector<64x1xbf16> to vector<64x128xbf16>
    %78 = arith.mulf %75, %77 : vector<64x128xbf16>
    %c0_42 = arith.constant 0 : index
    %c0_43 = arith.constant 0 : index
    %79 = vector.load %arg13[%c0_42, %c0_43] : memref<64x1152xbf16, #tpu.memory_space<vmem>>, vector<64x128xbf16>
    tpu.vector_store %arg13[%c0_42, %c0_43], %78 {strides = array<i32>} : memref<64x1152xbf16, #tpu.memory_space<vmem>>, vector<64x128xbf16>,
    %c2_44 = arith.constant 2 : index
    %c8 = arith.constant 8 : index
    %c0_45 = arith.constant 0 : index
    %80 = vector.load %arg12[%c2_44, %c8, %c0_45] : memref<4x96x128xbf16, #tpu.memory_space<vmem>>, vector<1x64x128xbf16>
    %81 = vector.shape_cast %80 : vector<1x64x128xbf16> to vector<64x128xbf16>
    %c0_46 = arith.constant 0 : index
    %c128_47 = arith.constant 128 : index
    %82 = vector.load %arg13[%c0_46, %c128_47] : memref<64x1152xbf16, #tpu.memory_space<vmem>>, vector<64x128xbf16>
    tpu.vector_store %arg13[%c0_46, %c128_47], %81 {strides = array<i32>} : memref<64x1152xbf16, #tpu.memory_space<vmem>>, vector<64x128xbf16>,
    %c3_48 = arith.constant 3 : index
    %c8_49 = arith.constant 8 : index
    %c0_50 = arith.constant 0 : index
    %83 = vector.load %arg12[%c3_48, %c8_49, %c0_50] : memref<4x96x128xbf16, #tpu.memory_space<vmem>>, vector<1x64x128xbf16>
    %84 = vector.shape_cast %83 : vector<1x64x128xbf16> to vector<64x128xbf16>
    %c0_51 = arith.constant 0 : index
    %c256 = arith.constant 256 : index
    %85 = vector.load %arg13[%c0_51, %c256] : memref<64x1152xbf16, #tpu.memory_space<vmem>>, vector<64x128xbf16>
    tpu.vector_store %arg13[%c0_51, %c256], %84 {strides = array<i32>} : memref<64x1152xbf16, #tpu.memory_space<vmem>>, vector<64x128xbf16>,
    %c1_52 = arith.constant 1 : index
    %c15 = arith.constant 15 : index
    %c0_53 = arith.constant 0 : index
    %86 = vector.load %arg12[%c1_52, %c15, %c0_53] : memref<4x96x128xbf16, #tpu.memory_space<vmem>>, vector<1x64x128xbf16>
    %87 = vector.shape_cast %86 : vector<1x64x128xbf16> to vector<64x128xbf16>
    %c0_54 = arith.constant 0 : index
    %c0_55 = arith.constant 0 : index
    %88 = vector.load %arg7[%c0_54, %c0_55] : memref<64x1xbf16, #tpu.memory_space<vmem>>, vector<64x1xbf16>
    %89 = vector.broadcast %88 : vector<64x1xbf16> to vector<64x128xbf16>
    %90 = arith.mulf %87, %89 : vector<64x128xbf16>
    %c0_56 = arith.constant 0 : index
    %c384 = arith.constant 384 : index
    %91 = vector.load %arg13[%c0_56, %c384] : memref<64x1152xbf16, #tpu.memory_space<vmem>>, vector<64x128xbf16>
    tpu.vector_store %arg13[%c0_56, %c384], %90 {strides = array<i32>} : memref<64x1152xbf16, #tpu.memory_space<vmem>>, vector<64x128xbf16>,
    %c0_57 = arith.constant 0 : index
    %c16_58 = arith.constant 16 : index
    %c0_59 = arith.constant 0 : index
    %92 = vector.load %arg12[%c0_57, %c16_58, %c0_59] : memref<4x96x128xbf16, #tpu.memory_space<vmem>>, vector<1x64x128xbf16>
    %93 = vector.shape_cast %92 : vector<1x64x128xbf16> to vector<64x128xbf16>
    %c0_60 = arith.constant 0 : index
    %c512 = arith.constant 512 : index
    %94 = vector.load %arg13[%c0_60, %c512] : memref<64x1152xbf16, #tpu.memory_space<vmem>>, vector<64x128xbf16>
    tpu.vector_store %arg13[%c0_60, %c512], %93 {strides = array<i32>} : memref<64x1152xbf16, #tpu.memory_space<vmem>>, vector<64x128xbf16>,
    %c1_61 = arith.constant 1 : index
    %c16_62 = arith.constant 16 : index
    %c0_63 = arith.constant 0 : index
    %95 = vector.load %arg12[%c1_61, %c16_62, %c0_63] : memref<4x96x128xbf16, #tpu.memory_space<vmem>>, vector<1x64x128xbf16>
    %96 = vector.shape_cast %95 : vector<1x64x128xbf16> to vector<64x128xbf16>
    %c0_64 = arith.constant 0 : index
    %c640 = arith.constant 640 : index
    %97 = vector.load %arg13[%c0_64, %c640] : memref<64x1152xbf16, #tpu.memory_space<vmem>>, vector<64x128xbf16>
    tpu.vector_store %arg13[%c0_64, %c640], %96 {strides = array<i32>} : memref<64x1152xbf16, #tpu.memory_space<vmem>>, vector<64x128xbf16>,
    %c3_65 = arith.constant 3 : index
    %c15_66 = arith.constant 15 : index
    %c0_67 = arith.constant 0 : index
    %98 = vector.load %arg12[%c3_65, %c15_66, %c0_67] : memref<4x96x128xbf16, #tpu.memory_space<vmem>>, vector<1x64x128xbf16>
    %99 = vector.shape_cast %98 : vector<1x64x128xbf16> to vector<64x128xbf16>
    %c0_68 = arith.constant 0 : index
    %c0_69 = arith.constant 0 : index
    %100 = vector.load %arg7[%c0_68, %c0_69] : memref<64x1xbf16, #tpu.memory_space<vmem>>, vector<64x1xbf16>
    %101 = vector.broadcast %100 : vector<64x1xbf16> to vector<64x128xbf16>
    %102 = arith.mulf %99, %101 : vector<64x128xbf16>
    %c0_70 = arith.constant 0 : index
    %c768 = arith.constant 768 : index
    %103 = vector.load %arg13[%c0_70, %c768] : memref<64x1152xbf16, #tpu.memory_space<vmem>>, vector<64x128xbf16>
    tpu.vector_store %arg13[%c0_70, %c768], %102 {strides = array<i32>} : memref<64x1152xbf16, #tpu.memory_space<vmem>>, vector<64x128xbf16>,
    %c2_71 = arith.constant 2 : index
    %c16_72 = arith.constant 16 : index
    %c0_73 = arith.constant 0 : index
    %104 = vector.load %arg12[%c2_71, %c16_72, %c0_73] : memref<4x96x128xbf16, #tpu.memory_space<vmem>>, vector<1x64x128xbf16>
    %105 = vector.shape_cast %104 : vector<1x64x128xbf16> to vector<64x128xbf16>
    %c0_74 = arith.constant 0 : index
    %c896 = arith.constant 896 : index
    %106 = vector.load %arg13[%c0_74, %c896] : memref<64x1152xbf16, #tpu.memory_space<vmem>>, vector<64x128xbf16>
    tpu.vector_store %arg13[%c0_74, %c896], %105 {strides = array<i32>} : memref<64x1152xbf16, #tpu.memory_space<vmem>>, vector<64x128xbf16>,
    %c3_75 = arith.constant 3 : index
    %c16_76 = arith.constant 16 : index
    %c0_77 = arith.constant 0 : index
    %107 = vector.load %arg12[%c3_75, %c16_76, %c0_77] : memref<4x96x128xbf16, #tpu.memory_space<vmem>>, vector<1x64x128xbf16>
    %108 = vector.shape_cast %107 : vector<1x64x128xbf16> to vector<64x128xbf16>
    %c0_78 = arith.constant 0 : index
    %c1024 = arith.constant 1024 : index
    %109 = vector.load %arg13[%c0_78, %c1024] : memref<64x1152xbf16, #tpu.memory_space<vmem>>, vector<64x128xbf16>
    tpu.vector_store %arg13[%c0_78, %c1024], %108 {strides = array<i32>} : memref<64x1152xbf16, #tpu.memory_space<vmem>>, vector<64x128xbf16>,
    %c0_79 = arith.constant 0 : index
    %c0_80 = arith.constant 0 : index
    %110 = vector.load %arg13[%c0_79, %c0_80] : memref<64x1152xbf16, #tpu.memory_space<vmem>>, vector<64x1152xbf16>
    %c0_81 = arith.constant 0 : index
    %c0_82 = arith.constant 0 : index
    %111 = vector.load %arg6[%c0_81, %c0_82] : memref<1152x128xbf16, #tpu.memory_space<vmem>>, vector<1152x128xbf16>
    %cst_83 = arith.constant dense<0.000000e+00> : vector<64x128xf32>
    %112 = tpu.matmul %110, %111, %cst_83 {dimension_numbers = #tpu.dot_dimension_numbers<[1], [0], [0], [1], [0, 0, 1, 1], [], []>} : vector<64x1152xbf16>, vector<1152x128xbf16>, vector<64x128xf32> -> vector<64x128xf32>
    %113 = arith.truncf %112 : vector<64x128xf32> to vector<64x128xbf16>
    %c0_84 = arith.constant 0 : index
    %c0_85 = arith.constant 0 : index
    %c0_86 = arith.constant 0 : index
    %114 = vector.load %arg9[%c0_84, %c0_85, %c0_86] : memref<1x64x128xbf16, #tpu.memory_space<vmem>>, vector<1x64x128xbf16>
    %115 = vector.shape_cast %114 : vector<1x64x128xbf16> to vector<64x128xbf16>
    %116 = vector.shape_cast %113 : vector<64x128xbf16> to vector<1x64x128xbf16>
    tpu.vector_store %arg9[%c0_84, %c0_85, %c0_86], %116 {strides = array<i32>} : memref<1x64x128xbf16, #tpu.memory_space<vmem>>, vector<1x64x128xbf16>,
    %117 = arith.extf %113 : vector<64x128xbf16> to vector<64x128xf32>
    %cst_87 = arith.constant dense<0.000000e+00> : vector<128xf32>
    %118 = vector.multi_reduction <add>, %117, %cst_87 [0] : vector<64x128xf32> to vector<128xf32>
    %119 = vector.shape_cast %118 : vector<128xf32> to vector<1x1x128xf32>
    %c0_88 = arith.constant 0 : index
    %c0_89 = arith.constant 0 : index
    %c0_90 = arith.constant 0 : index
    %120 = vector.load %arg10[%c0_88, %c0_89, %c0_90] : memref<1x1x128xf32, #tpu.memory_space<vmem>>, vector<1x1x128xf32>
    tpu.vector_store %arg10[%c0_88, %c0_89, %c0_90], %119 {strides = array<i32>} : memref<1x1x128xf32, #tpu.memory_space<vmem>>, vector<1x1x128xf32>,
    %121 = arith.mulf %117, %117 : vector<64x128xf32>
    %cst_91 = arith.constant dense<0.000000e+00> : vector<128xf32>
    %122 = vector.multi_reduction <add>, %121, %cst_91 [0] : vector<64x128xf32> to vector<128xf32>
    %123 = vector.shape_cast %122 : vector<128xf32> to vector<1x1x128xf32>
    %c0_92 = arith.constant 0 : index
    %c0_93 = arith.constant 0 : index
    %c0_94 = arith.constant 0 : index
    %124 = vector.load %arg11[%c0_92, %c0_93, %c0_94] : memref<1x1x128xf32, #tpu.memory_space<vmem>>, vector<1x1x128xf32>
    tpu.vector_store %arg11[%c0_92, %c0_93, %c0_94], %123 {strides = array<i32>} : memref<1x1x128xf32, #tpu.memory_space<vmem>>, vector<1x1x128xf32>,
    return
  }
  func.func @transform_0(%arg0: i32) -> (i32, i32, i32) {
    %c0_i32 = arith.constant 0 : i32
    %c0_i32_0 = arith.constant 0 : i32
    %c0_i32_1 = arith.constant 0 : i32
    return %arg0, %c0_i32, %c0_i32_0 : i32, i32, i32
  }
  func.func @transform_1(%arg0: i32) -> (i32, i32, i32) {
    %c0_i32 = arith.constant 0 : i32
    %c0_i32_0 = arith.constant 0 : i32
    %c0_i32_1 = arith.constant 0 : i32
    return %arg0, %c0_i32, %c0_i32_0 : i32, i32, i32
  }
  func.func @transform_2(%arg0: i32) -> (i32, i32, i32) {
    %c0_i32 = arith.constant 0 : i32
    %c0_i32_0 = arith.constant 0 : i32
    %c0_i32_1 = arith.constant 0 : i32
    return %arg0, %c0_i32, %c0_i32_0 : i32, i32, i32
  }
  func.func @transform_3(%arg0: i32) -> (i32, i32, i32) {
    %c0_i32 = arith.constant 0 : i32
    %c0_i32_0 = arith.constant 0 : i32
    %c0_i32_1 = arith.constant 0 : i32
    %c0_i32_2 = arith.constant 0 : i32
    return %c0_i32, %c0_i32_0, %c0_i32_1 : i32, i32, i32
  }
  func.func @transform_4(%arg0: i32) -> (i32, i32, i32) {
    %c0_i32 = arith.constant 0 : i32
    %c0_i32_0 = arith.constant 0 : i32
    %c0_i32_1 = arith.constant 0 : i32
    %c0_i32_2 = arith.constant 0 : i32
    return %c0_i32, %c0_i32_0, %c0_i32_1 : i32, i32, i32
  }
  func.func @transform_5(%arg0: i32) -> (i32, i32) {
    %c0_i32 = arith.constant 0 : i32
    %c0_i32_0 = arith.constant 0 : i32
    %c0_i32_1 = arith.constant 0 : i32
    return %c0_i32, %c0_i32_0 : i32, i32
  }
  func.func @transform_6(%arg0: i32) -> (i32, i32) {
    %c0_i32 = arith.constant 0 : i32
    %c0_i32_0 = arith.constant 0 : i32
    %c0_i32_1 = arith.constant 0 : i32
    return %c0_i32, %c0_i32_0 : i32, i32
  }
  func.func @transform_7(%arg0: i32) -> (i32, i32) {
    %c0_i32 = arith.constant 0 : i32
    %c0_i32_0 = arith.constant 0 : i32
    %c0_i32_1 = arith.constant 0 : i32
    return %c0_i32, %c0_i32_0 : i32, i32
  }
  func.func @transform_8(%arg0: i32) -> (i32, i32, i32) {
    %c0_i32 = arith.constant 0 : i32
    %c0_i32_0 = arith.constant 0 : i32
    %c0_i32_1 = arith.constant 0 : i32
    return %arg0, %c0_i32, %c0_i32_0 : i32, i32, i32
  }
  func.func @transform_9(%arg0: i32) -> (i32, i32, i32) {
    %c0_i32 = arith.constant 0 : i32
    %c0_i32_0 = arith.constant 0 : i32
    %c0_i32_1 = arith.constant 0 : i32
    return %arg0, %c0_i32, %c0_i32_0 : i32, i32, i32
  }
  func.func @transform_10(%arg0: i32) -> (i32, i32, i32) {
    %c0_i32 = arith.constant 0 : i32
    %c0_i32_0 = arith.constant 0 : i32
    %c0_i32_1 = arith.constant 0 : i32
    return %arg0, %c0_i32, %c0_i32_0 : i32, i32, i32
  }
}

module attributes {stable_mosaic.version = 11 : i64} {
  func.func @normconv1x1_stats_kernel(%arg0: i32, %arg1: i32, %arg2: memref<1x64x128xbf16, #tpu.memory_space<vmem>>, %arg3: memref<1x1x128xf32, #tpu.memory_space<vmem>>, %arg4: memref<1x1x128xf32, #tpu.memory_space<vmem>>, %arg5: memref<1x1x128xf32, #tpu.memory_space<vmem>>, %arg6: memref<1x1x128xf32, #tpu.memory_space<vmem>>, %arg7: memref<128x128xbf16, #tpu.memory_space<vmem>>, %arg8: memref<1x64x128xbf16, #tpu.memory_space<vmem>>, %arg9: memref<1x1x128xf32, #tpu.memory_space<vmem>>, %arg10: memref<1x1x128xf32, #tpu.memory_space<vmem>>) attributes {dimension_semantics = [#tpu.dimension_semantics<parallel>, #tpu.dimension_semantics<arbitrary>], iteration_bounds = array<i64: 2, 1>, scalar_prefetch = 0 : i64, scratch_operands = 0 : i64, tpu.core_type = #tpu.core_type<tc>, window_params = [{transform_indices = @transform_0, window_bounds = array<i64: 1, 64, 128>}, {transform_indices = @transform_1, window_bounds = array<i64: 1, 1, 128>}, {transform_indices = @transform_2, window_bounds = array<i64: 1, 1, 128>}, {pipeline_mode = #tpu.pipeline_mode<synchronous>, transform_indices = @transform_3, window_bounds = array<i64: 1, 1, 128>}, {pipeline_mode = #tpu.pipeline_mode<synchronous>, transform_indices = @transform_4, window_bounds = array<i64: 1, 1, 128>}, {pipeline_mode = #tpu.pipeline_mode<synchronous>, transform_indices = @transform_5, window_bounds = array<i64: 128, 128>}, {transform_indices = @transform_6, window_bounds = array<i64: 1, 64, 128>}, {transform_indices = @transform_7, window_bounds = array<i64: 1, 1, 128>}, {transform_indices = @transform_8, window_bounds = array<i64: 1, 1, 128>}]} {
    %c0_i32 = arith.constant 0 : i32
    %0 = arith.cmpi eq, %arg1, %c0_i32 : i32
    %1 = arith.extui %0 : i1 to i32
    %c0_i32_0 = arith.constant 0 : i32
    %2 = arith.cmpi ne, %1, %c0_i32_0 : i32
    scf.if %2 {
      %cst_38 = arith.constant 0.000000e+00 : f32
      %51 = vector.broadcast %cst_38 : f32 to vector<1x1x128xf32>
      %c0_39 = arith.constant 0 : index
      %c0_40 = arith.constant 0 : index
      %c0_41 = arith.constant 0 : index
      %52 = vector.load %arg9[%c0_39, %c0_40, %c0_41] : memref<1x1x128xf32, #tpu.memory_space<vmem>>, vector<1x1x128xf32>
      tpu.vector_store %arg9[%c0_39, %c0_40, %c0_41], %51 {strides = array<i32>} : memref<1x1x128xf32, #tpu.memory_space<vmem>>, vector<1x1x128xf32>,
      %cst_42 = arith.constant 0.000000e+00 : f32
      %53 = vector.broadcast %cst_42 : f32 to vector<1x1x128xf32>
      %c0_43 = arith.constant 0 : index
      %c0_44 = arith.constant 0 : index
      %c0_45 = arith.constant 0 : index
      %54 = vector.load %arg10[%c0_43, %c0_44, %c0_45] : memref<1x1x128xf32, #tpu.memory_space<vmem>>, vector<1x1x128xf32>
      tpu.vector_store %arg10[%c0_43, %c0_44, %c0_45], %53 {strides = array<i32>} : memref<1x1x128xf32, #tpu.memory_space<vmem>>, vector<1x1x128xf32>,
    } else {
    }
    %c0 = arith.constant 0 : index
    %c0_1 = arith.constant 0 : index
    %c0_2 = arith.constant 0 : index
    %3 = vector.load %arg3[%c0, %c0_1, %c0_2] : memref<1x1x128xf32, #tpu.memory_space<vmem>>, vector<1x1x128xf32>
    %4 = vector.shape_cast %3 : vector<1x1x128xf32> to vector<1x128xf32>
    %c0_3 = arith.constant 0 : index
    %c0_4 = arith.constant 0 : index
    %c0_5 = arith.constant 0 : index
    %5 = vector.load %arg4[%c0_3, %c0_4, %c0_5] : memref<1x1x128xf32, #tpu.memory_space<vmem>>, vector<1x1x128xf32>
    %6 = vector.shape_cast %5 : vector<1x1x128xf32> to vector<1x128xf32>
    %c0_6 = arith.constant 0 : index
    %c0_7 = arith.constant 0 : index
    %c0_8 = arith.constant 0 : index
    %7 = vector.load %arg5[%c0_6, %c0_7, %c0_8] : memref<1x1x128xf32, #tpu.memory_space<vmem>>, vector<1x1x128xf32>
    %8 = vector.shape_cast %7 : vector<1x1x128xf32> to vector<1x128xf32>
    %c0_9 = arith.constant 0 : index
    %c0_10 = arith.constant 0 : index
    %c0_11 = arith.constant 0 : index
    %9 = vector.load %arg6[%c0_9, %c0_10, %c0_11] : memref<1x1x128xf32, #tpu.memory_space<vmem>>, vector<1x1x128xf32>
    %10 = vector.shape_cast %9 : vector<1x1x128xf32> to vector<1x128xf32>
    %cst = arith.constant 1.562500e-02 : f32
    %11 = vector.broadcast %cst : f32 to vector<1x128xf32>
    %12 = arith.mulf %4, %11 : vector<1x128xf32>
    %cst_12 = arith.constant 1.562500e-02 : f32
    %13 = vector.broadcast %cst_12 : f32 to vector<1x128xf32>
    %14 = arith.mulf %6, %13 : vector<1x128xf32>
    %15 = arith.mulf %12, %12 : vector<1x128xf32>
    %16 = arith.subf %14, %15 : vector<1x128xf32>
    %cst_13 = arith.constant 9.99999974E-6 : f32
    %17 = vector.broadcast %cst_13 : f32 to vector<1x128xf32>
    %18 = arith.addf %16, %17 : vector<1x128xf32>
    %19 = math.rsqrt %18 : vector<1x128xf32>
    %20 = arith.mulf %19, %8 : vector<1x128xf32>
    %21 = arith.mulf %12, %20 : vector<1x128xf32>
    %22 = arith.subf %10, %21 : vector<1x128xf32>
    %c0_14 = arith.constant 0 : index
    %c0_15 = arith.constant 0 : index
    %c0_16 = arith.constant 0 : index
    %23 = vector.load %arg2[%c0_14, %c0_15, %c0_16] : memref<1x64x128xbf16, #tpu.memory_space<vmem>>, vector<1x64x128xbf16>
    %24 = vector.shape_cast %23 : vector<1x64x128xbf16> to vector<64x128xbf16>
    %25 = arith.extf %24 : vector<64x128xbf16> to vector<64x128xf32>
    %26 = vector.broadcast %20 : vector<1x128xf32> to vector<64x128xf32>
    %27 = arith.mulf %25, %26 : vector<64x128xf32>
    %28 = vector.broadcast %22 : vector<1x128xf32> to vector<64x128xf32>
    %29 = arith.addf %27, %28 : vector<64x128xf32>
    %cst_17 = arith.constant 0.000000e+00 : f32
    %30 = vector.broadcast %cst_17 : f32 to vector<64x128xf32>
    %31 = arith.maximumf %29, %30 : vector<64x128xf32>
    %32 = arith.truncf %31 : vector<64x128xf32> to vector<64x128xbf16>
    %c0_18 = arith.constant 0 : index
    %c0_19 = arith.constant 0 : index
    %33 = vector.load %arg7[%c0_18, %c0_19] : memref<128x128xbf16, #tpu.memory_space<vmem>>, vector<128x128xbf16>
    %cst_20 = arith.constant dense<0.000000e+00> : vector<64x128xf32>
    %34 = tpu.matmul %32, %33, %cst_20 {dimension_numbers = #tpu.dot_dimension_numbers<[1], [0], [0], [1], [0, 0, 1, 1], [], []>} : vector<64x128xbf16>, vector<128x128xbf16>, vector<64x128xf32> -> vector<64x128xf32>
    %35 = arith.truncf %34 : vector<64x128xf32> to vector<64x128xbf16>
    %c0_21 = arith.constant 0 : index
    %c0_22 = arith.constant 0 : index
    %c0_23 = arith.constant 0 : index
    %36 = vector.load %arg8[%c0_21, %c0_22, %c0_23] : memref<1x64x128xbf16, #tpu.memory_space<vmem>>, vector<1x64x128xbf16>
    %37 = vector.shape_cast %36 : vector<1x64x128xbf16> to vector<64x128xbf16>
    %38 = vector.shape_cast %35 : vector<64x128xbf16> to vector<1x64x128xbf16>
    tpu.vector_store %arg8[%c0_21, %c0_22, %c0_23], %38 {strides = array<i32>} : memref<1x64x128xbf16, #tpu.memory_space<vmem>>, vector<1x64x128xbf16>,
    %39 = arith.extf %35 : vector<64x128xbf16> to vector<64x128xf32>
    %c0_24 = arith.constant 0 : index
    %c0_25 = arith.constant 0 : index
    %c0_26 = arith.constant 0 : index
    %40 = vector.load %arg9[%c0_24, %c0_25, %c0_26] : memref<1x1x128xf32, #tpu.memory_space<vmem>>, vector<1x1x128xf32>
    %cst_27 = arith.constant dense<0.000000e+00> : vector<128xf32>
    %41 = vector.multi_reduction <add>, %39, %cst_27 [0] : vector<64x128xf32> to vector<128xf32>
    %42 = vector.shape_cast %41 : vector<128xf32> to vector<1x1x128xf32>
    %43 = arith.addf %40, %42 : vector<1x1x128xf32>
    %c0_28 = arith.constant 0 : index
    %c0_29 = arith.constant 0 : index
    %c0_30 = arith.constant 0 : index
    %44 = vector.load %arg9[%c0_28, %c0_29, %c0_30] : memref<1x1x128xf32, #tpu.memory_space<vmem>>, vector<1x1x128xf32>
    tpu.vector_store %arg9[%c0_28, %c0_29, %c0_30], %43 {strides = array<i32>} : memref<1x1x128xf32, #tpu.memory_space<vmem>>, vector<1x1x128xf32>,
    %c0_31 = arith.constant 0 : index
    %c0_32 = arith.constant 0 : index
    %c0_33 = arith.constant 0 : index
    %45 = vector.load %arg10[%c0_31, %c0_32, %c0_33] : memref<1x1x128xf32, #tpu.memory_space<vmem>>, vector<1x1x128xf32>
    %46 = arith.mulf %39, %39 : vector<64x128xf32>
    %cst_34 = arith.constant dense<0.000000e+00> : vector<128xf32>
    %47 = vector.multi_reduction <add>, %46, %cst_34 [0] : vector<64x128xf32> to vector<128xf32>
    %48 = vector.shape_cast %47 : vector<128xf32> to vector<1x1x128xf32>
    %49 = arith.addf %45, %48 : vector<1x1x128xf32>
    %c0_35 = arith.constant 0 : index
    %c0_36 = arith.constant 0 : index
    %c0_37 = arith.constant 0 : index
    %50 = vector.load %arg10[%c0_35, %c0_36, %c0_37] : memref<1x1x128xf32, #tpu.memory_space<vmem>>, vector<1x1x128xf32>
    tpu.vector_store %arg10[%c0_35, %c0_36, %c0_37], %49 {strides = array<i32>} : memref<1x1x128xf32, #tpu.memory_space<vmem>>, vector<1x1x128xf32>,
    return
  }
  func.func @transform_0(%arg0: i32, %arg1: i32) -> (i32, i32, i32) {
    %c0_i32 = arith.constant 0 : i32
    %c0_i32_0 = arith.constant 0 : i32
    return %arg0, %arg1, %c0_i32 : i32, i32, i32
  }
  func.func @transform_1(%arg0: i32, %arg1: i32) -> (i32, i32, i32) {
    %c0_i32 = arith.constant 0 : i32
    %c0_i32_0 = arith.constant 0 : i32
    %c0_i32_1 = arith.constant 0 : i32
    return %arg0, %c0_i32, %c0_i32_0 : i32, i32, i32
  }
  func.func @transform_2(%arg0: i32, %arg1: i32) -> (i32, i32, i32) {
    %c0_i32 = arith.constant 0 : i32
    %c0_i32_0 = arith.constant 0 : i32
    %c0_i32_1 = arith.constant 0 : i32
    return %arg0, %c0_i32, %c0_i32_0 : i32, i32, i32
  }
  func.func @transform_3(%arg0: i32, %arg1: i32) -> (i32, i32, i32) {
    %c0_i32 = arith.constant 0 : i32
    %c0_i32_0 = arith.constant 0 : i32
    %c0_i32_1 = arith.constant 0 : i32
    %c0_i32_2 = arith.constant 0 : i32
    return %c0_i32, %c0_i32_0, %c0_i32_1 : i32, i32, i32
  }
  func.func @transform_4(%arg0: i32, %arg1: i32) -> (i32, i32, i32) {
    %c0_i32 = arith.constant 0 : i32
    %c0_i32_0 = arith.constant 0 : i32
    %c0_i32_1 = arith.constant 0 : i32
    %c0_i32_2 = arith.constant 0 : i32
    return %c0_i32, %c0_i32_0, %c0_i32_1 : i32, i32, i32
  }
  func.func @transform_5(%arg0: i32, %arg1: i32) -> (i32, i32) {
    %c0_i32 = arith.constant 0 : i32
    %c0_i32_0 = arith.constant 0 : i32
    %c0_i32_1 = arith.constant 0 : i32
    return %c0_i32, %c0_i32_0 : i32, i32
  }
  func.func @transform_6(%arg0: i32, %arg1: i32) -> (i32, i32, i32) {
    %c0_i32 = arith.constant 0 : i32
    %c0_i32_0 = arith.constant 0 : i32
    return %arg0, %arg1, %c0_i32 : i32, i32, i32
  }
  func.func @transform_7(%arg0: i32, %arg1: i32) -> (i32, i32, i32) {
    %c0_i32 = arith.constant 0 : i32
    %c0_i32_0 = arith.constant 0 : i32
    %c0_i32_1 = arith.constant 0 : i32
    return %arg0, %c0_i32, %c0_i32_0 : i32, i32, i32
  }
  func.func @transform_8(%arg0: i32, %arg1: i32) -> (i32, i32, i32) {
    %c0_i32 = arith.constant 0 : i32
    %c0_i32_0 = arith.constant 0 : i32
    %c0_i32_1 = arith.constant 0 : i32
    return %arg0, %c0_i32, %c0_i32_0 : i32, i32, i32
  }
}

module attributes {stable_mosaic.version = 11 : i64} {
  func.func @norm_add_relu_proj_kernel(%arg0: i32, %arg1: i32, %arg2: memref<1x64x128xbf16, #tpu.memory_space<vmem>>, %arg3: memref<1x1x128xf32, #tpu.memory_space<vmem>>, %arg4: memref<1x1x128xf32, #tpu.memory_space<vmem>>, %arg5: memref<1x1x128xf32, #tpu.memory_space<vmem>>, %arg6: memref<1x1x128xf32, #tpu.memory_space<vmem>>, %arg7: memref<1x64x128xbf16, #tpu.memory_space<vmem>>, %arg8: memref<1x1x128xf32, #tpu.memory_space<vmem>>, %arg9: memref<1x1x128xf32, #tpu.memory_space<vmem>>, %arg10: memref<1x1x128xf32, #tpu.memory_space<vmem>>, %arg11: memref<1x1x128xf32, #tpu.memory_space<vmem>>, %arg12: memref<1x64x128xf32, #tpu.memory_space<vmem>>) attributes {dimension_semantics = [#tpu.dimension_semantics<parallel>, #tpu.dimension_semantics<parallel>], iteration_bounds = array<i64: 2, 1>, scalar_prefetch = 0 : i64, scratch_operands = 0 : i64, tpu.core_type = #tpu.core_type<tc>, window_params = [{transform_indices = @transform_0, window_bounds = array<i64: 1, 64, 128>}, {transform_indices = @transform_1, window_bounds = array<i64: 1, 1, 128>}, {transform_indices = @transform_2, window_bounds = array<i64: 1, 1, 128>}, {pipeline_mode = #tpu.pipeline_mode<synchronous>, transform_indices = @transform_3, window_bounds = array<i64: 1, 1, 128>}, {pipeline_mode = #tpu.pipeline_mode<synchronous>, transform_indices = @transform_4, window_bounds = array<i64: 1, 1, 128>}, {transform_indices = @transform_5, window_bounds = array<i64: 1, 64, 128>}, {transform_indices = @transform_6, window_bounds = array<i64: 1, 1, 128>}, {transform_indices = @transform_7, window_bounds = array<i64: 1, 1, 128>}, {pipeline_mode = #tpu.pipeline_mode<synchronous>, transform_indices = @transform_8, window_bounds = array<i64: 1, 1, 128>}, {pipeline_mode = #tpu.pipeline_mode<synchronous>, transform_indices = @transform_9, window_bounds = array<i64: 1, 1, 128>}, {transform_indices = @transform_10, window_bounds = array<i64: 1, 64, 128>}]} {
    %c0 = arith.constant 0 : index
    %c0_0 = arith.constant 0 : index
    %c0_1 = arith.constant 0 : index
    %0 = vector.load %arg3[%c0, %c0_0, %c0_1] : memref<1x1x128xf32, #tpu.memory_space<vmem>>, vector<1x1x128xf32>
    %1 = vector.shape_cast %0 : vector<1x1x128xf32> to vector<1x128xf32>
    %c0_2 = arith.constant 0 : index
    %c0_3 = arith.constant 0 : index
    %c0_4 = arith.constant 0 : index
    %2 = vector.load %arg4[%c0_2, %c0_3, %c0_4] : memref<1x1x128xf32, #tpu.memory_space<vmem>>, vector<1x1x128xf32>
    %3 = vector.shape_cast %2 : vector<1x1x128xf32> to vector<1x128xf32>
    %c0_5 = arith.constant 0 : index
    %c0_6 = arith.constant 0 : index
    %c0_7 = arith.constant 0 : index
    %4 = vector.load %arg5[%c0_5, %c0_6, %c0_7] : memref<1x1x128xf32, #tpu.memory_space<vmem>>, vector<1x1x128xf32>
    %5 = vector.shape_cast %4 : vector<1x1x128xf32> to vector<1x128xf32>
    %c0_8 = arith.constant 0 : index
    %c0_9 = arith.constant 0 : index
    %c0_10 = arith.constant 0 : index
    %6 = vector.load %arg6[%c0_8, %c0_9, %c0_10] : memref<1x1x128xf32, #tpu.memory_space<vmem>>, vector<1x1x128xf32>
    %7 = vector.shape_cast %6 : vector<1x1x128xf32> to vector<1x128xf32>
    %cst = arith.constant 1.562500e-02 : f32
    %8 = vector.broadcast %cst : f32 to vector<1x128xf32>
    %9 = arith.mulf %1, %8 : vector<1x128xf32>
    %cst_11 = arith.constant 1.562500e-02 : f32
    %10 = vector.broadcast %cst_11 : f32 to vector<1x128xf32>
    %11 = arith.mulf %3, %10 : vector<1x128xf32>
    %12 = arith.mulf %9, %9 : vector<1x128xf32>
    %13 = arith.subf %11, %12 : vector<1x128xf32>
    %cst_12 = arith.constant 9.99999974E-6 : f32
    %14 = vector.broadcast %cst_12 : f32 to vector<1x128xf32>
    %15 = arith.addf %13, %14 : vector<1x128xf32>
    %16 = math.rsqrt %15 : vector<1x128xf32>
    %17 = arith.mulf %16, %5 : vector<1x128xf32>
    %18 = arith.mulf %9, %17 : vector<1x128xf32>
    %19 = arith.subf %7, %18 : vector<1x128xf32>
    %c0_13 = arith.constant 0 : index
    %c0_14 = arith.constant 0 : index
    %c0_15 = arith.constant 0 : index
    %20 = vector.load %arg8[%c0_13, %c0_14, %c0_15] : memref<1x1x128xf32, #tpu.memory_space<vmem>>, vector<1x1x128xf32>
    %21 = vector.shape_cast %20 : vector<1x1x128xf32> to vector<1x128xf32>
    %c0_16 = arith.constant 0 : index
    %c0_17 = arith.constant 0 : index
    %c0_18 = arith.constant 0 : index
    %22 = vector.load %arg9[%c0_16, %c0_17, %c0_18] : memref<1x1x128xf32, #tpu.memory_space<vmem>>, vector<1x1x128xf32>
    %23 = vector.shape_cast %22 : vector<1x1x128xf32> to vector<1x128xf32>
    %c0_19 = arith.constant 0 : index
    %c0_20 = arith.constant 0 : index
    %c0_21 = arith.constant 0 : index
    %24 = vector.load %arg10[%c0_19, %c0_20, %c0_21] : memref<1x1x128xf32, #tpu.memory_space<vmem>>, vector<1x1x128xf32>
    %25 = vector.shape_cast %24 : vector<1x1x128xf32> to vector<1x128xf32>
    %c0_22 = arith.constant 0 : index
    %c0_23 = arith.constant 0 : index
    %c0_24 = arith.constant 0 : index
    %26 = vector.load %arg11[%c0_22, %c0_23, %c0_24] : memref<1x1x128xf32, #tpu.memory_space<vmem>>, vector<1x1x128xf32>
    %27 = vector.shape_cast %26 : vector<1x1x128xf32> to vector<1x128xf32>
    %cst_25 = arith.constant 1.562500e-02 : f32
    %28 = vector.broadcast %cst_25 : f32 to vector<1x128xf32>
    %29 = arith.mulf %21, %28 : vector<1x128xf32>
    %cst_26 = arith.constant 1.562500e-02 : f32
    %30 = vector.broadcast %cst_26 : f32 to vector<1x128xf32>
    %31 = arith.mulf %23, %30 : vector<1x128xf32>
    %32 = arith.mulf %29, %29 : vector<1x128xf32>
    %33 = arith.subf %31, %32 : vector<1x128xf32>
    %cst_27 = arith.constant 9.99999974E-6 : f32
    %34 = vector.broadcast %cst_27 : f32 to vector<1x128xf32>
    %35 = arith.addf %33, %34 : vector<1x128xf32>
    %36 = math.rsqrt %35 : vector<1x128xf32>
    %37 = arith.mulf %36, %25 : vector<1x128xf32>
    %38 = arith.mulf %29, %37 : vector<1x128xf32>
    %39 = arith.subf %27, %38 : vector<1x128xf32>
    %c0_28 = arith.constant 0 : index
    %c0_29 = arith.constant 0 : index
    %c0_30 = arith.constant 0 : index
    %40 = vector.load %arg2[%c0_28, %c0_29, %c0_30] : memref<1x64x128xbf16, #tpu.memory_space<vmem>>, vector<1x64x128xbf16>
    %41 = vector.shape_cast %40 : vector<1x64x128xbf16> to vector<64x128xbf16>
    %42 = arith.extf %41 : vector<64x128xbf16> to vector<64x128xf32>
    %43 = vector.broadcast %17 : vector<1x128xf32> to vector<64x128xf32>
    %44 = arith.mulf %42, %43 : vector<64x128xf32>
    %45 = vector.broadcast %19 : vector<1x128xf32> to vector<64x128xf32>
    %46 = arith.addf %44, %45 : vector<64x128xf32>
    %c0_31 = arith.constant 0 : index
    %c0_32 = arith.constant 0 : index
    %c0_33 = arith.constant 0 : index
    %47 = vector.load %arg7[%c0_31, %c0_32, %c0_33] : memref<1x64x128xbf16, #tpu.memory_space<vmem>>, vector<1x64x128xbf16>
    %48 = vector.shape_cast %47 : vector<1x64x128xbf16> to vector<64x128xbf16>
    %49 = arith.extf %48 : vector<64x128xbf16> to vector<64x128xf32>
    %50 = vector.broadcast %37 : vector<1x128xf32> to vector<64x128xf32>
    %51 = arith.mulf %49, %50 : vector<64x128xf32>
    %52 = vector.broadcast %39 : vector<1x128xf32> to vector<64x128xf32>
    %53 = arith.addf %51, %52 : vector<64x128xf32>
    %54 = arith.addf %46, %53 : vector<64x128xf32>
    %cst_34 = arith.constant 0.000000e+00 : f32
    %55 = vector.broadcast %cst_34 : f32 to vector<64x128xf32>
    %56 = arith.maximumf %54, %55 : vector<64x128xf32>
    %c0_35 = arith.constant 0 : index
    %c0_36 = arith.constant 0 : index
    %c0_37 = arith.constant 0 : index
    %57 = vector.load %arg12[%c0_35, %c0_36, %c0_37] : memref<1x64x128xf32, #tpu.memory_space<vmem>>, vector<1x64x128xf32>
    %58 = vector.shape_cast %57 : vector<1x64x128xf32> to vector<64x128xf32>
    %59 = vector.shape_cast %56 : vector<64x128xf32> to vector<1x64x128xf32>
    tpu.vector_store %arg12[%c0_35, %c0_36, %c0_37], %59 {strides = array<i32>} : memref<1x64x128xf32, #tpu.memory_space<vmem>>, vector<1x64x128xf32>,
    return
  }
  func.func @transform_0(%arg0: i32, %arg1: i32) -> (i32, i32, i32) {
    %c0_i32 = arith.constant 0 : i32
    %c0_i32_0 = arith.constant 0 : i32
    return %arg0, %arg1, %c0_i32 : i32, i32, i32
  }
  func.func @transform_1(%arg0: i32, %arg1: i32) -> (i32, i32, i32) {
    %c0_i32 = arith.constant 0 : i32
    %c0_i32_0 = arith.constant 0 : i32
    %c0_i32_1 = arith.constant 0 : i32
    return %arg0, %c0_i32, %c0_i32_0 : i32, i32, i32
  }
  func.func @transform_2(%arg0: i32, %arg1: i32) -> (i32, i32, i32) {
    %c0_i32 = arith.constant 0 : i32
    %c0_i32_0 = arith.constant 0 : i32
    %c0_i32_1 = arith.constant 0 : i32
    return %arg0, %c0_i32, %c0_i32_0 : i32, i32, i32
  }
  func.func @transform_3(%arg0: i32, %arg1: i32) -> (i32, i32, i32) {
    %c0_i32 = arith.constant 0 : i32
    %c0_i32_0 = arith.constant 0 : i32
    %c0_i32_1 = arith.constant 0 : i32
    %c0_i32_2 = arith.constant 0 : i32
    return %c0_i32, %c0_i32_0, %c0_i32_1 : i32, i32, i32
  }
  func.func @transform_4(%arg0: i32, %arg1: i32) -> (i32, i32, i32) {
    %c0_i32 = arith.constant 0 : i32
    %c0_i32_0 = arith.constant 0 : i32
    %c0_i32_1 = arith.constant 0 : i32
    %c0_i32_2 = arith.constant 0 : i32
    return %c0_i32, %c0_i32_0, %c0_i32_1 : i32, i32, i32
  }
  func.func @transform_5(%arg0: i32, %arg1: i32) -> (i32, i32, i32) {
    %c0_i32 = arith.constant 0 : i32
    %c0_i32_0 = arith.constant 0 : i32
    return %arg0, %arg1, %c0_i32 : i32, i32, i32
  }
  func.func @transform_6(%arg0: i32, %arg1: i32) -> (i32, i32, i32) {
    %c0_i32 = arith.constant 0 : i32
    %c0_i32_0 = arith.constant 0 : i32
    %c0_i32_1 = arith.constant 0 : i32
    return %arg0, %c0_i32, %c0_i32_0 : i32, i32, i32
  }
  func.func @transform_7(%arg0: i32, %arg1: i32) -> (i32, i32, i32) {
    %c0_i32 = arith.constant 0 : i32
    %c0_i32_0 = arith.constant 0 : i32
    %c0_i32_1 = arith.constant 0 : i32
    return %arg0, %c0_i32, %c0_i32_0 : i32, i32, i32
  }
  func.func @transform_8(%arg0: i32, %arg1: i32) -> (i32, i32, i32) {
    %c0_i32 = arith.constant 0 : i32
    %c0_i32_0 = arith.constant 0 : i32
    %c0_i32_1 = arith.constant 0 : i32
    %c0_i32_2 = arith.constant 0 : i32
    return %c0_i32, %c0_i32_0, %c0_i32_1 : i32, i32, i32
  }
  func.func @transform_9(%arg0: i32, %arg1: i32) -> (i32, i32, i32) {
    %c0_i32 = arith.constant 0 : i32
    %c0_i32_0 = arith.constant 0 : i32
    %c0_i32_1 = arith.constant 0 : i32
    %c0_i32_2 = arith.constant 0 : i32
    return %c0_i32, %c0_i32_0, %c0_i32_1 : i32, i32, i32
  }
  func.func @transform_10(%arg0: i32, %arg1: i32) -> (i32, i32, i32) {
    %c0_i32 = arith.constant 0 : i32
    %c0_i32_0 = arith.constant 0 : i32
    return %arg0, %arg1, %c0_i32 : i32, i32, i32
  }
}

</mosaic_0001>

<llo_original>
// kernel: _bottleneck_forward.8
$region0: #{_bottleneck_forward.8}
  #allocation0 [shape = 'u32[]', space=smem, size = 0x4, offset = 0x4, fixed_abs, tag = 'smem constant byte address 0x4 - core index']
  #allocation1 [shape = 'u32[144,128]{1,0:T(1,128)}', space=vmem, size = 0x12000, scoped, tag = 'internal scratch']
  %s0 = inlined_call_operand.hbm [shape: bf16[2,256,128], index: 0, kind: input, shape index: {}]
  %s1 = inlined_call_operand.hbm [shape: bf16[128,128], index: 1, kind: input, shape index: {}]
  %s2 = inlined_call_operand.hbm [shape: bf16[2,64,128], index: 2, kind: output, shape index: {0}]
  %s3 = inlined_call_operand.hbm [shape: f32[2,1,128], index: 3, kind: output, shape index: {1}]
  %s4 = inlined_call_operand.hbm [shape: f32[2,1,128], index: 4, kind: output, shape index: {2}]
  %5 = xla_tuple %s2, %s3, %s4
  %s6 = sld [smem:[#allocation0]]
  $region69: #{_bottleneck_forward.8} parent=0
    _
  %s8 = ssub.s32 1, %s6
  %s9 = scalar_select 0, %s8, %s6
  $region1: #{_bottleneck_forward.8} parent=0
    #allocation2 [shape = 'u8[32768]{0}', space=vmem, size = 0x8000, scoped, tag = 'input window, operand 0']
    #allocation3 [shape = 's32[2]{0}', space=sflag, size = 0x8, scoped, tag = 'scoped memory for _bottleneck_forward.8']
    #allocation4 [shape = 's32[2]{0}', space=sflag, size = 0x8, scoped, tag = 'scoped memory for _bottleneck_forward.8']
    #allocation5 [shape = 'u8[32768]{0}', space=vmem, size = 0x8000, scoped, tag = 'input window, operand 1, single buffered']
    #allocation6 [shape = 's32[1]{0}', space=sflag, size = 0x4, scoped, tag = 'scoped memory for _bottleneck_forward.8']
    #allocation7 [shape = 'u8[32768]{0}', space=vmem, size = 0x8000, scoped, tag = 'output window, operand 0']
    #allocation8 [shape = 'u8[1024]{0}', space=vmem, size = 0x400, scoped, tag = 'output window, operand 1']
    #allocation9 [shape = 's32[2]{0}', space=sflag, size = 0x8, scoped, tag = 'scoped memory for _bottleneck_forward.8']
    #allocation10 [shape = 'u8[1024]{0}', space=vmem, size = 0x400, scoped, tag = 'output window, operand 2']
    %10 = vsyncpa [#allocation3], 0
    %s11 = scalar_lea.sflag [#allocation3], 1
    %12 = vsyncpa %s11, 0
    %13 = vsyncpa [#allocation6], 0
    %14 = vsyncpa [#allocation4], 0
    %s15 = scalar_lea.sflag [#allocation4], 1
    %16 = vsyncpa %s15, 0
    %17 = vsyncpa [#allocation9], 0
    %s18 = scalar_lea.sflag [#allocation9], 1
    %19 = vsyncpa %s18, 0
    loop: start=0, step=1, limit=4
    $region2: #{_bottleneck_forward.8} parent=1 // loop_pre_header
      _
    $region3: #{_bottleneck_forward.8} parent=1 // loop_header
      %s21 = sphi 0, %s25
      %p22 = scmp.ge.s32.totalorder %s21, 4
      %s28 = sphi 0, %s40
      %s29 = sphi 0, %s36
      %s30 = sphi 0, %s28
      %s31 = sphi 0, %s29
      %s32 = sphi 0, %s30
      %s33 = sphi 0, %s31
      %s45 = sphi 0, %s47
      %s48 = sphi 0, %s45
      %s49 = sphi 0, %s48
      %s65 = sphi 0, %s49
      %s69 = sphi 0, %s69
      %s71 = sphi 0, %s69
      %s72 = sphi 0, %s71
      %s86 = sphi 0, %s72
      %s94 = sphi 0, %s96
      %s97 = sphi 0, %s94
      %s98 = sphi 0, %s97
      %s114 = sphi 0, %s98
      %s120 = sphi 0, %s122
      %s123 = sphi 0, %s120
      %s124 = sphi 0, %s123
      %s140 = sphi 0, %s124
      %s146 = sphi 0, %s148
      %s149 = sphi 0, %s146
      %s150 = sphi 0, %s149
      %s166 = sphi 0, %s150
    $region4: #{_bottleneck_forward.8} parent=1 // loop_header_branch
      %24 = sbr.rel (%p22) target = $region8
    $region5: #{_bottleneck_forward.8} parent=1 // loop_body
      %s26 = ssub.s32 %s21, 1
      %s27 = ssub.s32 %s21, 2
      %s34 = sadd.s32 1, %s29
      %p35 = scmp.ge.s32.totalorder %s34, 1
      %s36 = scalar_select %p35, 0, %s34
      %s37 = sadd.s32 1, %s28
      %s38 = scalar_select %p35, %s37, %s28
      %p39 = scmp.ge.s32.totalorder %s38, 2
      %s40 = scalar_select %p39, 0, %s38
      %s41 = ssub.s32 %s28, %s40
      %s42 = ssub.s32 %s29, %s36
      %s43 = sor.u32 %s41, %s42
      %p44 = scmp.eq.s32.totalorder %s43, 0
      %s46 = sadd.s32 %s45, 1
      %s47 = scalar_select %p44, %s45, %s46
      %p50 = pneg %p44
      %p51 = scmp.eq.s32.totalorder %s21, 1
      %p52 = por %p50, %p51
      %p53 = scmp.ne.s32.totalorder %s45, %s48
      %p54 = scmp.eq.s32.totalorder %s21, 0
      %p55 = por %p53, %p54
      %p56 = scmp.ne.s32.totalorder %s45, %s48
      %p57 = scmp.eq.s32.totalorder %s26, 1
      %p58 = por %p56, %p57
      %p59 = scmp.ne.s32.totalorder %s48, %s49
      %p60 = scmp.eq.s32.totalorder %s26, 0
      %p61 = por %p59, %p60
      %p62 = scmp.ne.s32.totalorder %s48, %s49
      %p63 = scmp.eq.s32.totalorder %s27, 1
      %p64 = por %p62, %p63
      %p66 = scmp.ne.s32.totalorder %s49, %s65
      %p67 = scmp.eq.s32.totalorder %s27, 0
      %p68 = por %p66, %p67
      %s70 = sadd.s32 %s69, 1
      %p73 = scmp.eq.s32.totalorder %s21, 1
      %p74 = scmp.ne.s32.totalorder %s69, %s71
      %p75 = scmp.eq.s32.totalorder %s21, 0
      %p76 = por %p74, %p75
      %p77 = scmp.ne.s32.totalorder %s69, %s71
      %p78 = scmp.eq.s32.totalorder %s26, 1
      %p79 = por %p77, %p78
      %p80 = scmp.ne.s32.totalorder %s71, %s72
      %p81 = scmp.eq.s32.totalorder %s26, 0
      %p82 = por %p80, %p81
      %p83 = scmp.ne.s32.totalorder %s71, %s72
      %p84 = scmp.eq.s32.totalorder %s27, 1
      %p85 = por %p83, %p84
      %p87 = scmp.ne.s32.totalorder %s72, %s86
      %p88 = scmp.eq.s32.totalorder %s27, 0
      %p89 = por %p87, %p88
      %s90 = ssub.s32 %s28, %s40
      %s91 = ssub.s32 %s29, %s36
      %s92 = sor.u32 %s90, %s91
      %p93 = scmp.eq.s32.totalorder %s92, 0
      %s95 = sadd.s32 %s94, 1
      %s96 = scalar_select %p93, %s94, %s95
      %p99 = pneg %p93
      %p100 = scmp.eq.s32.totalorder %s21, 1
      %p101 = por %p99, %p100
      %p102 = scmp.ne.s32.totalorder %s94, %s97
      %p103 = scmp.eq.s32.totalorder %s21, 0
      %p104 = por %p102, %p103
      %p105 = scmp.ne.s32.totalorder %s94, %s97
      %p106 = scmp.eq.s32.totalorder %s26, 1
      %p107 = por %p105, %p106
      %p108 = scmp.ne.s32.totalorder %s97, %s98
      %p109 = scmp.eq.s32.totalorder %s26, 0
      %p110 = por %p108, %p109
      %p111 = scmp.ne.s32.totalorder %s97, %s98
      %p112 = scmp.eq.s32.totalorder %s27, 1
      %p113 = por %p111, %p112
      %p115 = scmp.ne.s32.totalorder %s98, %s114
      %p116 = scmp.eq.s32.totalorder %s27, 0
      %p117 = por %p115, %p116
      %s118 = ssub.s32 %s28, %s40
      %p119 = scmp.eq.s32.totalorder %s118, 0
      %s121 = sadd.s32 %s120, 1
      %s122 = scalar_select %p119, %s120, %s121
      %p125 = pneg %p119
      %p126 = scmp.eq.s32.totalorder %s21, 1
      %p127 = por %p125, %p126
      %p128 = scmp.ne.s32.totalorder %s120, %s123
      %p129 = scmp.eq.s32.totalorder %s21, 0
      %p130 = por %p128, %p129
      %p131 = scmp.ne.s32.totalorder %s120, %s123
      %p132 = scmp.eq.s32.totalorder %s26, 1
      %p133 = por %p131, %p132
      %p134 = scmp.ne.s32.totalorder %s123, %s124
      %p135 = scmp.eq.s32.totalorder %s26, 0
      %p136 = por %p134, %p135
      %p137 = scmp.ne.s32.totalorder %s123, %s124
      %p138 = scmp.eq.s32.totalorder %s27, 1
      %p139 = por %p137, %p138
      %p141 = scmp.ne.s32.totalorder %s124, %s140
      %p142 = scmp.eq.s32.totalorder %s27, 0
      %p143 = por %p141, %p142
      %s144 = ssub.s32 %s28, %s40
      %p145 = scmp.eq.s32.totalorder %s144, 0
      %s147 = sadd.s32 %s146, 1
      %s148 = scalar_select %p145, %s146, %s147
      %p151 = pneg %p145
      %p152 = scmp.eq.s32.totalorder %s21, 1
      %p153 = por %p151, %p152
      %p154 = scmp.ne.s32.totalorder %s146, %s149
      %p155 = scmp.eq.s32.totalorder %s21, 0
      %p156 = por %p154, %p155
      %p157 = scmp.ne.s32.totalorder %s146, %s149
      %p158 = scmp.eq.s32.totalorder %s26, 1
      %p159 = por %p157, %p158
      %p160 = scmp.ne.s32.totalorder %s149, %s150
      %p161 = scmp.eq.s32.totalorder %s26, 0
      %p162 = por %p160, %p161
      %p163 = scmp.ne.s32.totalorder %s149, %s150
      %p164 = scmp.eq.s32.totalorder %s27, 1
      %p165 = por %p163, %p164
      %p167 = scmp.ne.s32.totalorder %s150, %s166
      %p168 = scmp.eq.s32.totalorder %s27, 0
      %p169 = por %p167, %p168
      %p170 = scmp.le.s32.totalorder 1, %s21
      %p171 = scmp.lt.s32.totalorder %s21, 3
      %p172 = pnand %p170, %p171
      %p173 = pneg %p172
      // Predicated region
      $region9: #{_bottleneck_forward.8} parent=5 // pred_check
        _
      $region10: #{_bottleneck_forward.8} parent=5 // pred_check_branch
        %175 = sbr.rel (%p172) target = $region12
      $region11: #{_bottleneck_forward.8} parent=5 // pred_region
        %s176 = ssub.s32 %s21, 1
        // Predicated region
        $region13: #{_bottleneck_forward.8} parent=11 // pred_check
          %p177 = pneg %p82
        $region14: #{_bottleneck_forward.8} parent=11 // pred_check_branch
          %179 = sbr.rel (%p177) target = $region16
        $region15: #{_bottleneck_forward.8} parent=11 // pred_region
          %s181 = ssub.s32 1024, 1024
          %182 = vsyncadd [#allocation6], %s181
          %s183 = sshll.u32 [#allocation5], 4
          %s184 = int_to_ptr.vmem [resolvable:$true] %s183
          %189 = dma.hbm_to_vmem [thread:$0]  %s1, 1024, %s184, [#allocation6], 64, 64, 4
        $region16: #{_bottleneck_forward.8} parent=11 // pred_fallthru
          _
      $region12: #{_bottleneck_forward.8} parent=5 // pred_fallthru
        _
      %p190 = scmp.lt.s32.totalorder %s21, 2
      // Predicated region
      $region17: #{_bottleneck_forward.8} parent=5 // pred_check
        %p191 = pneg %p190
      $region18: #{_bottleneck_forward.8} parent=5 // pred_check_branch
        %193 = sbr.rel (%p191) target = $region20
      $region19: #{_bottleneck_forward.8} parent=5 // pred_region
        // Predicated region
        $region21: #{_bottleneck_forward.8} parent=19 // pred_check
          %p194 = pneg %p55
        $region22: #{_bottleneck_forward.8} parent=19 // pred_check_branch
          %196 = sbr.rel (%p194) target = $region24
        $region23: #{_bottleneck_forward.8} parent=19 // pred_region
          %s197 = sand.u32 %s45, 1
          %s198 = scalar_lea.sflag [#allocation3], %s197
          %s199 = sand.u32 %s45, 1
          %s200 = smul.addr %s199, 32
          %s201 = scalar_lea.vmem [#allocation2], %s200
          %s202 = smul.u32 8, %s29
          %s204 = ssub.s32 512, 512
          %205 = vsyncadd %s198, %s204
          %s206 = smul.addr %s28, 32
          %s207 = sadd.s32 %s202, %s206
          %s208 = smul.addr %s207, 64
          %s209 = scalar_lea.hbm %s0, %s208
          %s210 = sshll.u32 %s201, 4
          %s211 = int_to_ptr.vmem [resolvable:$true] %s210
          %216 = dma.hbm_to_vmem [thread:$0]  %s209, 512, %s211, %s198, 64, 64, 4
        $region24: #{_bottleneck_forward.8} parent=19 // pred_fallthru
          _
      $region20: #{_bottleneck_forward.8} parent=5 // pred_fallthru
        _
      %p217 = scmp.le.s32.totalorder 1, %s21
      %p218 = scmp.lt.s32.totalorder %s21, 3
      %p219 = pnand %p217, %p218
      %p220 = pneg %p219
      // Predicated region
      $region25: #{_bottleneck_forward.8} parent=5 // pred_check
        _
      $region26: #{_bottleneck_forward.8} parent=5 // pred_check_branch
        %222 = sbr.rel (%p219) target = $region28
      $region27: #{_bottleneck_forward.8} parent=5 // pred_region
        %s223 = ssub.s32 %s21, 1
        %s224 = sand.u32 %s48, 1
        %s225 = scalar_lea.sflag [#allocation3], %s224
        %s226 = sand.u32 %s48, 1
        %s227 = smul.addr %s226, 32
        %s228 = scalar_lea.vmem [#allocation2], %s227
        // Predicated region
        $region29: #{_bottleneck_forward.8} parent=27 // pred_check
          %p229 = pneg %p61
        $region30: #{_bottleneck_forward.8} parent=27 // pred_check_branch
          %231 = sbr.rel (%p229) target = $region32
        $region31: #{_bottleneck_forward.8} parent=27 // pred_region
          %232 = dma.done %s225, 512
        $region32: #{_bottleneck_forward.8} parent=27 // pred_fallthru
          _
        // Predicated region
        $region33: #{_bottleneck_forward.8} parent=27 // pred_check
          %p233 = pneg %p82
        $region34: #{_bottleneck_forward.8} parent=27 // pred_check_branch
          %235 = sbr.rel (%p233) target = $region36
        $region35: #{_bottleneck_forward.8} parent=27 // pred_region
          %236 = dma.done [#allocation6], 1024
        $region36: #{_bottleneck_forward.8} parent=27 // pred_fallthru
          _
        %s237 = sand.u32 %s48, 1
        %s238 = scalar_lea.sflag [#allocation3], %s237
        %s239 = sand.u32 %s48, 1
        %s240 = smul.addr %s239, 32
        %s241 = scalar_lea.vmem [#allocation2], %s240
        %p242 = pneg %p61
        %p243 = pneg %p58
        %p244 = pneg %p82
        %p245 = pneg %p79
        %p246 = pneg %p110
        %p247 = pneg %p107
        %s248 = sand.u32 %s97, 1
        %s249 = scalar_lea.sflag [#allocation4], %s248
        %s250 = sand.u32 %s97, 1
        %s251 = smul.addr %s250, 32
        %s252 = scalar_lea.vmem [#allocation7], %s251
        %p253 = pneg %p136
        %p254 = pneg %p133
        %s255 = sand.u32 %s26, 1
        %s256 = scalar_lea.sflag [#allocation9], %s255
        %s257 = sand.u32 %s123, 1
        %s258 = scalar_lea.vmem [#allocation8], %s257
        %p259 = pneg %p162
        %p260 = pneg %p159
        %s261 = sand.u32 %s26, 1
        %s262 = scalar_lea.sflag [#allocation9], %s261
        %s263 = sand.u32 %s149, 1
        %s264 = scalar_lea.vmem [#allocation10], %s263
        %s265 = smul.u32 8, %s31
        %s266 = smul.u32 8, %s31
        %p268 = scmp.eq.s32.totalorder %s31, 0
        // Predicated region
        $region37: #{_bottleneck_forward.8} parent=27 // pred_check
          %p269 = pneg %p268
        $region38: #{_bottleneck_forward.8} parent=27 // pred_check_branch
          %271 = sbr.rel (%p269) target = $region40
        $region39: #{_bottleneck_forward.8} parent=27 // pred_region
          %272 = vst [vmem:[%s258] sm:$0x1] 0.0
          %273 = vst [vmem:[%s264] sm:$0x1] 0.0
        $region40: #{_bottleneck_forward.8} parent=27 // pred_fallthru
          _
        %v274 = vld [vmem:[%s228] sm:$0xf]
        %v275 = vld [vmem:[%s228 + $0x4] sm:$0xf]
        %v276 = vld [vmem:[%s228 + $0x8] sm:$0xf]
        %v277 = vld [vmem:[%s228 + $0xc] sm:$0xf]
        %v278 = vld [vmem:[%s228 + $0x10] sm:$0xf]
        %v279 = vld [vmem:[%s228 + $0x14] sm:$0xf]
        %v280 = vld [vmem:[%s228 + $0x18] sm:$0xf]
        %v281 = vld [vmem:[%s228 + $0x1c] sm:$0xf]
        %v282 = vld [vmem:[#allocation5] sm:$0xf]
        %v283 = vld [vmem:[#allocation5 + $0x4] sm:$0xf]
        %v284 = vld [vmem:[#allocation5 + $0x8] sm:$0xf]
        %v285 = vld [vmem:[#allocation5 + $0xc] sm:$0xf]
        %v286 = vld [vmem:[#allocation5 + $0x10] sm:$0xf]
        %v287 = vld [vmem:[#allocation5 + $0x14] sm:$0xf]
        %v288 = vld [vmem:[#allocation5 + $0x18] sm:$0xf]
        %v289 = vld [vmem:[#allocation5 + $0x1c] sm:$0xf]
        %v290 = vld [vmem:[#allocation5 + $0x20] sm:$0xf]
        %v291 = vld [vmem:[#allocation5 + $0x24] sm:$0xf]
        %v292 = vld [vmem:[#allocation5 + $0x28] sm:$0xf]
        %v293 = vld [vmem:[#allocation5 + $0x2c] sm:$0xf]
        %v294 = vld [vmem:[#allocation5 + $0x30] sm:$0xf]
        %v295 = vld [vmem:[#allocation5 + $0x34] sm:$0xf]
        %v296 = vld [vmem:[#allocation5 + $0x38] sm:$0xf]
        %v297 = vld [vmem:[#allocation5 + $0x3c] sm:$0xf]
        %v306 = vunpack.c.l.b16 %v274
        %v307 = vunpack.c.l.b16 %v275
        %v308 = vunpack.c.l.b16 %v276
        %v309 = vunpack.c.l.b16 %v277
        %v310 = vunpack.c.l.b16 %v278
        %v311 = vunpack.c.l.b16 %v279
        %v312 = vunpack.c.l.b16 %v280
        %v313 = vunpack.c.l.b16 %v281
        %v314 = vpack.c.b16 %v307, %v306
        %v315 = vpack.c.b16 %v309, %v308
        %v316 = vpack.c.b16 %v311, %v310
        %v317 = vpack.c.b16 %v313, %v312
        %v338 = vunpack.c.l.b16 %v282
        %v339 = vunpack.c.l.b16 %v283
        %v340 = vunpack.c.l.b16 %v284
        %v341 = vunpack.c.l.b16 %v285
        %v342 = vunpack.c.l.b16 %v286
        %v343 = vunpack.c.l.b16 %v287
        %v344 = vunpack.c.l.b16 %v288
        %v345 = vunpack.c.l.b16 %v289
        %v346 = vunpack.c.l.b16 %v290
        %v347 = vunpack.c.l.b16 %v291
        %v348 = vunpack.c.l.b16 %v292
        %v349 = vunpack.c.l.b16 %v293
        %v350 = vunpack.c.l.b16 %v294
        %v351 = vunpack.c.l.b16 %v295
        %v352 = vunpack.c.l.b16 %v296
        %v353 = vunpack.c.l.b16 %v297
        %v354 = vpack.c.b16 %v339, %v338
        %v355 = vpack.c.b16 %v341, %v340
        %v356 = vpack.c.b16 %v343, %v342
        %v357 = vpack.c.b16 %v345, %v344
        %v358 = vpack.c.b16 %v347, %v346
        %v359 = vpack.c.b16 %v349, %v348
        %v360 = vpack.c.b16 %v351, %v350
        %v361 = vpack.c.b16 %v353, %v352
        %370 = vmatprep.subr.bf16.mxu0 0
        %371 = vmatpush1.bf16.msra.mxu0 %v354
        %372 = vmatprep.subr.bf16.mxu0 0
        %373 = vmatpush1.bf16.msra.mxu0 %v355
        %374 = vmatprep.subr.bf16.mxu0 0
        %375 = vmatpush1.bf16.msra.mxu0 %v356
        %376 = vmatprep.subr.bf16.mxu0 0
        %377 = vmatpush1.bf16.msra.mxu0 %v357
        %378 = vmatprep.subr.bf16.mxu0 0
        %379 = vmatpush1.bf16.msra.mxu0 %v358
        %380 = vmatprep.subr.bf16.mxu0 0
        %381 = vmatpush1.bf16.msra.mxu0 %v359
        %382 = vmatprep.subr.bf16.mxu0 0
        %383 = vmatpush1.bf16.msra.mxu0 %v360
        %384 = vmatprep.subr.bf16.mxu0 0
        %385 = vmatpush1.bf16.msra.mxu0 %v361
        %386 = vmatprep.subr.bf16.mxu0 0
        %387 = vmatpush1.bf16.msra.mxu0 0
        %388 = vmatprep.subr.bf16.mxu0 0
        %389 = vmatpush1.bf16.msra.mxu0 0
        %390 = vmatprep.subr.bf16.mxu0 0
        %391 = vmatpush1.bf16.msra.mxu0 0
        %392 = vmatprep.subr.bf16.mxu0 0
        %393 = vmatpush1.bf16.msra.mxu0 0
        %394 = vmatprep.subr.bf16.mxu0 0
        %395 = vmatpush1.bf16.msra.mxu0 0
        %396 = vmatprep.subr.bf16.mxu0 0
        %397 = vmatpush1.bf16.msra.mxu0 0
        %398 = vmatprep.subr.bf16.mxu0 0
        %399 = vmatpush1.bf16.msra.mxu0 0
        %400 = vmatprep.subr.bf16.mxu0 0
        %401 = vmatpush1.bf16.msra.mxu0 0
        %402 = vmatprep.mubr.bf16.mxu0 0
        %403 = vmatmul.mubr.bf16.gmra.mrb[0].mxu0 %v314
        %v404 = vpop.f32.mrb[0].mxu0
        %v405 = vadd.f32 0.0, %v404
        %v406 = vpop.f32.mrb[0].mxu0
        %v407 = vpop.f32.mrb[0].mxu0
        %v408 = vadd.f32 0.0, %v407
        %v409 = vpop.f32.mrb[0].mxu0
        %410 = vmatprep.mubr.bf16.mxu0 0
        %411 = vmatmul.mubr.bf16.gmra.mrb[0].mxu0 %v315
        %v412 = vpop.f32.mrb[0].mxu0
        %v413 = vadd.f32 0.0, %v412
        %v414 = vpop.f32.mrb[0].mxu0
        %v415 = vpop.f32.mrb[0].mxu0
        %v416 = vadd.f32 0.0, %v415
        %v417 = vpop.f32.mrb[0].mxu0
        %418 = vmatprep.mubr.bf16.mxu0 0
        %419 = vmatmul.mubr.bf16.gmra.mrb[0].mxu0 %v316
        %v420 = vpop.f32.mrb[0].mxu0
        %v421 = vadd.f32 0.0, %v420
        %v422 = vpop.f32.mrb[0].mxu0
        %v423 = vpop.f32.mrb[0].mxu0
        %v424 = vadd.f32 0.0, %v423
        %v425 = vpop.f32.mrb[0].mxu0
        %426 = vmatprep.mubr.bf16.mxu0 0
        %427 = vmatmul.mubr.bf16.gmra.mrb[0].mxu0 %v317
        %v428 = vpop.f32.mrb[0].mxu0
        %v429 = vadd.f32 0.0, %v428
        %v430 = vpop.f32.mrb[0].mxu0
        %v431 = vpop.f32.mrb[0].mxu0
        %v432 = vadd.f32 0.0, %v431
        %v433 = vpop.f32.mrb[0].mxu0
        %434 = vdwg.mxu0
        %v435 = vpack.c.bf16 %v408, %v405
        %v436 = vpack.c.bf16 %v416, %v413
        %v437 = vpack.c.bf16 %v424, %v421
        %v438 = vpack.c.bf16 %v432, %v429
        %v443 = vunpack.c.l.b16 %v435
        %v444 = vunpack.c.h.b16 %v435
        %v445 = vunpack.c.l.b16 %v436
        %v446 = vunpack.c.h.b16 %v436
        %v447 = vunpack.c.l.b16 %v437
        %v448 = vunpack.c.h.b16 %v437
        %v449 = vunpack.c.l.b16 %v438
        %v450 = vunpack.c.h.b16 %v438
        %v451 = vpack.c.b16 %v443, %v443
        %v452 = vpack.c.b16 %v444, %v444
        %v453 = vpack.c.b16 %v445, %v445
        %v454 = vpack.c.b16 %v446, %v446
        %v455 = vpack.c.b16 %v447, %v447
        %v456 = vpack.c.b16 %v448, %v448
        %v457 = vpack.c.b16 %v449, %v449
        %v458 = vpack.c.b16 %v450, %v450
        %467 = vst [vmem:[%s252] sm:$0xf] %v451
        %468 = vst [vmem:[%s252 + $0x4] sm:$0xf] %v452
        %469 = vst [vmem:[%s252 + $0x8] sm:$0xf] %v453
        %470 = vst [vmem:[%s252 + $0xc] sm:$0xf] %v454
        %471 = vst [vmem:[%s252 + $0x10] sm:$0xf] %v455
        %472 = vst [vmem:[%s252 + $0x14] sm:$0xf] %v456
        %473 = vst [vmem:[%s252 + $0x18] sm:$0xf] %v457
        %474 = vst [vmem:[%s252 + $0x1c] sm:$0xf] %v458
        %v475 = vunpack.c.l.bf16 %v435
        %v476 = vunpack.c.h.bf16 %v435
        %v477 = vunpack.c.l.bf16 %v436
        %v478 = vunpack.c.h.bf16 %v436
        %v479 = vunpack.c.l.bf16 %v437
        %v480 = vunpack.c.h.bf16 %v437
        %v481 = vunpack.c.l.bf16 %v438
        %v482 = vunpack.c.h.bf16 %v438
        %v483 = vld [vmem:[%s258] sm:$0x1]
        %v484 = vadd.f32 %v475, %v476
        %v485 = vadd.f32 %v484, %v477
        %v486 = vadd.f32 %v485, %v478
        %v487 = vadd.f32 %v486, %v479
        %v488 = vadd.f32 %v487, %v480
        %v489 = vadd.f32 %v488, %v481
        %v490 = vadd.f32 %v489, %v482
        %v491 = vrot.slane %v490, 4
        %v492 = vadd.f32 %v490, %v491
        %v493 = vrot.slane %v492, 2
        %v494 = vadd.f32 %v492, %v493
        %v495 = vrot.slane %v494, 1
        %v496 = vadd.f32 %v494, %v495
        %v497 = vadd.f32 %v483, %v496
        %498 = vst [vmem:[%s258] sm:$0x1] %v497
        %v499 = vld [vmem:[%s264] sm:$0x1]
        %v500 = vmul.f32 %v475, %v475
        %v501 = vmul.f32 %v476, %v476
        %v502 = vmul.f32 %v477, %v477
        %v503 = vmul.f32 %v478, %v478
        %v504 = vmul.f32 %v479, %v479
        %v505 = vmul.f32 %v480, %v480
        %v506 = vmul.f32 %v481, %v481
        %v507 = vmul.f32 %v482, %v482
        %v508 = vadd.f32 %v500, %v501
        %v509 = vadd.f32 %v508, %v502
        %v510 = vadd.f32 %v509, %v503
        %v511 = vadd.f32 %v510, %v504
        %v512 = vadd.f32 %v511, %v505
        %v513 = vadd.f32 %v512, %v506
        %v514 = vadd.f32 %v513, %v507
        %v515 = vrot.slane %v514, 4
        %v516 = vadd.f32 %v514, %v515
        %v517 = vrot.slane %v516, 2
        %v518 = vadd.f32 %v516, %v517
        %v519 = vrot.slane %v518, 1
        %v520 = vadd.f32 %v518, %v519
        %v521 = vadd.f32 %v499, %v520
        %522 = vst [vmem:[%s264] sm:$0x1] %v521
        %s523 = sand.u32 %s97, 1
        %s524 = scalar_lea.sflag [#allocation4], %s523
        %s525 = sand.u32 %s97, 1
        %s526 = smul.addr %s525, 32
        %s527 = scalar_lea.vmem [#allocation7], %s526
        %s528 = sand.u32 %s26, 1
        %s529 = scalar_lea.sflag [#allocation9], %s528
        %s530 = sand.u32 %s123, 1
        %s531 = scalar_lea.vmem [#allocation8], %s530
        %s532 = sand.u32 %s26, 1
        %s533 = scalar_lea.sflag [#allocation9], %s532
        %s534 = sand.u32 %s149, 1
        %s535 = scalar_lea.vmem [#allocation10], %s534
        // Predicated region
        $region41: #{_bottleneck_forward.8} parent=27 // pred_check
          %p536 = pneg %p107
        $region42: #{_bottleneck_forward.8} parent=27 // pred_check_branch
          %538 = sbr.rel (%p536) target = $region44
        $region43: #{_bottleneck_forward.8} parent=27 // pred_region
          %s539 = smul.u32 8, %s31
          %s541 = ssub.s32 512, 512
          %542 = vsyncadd %s524, %s541
          %s543 = smul.addr %s30, 8
          %s544 = sadd.s32 %s539, %s543
          %s545 = smul.addr %s544, 64
          %s546 = scalar_lea.hbm %s2, %s545
          %s547 = sshll.u32 %s527, 4
          %s548 = int_to_ptr.vmem [resolvable:$true] %s547
          %553 = dma.vmem_to_hbm [thread:$0]  %s548, 512, %s546, %s524, 64, 64, 4
        $region44: #{_bottleneck_forward.8} parent=27 // pred_fallthru
          _
        // Predicated region
        $region45: #{_bottleneck_forward.8} parent=27 // pred_check
          %p554 = pneg %p133
        $region46: #{_bottleneck_forward.8} parent=27 // pred_check_branch
          %556 = sbr.rel (%p554) target = $region48
        $region47: #{_bottleneck_forward.8} parent=27 // pred_region
          %s558 = ssub.s32 16, 16
          %559 = vsyncadd %s529, %s558
          %s560 = smul.addr %s30, 16
          %s561 = scalar_lea.hbm %s3, %s560
          %s563 = sshll.u32 %s531, 4
          %s564 = int_to_ptr.vmem [resolvable:$true] %s563
          %566 = dma.vmem_to_hbm [thread:$0]  %s564, 16, %s561, %s529
        $region48: #{_bottleneck_forward.8} parent=27 // pred_fallthru
          _
        // Predicated region
        $region49: #{_bottleneck_forward.8} parent=27 // pred_check
          %p567 = pneg %p159
        $region50: #{_bottleneck_forward.8} parent=27 // pred_check_branch
          %569 = sbr.rel (%p567) target = $region52
        $region51: #{_bottleneck_forward.8} parent=27 // pred_region
          %s571 = ssub.s32 16, 16
          %572 = vsyncadd %s533, %s571
          %s573 = smul.addr %s30, 16
          %s574 = scalar_lea.hbm %s4, %s573
          %s576 = sshll.u32 %s535, 4
          %s577 = int_to_ptr.vmem [resolvable:$true] %s576
          %579 = dma.vmem_to_hbm [thread:$0]  %s577, 16, %s574, %s533
        $region52: #{_bottleneck_forward.8} parent=27 // pred_fallthru
          _
      $region28: #{_bottleneck_forward.8} parent=5 // pred_fallthru
        _
      %p580 = scmp.le.s32.totalorder 2, %s21
      // Predicated region
      $region53: #{_bottleneck_forward.8} parent=5 // pred_check
        %p581 = pneg %p580
      $region54: #{_bottleneck_forward.8} parent=5 // pred_check_branch
        %583 = sbr.rel (%p581) target = $region56
      $region55: #{_bottleneck_forward.8} parent=5 // pred_region
        %s584 = ssub.s32 %s21, 2
        // Predicated region
        $region57: #{_bottleneck_forward.8} parent=55 // pred_check
          %p585 = pneg %p113
        $region58: #{_bottleneck_forward.8} parent=55 // pred_check_branch
          %587 = sbr.rel (%p585) target = $region60
        $region59: #{_bottleneck_forward.8} parent=55 // pred_region
          %s588 = sand.u32 %s98, 1
          %s589 = scalar_lea.sflag [#allocation4], %s588
          %s590 = sand.u32 %s98, 1
          %s591 = smul.addr %s590, 32
          %s592 = scalar_lea.vmem [#allocation7], %s591
          %593 = dma.done %s589, 512
        $region60: #{_bottleneck_forward.8} parent=55 // pred_fallthru
          _
        // Predicated region
        $region61: #{_bottleneck_forward.8} parent=55 // pred_check
          %p594 = pneg %p139
        $region62: #{_bottleneck_forward.8} parent=55 // pred_check_branch
          %596 = sbr.rel (%p594) target = $region64
        $region63: #{_bottleneck_forward.8} parent=55 // pred_region
          %s597 = sand.u32 %s27, 1
          %s598 = scalar_lea.sflag [#allocation9], %s597
          %s599 = sand.u32 %s124, 1
          %s600 = scalar_lea.vmem [#allocation8], %s599
          %601 = dma.done %s598, 16
        $region64: #{_bottleneck_forward.8} parent=55 // pred_fallthru
          _
        // Predicated region
        $region65: #{_bottleneck_forward.8} parent=55 // pred_check
          %p602 = pneg %p165
        $region66: #{_bottleneck_forward.8} parent=55 // pred_check_branch
          %604 = sbr.rel (%p602) target = $region68
        $region67: #{_bottleneck_forward.8} parent=55 // pred_region
          %s605 = sand.u32 %s27, 1
          %s606 = scalar_lea.sflag [#allocation9], %s605
          %s607 = sand.u32 %s150, 1
          %s608 = scalar_lea.vmem [#allocation10], %s607
          %609 = dma.done %s606, 16
        $region68: #{_bottleneck_forward.8} parent=55 // pred_fallthru
          _
      $region56: #{_bottleneck_forward.8} parent=5 // pred_fallthru
        _
    $region6: #{_bottleneck_forward.8} parent=1 // loop_footer
      %s25 = sadd.s32 1, %s21
    $region7: #{_bottleneck_forward.8} parent=1 // loop_footer_branch
      %20 = sbr.rel target = $region3
    $region8: #{_bottleneck_forward.8} parent=1 // loop_exit
      _
    %610 = vsyncpa [#allocation3], 1
    %s611 = scalar_lea.sflag [#allocation3], 1
    %612 = vsyncpa %s611, 1
    %613 = vsyncpa [#allocation6], 1
    %614 = vsyncpa [#allocation4], 1
    %s615 = scalar_lea.sflag [#allocation4], 1
    %616 = vsyncpa %s615, 1
    %617 = vsyncpa [#allocation9], 1
    %s618 = scalar_lea.sflag [#allocation9], 1
    %619 = vsyncpa %s618, 1

// kernel: _bottleneck_forward.5
$region0: #{_bottleneck_forward.5}
  #allocation0 [shape = 'u32[]', space=smem, size = 0x4, offset = 0x4, fixed_abs, tag = 'smem constant byte address 0x4 - core index']
  #allocation1 [shape = 'u32[144,128]{1,0:T(1,128)}', space=vmem, size = 0x12000, scoped, tag = 'internal scratch']
  %s0 = inlined_call_operand.hbm [shape: bf16[2,256,128], index: 0, kind: input, shape index: {}]
  %s1 = inlined_call_operand.hbm [shape: bf16[128,128], index: 1, kind: input, shape index: {}]
  %s2 = inlined_call_operand.hbm [shape: bf16[2,256,128], index: 2, kind: output, shape index: {0}]
  %s3 = inlined_call_operand.hbm [shape: f32[2,1,128], index: 3, kind: output, shape index: {1}]
  %s4 = inlined_call_operand.hbm [shape: f32[2,1,128], index: 4, kind: output, shape index: {2}]
  %5 = xla_tuple %s2, %s3, %s4
  %s6 = sld [smem:[#allocation0]]
  $region69: #{_bottleneck_forward.5} parent=0
    _
  %s8 = ssub.s32 1, %s6
  %s9 = scalar_select 0, %s8, %s6
  $region1: #{_bottleneck_forward.5} parent=0
    #allocation2 [shape = 'u8[131072]{0}', space=vmem, size = 0x20000, scoped, tag = 'input window, operand 0']
    #allocation3 [shape = 's32[2]{0}', space=sflag, size = 0x8, scoped, tag = 'scoped memory for _bottleneck_forward.5']
    #allocation4 [shape = 's32[2]{0}', space=sflag, size = 0x8, scoped, tag = 'scoped memory for _bottleneck_forward.5']
    #allocation5 [shape = 'u8[32768]{0}', space=vmem, size = 0x8000, scoped, tag = 'input window, operand 1, single buffered']
    #allocation6 [shape = 's32[1]{0}', space=sflag, size = 0x4, scoped, tag = 'scoped memory for _bottleneck_forward.5']
    #allocation7 [shape = 'u8[131072]{0}', space=vmem, size = 0x20000, scoped, tag = 'output window, operand 0']
    #allocation8 [shape = 'u8[1024]{0}', space=vmem, size = 0x400, scoped, tag = 'output window, operand 1']
    #allocation9 [shape = 's32[2]{0}', space=sflag, size = 0x8, scoped, tag = 'scoped memory for _bottleneck_forward.5']
    #allocation10 [shape = 'u8[1024]{0}', space=vmem, size = 0x400, scoped, tag = 'output window, operand 2']
    %10 = vsyncpa [#allocation3], 0
    %s11 = scalar_lea.sflag [#allocation3], 1
    %12 = vsyncpa %s11, 0
    %13 = vsyncpa [#allocation6], 0
    %14 = vsyncpa [#allocation4], 0
    %s15 = scalar_lea.sflag [#allocation4], 1
    %16 = vsyncpa %s15, 0
    %17 = vsyncpa [#allocation9], 0
    %s18 = scalar_lea.sflag [#allocation9], 1
    %19 = vsyncpa %s18, 0
    loop: start=0, step=1, limit=4
    $region2: #{_bottleneck_forward.5} parent=1 // loop_pre_header
      _
    $region3: #{_bottleneck_forward.5} parent=1 // loop_header
      %s21 = sphi 0, %s25
      %p22 = scmp.ge.s32.totalorder %s21, 4
      %s28 = sphi 0, %s40
      %s29 = sphi 0, %s36
      %s30 = sphi 0, %s28
      %s31 = sphi 0, %s29
      %s32 = sphi 0, %s30
      %s33 = sphi 0, %s31
      %s45 = sphi 0, %s47
      %s48 = sphi 0, %s45
      %s49 = sphi 0, %s48
      %s65 = sphi 0, %s49
      %s69 = sphi 0, %s69
      %s71 = sphi 0, %s69
      %s72 = sphi 0, %s71
      %s86 = sphi 0, %s72
      %s94 = sphi 0, %s96
      %s97 = sphi 0, %s94
      %s98 = sphi 0, %s97
      %s114 = sphi 0, %s98
      %s120 = sphi 0, %s122
      %s123 = sphi 0, %s120
      %s124 = sphi 0, %s123
      %s140 = sphi 0, %s124
      %s146 = sphi 0, %s148
      %s149 = sphi 0, %s146
      %s150 = sphi 0, %s149
      %s166 = sphi 0, %s150
    $region4: #{_bottleneck_forward.5} parent=1 // loop_header_branch
      %24 = sbr.rel (%p22) target = $region8
    $region5: #{_bottleneck_forward.5} parent=1 // loop_body
      %s26 = ssub.s32 %s21, 1
      %s27 = ssub.s32 %s21, 2
      %s34 = sadd.s32 1, %s29
      %p35 = scmp.ge.s32.totalorder %s34, 1
      %s36 = scalar_select %p35, 0, %s34
      %s37 = sadd.s32 1, %s28
      %s38 = scalar_select %p35, %s37, %s28
      %p39 = scmp.ge.s32.totalorder %s38, 2
      %s40 = scalar_select %p39, 0, %s38
      %s41 = ssub.s32 %s28, %s40
      %s42 = ssub.s32 %s29, %s36
      %s43 = sor.u32 %s41, %s42
      %p44 = scmp.eq.s32.totalorder %s43, 0
      %s46 = sadd.s32 %s45, 1
      %s47 = scalar_select %p44, %s45, %s46
      %p50 = pneg %p44
      %p51 = scmp.eq.s32.totalorder %s21, 1
      %p52 = por %p50, %p51
      %p53 = scmp.ne.s32.totalorder %s45, %s48
      %p54 = scmp.eq.s32.totalorder %s21, 0
      %p55 = por %p53, %p54
      %p56 = scmp.ne.s32.totalorder %s45, %s48
      %p57 = scmp.eq.s32.totalorder %s26, 1
      %p58 = por %p56, %p57
      %p59 = scmp.ne.s32.totalorder %s48, %s49
      %p60 = scmp.eq.s32.totalorder %s26, 0
      %p61 = por %p59, %p60
      %p62 = scmp.ne.s32.totalorder %s48, %s49
      %p63 = scmp.eq.s32.totalorder %s27, 1
      %p64 = por %p62, %p63
      %p66 = scmp.ne.s32.totalorder %s49, %s65
      %p67 = scmp.eq.s32.totalorder %s27, 0
      %p68 = por %p66, %p67
      %s70 = sadd.s32 %s69, 1
      %p73 = scmp.eq.s32.totalorder %s21, 1
      %p74 = scmp.ne.s32.totalorder %s69, %s71
      %p75 = scmp.eq.s32.totalorder %s21, 0
      %p76 = por %p74, %p75
      %p77 = scmp.ne.s32.totalorder %s69, %s71
      %p78 = scmp.eq.s32.totalorder %s26, 1
      %p79 = por %p77, %p78
      %p80 = scmp.ne.s32.totalorder %s71, %s72
      %p81 = scmp.eq.s32.totalorder %s26, 0
      %p82 = por %p80, %p81
      %p83 = scmp.ne.s32.totalorder %s71, %s72
      %p84 = scmp.eq.s32.totalorder %s27, 1
      %p85 = por %p83, %p84
      %p87 = scmp.ne.s32.totalorder %s72, %s86
      %p88 = scmp.eq.s32.totalorder %s27, 0
      %p89 = por %p87, %p88
      %s90 = ssub.s32 %s28, %s40
      %s91 = ssub.s32 %s29, %s36
      %s92 = sor.u32 %s90, %s91
      %p93 = scmp.eq.s32.totalorder %s92, 0
      %s95 = sadd.s32 %s94, 1
      %s96 = scalar_select %p93, %s94, %s95
      %p99 = pneg %p93
      %p100 = scmp.eq.s32.totalorder %s21, 1
      %p101 = por %p99, %p100
      %p102 = scmp.ne.s32.totalorder %s94, %s97
      %p103 = scmp.eq.s32.totalorder %s21, 0
      %p104 = por %p102, %p103
      %p105 = scmp.ne.s32.totalorder %s94, %s97
      %p106 = scmp.eq.s32.totalorder %s26, 1
      %p107 = por %p105, %p106
      %p108 = scmp.ne.s32.totalorder %s97, %s98
      %p109 = scmp.eq.s32.totalorder %s26, 0
      %p110 = por %p108, %p109
      %p111 = scmp.ne.s32.totalorder %s97, %s98
      %p112 = scmp.eq.s32.totalorder %s27, 1
      %p113 = por %p111, %p112
      %p115 = scmp.ne.s32.totalorder %s98, %s114
      %p116 = scmp.eq.s32.totalorder %s27, 0
      %p117 = por %p115, %p116
      %s118 = ssub.s32 %s28, %s40
      %p119 = scmp.eq.s32.totalorder %s118, 0
      %s121 = sadd.s32 %s120, 1
      %s122 = scalar_select %p119, %s120, %s121
      %p125 = pneg %p119
      %p126 = scmp.eq.s32.totalorder %s21, 1
      %p127 = por %p125, %p126
      %p128 = scmp.ne.s32.totalorder %s120, %s123
      %p129 = scmp.eq.s32.totalorder %s21, 0
      %p130 = por %p128, %p129
      %p131 = scmp.ne.s32.totalorder %s120, %s123
      %p132 = scmp.eq.s32.totalorder %s26, 1
      %p133 = por %p131, %p132
      %p134 = scmp.ne.s32.totalorder %s123, %s124
      %p135 = scmp.eq.s32.totalorder %s26, 0
      %p136 = por %p134, %p135
      %p137 = scmp.ne.s32.totalorder %s123, %s124
      %p138 = scmp.eq.s32.totalorder %s27, 1
      %p139 = por %p137, %p138
      %p141 = scmp.ne.s32.totalorder %s124, %s140
      %p142 = scmp.eq.s32.totalorder %s27, 0
      %p143 = por %p141, %p142
      %s144 = ssub.s32 %s28, %s40
      %p145 = scmp.eq.s32.totalorder %s144, 0
      %s147 = sadd.s32 %s146, 1
      %s148 = scalar_select %p145, %s146, %s147
      %p151 = pneg %p145
      %p152 = scmp.eq.s32.totalorder %s21, 1
      %p153 = por %p151, %p152
      %p154 = scmp.ne.s32.totalorder %s146, %s149
      %p155 = scmp.eq.s32.totalorder %s21, 0
      %p156 = por %p154, %p155
      %p157 = scmp.ne.s32.totalorder %s146, %s149
      %p158 = scmp.eq.s32.totalorder %s26, 1
      %p159 = por %p157, %p158
      %p160 = scmp.ne.s32.totalorder %s149, %s150
      %p161 = scmp.eq.s32.totalorder %s26, 0
      %p162 = por %p160, %p161
      %p163 = scmp.ne.s32.totalorder %s149, %s150
      %p164 = scmp.eq.s32.totalorder %s27, 1
      %p165 = por %p163, %p164
      %p167 = scmp.ne.s32.totalorder %s150, %s166
      %p168 = scmp.eq.s32.totalorder %s27, 0
      %p169 = por %p167, %p168
      %p170 = scmp.le.s32.totalorder 1, %s21
      %p171 = scmp.lt.s32.totalorder %s21, 3
      %p172 = pnand %p170, %p171
      %p173 = pneg %p172
      // Predicated region
      $region9: #{_bottleneck_forward.5} parent=5 // pred_check
        _
      $region10: #{_bottleneck_forward.5} parent=5 // pred_check_branch
        %175 = sbr.rel (%p172) target = $region12
      $region11: #{_bottleneck_forward.5} parent=5 // pred_region
        %s176 = ssub.s32 %s21, 1
        // Predicated region
        $region13: #{_bottleneck_forward.5} parent=11 // pred_check
          %p177 = pneg %p82
        $region14: #{_bottleneck_forward.5} parent=11 // pred_check_branch
          %179 = sbr.rel (%p177) target = $region16
        $region15: #{_bottleneck_forward.5} parent=11 // pred_region
          %s181 = ssub.s32 1024, 1024
          %182 = vsyncadd [#allocation6], %s181
          %s183 = sshll.u32 [#allocation5], 4
          %s184 = int_to_ptr.vmem [resolvable:$true] %s183
          %189 = dma.hbm_to_vmem [thread:$0]  %s1, 1024, %s184, [#allocation6], 64, 64, 4
        $region16: #{_bottleneck_forward.5} parent=11 // pred_fallthru
          _
      $region12: #{_bottleneck_forward.5} parent=5 // pred_fallthru
        _
      %p190 = scmp.lt.s32.totalorder %s21, 2
      // Predicated region
      $region17: #{_bottleneck_forward.5} parent=5 // pred_check
        %p191 = pneg %p190
      $region18: #{_bottleneck_forward.5} parent=5 // pred_check_branch
        %193 = sbr.rel (%p191) target = $region20
      $region19: #{_bottleneck_forward.5} parent=5 // pred_region
        // Predicated region
        $region21: #{_bottleneck_forward.5} parent=19 // pred_check
          %p194 = pneg %p55
        $region22: #{_bottleneck_forward.5} parent=19 // pred_check_branch
          %196 = sbr.rel (%p194) target = $region24
        $region23: #{_bottleneck_forward.5} parent=19 // pred_region
          %s197 = sand.u32 %s45, 1
          %s198 = scalar_lea.sflag [#allocation3], %s197
          %s199 = sand.u32 %s45, 1
          %s200 = smul.addr %s199, 128
          %s201 = scalar_lea.vmem [#allocation2], %s200
          %s202 = smul.u32 32, %s29
          %s204 = ssub.s32 2048, 2048
          %205 = vsyncadd %s198, %s204
          %s206 = smul.addr %s28, 32
          %s207 = sadd.s32 %s202, %s206
          %s208 = smul.addr %s207, 64
          %s209 = scalar_lea.hbm %s0, %s208
          %s210 = sshll.u32 %s201, 4
          %s211 = int_to_ptr.vmem [resolvable:$true] %s210
          %216 = dma.hbm_to_vmem [thread:$0]  %s209, 2048, %s211, %s198, 64, 64, 4
        $region24: #{_bottleneck_forward.5} parent=19 // pred_fallthru
          _
      $region20: #{_bottleneck_forward.5} parent=5 // pred_fallthru
        _
      %p217 = scmp.le.s32.totalorder 1, %s21
      %p218 = scmp.lt.s32.totalorder %s21, 3
      %p219 = pnand %p217, %p218
      %p220 = pneg %p219
      // Predicated region
      $region25: #{_bottleneck_forward.5} parent=5 // pred_check
        _
      $region26: #{_bottleneck_forward.5} parent=5 // pred_check_branch
        %222 = sbr.rel (%p219) target = $region28
      $region27: #{_bottleneck_forward.5} parent=5 // pred_region
        %s223 = ssub.s32 %s21, 1
        %s224 = sand.u32 %s48, 1
        %s225 = scalar_lea.sflag [#allocation3], %s224
        %s226 = sand.u32 %s48, 1
        %s227 = smul.addr %s226, 128
        %s228 = scalar_lea.vmem [#allocation2], %s227
        // Predicated region
        $region29: #{_bottleneck_forward.5} parent=27 // pred_check
          %p229 = pneg %p61
        $region30: #{_bottleneck_forward.5} parent=27 // pred_check_branch
          %231 = sbr.rel (%p229) target = $region32
        $region31: #{_bottleneck_forward.5} parent=27 // pred_region
          %232 = dma.done %s225, 2048
        $region32: #{_bottleneck_forward.5} parent=27 // pred_fallthru
          _
        // Predicated region
        $region33: #{_bottleneck_forward.5} parent=27 // pred_check
          %p233 = pneg %p82
        $region34: #{_bottleneck_forward.5} parent=27 // pred_check_branch
          %235 = sbr.rel (%p233) target = $region36
        $region35: #{_bottleneck_forward.5} parent=27 // pred_region
          %236 = dma.done [#allocation6], 1024
        $region36: #{_bottleneck_forward.5} parent=27 // pred_fallthru
          _
        %s237 = sand.u32 %s48, 1
        %s238 = scalar_lea.sflag [#allocation3], %s237
        %s239 = sand.u32 %s48, 1
        %s240 = smul.addr %s239, 128
        %s241 = scalar_lea.vmem [#allocation2], %s240
        %p242 = pneg %p61
        %p243 = pneg %p58
        %p244 = pneg %p82
        %p245 = pneg %p79
        %p246 = pneg %p110
        %p247 = pneg %p107
        %s248 = sand.u32 %s97, 1
        %s249 = scalar_lea.sflag [#allocation4], %s248
        %s250 = sand.u32 %s97, 1
        %s251 = smul.addr %s250, 128
        %s252 = scalar_lea.vmem [#allocation7], %s251
        %p253 = pneg %p136
        %p254 = pneg %p133
        %s255 = sand.u32 %s26, 1
        %s256 = scalar_lea.sflag [#allocation9], %s255
        %s257 = sand.u32 %s123, 1
        %s258 = scalar_lea.vmem [#allocation8], %s257
        %p259 = pneg %p162
        %p260 = pneg %p159
        %s261 = sand.u32 %s26, 1
        %s262 = scalar_lea.sflag [#allocation9], %s261
        %s263 = sand.u32 %s149, 1
        %s264 = scalar_lea.vmem [#allocation10], %s263
        %s265 = smul.u32 32, %s31
        %s266 = smul.u32 32, %s31
        %p268 = scmp.eq.s32.totalorder %s31, 0
        // Predicated region
        $region37: #{_bottleneck_forward.5} parent=27 // pred_check
          %p269 = pneg %p268
        $region38: #{_bottleneck_forward.5} parent=27 // pred_check_branch
          %271 = sbr.rel (%p269) target = $region40
        $region39: #{_bottleneck_forward.5} parent=27 // pred_region
          %272 = vst [vmem:[%s258] sm:$0x1] 0.0
          %273 = vst [vmem:[%s264] sm:$0x1] 0.0
        $region40: #{_bottleneck_forward.5} parent=27 // pred_fallthru
          _
        %v274 = vld [vmem:[%s228] sm:$0xf]
        %v275 = vld [vmem:[%s228 + $0x4] sm:$0xf]
        %v276 = vld [vmem:[%s228 + $0x8] sm:$0xf]
        %v277 = vld [vmem:[%s228 + $0xc] sm:$0xf]
        %v278 = vld [vmem:[%s228 + $0x10] sm:$0xf]
        %v279 = vld [vmem:[%s228 + $0x14] sm:$0xf]
        %v280 = vld [vmem:[%s228 + $0x18] sm:$0xf]
        %v281 = vld [vmem:[%s228 + $0x1c] sm:$0xf]
        %v282 = vld [vmem:[%s228 + $0x20] sm:$0xf]
        %v283 = vld [vmem:[%s228 + $0x24] sm:$0xf]
        %v284 = vld [vmem:[%s228 + $0x28] sm:$0xf]
        %v285 = vld [vmem:[%s228 + $0x2c] sm:$0xf]
        %v286 = vld [vmem:[%s228 + $0x30] sm:$0xf]
        %v287 = vld [vmem:[%s228 + $0x34] sm:$0xf]
        %v288 = vld [vmem:[%s228 + $0x38] sm:$0xf]
        %v289 = vld [vmem:[%s228 + $0x3c] sm:$0xf]
        %v290 = vld [vmem:[%s228 + $0x40] sm:$0xf]
        %v291 = vld [vmem:[%s228 + $0x44] sm:$0xf]
        %v292 = vld [vmem:[%s228 + $0x48] sm:$0xf]
        %v293 = vld [vmem:[%s228 + $0x4c] sm:$0xf]
        %v294 = vld [vmem:[%s228 + $0x50] sm:$0xf]
        %v295 = vld [vmem:[%s228 + $0x54] sm:$0xf]
        %v296 = vld [vmem:[%s228 + $0x58] sm:$0xf]
        %v297 = vld [vmem:[%s228 + $0x5c] sm:$0xf]
        %v298 = vld [vmem:[%s228 + $0x60] sm:$0xf]
        %v299 = vld [vmem:[%s228 + $0x64] sm:$0xf]
        %v300 = vld [vmem:[%s228 + $0x68] sm:$0xf]
        %v301 = vld [vmem:[%s228 + $0x6c] sm:$0xf]
        %v302 = vld [vmem:[%s228 + $0x70] sm:$0xf]
        %v303 = vld [vmem:[%s228 + $0x74] sm:$0xf]
        %v304 = vld [vmem:[%s228 + $0x78] sm:$0xf]
        %v305 = vld [vmem:[%s228 + $0x7c] sm:$0xf]
        %v306 = vld [vmem:[#allocation5] sm:$0xf]
        %v307 = vld [vmem:[#allocation5 + $0x4] sm:$0xf]
        %v308 = vld [vmem:[#allocation5 + $0x8] sm:$0xf]
        %v309 = vld [vmem:[#allocation5 + $0xc] sm:$0xf]
        %v310 = vld [vmem:[#allocation5 + $0x10] sm:$0xf]
        %v311 = vld [vmem:[#allocation5 + $0x14] sm:$0xf]
        %v312 = vld [vmem:[#allocation5 + $0x18] sm:$0xf]
        %v313 = vld [vmem:[#allocation5 + $0x1c] sm:$0xf]
        %v314 = vld [vmem:[#allocation5 + $0x20] sm:$0xf]
        %v315 = vld [vmem:[#allocation5 + $0x24] sm:$0xf]
        %v316 = vld [vmem:[#allocation5 + $0x28] sm:$0xf]
        %v317 = vld [vmem:[#allocation5 + $0x2c] sm:$0xf]
        %v318 = vld [vmem:[#allocation5 + $0x30] sm:$0xf]
        %v319 = vld [vmem:[#allocation5 + $0x34] sm:$0xf]
        %v320 = vld [vmem:[#allocation5 + $0x38] sm:$0xf]
        %v321 = vld [vmem:[#allocation5 + $0x3c] sm:$0xf]
        %v354 = vunpack.c.l.b16 %v274
        %v355 = vunpack.c.l.b16 %v275
        %v356 = vunpack.c.l.b16 %v276
        %v357 = vunpack.c.l.b16 %v277
        %v358 = vunpack.c.l.b16 %v278
        %v359 = vunpack.c.l.b16 %v279
        %v360 = vunpack.c.l.b16 %v280
        %v361 = vunpack.c.l.b16 %v281
        %v362 = vunpack.c.l.b16 %v282
        %v363 = vunpack.c.l.b16 %v283
        %v364 = vunpack.c.l.b16 %v284
        %v365 = vunpack.c.l.b16 %v285
        %v366 = vunpack.c.l.b16 %v286
        %v367 = vunpack.c.l.b16 %v287
        %v368 = vunpack.c.l.b16 %v288
        %v369 = vunpack.c.l.b16 %v289
        %v370 = vunpack.c.l.b16 %v290
        %v371 = vunpack.c.l.b16 %v291
        %v372 = vunpack.c.l.b16 %v292
        %v373 = vunpack.c.l.b16 %v293
        %v374 = vunpack.c.l.b16 %v294
        %v375 = vunpack.c.l.b16 %v295
        %v376 = vunpack.c.l.b16 %v296
        %v377 = vunpack.c.l.b16 %v297
        %v378 = vunpack.c.l.b16 %v298
        %v379 = vunpack.c.l.b16 %v299
        %v380 = vunpack.c.l.b16 %v300
        %v381 = vunpack.c.l.b16 %v301
        %v382 = vunpack.c.l.b16 %v302
        %v383 = vunpack.c.l.b16 %v303
        %v384 = vunpack.c.l.b16 %v304
        %v385 = vunpack.c.l.b16 %v305
        %v386 = vpack.c.b16 %v355, %v354
        %v387 = vpack.c.b16 %v357, %v356
        %v388 = vpack.c.b16 %v359, %v358
        %v389 = vpack.c.b16 %v361, %v360
        %v390 = vpack.c.b16 %v363, %v362
        %v391 = vpack.c.b16 %v365, %v364
        %v392 = vpack.c.b16 %v367, %v366
        %v393 = vpack.c.b16 %v369, %v368
        %v394 = vpack.c.b16 %v371, %v370
        %v395 = vpack.c.b16 %v373, %v372
        %v396 = vpack.c.b16 %v375, %v374
        %v397 = vpack.c.b16 %v377, %v376
        %v398 = vpack.c.b16 %v379, %v378
        %v399 = vpack.c.b16 %v381, %v380
        %v400 = vpack.c.b16 %v383, %v382
        %v401 = vpack.c.b16 %v385, %v384
        %v434 = vunpack.c.l.b16 %v306
        %v435 = vunpack.c.l.b16 %v307
        %v436 = vunpack.c.l.b16 %v308
        %v437 = vunpack.c.l.b16 %v309
        %v438 = vunpack.c.l.b16 %v310
        %v439 = vunpack.c.l.b16 %v311
        %v440 = vunpack.c.l.b16 %v312
        %v441 = vunpack.c.l.b16 %v313
        %v442 = vunpack.c.l.b16 %v314
        %v443 = vunpack.c.l.b16 %v315
        %v444 = vunpack.c.l.b16 %v316
        %v445 = vunpack.c.l.b16 %v317
        %v446 = vunpack.c.l.b16 %v318
        %v447 = vunpack.c.l.b16 %v319
        %v448 = vunpack.c.l.b16 %v320
        %v449 = vunpack.c.l.b16 %v321
        %v450 = vpack.c.b16 %v435, %v434
        %v451 = vpack.c.b16 %v437, %v436
        %v452 = vpack.c.b16 %v439, %v438
        %v453 = vpack.c.b16 %v441, %v440
        %v454 = vpack.c.b16 %v443, %v442
        %v455 = vpack.c.b16 %v445, %v444
        %v456 = vpack.c.b16 %v447, %v446
        %v457 = vpack.c.b16 %v449, %v448
        %466 = vmatprep.subr.bf16.mxu0 0
        %467 = vmatpush1.bf16.msra.mxu0 %v450
        %468 = vmatprep.subr.bf16.mxu0 0
        %469 = vmatpush1.bf16.msra.mxu0 %v451
        %470 = vmatprep.subr.bf16.mxu0 0
        %471 = vmatpush1.bf16.msra.mxu0 %v452
        %472 = vmatprep.subr.bf16.mxu0 0
        %473 = vmatpush1.bf16.msra.mxu0 %v453
        %474 = vmatprep.subr.bf16.mxu0 0
        %475 = vmatpush1.bf16.msra.mxu0 %v454
        %476 = vmatprep.subr.bf16.mxu0 0
        %477 = vmatpush1.bf16.msra.mxu0 %v455
        %478 = vmatprep.subr.bf16.mxu0 0
        %479 = vmatpush1.bf16.msra.mxu0 %v456
        %480 = vmatprep.subr.bf16.mxu0 0
        %481 = vmatpush1.bf16.msra.mxu0 %v457
        %482 = vmatprep.subr.bf16.mxu0 0
        %483 = vmatpush1.bf16.msra.mxu0 0
        %484 = vmatprep.subr.bf16.mxu0 0
        %485 = vmatpush1.bf16.msra.mxu0 0
        %486 = vmatprep.subr.bf16.mxu0 0
        %487 = vmatpush1.bf16.msra.mxu0 0
        %488 = vmatprep.subr.bf16.mxu0 0
        %489 = vmatpush1.bf16.msra.mxu0 0
        %490 = vmatprep.subr.bf16.mxu0 0
        %491 = vmatpush1.bf16.msra.mxu0 0
        %492 = vmatprep.subr.bf16.mxu0 0
        %493 = vmatpush1.bf16.msra.mxu0 0
        %494 = vmatprep.subr.bf16.mxu0 0
        %495 = vmatpush1.bf16.msra.mxu0 0
        %496 = vmatprep.subr.bf16.mxu0 0
        %497 = vmatpush1.bf16.msra.mxu0 0
        %498 = vmatprep.mubr.bf16.mxu0 0
        %499 = vmatmul.mubr.bf16.gmra.mrb[0].mxu0 %v386
        %v500 = vpop.f32.mrb[0].mxu0
        %v501 = vadd.f32 0.0, %v500
        %v502 = vpop.f32.mrb[0].mxu0
        %v503 = vpop.f32.mrb[0].mxu0
        %v504 = vadd.f32 0.0, %v503
        %v505 = vpop.f32.mrb[0].mxu0
        %506 = vmatprep.mubr.bf16.mxu0 0
        %507 = vmatmul.mubr.bf16.gmra.mrb[0].mxu0 %v387
        %v508 = vpop.f32.mrb[0].mxu0
        %v509 = vadd.f32 0.0, %v508
        %v510 = vpop.f32.mrb[0].mxu0
        %v511 = vpop.f32.mrb[0].mxu0
        %v512 = vadd.f32 0.0, %v511
        %v513 = vpop.f32.mrb[0].mxu0
        %514 = vmatprep.mubr.bf16.mxu0 0
        %515 = vmatmul.mubr.bf16.gmra.mrb[0].mxu0 %v388
        %v516 = vpop.f32.mrb[0].mxu0
        %v517 = vadd.f32 0.0, %v516
        %v518 = vpop.f32.mrb[0].mxu0
        %v519 = vpop.f32.mrb[0].mxu0
        %v520 = vadd.f32 0.0, %v519
        %v521 = vpop.f32.mrb[0].mxu0
        %522 = vmatprep.mubr.bf16.mxu0 0
        %523 = vmatmul.mubr.bf16.gmra.mrb[0].mxu0 %v389
        %v524 = vpop.f32.mrb[0].mxu0
        %v525 = vadd.f32 0.0, %v524
        %v526 = vpop.f32.mrb[0].mxu0
        %v527 = vpop.f32.mrb[0].mxu0
        %v528 = vadd.f32 0.0, %v527
        %v529 = vpop.f32.mrb[0].mxu0
        %530 = vmatprep.mubr.bf16.mxu0 0
        %531 = vmatmul.mubr.bf16.gmra.mrb[0].mxu0 %v390
        %v532 = vpop.f32.mrb[0].mxu0
        %v533 = vadd.f32 0.0, %v532
        %v534 = vpop.f32.mrb[0].mxu0
        %v535 = vpop.f32.mrb[0].mxu0
        %v536 = vadd.f32 0.0, %v535
        %v537 = vpop.f32.mrb[0].mxu0
        %538 = vmatprep.mubr.bf16.mxu0 0
        %539 = vmatmul.mubr.bf16.gmra.mrb[0].mxu0 %v391
        %v540 = vpop.f32.mrb[0].mxu0
        %v541 = vadd.f32 0.0, %v540
        %v542 = vpop.f32.mrb[0].mxu0
        %v543 = vpop.f32.mrb[0].mxu0
        %v544 = vadd.f32 0.0, %v543
        %v545 = vpop.f32.mrb[0].mxu0
        %546 = vmatprep.mubr.bf16.mxu0 0
        %547 = vmatmul.mubr.bf16.gmra.mrb[0].mxu0 %v392
        %v548 = vpop.f32.mrb[0].mxu0
        %v549 = vadd.f32 0.0, %v548
        %v550 = vpop.f32.mrb[0].mxu0
        %v551 = vpop.f32.mrb[0].mxu0
        %v552 = vadd.f32 0.0, %v551
        %v553 = vpop.f32.mrb[0].mxu0
        %554 = vmatprep.mubr.bf16.mxu0 0
        %555 = vmatmul.mubr.bf16.gmra.mrb[0].mxu0 %v393
        %v556 = vpop.f32.mrb[0].mxu0
        %v557 = vadd.f32 0.0, %v556
        %v558 = vpop.f32.mrb[0].mxu0
        %v559 = vpop.f32.mrb[0].mxu0
        %v560 = vadd.f32 0.0, %v559
        %v561 = vpop.f32.mrb[0].mxu0
        %562 = vmatprep.mubr.bf16.mxu0 0
        %563 = vmatmul.mubr.bf16.gmra.mrb[0].mxu0 %v394
        %v564 = vpop.f32.mrb[0].mxu0
        %v565 = vadd.f32 0.0, %v564
        %v566 = vpop.f32.mrb[0].mxu0
        %v567 = vpop.f32.mrb[0].mxu0
        %v568 = vadd.f32 0.0, %v567
        %v569 = vpop.f32.mrb[0].mxu0
        %570 = vmatprep.mubr.bf16.mxu0 0
        %571 = vmatmul.mubr.bf16.gmra.mrb[0].mxu0 %v395
        %v572 = vpop.f32.mrb[0].mxu0
        %v573 = vadd.f32 0.0, %v572
        %v574 = vpop.f32.mrb[0].mxu0
        %v575 = vpop.f32.mrb[0].mxu0
        %v576 = vadd.f32 0.0, %v575
        %v577 = vpop.f32.mrb[0].mxu0
        %578 = vmatprep.mubr.bf16.mxu0 0
        %579 = vmatmul.mubr.bf16.gmra.mrb[0].mxu0 %v396
        %v580 = vpop.f32.mrb[0].mxu0
        %v581 = vadd.f32 0.0, %v580
        %v582 = vpop.f32.mrb[0].mxu0
        %v583 = vpop.f32.mrb[0].mxu0
        %v584 = vadd.f32 0.0, %v583
        %v585 = vpop.f32.mrb[0].mxu0
        %586 = vmatprep.mubr.bf16.mxu0 0
        %587 = vmatmul.mubr.bf16.gmra.mrb[0].mxu0 %v397
        %v588 = vpop.f32.mrb[0].mxu0
        %v589 = vadd.f32 0.0, %v588
        %v590 = vpop.f32.mrb[0].mxu0
        %v591 = vpop.f32.mrb[0].mxu0
        %v592 = vadd.f32 0.0, %v591
        %v593 = vpop.f32.mrb[0].mxu0
        %594 = vmatprep.mubr.bf16.mxu0 0
        %595 = vmatmul.mubr.bf16.gmra.mrb[0].mxu0 %v398
        %v596 = vpop.f32.mrb[0].mxu0
        %v597 = vadd.f32 0.0, %v596
        %v598 = vpop.f32.mrb[0].mxu0
        %v599 = vpop.f32.mrb[0].mxu0
        %v600 = vadd.f32 0.0, %v599
        %v601 = vpop.f32.mrb[0].mxu0
        %602 = vmatprep.mubr.bf16.mxu0 0
        %603 = vmatmul.mubr.bf16.gmra.mrb[0].mxu0 %v399
        %v604 = vpop.f32.mrb[0].mxu0
        %v605 = vadd.f32 0.0, %v604
        %v606 = vpop.f32.mrb[0].mxu0
        %v607 = vpop.f32.mrb[0].mxu0
        %v608 = vadd.f32 0.0, %v607
        %v609 = vpop.f32.mrb[0].mxu0
        %610 = vmatprep.mubr.bf16.mxu0 0
        %611 = vmatmul.mubr.bf16.gmra.mrb[0].mxu0 %v400
        %v612 = vpop.f32.mrb[0].mxu0
        %v613 = vadd.f32 0.0, %v612
        %v614 = vpop.f32.mrb[0].mxu0
        %v615 = vpop.f32.mrb[0].mxu0
        %v616 = vadd.f32 0.0, %v615
        %v617 = vpop.f32.mrb[0].mxu0
        %618 = vmatprep.mubr.bf16.mxu0 0
        %619 = vmatmul.mubr.bf16.gmra.mrb[0].mxu0 %v401
        %v620 = vpop.f32.mrb[0].mxu0
        %v621 = vadd.f32 0.0, %v620
        %v622 = vpop.f32.mrb[0].mxu0
        %v623 = vpop.f32.mrb[0].mxu0
        %v624 = vadd.f32 0.0, %v623
        %v625 = vpop.f32.mrb[0].mxu0
        %626 = vdwg.mxu0
        %v627 = vpack.c.bf16 %v504, %v501
        %v628 = vpack.c.bf16 %v512, %v509
        %v629 = vpack.c.bf16 %v520, %v517
        %v630 = vpack.c.bf16 %v528, %v525
        %v631 = vpack.c.bf16 %v536, %v533
        %v632 = vpack.c.bf16 %v544, %v541
        %v633 = vpack.c.bf16 %v552, %v549
        %v634 = vpack.c.bf16 %v560, %v557
        %v635 = vpack.c.bf16 %v568, %v565
        %v636 = vpack.c.bf16 %v576, %v573
        %v637 = vpack.c.bf16 %v584, %v581
        %v638 = vpack.c.bf16 %v592, %v589
        %v639 = vpack.c.bf16 %v600, %v597
        %v640 = vpack.c.bf16 %v608, %v605
        %v641 = vpack.c.bf16 %v616, %v613
        %v642 = vpack.c.bf16 %v624, %v621
        %v659 = vunpack.c.l.b16 %v627
        %v660 = vunpack.c.h.b16 %v627
        %v661 = vunpack.c.l.b16 %v628
        %v662 = vunpack.c.h.b16 %v628
        %v663 = vunpack.c.l.b16 %v629
        %v664 = vunpack.c.h.b16 %v629
        %v665 = vunpack.c.l.b16 %v630
        %v666 = vunpack.c.h.b16 %v630
        %v667 = vunpack.c.l.b16 %v631
        %v668 = vunpack.c.h.b16 %v631
        %v669 = vunpack.c.l.b16 %v632
        %v670 = vunpack.c.h.b16 %v632
        %v671 = vunpack.c.l.b16 %v633
        %v672 = vunpack.c.h.b16 %v633
        %v673 = vunpack.c.l.b16 %v634
        %v674 = vunpack.c.h.b16 %v634
        %v675 = vunpack.c.l.b16 %v635
        %v676 = vunpack.c.h.b16 %v635
        %v677 = vunpack.c.l.b16 %v636
        %v678 = vunpack.c.h.b16 %v636
        %v679 = vunpack.c.l.b16 %v637
        %v680 = vunpack.c.h.b16 %v637
        %v681 = vunpack.c.l.b16 %v638
        %v682 = vunpack.c.h.b16 %v638
        %v683 = vunpack.c.l.b16 %v639
        %v684 = vunpack.c.h.b16 %v639
        %v685 = vunpack.c.l.b16 %v640
        %v686 = vunpack.c.h.b16 %v640
        %v687 = vunpack.c.l.b16 %v641
        %v688 = vunpack.c.h.b16 %v641
        %v689 = vunpack.c.l.b16 %v642
        %v690 = vunpack.c.h.b16 %v642
        %v691 = vpack.c.b16 %v659, %v659
        %v692 = vpack.c.b16 %v660, %v660
        %v693 = vpack.c.b16 %v661, %v661
        %v694 = vpack.c.b16 %v662, %v662
        %v695 = vpack.c.b16 %v663, %v663
        %v696 = vpack.c.b16 %v664, %v664
        %v697 = vpack.c.b16 %v665, %v665
        %v698 = vpack.c.b16 %v666, %v666
        %v699 = vpack.c.b16 %v667, %v667
        %v700 = vpack.c.b16 %v668, %v668
        %v701 = vpack.c.b16 %v669, %v669
        %v702 = vpack.c.b16 %v670, %v670
        %v703 = vpack.c.b16 %v671, %v671
        %v704 = vpack.c.b16 %v672, %v672
        %v705 = vpack.c.b16 %v673, %v673
        %v706 = vpack.c.b16 %v674, %v674
        %v707 = vpack.c.b16 %v675, %v675
        %v708 = vpack.c.b16 %v676, %v676
        %v709 = vpack.c.b16 %v677, %v677
        %v710 = vpack.c.b16 %v678, %v678
        %v711 = vpack.c.b16 %v679, %v679
        %v712 = vpack.c.b16 %v680, %v680
        %v713 = vpack.c.b16 %v681, %v681
        %v714 = vpack.c.b16 %v682, %v682
        %v715 = vpack.c.b16 %v683, %v683
        %v716 = vpack.c.b16 %v684, %v684
        %v717 = vpack.c.b16 %v685, %v685
        %v718 = vpack.c.b16 %v686, %v686
        %v719 = vpack.c.b16 %v687, %v687
        %v720 = vpack.c.b16 %v688, %v688
        %v721 = vpack.c.b16 %v689, %v689
        %v722 = vpack.c.b16 %v690, %v690
        %755 = vst [vmem:[%s252] sm:$0xf] %v691
        %756 = vst [vmem:[%s252 + $0x4] sm:$0xf] %v692
        %757 = vst [vmem:[%s252 + $0x8] sm:$0xf] %v693
        %758 = vst [vmem:[%s252 + $0xc] sm:$0xf] %v694
        %759 = vst [vmem:[%s252 + $0x10] sm:$0xf] %v695
        %760 = vst [vmem:[%s252 + $0x14] sm:$0xf] %v696
        %761 = vst [vmem:[%s252 + $0x18] sm:$0xf] %v697
        %762 = vst [vmem:[%s252 + $0x1c] sm:$0xf] %v698
        %763 = vst [vmem:[%s252 + $0x20] sm:$0xf] %v699
        %764 = vst [vmem:[%s252 + $0x24] sm:$0xf] %v700
        %765 = vst [vmem:[%s252 + $0x28] sm:$0xf] %v701
        %766 = vst [vmem:[%s252 + $0x2c] sm:$0xf] %v702
        %767 = vst [vmem:[%s252 + $0x30] sm:$0xf] %v703
        %768 = vst [vmem:[%s252 + $0x34] sm:$0xf] %v704
        %769 = vst [vmem:[%s252 + $0x38] sm:$0xf] %v705
        %770 = vst [vmem:[%s252 + $0x3c] sm:$0xf] %v706
        %771 = vst [vmem:[%s252 + $0x40] sm:$0xf] %v707
        %772 = vst [vmem:[%s252 + $0x44] sm:$0xf] %v708
        %773 = vst [vmem:[%s252 + $0x48] sm:$0xf] %v709
        %774 = vst [vmem:[%s252 + $0x4c] sm:$0xf] %v710
        %775 = vst [vmem:[%s252 + $0x50] sm:$0xf] %v711
        %776 = vst [vmem:[%s252 + $0x54] sm:$0xf] %v712
        %777 = vst [vmem:[%s252 + $0x58] sm:$0xf] %v713
        %778 = vst [vmem:[%s252 + $0x5c] sm:$0xf] %v714
        %779 = vst [vmem:[%s252 + $0x60] sm:$0xf] %v715
        %780 = vst [vmem:[%s252 + $0x64] sm:$0xf] %v716
        %781 = vst [vmem:[%s252 + $0x68] sm:$0xf] %v717
        %782 = vst [vmem:[%s252 + $0x6c] sm:$0xf] %v718
        %783 = vst [vmem:[%s252 + $0x70] sm:$0xf] %v719
        %784 = vst [vmem:[%s252 + $0x74] sm:$0xf] %v720
        %785 = vst [vmem:[%s252 + $0x78] sm:$0xf] %v721
        %786 = vst [vmem:[%s252 + $0x7c] sm:$0xf] %v722
        %v787 = vunpack.c.l.bf16 %v627
        %v788 = vunpack.c.h.bf16 %v627
        %v789 = vunpack.c.l.bf16 %v628
        %v790 = vunpack.c.h.bf16 %v628
        %v791 = vunpack.c.l.bf16 %v629
        %v792 = vunpack.c.h.bf16 %v629
        %v793 = vunpack.c.l.bf16 %v630
        %v794 = vunpack.c.h.bf16 %v630
        %v795 = vunpack.c.l.bf16 %v631
        %v796 = vunpack.c.h.bf16 %v631
        %v797 = vunpack.c.l.bf16 %v632
        %v798 = vunpack.c.h.bf16 %v632
        %v799 = vunpack.c.l.bf16 %v633
        %v800 = vunpack.c.h.bf16 %v633
        %v801 = vunpack.c.l.bf16 %v634
        %v802 = vunpack.c.h.bf16 %v634
        %v803 = vunpack.c.l.bf16 %v635
        %v804 = vunpack.c.h.bf16 %v635
        %v805 = vunpack.c.l.bf16 %v636
        %v806 = vunpack.c.h.bf16 %v636
        %v807 = vunpack.c.l.bf16 %v637
        %v808 = vunpack.c.h.bf16 %v637
        %v809 = vunpack.c.l.bf16 %v638
        %v810 = vunpack.c.h.bf16 %v638
        %v811 = vunpack.c.l.bf16 %v639
        %v812 = vunpack.c.h.bf16 %v639
        %v813 = vunpack.c.l.bf16 %v640
        %v814 = vunpack.c.h.bf16 %v640
        %v815 = vunpack.c.l.bf16 %v641
        %v816 = vunpack.c.h.bf16 %v641
        %v817 = vunpack.c.l.bf16 %v642
        %v818 = vunpack.c.h.bf16 %v642
        %v819 = vld [vmem:[%s258] sm:$0x1]
        %v820 = vadd.f32 %v787, %v788
        %v821 = vadd.f32 %v820, %v789
        %v822 = vadd.f32 %v821, %v790
        %v823 = vadd.f32 %v822, %v791
        %v824 = vadd.f32 %v823, %v792
        %v825 = vadd.f32 %v824, %v793
        %v826 = vadd.f32 %v825, %v794
        %v827 = vadd.f32 %v826, %v795
        %v828 = vadd.f32 %v827, %v796
        %v829 = vadd.f32 %v828, %v797
        %v830 = vadd.f32 %v829, %v798
        %v831 = vadd.f32 %v830, %v799
        %v832 = vadd.f32 %v831, %v800
        %v833 = vadd.f32 %v832, %v801
        %v834 = vadd.f32 %v833, %v802
        %v835 = vadd.f32 %v834, %v803
        %v836 = vadd.f32 %v835, %v804
        %v837 = vadd.f32 %v836, %v805
        %v838 = vadd.f32 %v837, %v806
        %v839 = vadd.f32 %v838, %v807
        %v840 = vadd.f32 %v839, %v808
        %v841 = vadd.f32 %v840, %v809
        %v842 = vadd.f32 %v841, %v810
        %v843 = vadd.f32 %v842, %v811
        %v844 = vadd.f32 %v843, %v812
        %v845 = vadd.f32 %v844, %v813
        %v846 = vadd.f32 %v845, %v814
        %v847 = vadd.f32 %v846, %v815
        %v848 = vadd.f32 %v847, %v816
        %v849 = vadd.f32 %v848, %v817
        %v850 = vadd.f32 %v849, %v818
        %v851 = vrot.slane %v850, 4
        %v852 = vadd.f32 %v850, %v851
        %v853 = vrot.slane %v852, 2
        %v854 = vadd.f32 %v852, %v853
        %v855 = vrot.slane %v854, 1
        %v856 = vadd.f32 %v854, %v855
        %v857 = vadd.f32 %v819, %v856
        %858 = vst [vmem:[%s258] sm:$0x1] %v857
        %v859 = vld [vmem:[%s264] sm:$0x1]
        %v860 = vmul.f32 %v787, %v787
        %v861 = vmul.f32 %v788, %v788
        %v862 = vmul.f32 %v789, %v789
        %v863 = vmul.f32 %v790, %v790
        %v864 = vmul.f32 %v791, %v791
        %v865 = vmul.f32 %v792, %v792
        %v866 = vmul.f32 %v793, %v793
        %v867 = vmul.f32 %v794, %v794
        %v868 = vmul.f32 %v795, %v795
        %v869 = vmul.f32 %v796, %v796
        %v870 = vmul.f32 %v797, %v797
        %v871 = vmul.f32 %v798, %v798
        %v872 = vmul.f32 %v799, %v799
        %v873 = vmul.f32 %v800, %v800
        %v874 = vmul.f32 %v801, %v801
        %v875 = vmul.f32 %v802, %v802
        %v876 = vmul.f32 %v803, %v803
        %v877 = vmul.f32 %v804, %v804
        %v878 = vmul.f32 %v805, %v805
        %v879 = vmul.f32 %v806, %v806
        %v880 = vmul.f32 %v807, %v807
        %v881 = vmul.f32 %v808, %v808
        %v882 = vmul.f32 %v809, %v809
        %v883 = vmul.f32 %v810, %v810
        %v884 = vmul.f32 %v811, %v811
        %v885 = vmul.f32 %v812, %v812
        %v886 = vmul.f32 %v813, %v813
        %v887 = vmul.f32 %v814, %v814
        %v888 = vmul.f32 %v815, %v815
        %v889 = vmul.f32 %v816, %v816
        %v890 = vmul.f32 %v817, %v817
        %v891 = vmul.f32 %v818, %v818
        %v892 = vadd.f32 %v860, %v861
        %v893 = vadd.f32 %v892, %v862
        %v894 = vadd.f32 %v893, %v863
        %v895 = vadd.f32 %v894, %v864
        %v896 = vadd.f32 %v895, %v865
        %v897 = vadd.f32 %v896, %v866
        %v898 = vadd.f32 %v897, %v867
        %v899 = vadd.f32 %v898, %v868
        %v900 = vadd.f32 %v899, %v869
        %v901 = vadd.f32 %v900, %v870
        %v902 = vadd.f32 %v901, %v871
        %v903 = vadd.f32 %v902, %v872
        %v904 = vadd.f32 %v903, %v873
        %v905 = vadd.f32 %v904, %v874
        %v906 = vadd.f32 %v905, %v875
        %v907 = vadd.f32 %v906, %v876
        %v908 = vadd.f32 %v907, %v877
        %v909 = vadd.f32 %v908, %v878
        %v910 = vadd.f32 %v909, %v879
        %v911 = vadd.f32 %v910, %v880
        %v912 = vadd.f32 %v911, %v881
        %v913 = vadd.f32 %v912, %v882
        %v914 = vadd.f32 %v913, %v883
        %v915 = vadd.f32 %v914, %v884
        %v916 = vadd.f32 %v915, %v885
        %v917 = vadd.f32 %v916, %v886
        %v918 = vadd.f32 %v917, %v887
        %v919 = vadd.f32 %v918, %v888
        %v920 = vadd.f32 %v919, %v889
        %v921 = vadd.f32 %v920, %v890
        %v922 = vadd.f32 %v921, %v891
        %v923 = vrot.slane %v922, 4
        %v924 = vadd.f32 %v922, %v923
        %v925 = vrot.slane %v924, 2
        %v926 = vadd.f32 %v924, %v925
        %v927 = vrot.slane %v926, 1
        %v928 = vadd.f32 %v926, %v927
        %v929 = vadd.f32 %v859, %v928
        %930 = vst [vmem:[%s264] sm:$0x1] %v929
        %s931 = sand.u32 %s97, 1
        %s932 = scalar_lea.sflag [#allocation4], %s931
        %s933 = sand.u32 %s97, 1
        %s934 = smul.addr %s933, 128
        %s935 = scalar_lea.vmem [#allocation7], %s934
        %s936 = sand.u32 %s26, 1
        %s937 = scalar_lea.sflag [#allocation9], %s936
        %s938 = sand.u32 %s123, 1
        %s939 = scalar_lea.vmem [#allocation8], %s938
        %s940 = sand.u32 %s26, 1
        %s941 = scalar_lea.sflag [#allocation9], %s940
        %s942 = sand.u32 %s149, 1
        %s943 = scalar_lea.vmem [#allocation10], %s942
        // Predicated region
        $region41: #{_bottleneck_forward.5} parent=27 // pred_check
          %p944 = pneg %p107
        $region42: #{_bottleneck_forward.5} parent=27 // pred_check_branch
          %946 = sbr.rel (%p944) target = $region44
        $region43: #{_bottleneck_forward.5} parent=27 // pred_region
          %s947 = smul.u32 32, %s31
          %s949 = ssub.s32 2048, 2048
          %950 = vsyncadd %s932, %s949
          %s951 = smul.addr %s30, 32
          %s952 = sadd.s32 %s947, %s951
          %s953 = smul.addr %s952, 64
          %s954 = scalar_lea.hbm %s2, %s953
          %s955 = sshll.u32 %s935, 4
          %s956 = int_to_ptr.vmem [resolvable:$true] %s955
          %961 = dma.vmem_to_hbm [thread:$0]  %s956, 2048, %s954, %s932, 64, 64, 4
        $region44: #{_bottleneck_forward.5} parent=27 // pred_fallthru
          _
        // Predicated region
        $region45: #{_bottleneck_forward.5} parent=27 // pred_check
          %p962 = pneg %p133
        $region46: #{_bottleneck_forward.5} parent=27 // pred_check_branch
          %964 = sbr.rel (%p962) target = $region48
        $region47: #{_bottleneck_forward.5} parent=27 // pred_region
          %s966 = ssub.s32 16, 16
          %967 = vsyncadd %s937, %s966
          %s968 = smul.addr %s30, 16
          %s969 = scalar_lea.hbm %s3, %s968
          %s971 = sshll.u32 %s939, 4
          %s972 = int_to_ptr.vmem [resolvable:$true] %s971
          %974 = dma.vmem_to_hbm [thread:$0]  %s972, 16, %s969, %s937
        $region48: #{_bottleneck_forward.5} parent=27 // pred_fallthru
          _
        // Predicated region
        $region49: #{_bottleneck_forward.5} parent=27 // pred_check
          %p975 = pneg %p159
        $region50: #{_bottleneck_forward.5} parent=27 // pred_check_branch
          %977 = sbr.rel (%p975) target = $region52
        $region51: #{_bottleneck_forward.5} parent=27 // pred_region
          %s979 = ssub.s32 16, 16
          %980 = vsyncadd %s941, %s979
          %s981 = smul.addr %s30, 16
          %s982 = scalar_lea.hbm %s4, %s981
          %s984 = sshll.u32 %s943, 4
          %s985 = int_to_ptr.vmem [resolvable:$true] %s984
          %987 = dma.vmem_to_hbm [thread:$0]  %s985, 16, %s982, %s941
        $region52: #{_bottleneck_forward.5} parent=27 // pred_fallthru
          _
      $region28: #{_bottleneck_forward.5} parent=5 // pred_fallthru
        _
      %p988 = scmp.le.s32.totalorder 2, %s21
      // Predicated region
      $region53: #{_bottleneck_forward.5} parent=5 // pred_check
        %p989 = pneg %p988
      $region54: #{_bottleneck_forward.5} parent=5 // pred_check_branch
        %991 = sbr.rel (%p989) target = $region56
      $region55: #{_bottleneck_forward.5} parent=5 // pred_region
        %s992 = ssub.s32 %s21, 2
        // Predicated region
        $region57: #{_bottleneck_forward.5} parent=55 // pred_check
          %p993 = pneg %p113
        $region58: #{_bottleneck_forward.5} parent=55 // pred_check_branch
          %995 = sbr.rel (%p993) target = $region60
        $region59: #{_bottleneck_forward.5} parent=55 // pred_region
          %s996 = sand.u32 %s98, 1
          %s997 = scalar_lea.sflag [#allocation4], %s996
          %s998 = sand.u32 %s98, 1
          %s999 = smul.addr %s998, 128
          %s1000 = scalar_lea.vmem [#allocation7], %s999
          %1001 = dma.done %s997, 2048
        $region60: #{_bottleneck_forward.5} parent=55 // pred_fallthru
          _
        // Predicated region
        $region61: #{_bottleneck_forward.5} parent=55 // pred_check
          %p1002 = pneg %p139
        $region62: #{_bottleneck_forward.5} parent=55 // pred_check_branch
          %1004 = sbr.rel (%p1002) target = $region64
        $region63: #{_bottleneck_forward.5} parent=55 // pred_region
          %s1005 = sand.u32 %s27, 1
          %s1006 = scalar_lea.sflag [#allocation9], %s1005
          %s1007 = sand.u32 %s124, 1
          %s1008 = scalar_lea.vmem [#allocation8], %s1007
          %1009 = dma.done %s1006, 16
        $region64: #{_bottleneck_forward.5} parent=55 // pred_fallthru
          _
        // Predicated region
        $region65: #{_bottleneck_forward.5} parent=55 // pred_check
          %p1010 = pneg %p165
        $region66: #{_bottleneck_forward.5} parent=55 // pred_check_branch
          %1012 = sbr.rel (%p1010) target = $region68
        $region67: #{_bottleneck_forward.5} parent=55 // pred_region
          %s1013 = sand.u32 %s27, 1
          %s1014 = scalar_lea.sflag [#allocation9], %s1013
          %s1015 = sand.u32 %s150, 1
          %s1016 = scalar_lea.vmem [#allocation10], %s1015
          %1017 = dma.done %s1014, 16
        $region68: #{_bottleneck_forward.5} parent=55 // pred_fallthru
          _
      $region56: #{_bottleneck_forward.5} parent=5 // pred_fallthru
        _
    $region6: #{_bottleneck_forward.5} parent=1 // loop_footer
      %s25 = sadd.s32 1, %s21
    $region7: #{_bottleneck_forward.5} parent=1 // loop_footer_branch
      %20 = sbr.rel target = $region3
    $region8: #{_bottleneck_forward.5} parent=1 // loop_exit
      _
    %1018 = vsyncpa [#allocation3], 1
    %s1019 = scalar_lea.sflag [#allocation3], 1
    %1020 = vsyncpa %s1019, 1
    %1021 = vsyncpa [#allocation6], 1
    %1022 = vsyncpa [#allocation4], 1
    %s1023 = scalar_lea.sflag [#allocation4], 1
    %1024 = vsyncpa %s1023, 1
    %1025 = vsyncpa [#allocation9], 1
    %s1026 = scalar_lea.sflag [#allocation9], 1
    %1027 = vsyncpa %s1026, 1

// kernel: _bottleneck_forward.7
$region0: #{_bottleneck_forward.7}
  #allocation0 [shape = 'u32[]', space=smem, size = 0x4, offset = 0x4, fixed_abs, tag = 'smem constant byte address 0x4 - core index']
  #allocation1 [shape = 'u32[144,128]{1,0:T(1,128)}', space=vmem, size = 0x12000, scoped, tag = 'internal scratch']
  %s0 = inlined_call_operand.hbm [shape: bf16[2,64,128], index: 0, kind: input, shape index: {}]
  %s1 = inlined_call_operand.hbm [shape: f32[2,1,128], index: 1, kind: input, shape index: {}]
  %s2 = inlined_call_operand.hbm [shape: f32[2,1,128], index: 2, kind: input, shape index: {}]
  %s3 = inlined_call_operand.hbm [shape: f32[1,1,128], index: 3, kind: input, shape index: {}]
  %s4 = inlined_call_operand.hbm [shape: f32[1,1,128], index: 4, kind: input, shape index: {}]
  %s5 = inlined_call_operand.hbm [shape: bf16[128,128], index: 5, kind: input, shape index: {}]
  %s6 = inlined_call_operand.hbm [shape: bf16[2,64,128], index: 6, kind: output, shape index: {0}]
  %s7 = inlined_call_operand.hbm [shape: f32[2,1,128], index: 7, kind: output, shape index: {1}]
  %s8 = inlined_call_operand.hbm [shape: f32[2,1,128], index: 8, kind: output, shape index: {2}]
  %9 = xla_tuple %s6, %s7, %s8
  %s10 = sld [smem:[#allocation0]]
  $region101: #{_bottleneck_forward.7} parent=0
    _
  %s12 = ssub.s32 1, %s10
  %s13 = scalar_select 0, %s12, %s10
  $region1: #{_bottleneck_forward.7} parent=0
    #allocation2 [shape = 'u8[32768]{0}', space=vmem, size = 0x8000, scoped, tag = 'input window, operand 0']
    #allocation3 [shape = 's32[2]{0}', space=sflag, size = 0x8, scoped, tag = 'scoped memory for _bottleneck_forward.7']
    #allocation4 [shape = 's32[2]{0}', space=sflag, size = 0x8, scoped, tag = 'scoped memory for _bottleneck_forward.7']
    #allocation5 [shape = 'u8[1024]{0}', space=vmem, size = 0x400, scoped, tag = 'input window, operand 1']
    #allocation6 [shape = 's32[2]{0}', space=sflag, size = 0x8, scoped, tag = 'scoped memory for _bottleneck_forward.7']
    #allocation7 [shape = 'u8[1024]{0}', space=vmem, size = 0x400, scoped, tag = 'input window, operand 2']
    #allocation8 [shape = 'u8[512]{0}', space=vmem, size = 0x400, scoped, tag = 'input window, operand 3, single buffered']
    #allocation9 [shape = 's32[1]{0}', space=sflag, size = 0x4, scoped, tag = 'scoped memory for _bottleneck_forward.7']
    #allocation10 [shape = 'u8[512]{0}', space=vmem, size = 0x400, scoped, tag = 'input window, operand 4, single buffered']
    #allocation11 [shape = 'u8[32768]{0}', space=vmem, size = 0x8000, scoped, tag = 'input window, operand 5, single buffered']
    #allocation12 [shape = 's32[1]{0}', space=sflag, size = 0x4, scoped, tag = 'scoped memory for _bottleneck_forward.7']
    #allocation13 [shape = 'u8[32768]{0}', space=vmem, size = 0x8000, scoped, tag = 'output window, operand 0']
    #allocation14 [shape = 'u8[1024]{0}', space=vmem, size = 0x400, scoped, tag = 'output window, operand 1']
    #allocation15 [shape = 's32[2]{0}', space=sflag, size = 0x8, scoped, tag = 'scoped memory for _bottleneck_forward.7']
    #allocation16 [shape = 'u8[1024]{0}', space=vmem, size = 0x400, scoped, tag = 'output window, operand 2']
    %14 = vsyncpa [#allocation3], 0
    %s15 = scalar_lea.sflag [#allocation3], 1
    %16 = vsyncpa %s15, 0
    %17 = vsyncpa [#allocation6], 0
    %s18 = scalar_lea.sflag [#allocation6], 1
    %19 = vsyncpa %s18, 0
    %20 = vsyncpa [#allocation9], 0
    %21 = vsyncpa [#allocation12], 0
    %22 = vsyncpa [#allocation4], 0
    %s23 = scalar_lea.sflag [#allocation4], 1
    %24 = vsyncpa %s23, 0
    %25 = vsyncpa [#allocation15], 0
    %s26 = scalar_lea.sflag [#allocation15], 1
    %27 = vsyncpa %s26, 0
    loop: start=0, step=1, limit=4
    $region2: #{_bottleneck_forward.7} parent=1 // loop_pre_header
      _
    $region3: #{_bottleneck_forward.7} parent=1 // loop_header
      %s29 = sphi 0, %s33
      %p30 = scmp.ge.s32.totalorder %s29, 4
      %s36 = sphi 0, %s48
      %s37 = sphi 0, %s44
      %s38 = sphi 0, %s36
      %s39 = sphi 0, %s37
      %s40 = sphi 0, %s38
      %s41 = sphi 0, %s39
      %s53 = sphi 0, %s55
      %s56 = sphi 0, %s53
      %s57 = sphi 0, %s56
      %s73 = sphi 0, %s57
      %s79 = sphi 0, %s81
      %s82 = sphi 0, %s79
      %s83 = sphi 0, %s82
      %s99 = sphi 0, %s83
      %s105 = sphi 0, %s107
      %s108 = sphi 0, %s105
      %s109 = sphi 0, %s108
      %s125 = sphi 0, %s109
      %s129 = sphi 0, %s129
      %s131 = sphi 0, %s129
      %s132 = sphi 0, %s131
      %s146 = sphi 0, %s132
      %s150 = sphi 0, %s150
      %s152 = sphi 0, %s150
      %s153 = sphi 0, %s152
      %s167 = sphi 0, %s153
      %s171 = sphi 0, %s171
      %s173 = sphi 0, %s171
      %s174 = sphi 0, %s173
      %s188 = sphi 0, %s174
      %s196 = sphi 0, %s198
      %s199 = sphi 0, %s196
      %s200 = sphi 0, %s199
      %s216 = sphi 0, %s200
      %s222 = sphi 0, %s224
      %s225 = sphi 0, %s222
      %s226 = sphi 0, %s225
      %s242 = sphi 0, %s226
      %s248 = sphi 0, %s250
      %s251 = sphi 0, %s248
      %s252 = sphi 0, %s251
      %s268 = sphi 0, %s252
    $region4: #{_bottleneck_forward.7} parent=1 // loop_header_branch
      %32 = sbr.rel (%p30) target = $region8
    $region5: #{_bottleneck_forward.7} parent=1 // loop_body
      %s34 = ssub.s32 %s29, 1
      %s35 = ssub.s32 %s29, 2
      %s42 = sadd.s32 1, %s37
      %p43 = scmp.ge.s32.totalorder %s42, 1
      %s44 = scalar_select %p43, 0, %s42
      %s45 = sadd.s32 1, %s36
      %s46 = scalar_select %p43, %s45, %s36
      %p47 = scmp.ge.s32.totalorder %s46, 2
      %s48 = scalar_select %p47, 0, %s46
      %s49 = ssub.s32 %s36, %s48
      %s50 = ssub.s32 %s37, %s44
      %s51 = sor.u32 %s49, %s50
      %p52 = scmp.eq.s32.totalorder %s51, 0
      %s54 = sadd.s32 %s53, 1
      %s55 = scalar_select %p52, %s53, %s54
      %p58 = pneg %p52
      %p59 = scmp.eq.s32.totalorder %s29, 1
      %p60 = por %p58, %p59
      %p61 = scmp.ne.s32.totalorder %s53, %s56
      %p62 = scmp.eq.s32.totalorder %s29, 0
      %p63 = por %p61, %p62
      %p64 = scmp.ne.s32.totalorder %s53, %s56
      %p65 = scmp.eq.s32.totalorder %s34, 1
      %p66 = por %p64, %p65
      %p67 = scmp.ne.s32.totalorder %s56, %s57
      %p68 = scmp.eq.s32.totalorder %s34, 0
      %p69 = por %p67, %p68
      %p70 = scmp.ne.s32.totalorder %s56, %s57
      %p71 = scmp.eq.s32.totalorder %s35, 1
      %p72 = por %p70, %p71
      %p74 = scmp.ne.s32.totalorder %s57, %s73
      %p75 = scmp.eq.s32.totalorder %s35, 0
      %p76 = por %p74, %p75
      %s77 = ssub.s32 %s36, %s48
      %p78 = scmp.eq.s32.totalorder %s77, 0
      %s80 = sadd.s32 %s79, 1
      %s81 = scalar_select %p78, %s79, %s80
      %p84 = pneg %p78
      %p85 = scmp.eq.s32.totalorder %s29, 1
      %p86 = por %p84, %p85
      %p87 = scmp.ne.s32.totalorder %s79, %s82
      %p88 = scmp.eq.s32.totalorder %s29, 0
      %p89 = por %p87, %p88
      %p90 = scmp.ne.s32.totalorder %s79, %s82
      %p91 = scmp.eq.s32.totalorder %s34, 1
      %p92 = por %p90, %p91
      %p93 = scmp.ne.s32.totalorder %s82, %s83
      %p94 = scmp.eq.s32.totalorder %s34, 0
      %p95 = por %p93, %p94
      %p96 = scmp.ne.s32.totalorder %s82, %s83
      %p97 = scmp.eq.s32.totalorder %s35, 1
      %p98 = por %p96, %p97
      %p100 = scmp.ne.s32.totalorder %s83, %s99
      %p101 = scmp.eq.s32.totalorder %s35, 0
      %p102 = por %p100, %p101
      %s103 = ssub.s32 %s36, %s48
      %p104 = scmp.eq.s32.totalorder %s103, 0
      %s106 = sadd.s32 %s105, 1
      %s107 = scalar_select %p104, %s105, %s106
      %p110 = pneg %p104
      %p111 = scmp.eq.s32.totalorder %s29, 1
      %p112 = por %p110, %p111
      %p113 = scmp.ne.s32.totalorder %s105, %s108
      %p114 = scmp.eq.s32.totalorder %s29, 0
      %p115 = por %p113, %p114
      %p116 = scmp.ne.s32.totalorder %s105, %s108
      %p117 = scmp.eq.s32.totalorder %s34, 1
      %p118 = por %p116, %p117
      %p119 = scmp.ne.s32.totalorder %s108, %s109
      %p120 = scmp.eq.s32.totalorder %s34, 0
      %p121 = por %p119, %p120
      %p122 = scmp.ne.s32.totalorder %s108, %s109
      %p123 = scmp.eq.s32.totalorder %s35, 1
      %p124 = por %p122, %p123
      %p126 = scmp.ne.s32.totalorder %s109, %s125
      %p127 = scmp.eq.s32.totalorder %s35, 0
      %p128 = por %p126, %p127
      %s130 = sadd.s32 %s129, 1
      %p133 = scmp.eq.s32.totalorder %s29, 1
      %p134 = scmp.ne.s32.totalorder %s129, %s131
      %p135 = scmp.eq.s32.totalorder %s29, 0
      %p136 = por %p134, %p135
      %p137 = scmp.ne.s32.totalorder %s129, %s131
      %p138 = scmp.eq.s32.totalorder %s34, 1
      %p139 = por %p137, %p138
      %p140 = scmp.ne.s32.totalorder %s131, %s132
      %p141 = scmp.eq.s32.totalorder %s34, 0
      %p142 = por %p140, %p141
      %p143 = scmp.ne.s32.totalorder %s131, %s132
      %p144 = scmp.eq.s32.totalorder %s35, 1
      %p145 = por %p143, %p144
      %p147 = scmp.ne.s32.totalorder %s132, %s146
      %p148 = scmp.eq.s32.totalorder %s35, 0
      %p149 = por %p147, %p148
      %s151 = sadd.s32 %s150, 1
      %p154 = scmp.eq.s32.totalorder %s29, 1
      %p155 = scmp.ne.s32.totalorder %s150, %s152
      %p156 = scmp.eq.s32.totalorder %s29, 0
      %p157 = por %p155, %p156
      %p158 = scmp.ne.s32.totalorder %s150, %s152
      %p159 = scmp.eq.s32.totalorder %s34, 1
      %p160 = por %p158, %p159
      %p161 = scmp.ne.s32.totalorder %s152, %s153
      %p162 = scmp.eq.s32.totalorder %s34, 0
      %p163 = por %p161, %p162
      %p164 = scmp.ne.s32.totalorder %s152, %s153
      %p165 = scmp.eq.s32.totalorder %s35, 1
      %p166 = por %p164, %p165
      %p168 = scmp.ne.s32.totalorder %s153, %s167
      %p169 = scmp.eq.s32.totalorder %s35, 0
      %p170 = por %p168, %p169
      %s172 = sadd.s32 %s171, 1
      %p175 = scmp.eq.s32.totalorder %s29, 1
      %p176 = scmp.ne.s32.totalorder %s171, %s173
      %p177 = scmp.eq.s32.totalorder %s29, 0
      %p178 = por %p176, %p177
      %p179 = scmp.ne.s32.totalorder %s171, %s173
      %p180 = scmp.eq.s32.totalorder %s34, 1
      %p181 = por %p179, %p180
      %p182 = scmp.ne.s32.totalorder %s173, %s174
      %p183 = scmp.eq.s32.totalorder %s34, 0
      %p184 = por %p182, %p183
      %p185 = scmp.ne.s32.totalorder %s173, %s174
      %p186 = scmp.eq.s32.totalorder %s35, 1
      %p187 = por %p185, %p186
      %p189 = scmp.ne.s32.totalorder %s174, %s188
      %p190 = scmp.eq.s32.totalorder %s35, 0
      %p191 = por %p189, %p190
      %s192 = ssub.s32 %s36, %s48
      %s193 = ssub.s32 %s37, %s44
      %s194 = sor.u32 %s192, %s193
      %p195 = scmp.eq.s32.totalorder %s194, 0
      %s197 = sadd.s32 %s196, 1
      %s198 = scalar_select %p195, %s196, %s197
      %p201 = pneg %p195
      %p202 = scmp.eq.s32.totalorder %s29, 1
      %p203 = por %p201, %p202
      %p204 = scmp.ne.s32.totalorder %s196, %s199
      %p205 = scmp.eq.s32.totalorder %s29, 0
      %p206 = por %p204, %p205
      %p207 = scmp.ne.s32.totalorder %s196, %s199
      %p208 = scmp.eq.s32.totalorder %s34, 1
      %p209 = por %p207, %p208
      %p210 = scmp.ne.s32.totalorder %s199, %s200
      %p211 = scmp.eq.s32.totalorder %s34, 0
      %p212 = por %p210, %p211
      %p213 = scmp.ne.s32.totalorder %s199, %s200
      %p214 = scmp.eq.s32.totalorder %s35, 1
      %p215 = por %p213, %p214
      %p217 = scmp.ne.s32.totalorder %s200, %s216
      %p218 = scmp.eq.s32.totalorder %s35, 0
      %p219 = por %p217, %p218
      %s220 = ssub.s32 %s36, %s48
      %p221 = scmp.eq.s32.totalorder %s220, 0
      %s223 = sadd.s32 %s222, 1
      %s224 = scalar_select %p221, %s222, %s223
      %p227 = pneg %p221
      %p228 = scmp.eq.s32.totalorder %s29, 1
      %p229 = por %p227, %p228
      %p230 = scmp.ne.s32.totalorder %s222, %s225
      %p231 = scmp.eq.s32.totalorder %s29, 0
      %p232 = por %p230, %p231
      %p233 = scmp.ne.s32.totalorder %s222, %s225
      %p234 = scmp.eq.s32.totalorder %s34, 1
      %p235 = por %p233, %p234
      %p236 = scmp.ne.s32.totalorder %s225, %s226
      %p237 = scmp.eq.s32.totalorder %s34, 0
      %p238 = por %p236, %p237
      %p239 = scmp.ne.s32.totalorder %s225, %s226
      %p240 = scmp.eq.s32.totalorder %s35, 1
      %p241 = por %p239, %p240
      %p243 = scmp.ne.s32.totalorder %s226, %s242
      %p244 = scmp.eq.s32.totalorder %s35, 0
      %p245 = por %p243, %p244
      %s246 = ssub.s32 %s36, %s48
      %p247 = scmp.eq.s32.totalorder %s246, 0
      %s249 = sadd.s32 %s248, 1
      %s250 = scalar_select %p247, %s248, %s249
      %p253 = pneg %p247
      %p254 = scmp.eq.s32.totalorder %s29, 1
      %p255 = por %p253, %p254
      %p256 = scmp.ne.s32.totalorder %s248, %s251
      %p257 = scmp.eq.s32.totalorder %s29, 0
      %p258 = por %p256, %p257
      %p259 = scmp.ne.s32.totalorder %s248, %s251
      %p260 = scmp.eq.s32.totalorder %s34, 1
      %p261 = por %p259, %p260
      %p262 = scmp.ne.s32.totalorder %s251, %s252
      %p263 = scmp.eq.s32.totalorder %s34, 0
      %p264 = por %p262, %p263
      %p265 = scmp.ne.s32.totalorder %s251, %s252
      %p266 = scmp.eq.s32.totalorder %s35, 1
      %p267 = por %p265, %p266
      %p269 = scmp.ne.s32.totalorder %s252, %s268
      %p270 = scmp.eq.s32.totalorder %s35, 0
      %p271 = por %p269, %p270
      %p272 = scmp.le.s32.totalorder 1, %s29
      %p273 = scmp.lt.s32.totalorder %s29, 3
      %p274 = pnand %p272, %p273
      %p275 = pneg %p274
      // Predicated region
      $region9: #{_bottleneck_forward.7} parent=5 // pred_check
        _
      $region10: #{_bottleneck_forward.7} parent=5 // pred_check_branch
        %277 = sbr.rel (%p274) target = $region12
      $region11: #{_bottleneck_forward.7} parent=5 // pred_region
        %s278 = ssub.s32 %s29, 1
        // Predicated region
        $region13: #{_bottleneck_forward.7} parent=11 // pred_check
          %p279 = pneg %p142
        $region14: #{_bottleneck_forward.7} parent=11 // pred_check_branch
          %281 = sbr.rel (%p279) target = $region16
        $region15: #{_bottleneck_forward.7} parent=11 // pred_region
          %s283 = ssub.s32 16, 16
          %284 = vsyncadd [#allocation9], %s283
          %s286 = sshll.u32 [#allocation8], 4
          %s287 = int_to_ptr.vmem [resolvable:$true] %s286
          %289 = dma.hbm_to_vmem [thread:$0]  %s3, 16, %s287, [#allocation9]
        $region16: #{_bottleneck_forward.7} parent=11 // pred_fallthru
          _
        // Predicated region
        $region17: #{_bottleneck_forward.7} parent=11 // pred_check
          %p290 = pneg %p163
        $region18: #{_bottleneck_forward.7} parent=11 // pred_check_branch
          %292 = sbr.rel (%p290) target = $region20
        $region19: #{_bottleneck_forward.7} parent=11 // pred_region
          %s294 = ssub.s32 16, 16
          %295 = vsyncadd [#allocation9], %s294
          %s297 = sshll.u32 [#allocation10], 4
          %s298 = int_to_ptr.vmem [resolvable:$true] %s297
          %300 = dma.hbm_to_vmem [thread:$0]  %s4, 16, %s298, [#allocation9]
        $region20: #{_bottleneck_forward.7} parent=11 // pred_fallthru
          _
        // Predicated region
        $region21: #{_bottleneck_forward.7} parent=11 // pred_check
          %p301 = pneg %p184
        $region22: #{_bottleneck_forward.7} parent=11 // pred_check_branch
          %303 = sbr.rel (%p301) target = $region24
        $region23: #{_bottleneck_forward.7} parent=11 // pred_region
          %s305 = ssub.s32 1024, 1024
          %306 = vsyncadd [#allocation12], %s305
          %s307 = sshll.u32 [#allocation11], 4
          %s308 = int_to_ptr.vmem [resolvable:$true] %s307
          %313 = dma.hbm_to_vmem [thread:$0]  %s5, 1024, %s308, [#allocation12], 64, 64, 4
        $region24: #{_bottleneck_forward.7} parent=11 // pred_fallthru
          _
      $region12: #{_bottleneck_forward.7} parent=5 // pred_fallthru
        _
      %p314 = scmp.lt.s32.totalorder %s29, 2
      // Predicated region
      $region25: #{_bottleneck_forward.7} parent=5 // pred_check
        %p315 = pneg %p314
      $region26: #{_bottleneck_forward.7} parent=5 // pred_check_branch
        %317 = sbr.rel (%p315) target = $region28
      $region27: #{_bottleneck_forward.7} parent=5 // pred_region
        // Predicated region
        $region29: #{_bottleneck_forward.7} parent=27 // pred_check
          %p318 = pneg %p63
        $region30: #{_bottleneck_forward.7} parent=27 // pred_check_branch
          %320 = sbr.rel (%p318) target = $region32
        $region31: #{_bottleneck_forward.7} parent=27 // pred_region
          %s321 = sand.u32 %s53, 1
          %s322 = scalar_lea.sflag [#allocation3], %s321
          %s323 = sand.u32 %s53, 1
          %s324 = smul.addr %s323, 32
          %s325 = scalar_lea.vmem [#allocation2], %s324
          %s326 = smul.u32 8, %s37
          %s328 = ssub.s32 512, 512
          %329 = vsyncadd %s322, %s328
          %s330 = smul.addr %s36, 8
          %s331 = sadd.s32 %s326, %s330
          %s332 = smul.addr %s331, 64
          %s333 = scalar_lea.hbm %s0, %s332
          %s334 = sshll.u32 %s325, 4
          %s335 = int_to_ptr.vmem [resolvable:$true] %s334
          %340 = dma.hbm_to_vmem [thread:$0]  %s333, 512, %s335, %s322, 64, 64, 4
        $region32: #{_bottleneck_forward.7} parent=27 // pred_fallthru
          _
        // Predicated region
        $region33: #{_bottleneck_forward.7} parent=27 // pred_check
          %p341 = pneg %p89
        $region34: #{_bottleneck_forward.7} parent=27 // pred_check_branch
          %343 = sbr.rel (%p341) target = $region36
        $region35: #{_bottleneck_forward.7} parent=27 // pred_region
          %s344 = sand.u32 %s29, 1
          %s345 = scalar_lea.sflag [#allocation6], %s344
          %s346 = sand.u32 %s79, 1
          %s347 = scalar_lea.vmem [#allocation5], %s346
          %s349 = ssub.s32 16, 16
          %350 = vsyncadd %s345, %s349
          %s351 = smul.addr %s36, 16
          %s352 = scalar_lea.hbm %s1, %s351
          %s354 = sshll.u32 %s347, 4
          %s355 = int_to_ptr.vmem [resolvable:$true] %s354
          %357 = dma.hbm_to_vmem [thread:$0]  %s352, 16, %s355, %s345
        $region36: #{_bottleneck_forward.7} parent=27 // pred_fallthru
          _
        // Predicated region
        $region37: #{_bottleneck_forward.7} parent=27 // pred_check
          %p358 = pneg %p115
        $region38: #{_bottleneck_forward.7} parent=27 // pred_check_branch
          %360 = sbr.rel (%p358) target = $region40
        $region39: #{_bottleneck_forward.7} parent=27 // pred_region
          %s361 = sand.u32 %s29, 1
          %s362 = scalar_lea.sflag [#allocation6], %s361
          %s363 = sand.u32 %s105, 1
          %s364 = scalar_lea.vmem [#allocation7], %s363
          %s366 = ssub.s32 16, 16
          %367 = vsyncadd %s362, %s366
          %s368 = smul.addr %s36, 16
          %s369 = scalar_lea.hbm %s2, %s368
          %s371 = sshll.u32 %s364, 4
          %s372 = int_to_ptr.vmem [resolvable:$true] %s371
          %374 = dma.hbm_to_vmem [thread:$0]  %s369, 16, %s372, %s362
        $region40: #{_bottleneck_forward.7} parent=27 // pred_fallthru
          _
      $region28: #{_bottleneck_forward.7} parent=5 // pred_fallthru
        _
      %p375 = scmp.le.s32.totalorder 1, %s29
      %p376 = scmp.lt.s32.totalorder %s29, 3
      %p377 = pnand %p375, %p376
      %p378 = pneg %p377
      // Predicated region
      $region41: #{_bottleneck_forward.7} parent=5 // pred_check
        _
      $region42: #{_bottleneck_forward.7} parent=5 // pred_check_branch
        %380 = sbr.rel (%p377) target = $region44
      $region43: #{_bottleneck_forward.7} parent=5 // pred_region
        %s381 = ssub.s32 %s29, 1
        %s382 = sand.u32 %s56, 1
        %s383 = scalar_lea.sflag [#allocation3], %s382
        %s384 = sand.u32 %s56, 1
        %s385 = smul.addr %s384, 32
        %s386 = scalar_lea.vmem [#allocation2], %s385
        // Predicated region
        $region45: #{_bottleneck_forward.7} parent=43 // pred_check
          %p387 = pneg %p69
        $region46: #{_bottleneck_forward.7} parent=43 // pred_check_branch
          %389 = sbr.rel (%p387) target = $region48
        $region47: #{_bottleneck_forward.7} parent=43 // pred_region
          %390 = dma.done %s383, 512
        $region48: #{_bottleneck_forward.7} parent=43 // pred_fallthru
          _
        %s391 = sand.u32 %s34, 1
        %s392 = scalar_lea.sflag [#allocation6], %s391
        %s393 = sand.u32 %s82, 1
        %s394 = scalar_lea.vmem [#allocation5], %s393
        // Predicated region
        $region49: #{_bottleneck_forward.7} parent=43 // pred_check
          %p395 = pneg %p95
        $region50: #{_bottleneck_forward.7} parent=43 // pred_check_branch
          %397 = sbr.rel (%p395) target = $region52
        $region51: #{_bottleneck_forward.7} parent=43 // pred_region
          %398 = dma.done %s392, 16
        $region52: #{_bottleneck_forward.7} parent=43 // pred_fallthru
          _
        %s399 = sand.u32 %s34, 1
        %s400 = scalar_lea.sflag [#allocation6], %s399
        %s401 = sand.u32 %s108, 1
        %s402 = scalar_lea.vmem [#allocation7], %s401
        // Predicated region
        $region53: #{_bottleneck_forward.7} parent=43 // pred_check
          %p403 = pneg %p121
        $region54: #{_bottleneck_forward.7} parent=43 // pred_check_branch
          %405 = sbr.rel (%p403) target = $region56
        $region55: #{_bottleneck_forward.7} parent=43 // pred_region
          %406 = dma.done %s400, 16
        $region56: #{_bottleneck_forward.7} parent=43 // pred_fallthru
          _
        // Predicated region
        $region57: #{_bottleneck_forward.7} parent=43 // pred_check
          %p407 = pneg %p142
        $region58: #{_bottleneck_forward.7} parent=43 // pred_check_branch
          %409 = sbr.rel (%p407) target = $region60
        $region59: #{_bottleneck_forward.7} parent=43 // pred_region
          %410 = dma.done [#allocation9], 16
        $region60: #{_bottleneck_forward.7} parent=43 // pred_fallthru
          _
        // Predicated region
        $region61: #{_bottleneck_forward.7} parent=43 // pred_check
          %p411 = pneg %p163
        $region62: #{_bottleneck_forward.7} parent=43 // pred_check_branch
          %413 = sbr.rel (%p411) target = $region64
        $region63: #{_bottleneck_forward.7} parent=43 // pred_region
          %414 = dma.done [#allocation9], 16
        $region64: #{_bottleneck_forward.7} parent=43 // pred_fallthru
          _
        // Predicated region
        $region65: #{_bottleneck_forward.7} parent=43 // pred_check
          %p415 = pneg %p184
        $region66: #{_bottleneck_forward.7} parent=43 // pred_check_branch
          %417 = sbr.rel (%p415) target = $region68
        $region67: #{_bottleneck_forward.7} parent=43 // pred_region
          %418 = dma.done [#allocation12], 1024
        $region68: #{_bottleneck_forward.7} parent=43 // pred_fallthru
          _
        %s419 = sand.u32 %s56, 1
        %s420 = scalar_lea.sflag [#allocation3], %s419
        %s421 = sand.u32 %s56, 1
        %s422 = smul.addr %s421, 32
        %s423 = scalar_lea.vmem [#allocation2], %s422
        %p424 = pneg %p69
        %p425 = pneg %p66
        %s426 = sand.u32 %s34, 1
        %s427 = scalar_lea.sflag [#allocation6], %s426
        %s428 = sand.u32 %s82, 1
        %s429 = scalar_lea.vmem [#allocation5], %s428
        %p430 = pneg %p95
        %p431 = pneg %p92
        %s432 = sand.u32 %s34, 1
        %s433 = scalar_lea.sflag [#allocation6], %s432
        %s434 = sand.u32 %s108, 1
        %s435 = scalar_lea.vmem [#allocation7], %s434
        %p436 = pneg %p121
        %p437 = pneg %p118
        %p438 = pneg %p142
        %p439 = pneg %p139
        %p440 = pneg %p163
        %p441 = pneg %p160
        %p442 = pneg %p184
        %p443 = pneg %p181
        %p444 = pneg %p212
        %p445 = pneg %p209
        %s446 = sand.u32 %s199, 1
        %s447 = scalar_lea.sflag [#allocation4], %s446
        %s448 = sand.u32 %s199, 1
        %s449 = smul.addr %s448, 32
        %s450 = scalar_lea.vmem [#allocation13], %s449
        %p451 = pneg %p238
        %p452 = pneg %p235
        %s453 = sand.u32 %s34, 1
        %s454 = scalar_lea.sflag [#allocation15], %s453
        %s455 = sand.u32 %s225, 1
        %s456 = scalar_lea.vmem [#allocation14], %s455
        %p457 = pneg %p264
        %p458 = pneg %p261
        %s459 = sand.u32 %s34, 1
        %s460 = scalar_lea.sflag [#allocation15], %s459
        %s461 = sand.u32 %s251, 1
        %s462 = scalar_lea.vmem [#allocation16], %s461
        %s463 = smul.u32 8, %s39
        %s464 = smul.u32 8, %s39
        %p466 = scmp.eq.s32.totalorder %s39, 0
        // Predicated region
        $region69: #{_bottleneck_forward.7} parent=43 // pred_check
          %p467 = pneg %p466
        $region70: #{_bottleneck_forward.7} parent=43 // pred_check_branch
          %469 = sbr.rel (%p467) target = $region72
        $region71: #{_bottleneck_forward.7} parent=43 // pred_region
          %470 = vst [vmem:[%s456] sm:$0x1] 0.0
          %471 = vst [vmem:[%s462] sm:$0x1] 0.0
        $region72: #{_bottleneck_forward.7} parent=43 // pred_fallthru
          _
        %v472 = vld [vmem:[%s394] sm:$0x1]
        %v473 = vld [vmem:[%s402] sm:$0x1]
        %v474 = vld [vmem:[#allocation8] sm:$0x1]
        %v475 = vld [vmem:[#allocation10] sm:$0x1]
        %v476 = vmul.f32 %v472, 0.015625
        %v477 = vmul.f32 %v473, 0.015625
        %v478 = vmul.f32 %v476, %v476
        %v479 = vsub.f32 %v477, %v478
        %v480 = vadd.f32 %v479, 1e-05
        %v481 = vrsqrt.pop %v480
        %v482 = vmul.f32 %v481, %v474
        %v483 = vmul.f32 %v476, %v482
        %v484 = vsub.f32 %v475, %v483
        %v485 = vld [vmem:[%s386] sm:$0xf]
        %v486 = vld [vmem:[%s386 + $0x4] sm:$0xf]
        %v487 = vld [vmem:[%s386 + $0x8] sm:$0xf]
        %v488 = vld [vmem:[%s386 + $0xc] sm:$0xf]
        %v489 = vld [vmem:[%s386 + $0x10] sm:$0xf]
        %v490 = vld [vmem:[%s386 + $0x14] sm:$0xf]
        %v491 = vld [vmem:[%s386 + $0x18] sm:$0xf]
        %v492 = vld [vmem:[%s386 + $0x1c] sm:$0xf]
        %v493 = vunpack.c.l.bf16 %v485
        %v494 = vunpack.c.l.bf16 %v486
        %v495 = vunpack.c.l.bf16 %v487
        %v496 = vunpack.c.l.bf16 %v488
        %v497 = vunpack.c.l.bf16 %v489
        %v498 = vunpack.c.l.bf16 %v490
        %v499 = vunpack.c.l.bf16 %v491
        %v500 = vunpack.c.l.bf16 %v492
        %v502 = vlaneseq
        %v503 = vshrl.u32 %v502, 7
        %v504 = vsub.s32 0, %v503
        %v505 = vrot.slane %v482, %v504
        %v507 = vmul.f32 %v493, %v505
        %v508 = vmul.f32 %v494, %v505
        %v509 = vmul.f32 %v495, %v505
        %v510 = vmul.f32 %v496, %v505
        %v511 = vmul.f32 %v497, %v505
        %v512 = vmul.f32 %v498, %v505
        %v513 = vmul.f32 %v499, %v505
        %v514 = vmul.f32 %v500, %v505
        %v516 = vlaneseq
        %v517 = vshrl.u32 %v516, 7
        %v518 = vsub.s32 0, %v517
        %v519 = vrot.slane %v484, %v518
        %v521 = vadd.f32 %v507, %v519
        %v522 = vadd.f32 %v508, %v519
        %v523 = vadd.f32 %v509, %v519
        %v524 = vadd.f32 %v510, %v519
        %v525 = vadd.f32 %v511, %v519
        %v526 = vadd.f32 %v512, %v519
        %v527 = vadd.f32 %v513, %v519
        %v528 = vadd.f32 %v514, %v519
        %v529 = vmax.f32 %v521, 0.0
        %v530 = vmax.f32 %v522, 0.0
        %v531 = vmax.f32 %v523, 0.0
        %v532 = vmax.f32 %v524, 0.0
        %v533 = vmax.f32 %v525, 0.0
        %v534 = vmax.f32 %v526, 0.0
        %v535 = vmax.f32 %v527, 0.0
        %v536 = vmax.f32 %v528, 0.0
        %v537 = vpack.c.bf16 %v530, %v529
        %v538 = vpack.c.bf16 %v532, %v531
        %v539 = vpack.c.bf16 %v534, %v533
        %v540 = vpack.c.bf16 %v536, %v535
        %v541 = vld [vmem:[#allocation11] sm:$0xf]
        %v542 = vld [vmem:[#allocation11 + $0x4] sm:$0xf]
        %v543 = vld [vmem:[#allocation11 + $0x8] sm:$0xf]
        %v544 = vld [vmem:[#allocation11 + $0xc] sm:$0xf]
        %v545 = vld [vmem:[#allocation11 + $0x10] sm:$0xf]
        %v546 = vld [vmem:[#allocation11 + $0x14] sm:$0xf]
        %v547 = vld [vmem:[#allocation11 + $0x18] sm:$0xf]
        %v548 = vld [vmem:[#allocation11 + $0x1c] sm:$0xf]
        %v549 = vld [vmem:[#allocation11 + $0x20] sm:$0xf]
        %v550 = vld [vmem:[#allocation11 + $0x24] sm:$0xf]
        %v551 = vld [vmem:[#allocation11 + $0x28] sm:$0xf]
        %v552 = vld [vmem:[#allocation11 + $0x2c] sm:$0xf]
        %v553 = vld [vmem:[#allocation11 + $0x30] sm:$0xf]
        %v554 = vld [vmem:[#allocation11 + $0x34] sm:$0xf]
        %v555 = vld [vmem:[#allocation11 + $0x38] sm:$0xf]
        %v556 = vld [vmem:[#allocation11 + $0x3c] sm:$0xf]
        %v573 = vunpack.c.l.b16 %v541
        %v574 = vunpack.c.l.b16 %v542
        %v575 = vunpack.c.l.b16 %v543
        %v576 = vunpack.c.l.b16 %v544
        %v577 = vunpack.c.l.b16 %v545
        %v578 = vunpack.c.l.b16 %v546
        %v579 = vunpack.c.l.b16 %v547
        %v580 = vunpack.c.l.b16 %v548
        %v581 = vunpack.c.l.b16 %v549
        %v582 = vunpack.c.l.b16 %v550
        %v583 = vunpack.c.l.b16 %v551
        %v584 = vunpack.c.l.b16 %v552
        %v585 = vunpack.c.l.b16 %v553
        %v586 = vunpack.c.l.b16 %v554
        %v587 = vunpack.c.l.b16 %v555
        %v588 = vunpack.c.l.b16 %v556
        %v589 = vpack.c.b16 %v574, %v573
        %v590 = vpack.c.b16 %v576, %v575
        %v591 = vpack.c.b16 %v578, %v577
        %v592 = vpack.c.b16 %v580, %v579
        %v593 = vpack.c.b16 %v582, %v581
        %v594 = vpack.c.b16 %v584, %v583
        %v595 = vpack.c.b16 %v586, %v585
        %v596 = vpack.c.b16 %v588, %v587
        %605 = vmatprep.subr.bf16.mxu0 0
        %606 = vmatpush1.bf16.msra.mxu0 %v589
        %607 = vmatprep.subr.bf16.mxu0 0
        %608 = vmatpush1.bf16.msra.mxu0 %v590
        %609 = vmatprep.subr.bf16.mxu0 0
        %610 = vmatpush1.bf16.msra.mxu0 %v591
        %611 = vmatprep.subr.bf16.mxu0 0
        %612 = vmatpush1.bf16.msra.mxu0 %v592
        %613 = vmatprep.subr.bf16.mxu0 0
        %614 = vmatpush1.bf16.msra.mxu0 %v593
        %615 = vmatprep.subr.bf16.mxu0 0
        %616 = vmatpush1.bf16.msra.mxu0 %v594
        %617 = vmatprep.subr.bf16.mxu0 0
        %618 = vmatpush1.bf16.msra.mxu0 %v595
        %619 = vmatprep.subr.bf16.mxu0 0
        %620 = vmatpush1.bf16.msra.mxu0 %v596
        %621 = vmatprep.subr.bf16.mxu0 0
        %622 = vmatpush1.bf16.msra.mxu0 0
        %623 = vmatprep.subr.bf16.mxu0 0
        %624 = vmatpush1.bf16.msra.mxu0 0
        %625 = vmatprep.subr.bf16.mxu0 0
        %626 = vmatpush1.bf16.msra.mxu0 0
        %627 = vmatprep.subr.bf16.mxu0 0
        %628 = vmatpush1.bf16.msra.mxu0 0
        %629 = vmatprep.subr.bf16.mxu0 0
        %630 = vmatpush1.bf16.msra.mxu0 0
        %631 = vmatprep.subr.bf16.mxu0 0
        %632 = vmatpush1.bf16.msra.mxu0 0
        %633 = vmatprep.subr.bf16.mxu0 0
        %634 = vmatpush1.bf16.msra.mxu0 0
        %635 = vmatprep.subr.bf16.mxu0 0
        %636 = vmatpush1.bf16.msra.mxu0 0
        %637 = vmatprep.mubr.bf16.mxu0 0
        %638 = vmatmul.mubr.bf16.gmra.mrb[0].mxu0 %v537
        %v639 = vpop.f32.mrb[0].mxu0
        %v640 = vadd.f32 0.0, %v639
        %v641 = vpop.f32.mrb[0].mxu0
        %v642 = vpop.f32.mrb[0].mxu0
        %v643 = vadd.f32 0.0, %v642
        %v644 = vpop.f32.mrb[0].mxu0
        %645 = vmatprep.mubr.bf16.mxu0 0
        %646 = vmatmul.mubr.bf16.gmra.mrb[0].mxu0 %v538
        %v647 = vpop.f32.mrb[0].mxu0
        %v648 = vadd.f32 0.0, %v647
        %v649 = vpop.f32.mrb[0].mxu0
        %v650 = vpop.f32.mrb[0].mxu0
        %v651 = vadd.f32 0.0, %v650
        %v652 = vpop.f32.mrb[0].mxu0
        %653 = vmatprep.mubr.bf16.mxu0 0
        %654 = vmatmul.mubr.bf16.gmra.mrb[0].mxu0 %v539
        %v655 = vpop.f32.mrb[0].mxu0
        %v656 = vadd.f32 0.0, %v655
        %v657 = vpop.f32.mrb[0].mxu0
        %v658 = vpop.f32.mrb[0].mxu0
        %v659 = vadd.f32 0.0, %v658
        %v660 = vpop.f32.mrb[0].mxu0
        %661 = vmatprep.mubr.bf16.mxu0 0
        %662 = vmatmul.mubr.bf16.gmra.mrb[0].mxu0 %v540
        %v663 = vpop.f32.mrb[0].mxu0
        %v664 = vadd.f32 0.0, %v663
        %v665 = vpop.f32.mrb[0].mxu0
        %v666 = vpop.f32.mrb[0].mxu0
        %v667 = vadd.f32 0.0, %v666
        %v668 = vpop.f32.mrb[0].mxu0
        %669 = vdwg.mxu0
        %v670 = vpack.c.bf16 %v643, %v640
        %v671 = vpack.c.bf16 %v651, %v648
        %v672 = vpack.c.bf16 %v659, %v656
        %v673 = vpack.c.bf16 %v667, %v664
        %v678 = vunpack.c.l.b16 %v670
        %v679 = vunpack.c.h.b16 %v670
        %v680 = vunpack.c.l.b16 %v671
        %v681 = vunpack.c.h.b16 %v671
        %v682 = vunpack.c.l.b16 %v672
        %v683 = vunpack.c.h.b16 %v672
        %v684 = vunpack.c.l.b16 %v673
        %v685 = vunpack.c.h.b16 %v673
        %v686 = vpack.c.b16 %v678, %v678
        %v687 = vpack.c.b16 %v679, %v679
        %v688 = vpack.c.b16 %v680, %v680
        %v689 = vpack.c.b16 %v681, %v681
        %v690 = vpack.c.b16 %v682, %v682
        %v691 = vpack.c.b16 %v683, %v683
        %v692 = vpack.c.b16 %v684, %v684
        %v693 = vpack.c.b16 %v685, %v685
        %702 = vst [vmem:[%s450] sm:$0xf] %v686
        %703 = vst [vmem:[%s450 + $0x4] sm:$0xf] %v687
        %704 = vst [vmem:[%s450 + $0x8] sm:$0xf] %v688
        %705 = vst [vmem:[%s450 + $0xc] sm:$0xf] %v689
        %706 = vst [vmem:[%s450 + $0x10] sm:$0xf] %v690
        %707 = vst [vmem:[%s450 + $0x14] sm:$0xf] %v691
        %708 = vst [vmem:[%s450 + $0x18] sm:$0xf] %v692
        %709 = vst [vmem:[%s450 + $0x1c] sm:$0xf] %v693
        %v710 = vunpack.c.l.bf16 %v670
        %v711 = vunpack.c.h.bf16 %v670
        %v712 = vunpack.c.l.bf16 %v671
        %v713 = vunpack.c.h.bf16 %v671
        %v714 = vunpack.c.l.bf16 %v672
        %v715 = vunpack.c.h.bf16 %v672
        %v716 = vunpack.c.l.bf16 %v673
        %v717 = vunpack.c.h.bf16 %v673
        %v718 = vld [vmem:[%s456] sm:$0x1]
        %v719 = vadd.f32 %v710, %v711
        %v720 = vadd.f32 %v719, %v712
        %v721 = vadd.f32 %v720, %v713
        %v722 = vadd.f32 %v721, %v714
        %v723 = vadd.f32 %v722, %v715
        %v724 = vadd.f32 %v723, %v716
        %v725 = vadd.f32 %v724, %v717
        %v726 = vrot.slane %v725, 4
        %v727 = vadd.f32 %v725, %v726
        %v728 = vrot.slane %v727, 2
        %v729 = vadd.f32 %v727, %v728
        %v730 = vrot.slane %v729, 1
        %v731 = vadd.f32 %v729, %v730
        %v732 = vadd.f32 %v718, %v731
        %733 = vst [vmem:[%s456] sm:$0x1] %v732
        %v734 = vld [vmem:[%s462] sm:$0x1]
        %v735 = vmul.f32 %v710, %v710
        %v736 = vmul.f32 %v711, %v711
        %v737 = vmul.f32 %v712, %v712
        %v738 = vmul.f32 %v713, %v713
        %v739 = vmul.f32 %v714, %v714
        %v740 = vmul.f32 %v715, %v715
        %v741 = vmul.f32 %v716, %v716
        %v742 = vmul.f32 %v717, %v717
        %v743 = vadd.f32 %v735, %v736
        %v744 = vadd.f32 %v743, %v737
        %v745 = vadd.f32 %v744, %v738
        %v746 = vadd.f32 %v745, %v739
        %v747 = vadd.f32 %v746, %v740
        %v748 = vadd.f32 %v747, %v741
        %v749 = vadd.f32 %v748, %v742
        %v750 = vrot.slane %v749, 4
        %v751 = vadd.f32 %v749, %v750
        %v752 = vrot.slane %v751, 2
        %v753 = vadd.f32 %v751, %v752
        %v754 = vrot.slane %v753, 1
        %v755 = vadd.f32 %v753, %v754
        %v756 = vadd.f32 %v734, %v755
        %757 = vst [vmem:[%s462] sm:$0x1] %v756
        %s758 = sand.u32 %s199, 1
        %s759 = scalar_lea.sflag [#allocation4], %s758
        %s760 = sand.u32 %s199, 1
        %s761 = smul.addr %s760, 32
        %s762 = scalar_lea.vmem [#allocation13], %s761
        %s763 = sand.u32 %s34, 1
        %s764 = scalar_lea.sflag [#allocation15], %s763
        %s765 = sand.u32 %s225, 1
        %s766 = scalar_lea.vmem [#allocation14], %s765
        %s767 = sand.u32 %s34, 1
        %s768 = scalar_lea.sflag [#allocation15], %s767
        %s769 = sand.u32 %s251, 1
        %s770 = scalar_lea.vmem [#allocation16], %s769
        // Predicated region
        $region73: #{_bottleneck_forward.7} parent=43 // pred_check
          %p771 = pneg %p209
        $region74: #{_bottleneck_forward.7} parent=43 // pred_check_branch
          %773 = sbr.rel (%p771) target = $region76
        $region75: #{_bottleneck_forward.7} parent=43 // pred_region
          %s774 = smul.u32 8, %s39
          %s776 = ssub.s32 512, 512
          %777 = vsyncadd %s759, %s776
          %s778 = smul.addr %s38, 8
          %s779 = sadd.s32 %s774, %s778
          %s780 = smul.addr %s779, 64
          %s781 = scalar_lea.hbm %s6, %s780
          %s782 = sshll.u32 %s762, 4
          %s783 = int_to_ptr.vmem [resolvable:$true] %s782
          %788 = dma.vmem_to_hbm [thread:$0]  %s783, 512, %s781, %s759, 64, 64, 4
        $region76: #{_bottleneck_forward.7} parent=43 // pred_fallthru
          _
        // Predicated region
        $region77: #{_bottleneck_forward.7} parent=43 // pred_check
          %p789 = pneg %p235
        $region78: #{_bottleneck_forward.7} parent=43 // pred_check_branch
          %791 = sbr.rel (%p789) target = $region80
        $region79: #{_bottleneck_forward.7} parent=43 // pred_region
          %s793 = ssub.s32 16, 16
          %794 = vsyncadd %s764, %s793
          %s795 = smul.addr %s38, 16
          %s796 = scalar_lea.hbm %s7, %s795
          %s798 = sshll.u32 %s766, 4
          %s799 = int_to_ptr.vmem [resolvable:$true] %s798
          %801 = dma.vmem_to_hbm [thread:$0]  %s799, 16, %s796, %s764
        $region80: #{_bottleneck_forward.7} parent=43 // pred_fallthru
          _
        // Predicated region
        $region81: #{_bottleneck_forward.7} parent=43 // pred_check
          %p802 = pneg %p261
        $region82: #{_bottleneck_forward.7} parent=43 // pred_check_branch
          %804 = sbr.rel (%p802) target = $region84
        $region83: #{_bottleneck_forward.7} parent=43 // pred_region
          %s806 = ssub.s32 16, 16
          %807 = vsyncadd %s768, %s806
          %s808 = smul.addr %s38, 16
          %s809 = scalar_lea.hbm %s8, %s808
          %s811 = sshll.u32 %s770, 4
          %s812 = int_to_ptr.vmem [resolvable:$true] %s811
          %814 = dma.vmem_to_hbm [thread:$0]  %s812, 16, %s809, %s768
        $region84: #{_bottleneck_forward.7} parent=43 // pred_fallthru
          _
      $region44: #{_bottleneck_forward.7} parent=5 // pred_fallthru
        _
      %p815 = scmp.le.s32.totalorder 2, %s29
      // Predicated region
      $region85: #{_bottleneck_forward.7} parent=5 // pred_check
        %p816 = pneg %p815
      $region86: #{_bottleneck_forward.7} parent=5 // pred_check_branch
        %818 = sbr.rel (%p816) target = $region88
      $region87: #{_bottleneck_forward.7} parent=5 // pred_region
        %s819 = ssub.s32 %s29, 2
        // Predicated region
        $region89: #{_bottleneck_forward.7} parent=87 // pred_check
          %p820 = pneg %p215
        $region90: #{_bottleneck_forward.7} parent=87 // pred_check_branch
          %822 = sbr.rel (%p820) target = $region92
        $region91: #{_bottleneck_forward.7} parent=87 // pred_region
          %s823 = sand.u32 %s200, 1
          %s824 = scalar_lea.sflag [#allocation4], %s823
          %s825 = sand.u32 %s200, 1
          %s826 = smul.addr %s825, 32
          %s827 = scalar_lea.vmem [#allocation13], %s826
          %828 = dma.done %s824, 512
        $region92: #{_bottleneck_forward.7} parent=87 // pred_fallthru
          _
        // Predicated region
        $region93: #{_bottleneck_forward.7} parent=87 // pred_check
          %p829 = pneg %p241
        $region94: #{_bottleneck_forward.7} parent=87 // pred_check_branch
          %831 = sbr.rel (%p829) target = $region96
        $region95: #{_bottleneck_forward.7} parent=87 // pred_region
          %s832 = sand.u32 %s35, 1
          %s833 = scalar_lea.sflag [#allocation15], %s832
          %s834 = sand.u32 %s226, 1
          %s835 = scalar_lea.vmem [#allocation14], %s834
          %836 = dma.done %s833, 16
        $region96: #{_bottleneck_forward.7} parent=87 // pred_fallthru
          _
        // Predicated region
        $region97: #{_bottleneck_forward.7} parent=87 // pred_check
          %p837 = pneg %p267
        $region98: #{_bottleneck_forward.7} parent=87 // pred_check_branch
          %839 = sbr.rel (%p837) target = $region100
        $region99: #{_bottleneck_forward.7} parent=87 // pred_region
          %s840 = sand.u32 %s35, 1
          %s841 = scalar_lea.sflag [#allocation15], %s840
          %s842 = sand.u32 %s252, 1
          %s843 = scalar_lea.vmem [#allocation16], %s842
          %844 = dma.done %s841, 16
        $region100: #{_bottleneck_forward.7} parent=87 // pred_fallthru
          _
      $region88: #{_bottleneck_forward.7} parent=5 // pred_fallthru
        _
    $region6: #{_bottleneck_forward.7} parent=1 // loop_footer
      %s33 = sadd.s32 1, %s29
    $region7: #{_bottleneck_forward.7} parent=1 // loop_footer_branch
      %28 = sbr.rel target = $region3
    $region8: #{_bottleneck_forward.7} parent=1 // loop_exit
      _
    %845 = vsyncpa [#allocation3], 1
    %s846 = scalar_lea.sflag [#allocation3], 1
    %847 = vsyncpa %s846, 1
    %848 = vsyncpa [#allocation6], 1
    %s849 = scalar_lea.sflag [#allocation6], 1
    %850 = vsyncpa %s849, 1
    %851 = vsyncpa [#allocation9], 1
    %852 = vsyncpa [#allocation12], 1
    %853 = vsyncpa [#allocation4], 1
    %s854 = scalar_lea.sflag [#allocation4], 1
    %855 = vsyncpa %s854, 1
    %856 = vsyncpa [#allocation15], 1
    %s857 = scalar_lea.sflag [#allocation15], 1
    %858 = vsyncpa %s857, 1

// kernel: _bottleneck_forward.9
$region0: #{_bottleneck_forward.9}
  #allocation0 [shape = 'u32[]', space=smem, size = 0x4, offset = 0x4, fixed_abs, tag = 'smem constant byte address 0x4 - core index']
  #allocation1 [shape = 'u32[144,128]{1,0:T(1,128)}', space=vmem, size = 0x12000, scoped, tag = 'internal scratch']
  %s0 = inlined_call_operand.hbm [shape: bf16[2,64,128], index: 0, kind: input, shape index: {}]
  %s1 = inlined_call_operand.hbm [shape: f32[2,1,128], index: 1, kind: input, shape index: {}]
  %s2 = inlined_call_operand.hbm [shape: f32[2,1,128], index: 2, kind: input, shape index: {}]
  %s3 = inlined_call_operand.hbm [shape: f32[1,1,128], index: 3, kind: input, shape index: {}]
  %s4 = inlined_call_operand.hbm [shape: f32[1,1,128], index: 4, kind: input, shape index: {}]
  %s5 = inlined_call_operand.hbm [shape: bf16[2,64,128], index: 5, kind: input, shape index: {}]
  %s6 = inlined_call_operand.hbm [shape: f32[2,1,128], index: 6, kind: input, shape index: {}]
  %s7 = inlined_call_operand.hbm [shape: f32[2,1,128], index: 7, kind: input, shape index: {}]
  %s8 = inlined_call_operand.hbm [shape: f32[1,1,128], index: 8, kind: input, shape index: {}]
  %s9 = inlined_call_operand.hbm [shape: f32[1,1,128], index: 9, kind: input, shape index: {}]
  %s10 = inlined_call_operand.hbm [shape: f32[2,64,128], index: 10, kind: output, shape index: {}]
  %s11 = sld [smem:[#allocation0]]
  $region113: #{_bottleneck_forward.9} parent=0
    _
  %s13 = ssub.s32 1, %s11
  %s14 = scalar_select 0, %s13, %s11
  $region1: #{_bottleneck_forward.9} parent=0
    #allocation2 [shape = 'u8[32768]{0}', space=vmem, size = 0x8000, scoped, tag = 'input window, operand 0']
    #allocation3 [shape = 's32[2]{0}', space=sflag, size = 0x8, scoped, tag = 'scoped memory for _bottleneck_forward.9']
    #allocation4 [shape = 's32[2]{0}', space=sflag, size = 0x8, scoped, tag = 'scoped memory for _bottleneck_forward.9']
    #allocation5 [shape = 'u8[1024]{0}', space=vmem, size = 0x400, scoped, tag = 'input window, operand 1']
    #allocation6 [shape = 's32[2]{0}', space=sflag, size = 0x8, scoped, tag = 'scoped memory for _bottleneck_forward.9']
    #allocation7 [shape = 'u8[1024]{0}', space=vmem, size = 0x400, scoped, tag = 'input window, operand 2']
    #allocation8 [shape = 'u8[512]{0}', space=vmem, size = 0x400, scoped, tag = 'input window, operand 3, single buffered']
    #allocation9 [shape = 's32[1]{0}', space=sflag, size = 0x4, scoped, tag = 'scoped memory for _bottleneck_forward.9']
    #allocation10 [shape = 'u8[512]{0}', space=vmem, size = 0x400, scoped, tag = 'input window, operand 4, single buffered']
    #allocation11 [shape = 'u8[32768]{0}', space=vmem, size = 0x8000, scoped, tag = 'input window, operand 5']
    #allocation12 [shape = 's32[2]{0}', space=sflag, size = 0x8, scoped, tag = 'scoped memory for _bottleneck_forward.9']
    #allocation13 [shape = 'u8[1024]{0}', space=vmem, size = 0x400, scoped, tag = 'input window, operand 6']
    #allocation14 [shape = 'u8[1024]{0}', space=vmem, size = 0x400, scoped, tag = 'input window, operand 7']
    #allocation15 [shape = 's32[2]{0}', space=sflag, size = 0x8, scoped, tag = 'scoped memory for _bottleneck_forward.9']
    #allocation16 [shape = 'u8[512]{0}', space=vmem, size = 0x400, scoped, tag = 'input window, operand 8, single buffered']
    #allocation17 [shape = 'u8[512]{0}', space=vmem, size = 0x400, scoped, tag = 'input window, operand 9, single buffered']
    #allocation18 [shape = 's32[1]{0}', space=sflag, size = 0x4, scoped, tag = 'scoped memory for _bottleneck_forward.9']
    #allocation19 [shape = 'u8[65536]{0}', space=vmem, size = 0x10000, scoped, tag = 'output window, operand 0']
    %15 = vsyncpa [#allocation3], 0
    %s16 = scalar_lea.sflag [#allocation3], 1
    %17 = vsyncpa %s16, 0
    %18 = vsyncpa [#allocation6], 0
    %s19 = scalar_lea.sflag [#allocation6], 1
    %20 = vsyncpa %s19, 0
    %21 = vsyncpa [#allocation9], 0
    %22 = vsyncpa [#allocation12], 0
    %s23 = scalar_lea.sflag [#allocation12], 1
    %24 = vsyncpa %s23, 0
    %25 = vsyncpa [#allocation15], 0
    %s26 = scalar_lea.sflag [#allocation15], 1
    %27 = vsyncpa %s26, 0
    %28 = vsyncpa [#allocation18], 0
    %29 = vsyncpa [#allocation4], 0
    %s30 = scalar_lea.sflag [#allocation4], 1
    %31 = vsyncpa %s30, 0
    loop: start=0, step=1, limit=4
    $region2: #{_bottleneck_forward.9} parent=1 // loop_pre_header
      _
    $region3: #{_bottleneck_forward.9} parent=1 // loop_header
      %s33 = sphi 0, %s37
      %p34 = scmp.ge.s32.totalorder %s33, 4
      %s40 = sphi 0, %s52
      %s41 = sphi 0, %s48
      %s42 = sphi 0, %s40
      %s43 = sphi 0, %s41
      %s44 = sphi 0, %s42
      %s45 = sphi 0, %s43
      %s57 = sphi 0, %s59
      %s60 = sphi 0, %s57
      %s61 = sphi 0, %s60
      %s77 = sphi 0, %s61
      %s83 = sphi 0, %s85
      %s86 = sphi 0, %s83
      %s87 = sphi 0, %s86
      %s103 = sphi 0, %s87
      %s109 = sphi 0, %s111
      %s112 = sphi 0, %s109
      %s113 = sphi 0, %s112
      %s129 = sphi 0, %s113
      %s133 = sphi 0, %s133
      %s135 = sphi 0, %s133
      %s136 = sphi 0, %s135
      %s150 = sphi 0, %s136
      %s154 = sphi 0, %s154
      %s156 = sphi 0, %s154
      %s157 = sphi 0, %s156
      %s171 = sphi 0, %s157
      %s179 = sphi 0, %s181
      %s182 = sphi 0, %s179
      %s183 = sphi 0, %s182
      %s199 = sphi 0, %s183
      %s205 = sphi 0, %s207
      %s208 = sphi 0, %s205
      %s209 = sphi 0, %s208
      %s225 = sphi 0, %s209
      %s231 = sphi 0, %s233
      %s234 = sphi 0, %s231
      %s235 = sphi 0, %s234
      %s251 = sphi 0, %s235
      %s255 = sphi 0, %s255
      %s257 = sphi 0, %s255
      %s258 = sphi 0, %s257
      %s272 = sphi 0, %s258
      %s276 = sphi 0, %s276
      %s278 = sphi 0, %s276
      %s279 = sphi 0, %s278
      %s293 = sphi 0, %s279
      %s301 = sphi 0, %s303
      %s304 = sphi 0, %s301
      %s305 = sphi 0, %s304
      %s321 = sphi 0, %s305
    $region4: #{_bottleneck_forward.9} parent=1 // loop_header_branch
      %36 = sbr.rel (%p34) target = $region8
    $region5: #{_bottleneck_forward.9} parent=1 // loop_body
      %s38 = ssub.s32 %s33, 1
      %s39 = ssub.s32 %s33, 2
      %s46 = sadd.s32 1, %s41
      %p47 = scmp.ge.s32.totalorder %s46, 1
      %s48 = scalar_select %p47, 0, %s46
      %s49 = sadd.s32 1, %s40
      %s50 = scalar_select %p47, %s49, %s40
      %p51 = scmp.ge.s32.totalorder %s50, 2
      %s52 = scalar_select %p51, 0, %s50
      %s53 = ssub.s32 %s40, %s52
      %s54 = ssub.s32 %s41, %s48
      %s55 = sor.u32 %s53, %s54
      %p56 = scmp.eq.s32.totalorder %s55, 0
      %s58 = sadd.s32 %s57, 1
      %s59 = scalar_select %p56, %s57, %s58
      %p62 = pneg %p56
      %p63 = scmp.eq.s32.totalorder %s33, 1
      %p64 = por %p62, %p63
      %p65 = scmp.ne.s32.totalorder %s57, %s60
      %p66 = scmp.eq.s32.totalorder %s33, 0
      %p67 = por %p65, %p66
      %p68 = scmp.ne.s32.totalorder %s57, %s60
      %p69 = scmp.eq.s32.totalorder %s38, 1
      %p70 = por %p68, %p69
      %p71 = scmp.ne.s32.totalorder %s60, %s61
      %p72 = scmp.eq.s32.totalorder %s38, 0
      %p73 = por %p71, %p72
      %p74 = scmp.ne.s32.totalorder %s60, %s61
      %p75 = scmp.eq.s32.totalorder %s39, 1
      %p76 = por %p74, %p75
      %p78 = scmp.ne.s32.totalorder %s61, %s77
      %p79 = scmp.eq.s32.totalorder %s39, 0
      %p80 = por %p78, %p79
      %s81 = ssub.s32 %s40, %s52
      %p82 = scmp.eq.s32.totalorder %s81, 0
      %s84 = sadd.s32 %s83, 1
      %s85 = scalar_select %p82, %s83, %s84
      %p88 = pneg %p82
      %p89 = scmp.eq.s32.totalorder %s33, 1
      %p90 = por %p88, %p89
      %p91 = scmp.ne.s32.totalorder %s83, %s86
      %p92 = scmp.eq.s32.totalorder %s33, 0
      %p93 = por %p91, %p92
      %p94 = scmp.ne.s32.totalorder %s83, %s86
      %p95 = scmp.eq.s32.totalorder %s38, 1
      %p96 = por %p94, %p95
      %p97 = scmp.ne.s32.totalorder %s86, %s87
      %p98 = scmp.eq.s32.totalorder %s38, 0
      %p99 = por %p97, %p98
      %p100 = scmp.ne.s32.totalorder %s86, %s87
      %p101 = scmp.eq.s32.totalorder %s39, 1
      %p102 = por %p100, %p101
      %p104 = scmp.ne.s32.totalorder %s87, %s103
      %p105 = scmp.eq.s32.totalorder %s39, 0
      %p106 = por %p104, %p105
      %s107 = ssub.s32 %s40, %s52
      %p108 = scmp.eq.s32.totalorder %s107, 0
      %s110 = sadd.s32 %s109, 1
      %s111 = scalar_select %p108, %s109, %s110
      %p114 = pneg %p108
      %p115 = scmp.eq.s32.totalorder %s33, 1
      %p116 = por %p114, %p115
      %p117 = scmp.ne.s32.totalorder %s109, %s112
      %p118 = scmp.eq.s32.totalorder %s33, 0
      %p119 = por %p117, %p118
      %p120 = scmp.ne.s32.totalorder %s109, %s112
      %p121 = scmp.eq.s32.totalorder %s38, 1
      %p122 = por %p120, %p121
      %p123 = scmp.ne.s32.totalorder %s112, %s113
      %p124 = scmp.eq.s32.totalorder %s38, 0
      %p125 = por %p123, %p124
      %p126 = scmp.ne.s32.totalorder %s112, %s113
      %p127 = scmp.eq.s32.totalorder %s39, 1
      %p128 = por %p126, %p127
      %p130 = scmp.ne.s32.totalorder %s113, %s129
      %p131 = scmp.eq.s32.totalorder %s39, 0
      %p132 = por %p130, %p131
      %s134 = sadd.s32 %s133, 1
      %p137 = scmp.eq.s32.totalorder %s33, 1
      %p138 = scmp.ne.s32.totalorder %s133, %s135
      %p139 = scmp.eq.s32.totalorder %s33, 0
      %p140 = por %p138, %p139
      %p141 = scmp.ne.s32.totalorder %s133, %s135
      %p142 = scmp.eq.s32.totalorder %s38, 1
      %p143 = por %p141, %p142
      %p144 = scmp.ne.s32.totalorder %s135, %s136
      %p145 = scmp.eq.s32.totalorder %s38, 0
      %p146 = por %p144, %p145
      %p147 = scmp.ne.s32.totalorder %s135, %s136
      %p148 = scmp.eq.s32.totalorder %s39, 1
      %p149 = por %p147, %p148
      %p151 = scmp.ne.s32.totalorder %s136, %s150
      %p152 = scmp.eq.s32.totalorder %s39, 0
      %p153 = por %p151, %p152
      %s155 = sadd.s32 %s154, 1
      %p158 = scmp.eq.s32.totalorder %s33, 1
      %p159 = scmp.ne.s32.totalorder %s154, %s156
      %p160 = scmp.eq.s32.totalorder %s33, 0
      %p161 = por %p159, %p160
      %p162 = scmp.ne.s32.totalorder %s154, %s156
      %p163 = scmp.eq.s32.totalorder %s38, 1
      %p164 = por %p162, %p163
      %p165 = scmp.ne.s32.totalorder %s156, %s157
      %p166 = scmp.eq.s32.totalorder %s38, 0
      %p167 = por %p165, %p166
      %p168 = scmp.ne.s32.totalorder %s156, %s157
      %p169 = scmp.eq.s32.totalorder %s39, 1
      %p170 = por %p168, %p169
      %p172 = scmp.ne.s32.totalorder %s157, %s171
      %p173 = scmp.eq.s32.totalorder %s39, 0
      %p174 = por %p172, %p173
      %s175 = ssub.s32 %s40, %s52
      %s176 = ssub.s32 %s41, %s48
      %s177 = sor.u32 %s175, %s176
      %p178 = scmp.eq.s32.totalorder %s177, 0
      %s180 = sadd.s32 %s179, 1
      %s181 = scalar_select %p178, %s179, %s180
      %p184 = pneg %p178
      %p185 = scmp.eq.s32.totalorder %s33, 1
      %p186 = por %p184, %p185
      %p187 = scmp.ne.s32.totalorder %s179, %s182
      %p188 = scmp.eq.s32.totalorder %s33, 0
      %p189 = por %p187, %p188
      %p190 = scmp.ne.s32.totalorder %s179, %s182
      %p191 = scmp.eq.s32.totalorder %s38, 1
      %p192 = por %p190, %p191
      %p193 = scmp.ne.s32.totalorder %s182, %s183
      %p194 = scmp.eq.s32.totalorder %s38, 0
      %p195 = por %p193, %p194
      %p196 = scmp.ne.s32.totalorder %s182, %s183
      %p197 = scmp.eq.s32.totalorder %s39, 1
      %p198 = por %p196, %p197
      %p200 = scmp.ne.s32.totalorder %s183, %s199
      %p201 = scmp.eq.s32.totalorder %s39, 0
      %p202 = por %p200, %p201
      %s203 = ssub.s32 %s40, %s52
      %p204 = scmp.eq.s32.totalorder %s203, 0
      %s206 = sadd.s32 %s205, 1
      %s207 = scalar_select %p204, %s205, %s206
      %p210 = pneg %p204
      %p211 = scmp.eq.s32.totalorder %s33, 1
      %p212 = por %p210, %p211
      %p213 = scmp.ne.s32.totalorder %s205, %s208
      %p214 = scmp.eq.s32.totalorder %s33, 0
      %p215 = por %p213, %p214
      %p216 = scmp.ne.s32.totalorder %s205, %s208
      %p217 = scmp.eq.s32.totalorder %s38, 1
      %p218 = por %p216, %p217
      %p219 = scmp.ne.s32.totalorder %s208, %s209
      %p220 = scmp.eq.s32.totalorder %s38, 0
      %p221 = por %p219, %p220
      %p222 = scmp.ne.s32.totalorder %s208, %s209
      %p223 = scmp.eq.s32.totalorder %s39, 1
      %p224 = por %p222, %p223
      %p226 = scmp.ne.s32.totalorder %s209, %s225
      %p227 = scmp.eq.s32.totalorder %s39, 0
      %p228 = por %p226, %p227
      %s229 = ssub.s32 %s40, %s52
      %p230 = scmp.eq.s32.totalorder %s229, 0
      %s232 = sadd.s32 %s231, 1
      %s233 = scalar_select %p230, %s231, %s232
      %p236 = pneg %p230
      %p237 = scmp.eq.s32.totalorder %s33, 1
      %p238 = por %p236, %p237
      %p239 = scmp.ne.s32.totalorder %s231, %s234
      %p240 = scmp.eq.s32.totalorder %s33, 0
      %p241 = por %p239, %p240
      %p242 = scmp.ne.s32.totalorder %s231, %s234
      %p243 = scmp.eq.s32.totalorder %s38, 1
      %p244 = por %p242, %p243
      %p245 = scmp.ne.s32.totalorder %s234, %s235
      %p246 = scmp.eq.s32.totalorder %s38, 0
      %p247 = por %p245, %p246
      %p248 = scmp.ne.s32.totalorder %s234, %s235
      %p249 = scmp.eq.s32.totalorder %s39, 1
      %p250 = por %p248, %p249
      %p252 = scmp.ne.s32.totalorder %s235, %s251
      %p253 = scmp.eq.s32.totalorder %s39, 0
      %p254 = por %p252, %p253
      %s256 = sadd.s32 %s255, 1
      %p259 = scmp.eq.s32.totalorder %s33, 1
      %p260 = scmp.ne.s32.totalorder %s255, %s257
      %p261 = scmp.eq.s32.totalorder %s33, 0
      %p262 = por %p260, %p261
      %p263 = scmp.ne.s32.totalorder %s255, %s257
      %p264 = scmp.eq.s32.totalorder %s38, 1
      %p265 = por %p263, %p264
      %p266 = scmp.ne.s32.totalorder %s257, %s258
      %p267 = scmp.eq.s32.totalorder %s38, 0
      %p268 = por %p266, %p267
      %p269 = scmp.ne.s32.totalorder %s257, %s258
      %p270 = scmp.eq.s32.totalorder %s39, 1
      %p271 = por %p269, %p270
      %p273 = scmp.ne.s32.totalorder %s258, %s272
      %p274 = scmp.eq.s32.totalorder %s39, 0
      %p275 = por %p273, %p274
      %s277 = sadd.s32 %s276, 1
      %p280 = scmp.eq.s32.totalorder %s33, 1
      %p281 = scmp.ne.s32.totalorder %s276, %s278
      %p282 = scmp.eq.s32.totalorder %s33, 0
      %p283 = por %p281, %p282
      %p284 = scmp.ne.s32.totalorder %s276, %s278
      %p285 = scmp.eq.s32.totalorder %s38, 1
      %p286 = por %p284, %p285
      %p287 = scmp.ne.s32.totalorder %s278, %s279
      %p288 = scmp.eq.s32.totalorder %s38, 0
      %p289 = por %p287, %p288
      %p290 = scmp.ne.s32.totalorder %s278, %s279
      %p291 = scmp.eq.s32.totalorder %s39, 1
      %p292 = por %p290, %p291
      %p294 = scmp.ne.s32.totalorder %s279, %s293
      %p295 = scmp.eq.s32.totalorder %s39, 0
      %p296 = por %p294, %p295
      %s297 = ssub.s32 %s40, %s52
      %s298 = ssub.s32 %s41, %s48
      %s299 = sor.u32 %s297, %s298
      %p300 = scmp.eq.s32.totalorder %s299, 0
      %s302 = sadd.s32 %s301, 1
      %s303 = scalar_select %p300, %s301, %s302
      %p306 = pneg %p300
      %p307 = scmp.eq.s32.totalorder %s33, 1
      %p308 = por %p306, %p307
      %p309 = scmp.ne.s32.totalorder %s301, %s304
      %p310 = scmp.eq.s32.totalorder %s33, 0
      %p311 = por %p309, %p310
      %p312 = scmp.ne.s32.totalorder %s301, %s304
      %p313 = scmp.eq.s32.totalorder %s38, 1
      %p314 = por %p312, %p313
      %p315 = scmp.ne.s32.totalorder %s304, %s305
      %p316 = scmp.eq.s32.totalorder %s38, 0
      %p317 = por %p315, %p316
      %p318 = scmp.ne.s32.totalorder %s304, %s305
      %p319 = scmp.eq.s32.totalorder %s39, 1
      %p320 = por %p318, %p319
      %p322 = scmp.ne.s32.totalorder %s305, %s321
      %p323 = scmp.eq.s32.totalorder %s39, 0
      %p324 = por %p322, %p323
      %p325 = scmp.le.s32.totalorder 1, %s33
      %p326 = scmp.lt.s32.totalorder %s33, 3
      %p327 = pnand %p325, %p326
      %p328 = pneg %p327
      // Predicated region
      $region9: #{_bottleneck_forward.9} parent=5 // pred_check
        _
      $region10: #{_bottleneck_forward.9} parent=5 // pred_check_branch
        %330 = sbr.rel (%p327) target = $region12
      $region11: #{_bottleneck_forward.9} parent=5 // pred_region
        %s331 = ssub.s32 %s33, 1
        // Predicated region
        $region13: #{_bottleneck_forward.9} parent=11 // pred_check
          %p332 = pneg %p146
        $region14: #{_bottleneck_forward.9} parent=11 // pred_check_branch
          %334 = sbr.rel (%p332) target = $region16
        $region15: #{_bottleneck_forward.9} parent=11 // pred_region
          %s336 = ssub.s32 16, 16
          %337 = vsyncadd [#allocation9], %s336
          %s339 = sshll.u32 [#allocation8], 4
          %s340 = int_to_ptr.vmem [resolvable:$true] %s339
          %342 = dma.hbm_to_vmem [thread:$0]  %s3, 16, %s340, [#allocation9]
        $region16: #{_bottleneck_forward.9} parent=11 // pred_fallthru
          _
        // Predicated region
        $region17: #{_bottleneck_forward.9} parent=11 // pred_check
          %p343 = pneg %p167
        $region18: #{_bottleneck_forward.9} parent=11 // pred_check_branch
          %345 = sbr.rel (%p343) target = $region20
        $region19: #{_bottleneck_forward.9} parent=11 // pred_region
          %s347 = ssub.s32 16, 16
          %348 = vsyncadd [#allocation9], %s347
          %s350 = sshll.u32 [#allocation10], 4
          %s351 = int_to_ptr.vmem [resolvable:$true] %s350
          %353 = dma.hbm_to_vmem [thread:$0]  %s4, 16, %s351, [#allocation9]
        $region20: #{_bottleneck_forward.9} parent=11 // pred_fallthru
          _
        // Predicated region
        $region21: #{_bottleneck_forward.9} parent=11 // pred_check
          %p354 = pneg %p268
        $region22: #{_bottleneck_forward.9} parent=11 // pred_check_branch
          %356 = sbr.rel (%p354) target = $region24
        $region23: #{_bottleneck_forward.9} parent=11 // pred_region
          %s358 = ssub.s32 16, 16
          %359 = vsyncadd [#allocation15], %s358
          %s361 = sshll.u32 [#allocation16], 4
          %s362 = int_to_ptr.vmem [resolvable:$true] %s361
          %364 = dma.hbm_to_vmem [thread:$0]  %s8, 16, %s362, [#allocation15]
        $region24: #{_bottleneck_forward.9} parent=11 // pred_fallthru
          _
        // Predicated region
        $region25: #{_bottleneck_forward.9} parent=11 // pred_check
          %p365 = pneg %p289
        $region26: #{_bottleneck_forward.9} parent=11 // pred_check_branch
          %367 = sbr.rel (%p365) target = $region28
        $region27: #{_bottleneck_forward.9} parent=11 // pred_region
          %s369 = ssub.s32 16, 16
          %370 = vsyncadd [#allocation18], %s369
          %s372 = sshll.u32 [#allocation17], 4
          %s373 = int_to_ptr.vmem [resolvable:$true] %s372
          %375 = dma.hbm_to_vmem [thread:$0]  %s9, 16, %s373, [#allocation18]
        $region28: #{_bottleneck_forward.9} parent=11 // pred_fallthru
          _
      $region12: #{_bottleneck_forward.9} parent=5 // pred_fallthru
        _
      %p376 = scmp.lt.s32.totalorder %s33, 2
      // Predicated region
      $region29: #{_bottleneck_forward.9} parent=5 // pred_check
        %p377 = pneg %p376
      $region30: #{_bottleneck_forward.9} parent=5 // pred_check_branch
        %379 = sbr.rel (%p377) target = $region32
      $region31: #{_bottleneck_forward.9} parent=5 // pred_region
        // Predicated region
        $region33: #{_bottleneck_forward.9} parent=31 // pred_check
          %p380 = pneg %p67
        $region34: #{_bottleneck_forward.9} parent=31 // pred_check_branch
          %382 = sbr.rel (%p380) target = $region36
        $region35: #{_bottleneck_forward.9} parent=31 // pred_region
          %s383 = sand.u32 %s57, 1
          %s384 = scalar_lea.sflag [#allocation3], %s383
          %s385 = sand.u32 %s57, 1
          %s386 = smul.addr %s385, 32
          %s387 = scalar_lea.vmem [#allocation2], %s386
          %s388 = smul.u32 8, %s41
          %s390 = ssub.s32 512, 512
          %391 = vsyncadd %s384, %s390
          %s392 = smul.addr %s40, 8
          %s393 = sadd.s32 %s388, %s392
          %s394 = smul.addr %s393, 64
          %s395 = scalar_lea.hbm %s0, %s394
          %s396 = sshll.u32 %s387, 4
          %s397 = int_to_ptr.vmem [resolvable:$true] %s396
          %402 = dma.hbm_to_vmem [thread:$0]  %s395, 512, %s397, %s384, 64, 64, 4
        $region36: #{_bottleneck_forward.9} parent=31 // pred_fallthru
          _
        // Predicated region
        $region37: #{_bottleneck_forward.9} parent=31 // pred_check
          %p403 = pneg %p93
        $region38: #{_bottleneck_forward.9} parent=31 // pred_check_branch
          %405 = sbr.rel (%p403) target = $region40
        $region39: #{_bottleneck_forward.9} parent=31 // pred_region
          %s406 = sand.u32 %s33, 1
          %s407 = scalar_lea.sflag [#allocation6], %s406
          %s408 = sand.u32 %s83, 1
          %s409 = scalar_lea.vmem [#allocation5], %s408
          %s411 = ssub.s32 16, 16
          %412 = vsyncadd %s407, %s411
          %s413 = smul.addr %s40, 16
          %s414 = scalar_lea.hbm %s1, %s413
          %s416 = sshll.u32 %s409, 4
          %s417 = int_to_ptr.vmem [resolvable:$true] %s416
          %419 = dma.hbm_to_vmem [thread:$0]  %s414, 16, %s417, %s407
        $region40: #{_bottleneck_forward.9} parent=31 // pred_fallthru
          _
        // Predicated region
        $region41: #{_bottleneck_forward.9} parent=31 // pred_check
          %p420 = pneg %p119
        $region42: #{_bottleneck_forward.9} parent=31 // pred_check_branch
          %422 = sbr.rel (%p420) target = $region44
        $region43: #{_bottleneck_forward.9} parent=31 // pred_region
          %s423 = sand.u32 %s33, 1
          %s424 = scalar_lea.sflag [#allocation6], %s423
          %s425 = sand.u32 %s109, 1
          %s426 = scalar_lea.vmem [#allocation7], %s425
          %s428 = ssub.s32 16, 16
          %429 = vsyncadd %s424, %s428
          %s430 = smul.addr %s40, 16
          %s431 = scalar_lea.hbm %s2, %s430
          %s433 = sshll.u32 %s426, 4
          %s434 = int_to_ptr.vmem [resolvable:$true] %s433
          %436 = dma.hbm_to_vmem [thread:$0]  %s431, 16, %s434, %s424
        $region44: #{_bottleneck_forward.9} parent=31 // pred_fallthru
          _
        // Predicated region
        $region45: #{_bottleneck_forward.9} parent=31 // pred_check
          %p437 = pneg %p189
        $region46: #{_bottleneck_forward.9} parent=31 // pred_check_branch
          %439 = sbr.rel (%p437) target = $region48
        $region47: #{_bottleneck_forward.9} parent=31 // pred_region
          %s440 = sand.u32 %s33, 1
          %s441 = scalar_lea.sflag [#allocation12], %s440
          %s442 = sand.u32 %s179, 1
          %s443 = smul.addr %s442, 32
          %s444 = scalar_lea.vmem [#allocation11], %s443
          %s445 = smul.u32 8, %s41
          %s447 = ssub.s32 512, 512
          %448 = vsyncadd %s441, %s447
          %s449 = smul.addr %s40, 8
          %s450 = sadd.s32 %s445, %s449
          %s451 = smul.addr %s450, 64
          %s452 = scalar_lea.hbm %s5, %s451
          %s453 = sshll.u32 %s444, 4
          %s454 = int_to_ptr.vmem [resolvable:$true] %s453
          %459 = dma.hbm_to_vmem [thread:$0]  %s452, 512, %s454, %s441, 64, 64, 4
        $region48: #{_bottleneck_forward.9} parent=31 // pred_fallthru
          _
        // Predicated region
        $region49: #{_bottleneck_forward.9} parent=31 // pred_check
          %p460 = pneg %p215
        $region50: #{_bottleneck_forward.9} parent=31 // pred_check_branch
          %462 = sbr.rel (%p460) target = $region52
        $region51: #{_bottleneck_forward.9} parent=31 // pred_region
          %s463 = sand.u32 %s33, 1
          %s464 = scalar_lea.sflag [#allocation12], %s463
          %s465 = sand.u32 %s205, 1
          %s466 = scalar_lea.vmem [#allocation13], %s465
          %s468 = ssub.s32 16, 16
          %469 = vsyncadd %s464, %s468
          %s470 = smul.addr %s40, 16
          %s471 = scalar_lea.hbm %s6, %s470
          %s473 = sshll.u32 %s466, 4
          %s474 = int_to_ptr.vmem [resolvable:$true] %s473
          %476 = dma.hbm_to_vmem [thread:$0]  %s471, 16, %s474, %s464
        $region52: #{_bottleneck_forward.9} parent=31 // pred_fallthru
          _
        // Predicated region
        $region53: #{_bottleneck_forward.9} parent=31 // pred_check
          %p477 = pneg %p241
        $region54: #{_bottleneck_forward.9} parent=31 // pred_check_branch
          %479 = sbr.rel (%p477) target = $region56
        $region55: #{_bottleneck_forward.9} parent=31 // pred_region
          %s480 = sand.u32 %s33, 1
          %s481 = scalar_lea.sflag [#allocation15], %s480
          %s482 = sand.u32 %s231, 1
          %s483 = scalar_lea.vmem [#allocation14], %s482
          %s485 = ssub.s32 16, 16
          %486 = vsyncadd %s481, %s485
          %s487 = smul.addr %s40, 16
          %s488 = scalar_lea.hbm %s7, %s487
          %s490 = sshll.u32 %s483, 4
          %s491 = int_to_ptr.vmem [resolvable:$true] %s490
          %493 = dma.hbm_to_vmem [thread:$0]  %s488, 16, %s491, %s481
        $region56: #{_bottleneck_forward.9} parent=31 // pred_fallthru
          _
      $region32: #{_bottleneck_forward.9} parent=5 // pred_fallthru
        _
      %p494 = scmp.le.s32.totalorder 1, %s33
      %p495 = scmp.lt.s32.totalorder %s33, 3
      %p496 = pnand %p494, %p495
      %p497 = pneg %p496
      // Predicated region
      $region57: #{_bottleneck_forward.9} parent=5 // pred_check
        _
      $region58: #{_bottleneck_forward.9} parent=5 // pred_check_branch
        %499 = sbr.rel (%p496) target = $region60
      $region59: #{_bottleneck_forward.9} parent=5 // pred_region
        %s500 = ssub.s32 %s33, 1
        %s501 = sand.u32 %s60, 1
        %s502 = scalar_lea.sflag [#allocation3], %s501
        %s503 = sand.u32 %s60, 1
        %s504 = smul.addr %s503, 32
        %s505 = scalar_lea.vmem [#allocation2], %s504
        // Predicated region
        $region61: #{_bottleneck_forward.9} parent=59 // pred_check
          %p506 = pneg %p73
        $region62: #{_bottleneck_forward.9} parent=59 // pred_check_branch
          %508 = sbr.rel (%p506) target = $region64
        $region63: #{_bottleneck_forward.9} parent=59 // pred_region
          %509 = dma.done %s502, 512
        $region64: #{_bottleneck_forward.9} parent=59 // pred_fallthru
          _
        %s510 = sand.u32 %s38, 1
        %s511 = scalar_lea.sflag [#allocation6], %s510
        %s512 = sand.u32 %s86, 1
        %s513 = scalar_lea.vmem [#allocation5], %s512
        // Predicated region
        $region65: #{_bottleneck_forward.9} parent=59 // pred_check
          %p514 = pneg %p99
        $region66: #{_bottleneck_forward.9} parent=59 // pred_check_branch
          %516 = sbr.rel (%p514) target = $region68
        $region67: #{_bottleneck_forward.9} parent=59 // pred_region
          %517 = dma.done %s511, 16
        $region68: #{_bottleneck_forward.9} parent=59 // pred_fallthru
          _
        %s518 = sand.u32 %s38, 1
        %s519 = scalar_lea.sflag [#allocation6], %s518
        %s520 = sand.u32 %s112, 1
        %s521 = scalar_lea.vmem [#allocation7], %s520
        // Predicated region
        $region69: #{_bottleneck_forward.9} parent=59 // pred_check
          %p522 = pneg %p125
        $region70: #{_bottleneck_forward.9} parent=59 // pred_check_branch
          %524 = sbr.rel (%p522) target = $region72
        $region71: #{_bottleneck_forward.9} parent=59 // pred_region
          %525 = dma.done %s519, 16
        $region72: #{_bottleneck_forward.9} parent=59 // pred_fallthru
          _
        // Predicated region
        $region73: #{_bottleneck_forward.9} parent=59 // pred_check
          %p526 = pneg %p146
        $region74: #{_bottleneck_forward.9} parent=59 // pred_check_branch
          %528 = sbr.rel (%p526) target = $region76
        $region75: #{_bottleneck_forward.9} parent=59 // pred_region
          %529 = dma.done [#allocation9], 16
        $region76: #{_bottleneck_forward.9} parent=59 // pred_fallthru
          _
        // Predicated region
        $region77: #{_bottleneck_forward.9} parent=59 // pred_check
          %p530 = pneg %p167
        $region78: #{_bottleneck_forward.9} parent=59 // pred_check_branch
          %532 = sbr.rel (%p530) target = $region80
        $region79: #{_bottleneck_forward.9} parent=59 // pred_region
          %533 = dma.done [#allocation9], 16
        $region80: #{_bottleneck_forward.9} parent=59 // pred_fallthru
          _
        %s534 = sand.u32 %s38, 1
        %s535 = scalar_lea.sflag [#allocation12], %s534
        %s536 = sand.u32 %s182, 1
        %s537 = smul.addr %s536, 32
        %s538 = scalar_lea.vmem [#allocation11], %s537
        // Predicated region
        $region81: #{_bottleneck_forward.9} parent=59 // pred_check
          %p539 = pneg %p195
        $region82: #{_bottleneck_forward.9} parent=59 // pred_check_branch
          %541 = sbr.rel (%p539) target = $region84
        $region83: #{_bottleneck_forward.9} parent=59 // pred_region
          %542 = dma.done %s535, 512
        $region84: #{_bottleneck_forward.9} parent=59 // pred_fallthru
          _
        %s543 = sand.u32 %s38, 1
        %s544 = scalar_lea.sflag [#allocation12], %s543
        %s545 = sand.u32 %s208, 1
        %s546 = scalar_lea.vmem [#allocation13], %s545
        // Predicated region
        $region85: #{_bottleneck_forward.9} parent=59 // pred_check
          %p547 = pneg %p221
        $region86: #{_bottleneck_forward.9} parent=59 // pred_check_branch
          %549 = sbr.rel (%p547) target = $region88
        $region87: #{_bottleneck_forward.9} parent=59 // pred_region
          %550 = dma.done %s544, 16
        $region88: #{_bottleneck_forward.9} parent=59 // pred_fallthru
          _
        %s551 = sand.u32 %s38, 1
        %s552 = scalar_lea.sflag [#allocation15], %s551
        %s553 = sand.u32 %s234, 1
        %s554 = scalar_lea.vmem [#allocation14], %s553
        // Predicated region
        $region89: #{_bottleneck_forward.9} parent=59 // pred_check
          %p555 = pneg %p247
        $region90: #{_bottleneck_forward.9} parent=59 // pred_check_branch
          %557 = sbr.rel (%p555) target = $region92
        $region91: #{_bottleneck_forward.9} parent=59 // pred_region
          %558 = dma.done %s552, 16
        $region92: #{_bottleneck_forward.9} parent=59 // pred_fallthru
          _
        // Predicated region
        $region93: #{_bottleneck_forward.9} parent=59 // pred_check
          %p559 = pneg %p268
        $region94: #{_bottleneck_forward.9} parent=59 // pred_check_branch
          %561 = sbr.rel (%p559) target = $region96
        $region95: #{_bottleneck_forward.9} parent=59 // pred_region
          %562 = dma.done [#allocation15], 16
        $region96: #{_bottleneck_forward.9} parent=59 // pred_fallthru
          _
        // Predicated region
        $region97: #{_bottleneck_forward.9} parent=59 // pred_check
          %p563 = pneg %p289
        $region98: #{_bottleneck_forward.9} parent=59 // pred_check_branch
          %565 = sbr.rel (%p563) target = $region100
        $region99: #{_bottleneck_forward.9} parent=59 // pred_region
          %566 = dma.done [#allocation18], 16
        $region100: #{_bottleneck_forward.9} parent=59 // pred_fallthru
          _
        %s567 = sand.u32 %s60, 1
        %s568 = scalar_lea.sflag [#allocation3], %s567
        %s569 = sand.u32 %s60, 1
        %s570 = smul.addr %s569, 32
        %s571 = scalar_lea.vmem [#allocation2], %s570
        %p572 = pneg %p73
        %p573 = pneg %p70
        %s574 = sand.u32 %s38, 1
        %s575 = scalar_lea.sflag [#allocation6], %s574
        %s576 = sand.u32 %s86, 1
        %s577 = scalar_lea.vmem [#allocation5], %s576
        %p578 = pneg %p99
        %p579 = pneg %p96
        %s580 = sand.u32 %s38, 1
        %s581 = scalar_lea.sflag [#allocation6], %s580
        %s582 = sand.u32 %s112, 1
        %s583 = scalar_lea.vmem [#allocation7], %s582
        %p584 = pneg %p125
        %p585 = pneg %p122
        %p586 = pneg %p146
        %p587 = pneg %p143
        %p588 = pneg %p167
        %p589 = pneg %p164
        %s590 = sand.u32 %s38, 1
        %s591 = scalar_lea.sflag [#allocation12], %s590
        %s592 = sand.u32 %s182, 1
        %s593 = smul.addr %s592, 32
        %s594 = scalar_lea.vmem [#allocation11], %s593
        %p595 = pneg %p195
        %p596 = pneg %p192
        %s597 = sand.u32 %s38, 1
        %s598 = scalar_lea.sflag [#allocation12], %s597
        %s599 = sand.u32 %s208, 1
        %s600 = scalar_lea.vmem [#allocation13], %s599
        %p601 = pneg %p221
        %p602 = pneg %p218
        %s603 = sand.u32 %s38, 1
        %s604 = scalar_lea.sflag [#allocation15], %s603
        %s605 = sand.u32 %s234, 1
        %s606 = scalar_lea.vmem [#allocation14], %s605
        %p607 = pneg %p247
        %p608 = pneg %p244
        %p609 = pneg %p268
        %p610 = pneg %p265
        %p611 = pneg %p289
        %p612 = pneg %p286
        %p613 = pneg %p317
        %p614 = pneg %p314
        %s615 = sand.u32 %s304, 1
        %s616 = scalar_lea.sflag [#allocation4], %s615
        %s617 = sand.u32 %s304, 1
        %s618 = smul.addr %s617, 64
        %s619 = scalar_lea.vmem [#allocation19], %s618
        %s620 = smul.u32 8, %s43
        %s621 = smul.u32 8, %s43
        %s622 = smul.u32 8, %s43
        %v623 = vld [vmem:[%s513] sm:$0x1]
        %v624 = vld [vmem:[%s521] sm:$0x1]
        %v625 = vld [vmem:[#allocation8] sm:$0x1]
        %v626 = vld [vmem:[#allocation10] sm:$0x1]
        %v627 = vmul.f32 %v623, 0.015625
        %v628 = vmul.f32 %v624, 0.015625
        %v629 = vmul.f32 %v627, %v627
        %v630 = vsub.f32 %v628, %v629
        %v631 = vadd.f32 %v630, 1e-05
        %v632 = vrsqrt.pop %v631
        %v633 = vmul.f32 %v632, %v625
        %v634 = vmul.f32 %v627, %v633
        %v635 = vsub.f32 %v626, %v634
        %v636 = vld [vmem:[%s546] sm:$0x1]
        %v637 = vld [vmem:[%s554] sm:$0x1]
        %v638 = vld [vmem:[#allocation16] sm:$0x1]
        %v639 = vld [vmem:[#allocation17] sm:$0x1]
        %v640 = vmul.f32 %v636, 0.015625
        %v641 = vmul.f32 %v637, 0.015625
        %v642 = vmul.f32 %v640, %v640
        %v643 = vsub.f32 %v641, %v642
        %v644 = vadd.f32 %v643, 1e-05
        %v645 = vrsqrt.pop %v644
        %v646 = vmul.f32 %v645, %v638
        %v647 = vmul.f32 %v640, %v646
        %v648 = vsub.f32 %v639, %v647
        %v649 = vld [vmem:[%s505] sm:$0xf]
        %v650 = vld [vmem:[%s505 + $0x4] sm:$0xf]
        %v651 = vld [vmem:[%s505 + $0x8] sm:$0xf]
        %v652 = vld [vmem:[%s505 + $0xc] sm:$0xf]
        %v653 = vld [vmem:[%s505 + $0x10] sm:$0xf]
        %v654 = vld [vmem:[%s505 + $0x14] sm:$0xf]
        %v655 = vld [vmem:[%s505 + $0x18] sm:$0xf]
        %v656 = vld [vmem:[%s505 + $0x1c] sm:$0xf]
        %v657 = vunpack.c.l.bf16 %v649
        %v658 = vunpack.c.l.bf16 %v650
        %v659 = vunpack.c.l.bf16 %v651
        %v660 = vunpack.c.l.bf16 %v652
        %v661 = vunpack.c.l.bf16 %v653
        %v662 = vunpack.c.l.bf16 %v654
        %v663 = vunpack.c.l.bf16 %v655
        %v664 = vunpack.c.l.bf16 %v656
        %v666 = vlaneseq
        %v667 = vshrl.u32 %v666, 7
        %v668 = vsub.s32 0, %v667
        %v669 = vrot.slane %v633, %v668
        %v671 = vmul.f32 %v657, %v669
        %v672 = vmul.f32 %v658, %v669
        %v673 = vmul.f32 %v659, %v669
        %v674 = vmul.f32 %v660, %v669
        %v675 = vmul.f32 %v661, %v669
        %v676 = vmul.f32 %v662, %v669
        %v677 = vmul.f32 %v663, %v669
        %v678 = vmul.f32 %v664, %v669
        %v680 = vlaneseq
        %v681 = vshrl.u32 %v680, 7
        %v682 = vsub.s32 0, %v681
        %v683 = vrot.slane %v635, %v682
        %v685 = vadd.f32 %v671, %v683
        %v686 = vadd.f32 %v672, %v683
        %v687 = vadd.f32 %v673, %v683
        %v688 = vadd.f32 %v674, %v683
        %v689 = vadd.f32 %v675, %v683
        %v690 = vadd.f32 %v676, %v683
        %v691 = vadd.f32 %v677, %v683
        %v692 = vadd.f32 %v678, %v683
        %v693 = vld [vmem:[%s538] sm:$0xf]
        %v694 = vld [vmem:[%s538 + $0x4] sm:$0xf]
        %v695 = vld [vmem:[%s538 + $0x8] sm:$0xf]
        %v696 = vld [vmem:[%s538 + $0xc] sm:$0xf]
        %v697 = vld [vmem:[%s538 + $0x10] sm:$0xf]
        %v698 = vld [vmem:[%s538 + $0x14] sm:$0xf]
        %v699 = vld [vmem:[%s538 + $0x18] sm:$0xf]
        %v700 = vld [vmem:[%s538 + $0x1c] sm:$0xf]
        %v701 = vunpack.c.l.bf16 %v693
        %v702 = vunpack.c.l.bf16 %v694
        %v703 = vunpack.c.l.bf16 %v695
        %v704 = vunpack.c.l.bf16 %v696
        %v705 = vunpack.c.l.bf16 %v697
        %v706 = vunpack.c.l.bf16 %v698
        %v707 = vunpack.c.l.bf16 %v699
        %v708 = vunpack.c.l.bf16 %v700
        %v710 = vlaneseq
        %v711 = vshrl.u32 %v710, 7
        %v712 = vsub.s32 0, %v711
        %v713 = vrot.slane %v646, %v712
        %v715 = vmul.f32 %v701, %v713
        %v716 = vmul.f32 %v702, %v713
        %v717 = vmul.f32 %v703, %v713
        %v718 = vmul.f32 %v704, %v713
        %v719 = vmul.f32 %v705, %v713
        %v720 = vmul.f32 %v706, %v713
        %v721 = vmul.f32 %v707, %v713
        %v722 = vmul.f32 %v708, %v713
        %v724 = vlaneseq
        %v725 = vshrl.u32 %v724, 7
        %v726 = vsub.s32 0, %v725
        %v727 = vrot.slane %v648, %v726
        %v729 = vadd.f32 %v715, %v727
        %v730 = vadd.f32 %v716, %v727
        %v731 = vadd.f32 %v717, %v727
        %v732 = vadd.f32 %v718, %v727
        %v733 = vadd.f32 %v719, %v727
        %v734 = vadd.f32 %v720, %v727
        %v735 = vadd.f32 %v721, %v727
        %v736 = vadd.f32 %v722, %v727
        %v737 = vadd.f32 %v685, %v729
        %v738 = vadd.f32 %v686, %v730
        %v739 = vadd.f32 %v687, %v731
        %v740 = vadd.f32 %v688, %v732
        %v741 = vadd.f32 %v689, %v733
        %v742 = vadd.f32 %v690, %v734
        %v743 = vadd.f32 %v691, %v735
        %v744 = vadd.f32 %v692, %v736
        %v745 = vmax.f32 %v737, 0.0
        %v746 = vmax.f32 %v738, 0.0
        %v747 = vmax.f32 %v739, 0.0
        %v748 = vmax.f32 %v740, 0.0
        %v749 = vmax.f32 %v741, 0.0
        %v750 = vmax.f32 %v742, 0.0
        %v751 = vmax.f32 %v743, 0.0
        %v752 = vmax.f32 %v744, 0.0
        %753 = vst [vmem:[%s619] sm:$0xff] %v745
        %754 = vst [vmem:[%s619 + $0x8] sm:$0xff] %v746
        %755 = vst [vmem:[%s619 + $0x10] sm:$0xff] %v747
        %756 = vst [vmem:[%s619 + $0x18] sm:$0xff] %v748
        %757 = vst [vmem:[%s619 + $0x20] sm:$0xff] %v749
        %758 = vst [vmem:[%s619 + $0x28] sm:$0xff] %v750
        %759 = vst [vmem:[%s619 + $0x30] sm:$0xff] %v751
        %760 = vst [vmem:[%s619 + $0x38] sm:$0xff] %v752
        %s761 = sand.u32 %s304, 1
        %s762 = scalar_lea.sflag [#allocation4], %s761
        %s763 = sand.u32 %s304, 1
        %s764 = smul.addr %s763, 64
        %s765 = scalar_lea.vmem [#allocation19], %s764
        // Predicated region
        $region101: #{_bottleneck_forward.9} parent=59 // pred_check
          %p766 = pneg %p314
        $region102: #{_bottleneck_forward.9} parent=59 // pred_check_branch
          %768 = sbr.rel (%p766) target = $region104
        $region103: #{_bottleneck_forward.9} parent=59 // pred_region
          %s769 = smul.u32 8, %s43
          %s771 = ssub.s32 1024, 1024
          %772 = vsyncadd %s762, %s771
          %s773 = smul.addr %s42, 8
          %s774 = sadd.s32 %s769, %s773
          %s775 = smul.addr %s774, 128
          %s776 = scalar_lea.hbm %s10, %s775
          %s777 = sshll.u32 %s765, 4
          %s778 = int_to_ptr.vmem [resolvable:$true] %s777
          %783 = dma.vmem_to_hbm [thread:$0]  %s778, 1024, %s776, %s762, 128, 128, 8
        $region104: #{_bottleneck_forward.9} parent=59 // pred_fallthru
          _
      $region60: #{_bottleneck_forward.9} parent=5 // pred_fallthru
        _
      %p784 = scmp.le.s32.totalorder 2, %s33
      // Predicated region
      $region105: #{_bottleneck_forward.9} parent=5 // pred_check
        %p785 = pneg %p784
      $region106: #{_bottleneck_forward.9} parent=5 // pred_check_branch
        %787 = sbr.rel (%p785) target = $region108
      $region107: #{_bottleneck_forward.9} parent=5 // pred_region
        %s788 = ssub.s32 %s33, 2
        // Predicated region
        $region109: #{_bottleneck_forward.9} parent=107 // pred_check
          %p789 = pneg %p320
        $region110: #{_bottleneck_forward.9} parent=107 // pred_check_branch
          %791 = sbr.rel (%p789) target = $region112
        $region111: #{_bottleneck_forward.9} parent=107 // pred_region
          %s792 = sand.u32 %s305, 1
          %s793 = scalar_lea.sflag [#allocation4], %s792
          %s794 = sand.u32 %s305, 1
          %s795 = smul.addr %s794, 64
          %s796 = scalar_lea.vmem [#allocation19], %s795
          %797 = dma.done %s793, 1024
        $region112: #{_bottleneck_forward.9} parent=107 // pred_fallthru
          _
      $region108: #{_bottleneck_forward.9} parent=5 // pred_fallthru
        _
    $region6: #{_bottleneck_forward.9} parent=1 // loop_footer
      %s37 = sadd.s32 1, %s33
    $region7: #{_bottleneck_forward.9} parent=1 // loop_footer_branch
      %32 = sbr.rel target = $region3
    $region8: #{_bottleneck_forward.9} parent=1 // loop_exit
      _
    %798 = vsyncpa [#allocation3], 1
    %s799 = scalar_lea.sflag [#allocation3], 1
    %800 = vsyncpa %s799, 1
    %801 = vsyncpa [#allocation6], 1
    %s802 = scalar_lea.sflag [#allocation6], 1
    %803 = vsyncpa %s802, 1
    %804 = vsyncpa [#allocation9], 1
    %805 = vsyncpa [#allocation12], 1
    %s806 = scalar_lea.sflag [#allocation12], 1
    %807 = vsyncpa %s806, 1
    %808 = vsyncpa [#allocation15], 1
    %s809 = scalar_lea.sflag [#allocation15], 1
    %810 = vsyncpa %s809, 1
    %811 = vsyncpa [#allocation18], 1
    %812 = vsyncpa [#allocation4], 1
    %s813 = scalar_lea.sflag [#allocation4], 1
    %814 = vsyncpa %s813, 1

// kernel: _bottleneck_forward.6
$region0: #{_bottleneck_forward.6}
  #allocation0 [shape = 'u32[]', space=smem, size = 0x4, offset = 0x4, fixed_abs, tag = 'smem constant byte address 0x4 - core index']
  #allocation1 [shape = 'u32[144,128]{1,0:T(1,128)}', space=vmem, size = 0x12000, scoped, tag = 'internal scratch']
  #allocation2 [shape = 'bf16[4,96,128]{2,1,0:T(16,128)(2,1)}', space=vmem, size = 0x18000, scoped, tag = 'scratch operand']
  #allocation3 [shape = 'bf16[64,1152]{1,0:T(16,128)(2,1)}', space=vmem, size = 0x24000, scoped, tag = 'scratch operand']
  %s0 = inlined_call_operand.hbm [shape: bf16[2,256,128], index: 0, kind: input, shape index: {}]
  %s1 = inlined_call_operand.hbm [shape: f32[2,1,128], index: 1, kind: input, shape index: {}]
  %s2 = inlined_call_operand.hbm [shape: f32[2,1,128], index: 2, kind: input, shape index: {}]
  %s3 = inlined_call_operand.hbm [shape: f32[1,1,128], index: 3, kind: input, shape index: {}]
  %s4 = inlined_call_operand.hbm [shape: f32[1,1,128], index: 4, kind: input, shape index: {}]
  %s5 = inlined_call_operand.hbm [shape: bf16[1152,128], index: 5, kind: input, shape index: {}]
  %s6 = inlined_call_operand.hbm [shape: bf16[64,1], index: 6, kind: input, shape index: {}]
  %s7 = inlined_call_operand.hbm [shape: bf16[64,1], index: 7, kind: input, shape index: {}]
  %s8 = inlined_call_operand.hbm [shape: bf16[2,64,128], index: 8, kind: output, shape index: {0}]
  %s9 = inlined_call_operand.hbm [shape: f32[2,1,128], index: 9, kind: output, shape index: {1}]
  %s10 = inlined_call_operand.hbm [shape: f32[2,1,128], index: 10, kind: output, shape index: {2}]
  %11 = xla_tuple %s8, %s9, %s10
  %s12 = sld [smem:[#allocation0]]
  $region113: #{_bottleneck_forward.6} parent=0
    _
  %s14 = ssub.s32 1, %s12
  %s15 = scalar_select 0, %s14, %s12
  $region1: #{_bottleneck_forward.6} parent=0
    #allocation4 [shape = 'u8[131072]{0}', space=vmem, size = 0x20000, scoped, tag = 'input window, operand 0']
    #allocation5 [shape = 's32[2]{0}', space=sflag, size = 0x8, scoped, tag = 'scoped memory for _bottleneck_forward.6']
    #allocation6 [shape = 's32[2]{0}', space=sflag, size = 0x8, scoped, tag = 'scoped memory for _bottleneck_forward.6']
    #allocation7 [shape = 'u8[1024]{0}', space=vmem, size = 0x400, scoped, tag = 'input window, operand 1']
    #allocation8 [shape = 's32[2]{0}', space=sflag, size = 0x8, scoped, tag = 'scoped memory for _bottleneck_forward.6']
    #allocation9 [shape = 'u8[1024]{0}', space=vmem, size = 0x400, scoped, tag = 'input window, operand 2']
    #allocation10 [shape = 'u8[512]{0}', space=vmem, size = 0x400, scoped, tag = 'input window, operand 3, single buffered']
    #allocation11 [shape = 's32[1]{0}', space=sflag, size = 0x4, scoped, tag = 'scoped memory for _bottleneck_forward.6']
    #allocation12 [shape = 'u8[512]{0}', space=vmem, size = 0x400, scoped, tag = 'input window, operand 4, single buffered']
    #allocation13 [shape = 'u8[294912]{0}', space=vmem, size = 0x48000, scoped, tag = 'input window, operand 5, single buffered']
    #allocation14 [shape = 's32[1]{0}', space=sflag, size = 0x4, scoped, tag = 'scoped memory for _bottleneck_forward.6']
    #allocation15 [shape = 'u8[16384]{0}', space=vmem, size = 0x4000, scoped, tag = 'input window, operand 6, single buffered']
    #allocation16 [shape = 'u8[16384]{0}', space=vmem, size = 0x4000, scoped, tag = 'input window, operand 7, single buffered']
    #allocation17 [shape = 's32[1]{0}', space=sflag, size = 0x4, scoped, tag = 'scoped memory for _bottleneck_forward.6']
    #allocation18 [shape = 'u8[32768]{0}', space=vmem, size = 0x8000, scoped, tag = 'output window, operand 0']
    #allocation19 [shape = 'u8[1024]{0}', space=vmem, size = 0x400, scoped, tag = 'output window, operand 1']
    #allocation20 [shape = 's32[2]{0}', space=sflag, size = 0x8, scoped, tag = 'scoped memory for _bottleneck_forward.6']
    #allocation21 [shape = 'u8[1024]{0}', space=vmem, size = 0x400, scoped, tag = 'output window, operand 2']
    %16 = vsyncpa [#allocation5], 0
    %s17 = scalar_lea.sflag [#allocation5], 1
    %18 = vsyncpa %s17, 0
    %19 = vsyncpa [#allocation8], 0
    %s20 = scalar_lea.sflag [#allocation8], 1
    %21 = vsyncpa %s20, 0
    %22 = vsyncpa [#allocation11], 0
    %23 = vsyncpa [#allocation14], 0
    %24 = vsyncpa [#allocation17], 0
    %25 = vsyncpa [#allocation6], 0
    %s26 = scalar_lea.sflag [#allocation6], 1
    %27 = vsyncpa %s26, 0
    %28 = vsyncpa [#allocation20], 0
    %s29 = scalar_lea.sflag [#allocation20], 1
    %30 = vsyncpa %s29, 0
    loop: start=0, step=1, limit=4
    $region2: #{_bottleneck_forward.6} parent=1 // loop_pre_header
      _
    $region3: #{_bottleneck_forward.6} parent=1 // loop_header
      %s32 = sphi 0, %s36
      %p33 = scmp.ge.s32.totalorder %s32, 4
      %s42 = sphi 0, %s44
      %s45 = sphi 0, %s42
      %s46 = sphi 0, %s45
      %s62 = sphi 0, %s46
      %s68 = sphi 0, %s70
      %s71 = sphi 0, %s68
      %s72 = sphi 0, %s71
      %s88 = sphi 0, %s72
      %s94 = sphi 0, %s96
      %s97 = sphi 0, %s94
      %s98 = sphi 0, %s97
      %s114 = sphi 0, %s98
      %s118 = sphi 0, %s118
      %s120 = sphi 0, %s118
      %s121 = sphi 0, %s120
      %s135 = sphi 0, %s121
      %s139 = sphi 0, %s139
      %s141 = sphi 0, %s139
      %s142 = sphi 0, %s141
      %s156 = sphi 0, %s142
      %s160 = sphi 0, %s160
      %s162 = sphi 0, %s160
      %s163 = sphi 0, %s162
      %s177 = sphi 0, %s163
      %s181 = sphi 0, %s181
      %s183 = sphi 0, %s181
      %s184 = sphi 0, %s183
      %s198 = sphi 0, %s184
      %s202 = sphi 0, %s202
      %s204 = sphi 0, %s202
      %s205 = sphi 0, %s204
      %s219 = sphi 0, %s205
      %s225 = sphi 0, %s227
      %s228 = sphi 0, %s225
      %s229 = sphi 0, %s228
      %s245 = sphi 0, %s229
      %s251 = sphi 0, %s253
      %s254 = sphi 0, %s251
      %s255 = sphi 0, %s254
      %s271 = sphi 0, %s255
      %s277 = sphi 0, %s279
      %s280 = sphi 0, %s277
      %s281 = sphi 0, %s280
      %s297 = sphi 0, %s281
    $region4: #{_bottleneck_forward.6} parent=1 // loop_header_branch
      %35 = sbr.rel (%p33) target = $region8
    $region5: #{_bottleneck_forward.6} parent=1 // loop_body
      %s37 = ssub.s32 %s32, 1
      %s38 = ssub.s32 %s32, 2
      %s39 = sadd.s32 %s32, 1
      %s40 = ssub.s32 %s32, %s39
      %p41 = scmp.eq.s32.totalorder %s40, 0
      %s43 = sadd.s32 %s42, 1
      %s44 = scalar_select %p41, %s42, %s43
      %p47 = pneg %p41
      %p48 = scmp.eq.s32.totalorder %s32, 1
      %p49 = por %p47, %p48
      %p50 = scmp.ne.s32.totalorder %s42, %s45
      %p51 = scmp.eq.s32.totalorder %s32, 0
      %p52 = por %p50, %p51
      %p53 = scmp.ne.s32.totalorder %s42, %s45
      %p54 = scmp.eq.s32.totalorder %s37, 1
      %p55 = por %p53, %p54
      %p56 = scmp.ne.s32.totalorder %s45, %s46
      %p57 = scmp.eq.s32.totalorder %s37, 0
      %p58 = por %p56, %p57
      %p59 = scmp.ne.s32.totalorder %s45, %s46
      %p60 = scmp.eq.s32.totalorder %s38, 1
      %p61 = por %p59, %p60
      %p63 = scmp.ne.s32.totalorder %s46, %s62
      %p64 = scmp.eq.s32.totalorder %s38, 0
      %p65 = por %p63, %p64
      %s66 = ssub.s32 %s32, %s39
      %p67 = scmp.eq.s32.totalorder %s66, 0
      %s69 = sadd.s32 %s68, 1
      %s70 = scalar_select %p67, %s68, %s69
      %p73 = pneg %p67
      %p74 = scmp.eq.s32.totalorder %s32, 1
      %p75 = por %p73, %p74
      %p76 = scmp.ne.s32.totalorder %s68, %s71
      %p77 = scmp.eq.s32.totalorder %s32, 0
      %p78 = por %p76, %p77
      %p79 = scmp.ne.s32.totalorder %s68, %s71
      %p80 = scmp.eq.s32.totalorder %s37, 1
      %p81 = por %p79, %p80
      %p82 = scmp.ne.s32.totalorder %s71, %s72
      %p83 = scmp.eq.s32.totalorder %s37, 0
      %p84 = por %p82, %p83
      %p85 = scmp.ne.s32.totalorder %s71, %s72
      %p86 = scmp.eq.s32.totalorder %s38, 1
      %p87 = por %p85, %p86
      %p89 = scmp.ne.s32.totalorder %s72, %s88
      %p90 = scmp.eq.s32.totalorder %s38, 0
      %p91 = por %p89, %p90
      %s92 = ssub.s32 %s32, %s39
      %p93 = scmp.eq.s32.totalorder %s92, 0
      %s95 = sadd.s32 %s94, 1
      %s96 = scalar_select %p93, %s94, %s95
      %p99 = pneg %p93
      %p100 = scmp.eq.s32.totalorder %s32, 1
      %p101 = por %p99, %p100
      %p102 = scmp.ne.s32.totalorder %s94, %s97
      %p103 = scmp.eq.s32.totalorder %s32, 0
      %p104 = por %p102, %p103
      %p105 = scmp.ne.s32.totalorder %s94, %s97
      %p106 = scmp.eq.s32.totalorder %s37, 1
      %p107 = por %p105, %p106
      %p108 = scmp.ne.s32.totalorder %s97, %s98
      %p109 = scmp.eq.s32.totalorder %s37, 0
      %p110 = por %p108, %p109
      %p111 = scmp.ne.s32.totalorder %s97, %s98
      %p112 = scmp.eq.s32.totalorder %s38, 1
      %p113 = por %p111, %p112
      %p115 = scmp.ne.s32.totalorder %s98, %s114
      %p116 = scmp.eq.s32.totalorder %s38, 0
      %p117 = por %p115, %p116
      %s119 = sadd.s32 %s118, 1
      %p122 = scmp.eq.s32.totalorder %s32, 1
      %p123 = scmp.ne.s32.totalorder %s118, %s120
      %p124 = scmp.eq.s32.totalorder %s32, 0
      %p125 = por %p123, %p124
      %p126 = scmp.ne.s32.totalorder %s118, %s120
      %p127 = scmp.eq.s32.totalorder %s37, 1
      %p128 = por %p126, %p127
      %p129 = scmp.ne.s32.totalorder %s120, %s121
      %p130 = scmp.eq.s32.totalorder %s37, 0
      %p131 = por %p129, %p130
      %p132 = scmp.ne.s32.totalorder %s120, %s121
      %p133 = scmp.eq.s32.totalorder %s38, 1
      %p134 = por %p132, %p133
      %p136 = scmp.ne.s32.totalorder %s121, %s135
      %p137 = scmp.eq.s32.totalorder %s38, 0
      %p138 = por %p136, %p137
      %s140 = sadd.s32 %s139, 1
      %p143 = scmp.eq.s32.totalorder %s32, 1
      %p144 = scmp.ne.s32.totalorder %s139, %s141
      %p145 = scmp.eq.s32.totalorder %s32, 0
      %p146 = por %p144, %p145
      %p147 = scmp.ne.s32.totalorder %s139, %s141
      %p148 = scmp.eq.s32.totalorder %s37, 1
      %p149 = por %p147, %p148
      %p150 = scmp.ne.s32.totalorder %s141, %s142
      %p151 = scmp.eq.s32.totalorder %s37, 0
      %p152 = por %p150, %p151
      %p153 = scmp.ne.s32.totalorder %s141, %s142
      %p154 = scmp.eq.s32.totalorder %s38, 1
      %p155 = por %p153, %p154
      %p157 = scmp.ne.s32.totalorder %s142, %s156
      %p158 = scmp.eq.s32.totalorder %s38, 0
      %p159 = por %p157, %p158
      %s161 = sadd.s32 %s160, 1
      %p164 = scmp.eq.s32.totalorder %s32, 1
      %p165 = scmp.ne.s32.totalorder %s160, %s162
      %p166 = scmp.eq.s32.totalorder %s32, 0
      %p167 = por %p165, %p166
      %p168 = scmp.ne.s32.totalorder %s160, %s162
      %p169 = scmp.eq.s32.totalorder %s37, 1
      %p170 = por %p168, %p169
      %p171 = scmp.ne.s32.totalorder %s162, %s163
      %p172 = scmp.eq.s32.totalorder %s37, 0
      %p173 = por %p171, %p172
      %p174 = scmp.ne.s32.totalorder %s162, %s163
      %p175 = scmp.eq.s32.totalorder %s38, 1
      %p176 = por %p174, %p175
      %p178 = scmp.ne.s32.totalorder %s163, %s177
      %p179 = scmp.eq.s32.totalorder %s38, 0
      %p180 = por %p178, %p179
      %s182 = sadd.s32 %s181, 1
      %p185 = scmp.eq.s32.totalorder %s32, 1
      %p186 = scmp.ne.s32.totalorder %s181, %s183
      %p187 = scmp.eq.s32.totalorder %s32, 0
      %p188 = por %p186, %p187
      %p189 = scmp.ne.s32.totalorder %s181, %s183
      %p190 = scmp.eq.s32.totalorder %s37, 1
      %p191 = por %p189, %p190
      %p192 = scmp.ne.s32.totalorder %s183, %s184
      %p193 = scmp.eq.s32.totalorder %s37, 0
      %p194 = por %p192, %p193
      %p195 = scmp.ne.s32.totalorder %s183, %s184
      %p196 = scmp.eq.s32.totalorder %s38, 1
      %p197 = por %p195, %p196
      %p199 = scmp.ne.s32.totalorder %s184, %s198
      %p200 = scmp.eq.s32.totalorder %s38, 0
      %p201 = por %p199, %p200
      %s203 = sadd.s32 %s202, 1
      %p206 = scmp.eq.s32.totalorder %s32, 1
      %p207 = scmp.ne.s32.totalorder %s202, %s204
      %p208 = scmp.eq.s32.totalorder %s32, 0
      %p209 = por %p207, %p208
      %p210 = scmp.ne.s32.totalorder %s202, %s204
      %p211 = scmp.eq.s32.totalorder %s37, 1
      %p212 = por %p210, %p211
      %p213 = scmp.ne.s32.totalorder %s204, %s205
      %p214 = scmp.eq.s32.totalorder %s37, 0
      %p215 = por %p213, %p214
      %p216 = scmp.ne.s32.totalorder %s204, %s205
      %p217 = scmp.eq.s32.totalorder %s38, 1
      %p218 = por %p216, %p217
      %p220 = scmp.ne.s32.totalorder %s205, %s219
      %p221 = scmp.eq.s32.totalorder %s38, 0
      %p222 = por %p220, %p221
      %s223 = ssub.s32 %s32, %s39
      %p224 = scmp.eq.s32.totalorder %s223, 0
      %s226 = sadd.s32 %s225, 1
      %s227 = scalar_select %p224, %s225, %s226
      %p230 = pneg %p224
      %p231 = scmp.eq.s32.totalorder %s32, 1
      %p232 = por %p230, %p231
      %p233 = scmp.ne.s32.totalorder %s225, %s228
      %p234 = scmp.eq.s32.totalorder %s32, 0
      %p235 = por %p233, %p234
      %p236 = scmp.ne.s32.totalorder %s225, %s228
      %p237 = scmp.eq.s32.totalorder %s37, 1
      %p238 = por %p236, %p237
      %p239 = scmp.ne.s32.totalorder %s228, %s229
      %p240 = scmp.eq.s32.totalorder %s37, 0
      %p241 = por %p239, %p240
      %p242 = scmp.ne.s32.totalorder %s228, %s229
      %p243 = scmp.eq.s32.totalorder %s38, 1
      %p244 = por %p242, %p243
      %p246 = scmp.ne.s32.totalorder %s229, %s245
      %p247 = scmp.eq.s32.totalorder %s38, 0
      %p248 = por %p246, %p247
      %s249 = ssub.s32 %s32, %s39
      %p250 = scmp.eq.s32.totalorder %s249, 0
      %s252 = sadd.s32 %s251, 1
      %s253 = scalar_select %p250, %s251, %s252
      %p256 = pneg %p250
      %p257 = scmp.eq.s32.totalorder %s32, 1
      %p258 = por %p256, %p257
      %p259 = scmp.ne.s32.totalorder %s251, %s254
      %p260 = scmp.eq.s32.totalorder %s32, 0
      %p261 = por %p259, %p260
      %p262 = scmp.ne.s32.totalorder %s251, %s254
      %p263 = scmp.eq.s32.totalorder %s37, 1
      %p264 = por %p262, %p263
      %p265 = scmp.ne.s32.totalorder %s254, %s255
      %p266 = scmp.eq.s32.totalorder %s37, 0
      %p267 = por %p265, %p266
      %p268 = scmp.ne.s32.totalorder %s254, %s255
      %p269 = scmp.eq.s32.totalorder %s38, 1
      %p270 = por %p268, %p269
      %p272 = scmp.ne.s32.totalorder %s255, %s271
      %p273 = scmp.eq.s32.totalorder %s38, 0
      %p274 = por %p272, %p273
      %s275 = ssub.s32 %s32, %s39
      %p276 = scmp.eq.s32.totalorder %s275, 0
      %s278 = sadd.s32 %s277, 1
      %s279 = scalar_select %p276, %s277, %s278
      %p282 = pneg %p276
      %p283 = scmp.eq.s32.totalorder %s32, 1
      %p284 = por %p282, %p283
      %p285 = scmp.ne.s32.totalorder %s277, %s280
      %p286 = scmp.eq.s32.totalorder %s32, 0
      %p287 = por %p285, %p286
      %p288 = scmp.ne.s32.totalorder %s277, %s280
      %p289 = scmp.eq.s32.totalorder %s37, 1
      %p290 = por %p288, %p289
      %p291 = scmp.ne.s32.totalorder %s280, %s281
      %p292 = scmp.eq.s32.totalorder %s37, 0
      %p293 = por %p291, %p292
      %p294 = scmp.ne.s32.totalorder %s280, %s281
      %p295 = scmp.eq.s32.totalorder %s38, 1
      %p296 = por %p294, %p295
      %p298 = scmp.ne.s32.totalorder %s281, %s297
      %p299 = scmp.eq.s32.totalorder %s38, 0
      %p300 = por %p298, %p299
      %p301 = scmp.le.s32.totalorder 1, %s32
      %p302 = scmp.lt.s32.totalorder %s32, 3
      %p303 = pnand %p301, %p302
      %p304 = pneg %p303
      // Predicated region
      $region9: #{_bottleneck_forward.6} parent=5 // pred_check
        _
      $region10: #{_bottleneck_forward.6} parent=5 // pred_check_branch
        %306 = sbr.rel (%p303) target = $region12
      $region11: #{_bottleneck_forward.6} parent=5 // pred_region
        %s307 = ssub.s32 %s32, 1
        // Predicated region
        $region13: #{_bottleneck_forward.6} parent=11 // pred_check
          %p308 = pneg %p131
        $region14: #{_bottleneck_forward.6} parent=11 // pred_check_branch
          %310 = sbr.rel (%p308) target = $region16
        $region15: #{_bottleneck_forward.6} parent=11 // pred_region
          %s312 = ssub.s32 16, 16
          %313 = vsyncadd [#allocation11], %s312
          %s315 = sshll.u32 [#allocation10], 4
          %s316 = int_to_ptr.vmem [resolvable:$true] %s315
          %318 = dma.hbm_to_vmem [thread:$0]  %s3, 16, %s316, [#allocation11]
        $region16: #{_bottleneck_forward.6} parent=11 // pred_fallthru
          _
        // Predicated region
        $region17: #{_bottleneck_forward.6} parent=11 // pred_check
          %p319 = pneg %p152
        $region18: #{_bottleneck_forward.6} parent=11 // pred_check_branch
          %321 = sbr.rel (%p319) target = $region20
        $region19: #{_bottleneck_forward.6} parent=11 // pred_region
          %s323 = ssub.s32 16, 16
          %324 = vsyncadd [#allocation11], %s323
          %s326 = sshll.u32 [#allocation12], 4
          %s327 = int_to_ptr.vmem [resolvable:$true] %s326
          %329 = dma.hbm_to_vmem [thread:$0]  %s4, 16, %s327, [#allocation11]
        $region20: #{_bottleneck_forward.6} parent=11 // pred_fallthru
          _
        // Predicated region
        $region21: #{_bottleneck_forward.6} parent=11 // pred_check
          %p330 = pneg %p173
        $region22: #{_bottleneck_forward.6} parent=11 // pred_check_branch
          %332 = sbr.rel (%p330) target = $region24
        $region23: #{_bottleneck_forward.6} parent=11 // pred_region
          %s334 = ssub.s32 9216, 9216
          %335 = vsyncadd [#allocation14], %s334
          %s336 = sshll.u32 [#allocation13], 4
          %s337 = int_to_ptr.vmem [resolvable:$true] %s336
          %342 = dma.hbm_to_vmem [thread:$0]  %s5, 9216, %s337, [#allocation14], 64, 64, 4
        $region24: #{_bottleneck_forward.6} parent=11 // pred_fallthru
          _
        // Predicated region
        $region25: #{_bottleneck_forward.6} parent=11 // pred_check
          %p343 = pneg %p194
        $region26: #{_bottleneck_forward.6} parent=11 // pred_check_branch
          %345 = sbr.rel (%p343) target = $region28
        $region27: #{_bottleneck_forward.6} parent=11 // pred_region
          %s347 = ssub.s32 512, 512
          %348 = vsyncadd [#allocation14], %s347
          %s349 = sshll.u32 [#allocation15], 4
          %s350 = int_to_ptr.vmem [resolvable:$true] %s349
          %355 = dma.hbm_to_vmem [thread:$0]  %s6, 512, %s350, [#allocation14], 64, 64, 4
        $region28: #{_bottleneck_forward.6} parent=11 // pred_fallthru
          _
        // Predicated region
        $region29: #{_bottleneck_forward.6} parent=11 // pred_check
          %p356 = pneg %p215
        $region30: #{_bottleneck_forward.6} parent=11 // pred_check_branch
          %358 = sbr.rel (%p356) target = $region32
        $region31: #{_bottleneck_forward.6} parent=11 // pred_region
          %s360 = ssub.s32 512, 512
          %361 = vsyncadd [#allocation17], %s360
          %s362 = sshll.u32 [#allocation16], 4
          %s363 = int_to_ptr.vmem [resolvable:$true] %s362
          %368 = dma.hbm_to_vmem [thread:$0]  %s7, 512, %s363, [#allocation17], 64, 64, 4
        $region32: #{_bottleneck_forward.6} parent=11 // pred_fallthru
          _
      $region12: #{_bottleneck_forward.6} parent=5 // pred_fallthru
        _
      %p369 = scmp.lt.s32.totalorder %s32, 2
      // Predicated region
      $region33: #{_bottleneck_forward.6} parent=5 // pred_check
        %p370 = pneg %p369
      $region34: #{_bottleneck_forward.6} parent=5 // pred_check_branch
        %372 = sbr.rel (%p370) target = $region36
      $region35: #{_bottleneck_forward.6} parent=5 // pred_region
        // Predicated region
        $region37: #{_bottleneck_forward.6} parent=35 // pred_check
          %p373 = pneg %p52
        $region38: #{_bottleneck_forward.6} parent=35 // pred_check_branch
          %375 = sbr.rel (%p373) target = $region40
        $region39: #{_bottleneck_forward.6} parent=35 // pred_region
          %s376 = sand.u32 %s42, 1
          %s377 = scalar_lea.sflag [#allocation5], %s376
          %s378 = sand.u32 %s42, 1
          %s379 = smul.addr %s378, 128
          %s380 = scalar_lea.vmem [#allocation4], %s379
          %s382 = ssub.s32 2048, 2048
          %383 = vsyncadd %s377, %s382
          %s384 = smul.addr %s32, 32
          %s385 = smul.addr %s384, 64
          %s386 = scalar_lea.hbm %s0, %s385
          %s387 = sshll.u32 %s380, 4
          %s388 = int_to_ptr.vmem [resolvable:$true] %s387
          %393 = dma.hbm_to_vmem [thread:$0]  %s386, 2048, %s388, %s377, 64, 64, 4
        $region40: #{_bottleneck_forward.6} parent=35 // pred_fallthru
          _
        // Predicated region
        $region41: #{_bottleneck_forward.6} parent=35 // pred_check
          %p394 = pneg %p78
        $region42: #{_bottleneck_forward.6} parent=35 // pred_check_branch
          %396 = sbr.rel (%p394) target = $region44
        $region43: #{_bottleneck_forward.6} parent=35 // pred_region
          %s397 = sand.u32 %s32, 1
          %s398 = scalar_lea.sflag [#allocation8], %s397
          %s399 = sand.u32 %s68, 1
          %s400 = scalar_lea.vmem [#allocation7], %s399
          %s402 = ssub.s32 16, 16
          %403 = vsyncadd %s398, %s402
          %s404 = smul.addr %s32, 16
          %s405 = scalar_lea.hbm %s1, %s404
          %s407 = sshll.u32 %s400, 4
          %s408 = int_to_ptr.vmem [resolvable:$true] %s407
          %410 = dma.hbm_to_vmem [thread:$0]  %s405, 16, %s408, %s398
        $region44: #{_bottleneck_forward.6} parent=35 // pred_fallthru
          _
        // Predicated region
        $region45: #{_bottleneck_forward.6} parent=35 // pred_check
          %p411 = pneg %p104
        $region46: #{_bottleneck_forward.6} parent=35 // pred_check_branch
          %413 = sbr.rel (%p411) target = $region48
        $region47: #{_bottleneck_forward.6} parent=35 // pred_region
          %s414 = sand.u32 %s32, 1
          %s415 = scalar_lea.sflag [#allocation8], %s414
          %s416 = sand.u32 %s94, 1
          %s417 = scalar_lea.vmem [#allocation9], %s416
          %s419 = ssub.s32 16, 16
          %420 = vsyncadd %s415, %s419
          %s421 = smul.addr %s32, 16
          %s422 = scalar_lea.hbm %s2, %s421
          %s424 = sshll.u32 %s417, 4
          %s425 = int_to_ptr.vmem [resolvable:$true] %s424
          %427 = dma.hbm_to_vmem [thread:$0]  %s422, 16, %s425, %s415
        $region48: #{_bottleneck_forward.6} parent=35 // pred_fallthru
          _
      $region36: #{_bottleneck_forward.6} parent=5 // pred_fallthru
        _
      %p428 = scmp.le.s32.totalorder 1, %s32
      %p429 = scmp.lt.s32.totalorder %s32, 3
      %p430 = pnand %p428, %p429
      %p431 = pneg %p430
      // Predicated region
      $region49: #{_bottleneck_forward.6} parent=5 // pred_check
        _
      $region50: #{_bottleneck_forward.6} parent=5 // pred_check_branch
        %433 = sbr.rel (%p430) target = $region52
      $region51: #{_bottleneck_forward.6} parent=5 // pred_region
        %s434 = ssub.s32 %s32, 1
        %s435 = sand.u32 %s45, 1
        %s436 = scalar_lea.sflag [#allocation5], %s435
        %s437 = sand.u32 %s45, 1
        %s438 = smul.addr %s437, 128
        %s439 = scalar_lea.vmem [#allocation4], %s438
        // Predicated region
        $region53: #{_bottleneck_forward.6} parent=51 // pred_check
          %p440 = pneg %p58
        $region54: #{_bottleneck_forward.6} parent=51 // pred_check_branch
          %442 = sbr.rel (%p440) target = $region56
        $region55: #{_bottleneck_forward.6} parent=51 // pred_region
          %443 = dma.done %s436, 2048
        $region56: #{_bottleneck_forward.6} parent=51 // pred_fallthru
          _
        %s444 = sand.u32 %s37, 1
        %s445 = scalar_lea.sflag [#allocation8], %s444
        %s446 = sand.u32 %s71, 1
        %s447 = scalar_lea.vmem [#allocation7], %s446
        // Predicated region
        $region57: #{_bottleneck_forward.6} parent=51 // pred_check
          %p448 = pneg %p84
        $region58: #{_bottleneck_forward.6} parent=51 // pred_check_branch
          %450 = sbr.rel (%p448) target = $region60
        $region59: #{_bottleneck_forward.6} parent=51 // pred_region
          %451 = dma.done %s445, 16
        $region60: #{_bottleneck_forward.6} parent=51 // pred_fallthru
          _
        %s452 = sand.u32 %s37, 1
        %s453 = scalar_lea.sflag [#allocation8], %s452
        %s454 = sand.u32 %s97, 1
        %s455 = scalar_lea.vmem [#allocation9], %s454
        // Predicated region
        $region61: #{_bottleneck_forward.6} parent=51 // pred_check
          %p456 = pneg %p110
        $region62: #{_bottleneck_forward.6} parent=51 // pred_check_branch
          %458 = sbr.rel (%p456) target = $region64
        $region63: #{_bottleneck_forward.6} parent=51 // pred_region
          %459 = dma.done %s453, 16
        $region64: #{_bottleneck_forward.6} parent=51 // pred_fallthru
          _
        // Predicated region
        $region65: #{_bottleneck_forward.6} parent=51 // pred_check
          %p460 = pneg %p131
        $region66: #{_bottleneck_forward.6} parent=51 // pred_check_branch
          %462 = sbr.rel (%p460) target = $region68
        $region67: #{_bottleneck_forward.6} parent=51 // pred_region
          %463 = dma.done [#allocation11], 16
        $region68: #{_bottleneck_forward.6} parent=51 // pred_fallthru
          _
        // Predicated region
        $region69: #{_bottleneck_forward.6} parent=51 // pred_check
          %p464 = pneg %p152
        $region70: #{_bottleneck_forward.6} parent=51 // pred_check_branch
          %466 = sbr.rel (%p464) target = $region72
        $region71: #{_bottleneck_forward.6} parent=51 // pred_region
          %467 = dma.done [#allocation11], 16
        $region72: #{_bottleneck_forward.6} parent=51 // pred_fallthru
          _
        // Predicated region
        $region73: #{_bottleneck_forward.6} parent=51 // pred_check
          %p468 = pneg %p173
        $region74: #{_bottleneck_forward.6} parent=51 // pred_check_branch
          %470 = sbr.rel (%p468) target = $region76
        $region75: #{_bottleneck_forward.6} parent=51 // pred_region
          %471 = dma.done [#allocation14], 9216
        $region76: #{_bottleneck_forward.6} parent=51 // pred_fallthru
          _
        // Predicated region
        $region77: #{_bottleneck_forward.6} parent=51 // pred_check
          %p472 = pneg %p194
        $region78: #{_bottleneck_forward.6} parent=51 // pred_check_branch
          %474 = sbr.rel (%p472) target = $region80
        $region79: #{_bottleneck_forward.6} parent=51 // pred_region
          %475 = dma.done [#allocation14], 512
        $region80: #{_bottleneck_forward.6} parent=51 // pred_fallthru
          _
        // Predicated region
        $region81: #{_bottleneck_forward.6} parent=51 // pred_check
          %p476 = pneg %p215
        $region82: #{_bottleneck_forward.6} parent=51 // pred_check_branch
          %478 = sbr.rel (%p476) target = $region84
        $region83: #{_bottleneck_forward.6} parent=51 // pred_region
          %479 = dma.done [#allocation17], 512
        $region84: #{_bottleneck_forward.6} parent=51 // pred_fallthru
          _
        %s480 = sand.u32 %s45, 1
        %s481 = scalar_lea.sflag [#allocation5], %s480
        %s482 = sand.u32 %s45, 1
        %s483 = smul.addr %s482, 128
        %s484 = scalar_lea.vmem [#allocation4], %s483
        %p485 = pneg %p58
        %p486 = pneg %p55
        %s487 = sand.u32 %s37, 1
        %s488 = scalar_lea.sflag [#allocation8], %s487
        %s489 = sand.u32 %s71, 1
        %s490 = scalar_lea.vmem [#allocation7], %s489
        %p491 = pneg %p84
        %p492 = pneg %p81
        %s493 = sand.u32 %s37, 1
        %s494 = scalar_lea.sflag [#allocation8], %s493
        %s495 = sand.u32 %s97, 1
        %s496 = scalar_lea.vmem [#allocation9], %s495
        %p497 = pneg %p110
        %p498 = pneg %p107
        %p499 = pneg %p131
        %p500 = pneg %p128
        %p501 = pneg %p152
        %p502 = pneg %p149
        %p503 = pneg %p173
        %p504 = pneg %p170
        %p505 = pneg %p194
        %p506 = pneg %p191
        %p507 = pneg %p215
        %p508 = pneg %p212
        %p509 = pneg %p241
        %p510 = pneg %p238
        %s511 = sand.u32 %s228, 1
        %s512 = scalar_lea.sflag [#allocation6], %s511
        %s513 = sand.u32 %s228, 1
        %s514 = smul.addr %s513, 32
        %s515 = scalar_lea.vmem [#allocation18], %s514
        %p516 = pneg %p267
        %p517 = pneg %p264
        %s518 = sand.u32 %s37, 1
        %s519 = scalar_lea.sflag [#allocation20], %s518
        %s520 = sand.u32 %s254, 1
        %s521 = scalar_lea.vmem [#allocation19], %s520
        %p522 = pneg %p293
        %p523 = pneg %p290
        %s524 = sand.u32 %s37, 1
        %s525 = scalar_lea.sflag [#allocation20], %s524
        %s526 = sand.u32 %s280, 1
        %s527 = scalar_lea.vmem [#allocation21], %s526
        %v529 = vld [vmem:[%s447] sm:$0x1]
        %v530 = vld [vmem:[%s455] sm:$0x1]
        %v531 = vld [vmem:[#allocation10] sm:$0x1]
        %v532 = vld [vmem:[#allocation12] sm:$0x1]
        %v533 = vmul.f32 %v529, 0.00390625
        %v534 = vmul.f32 %v530, 0.00390625
        %v535 = vmul.f32 %v533, %v533
        %v536 = vsub.f32 %v534, %v535
        %v537 = vadd.f32 %v536, 1e-05
        %v538 = vrsqrt.pop %v537
        %v539 = vmul.f32 %v538, %v531
        %v540 = vmul.f32 %v533, %v539
        %v541 = vsub.f32 %v532, %v540
        %542 = vst [vmem:[#allocation2] sm:$0xff] 0
        %543 = vst [vmem:[#allocation2 + $0x8] sm:$0xff] 0
        %544 = vst [vmem:[#allocation2 + $0x10] sm:$0xff] 0
        %545 = vst [vmem:[#allocation2 + $0x18] sm:$0xff] 0
        %546 = vst [vmem:[#allocation2 + $0x20] sm:$0xff] 0
        %547 = vst [vmem:[#allocation2 + $0x28] sm:$0xff] 0
        %548 = vst [vmem:[#allocation2 + $0x30] sm:$0xff] 0
        %549 = vst [vmem:[#allocation2 + $0x38] sm:$0xff] 0
        %550 = vst [vmem:[#allocation2 + $0x40] sm:$0xff] 0
        %551 = vst [vmem:[#allocation2 + $0x48] sm:$0xff] 0
        %552 = vst [vmem:[#allocation2 + $0x50] sm:$0xff] 0
        %553 = vst [vmem:[#allocation2 + $0x58] sm:$0xff] 0
        %554 = vst [vmem:[#allocation2 + $0x60] sm:$0xff] 0
        %555 = vst [vmem:[#allocation2 + $0x68] sm:$0xff] 0
        %556 = vst [vmem:[#allocation2 + $0x70] sm:$0xff] 0
        %557 = vst [vmem:[#allocation2 + $0x78] sm:$0xff] 0
        %558 = vst [vmem:[#allocation2 + $0x80] sm:$0xff] 0
        %559 = vst [vmem:[#allocation2 + $0x88] sm:$0xff] 0
        %560 = vst [vmem:[#allocation2 + $0x90] sm:$0xff] 0
        %561 = vst [vmem:[#allocation2 + $0x98] sm:$0xff] 0
        %562 = vst [vmem:[#allocation2 + $0xa0] sm:$0xff] 0
        %563 = vst [vmem:[#allocation2 + $0xa8] sm:$0xff] 0
        %564 = vst [vmem:[#allocation2 + $0xb0] sm:$0xff] 0
        %565 = vst [vmem:[#allocation2 + $0xb8] sm:$0xff] 0
        %v566 = vld [vmem:[%s439] sm:$0xf]
        %v567 = vld [vmem:[%s439 + $0x4] sm:$0xf]
        %v568 = vld [vmem:[%s439 + $0x8] sm:$0xf]
        %v569 = vld [vmem:[%s439 + $0xc] sm:$0xf]
        %v570 = vld [vmem:[%s439 + $0x10] sm:$0xf]
        %v571 = vld [vmem:[%s439 + $0x14] sm:$0xf]
        %v572 = vld [vmem:[%s439 + $0x18] sm:$0xf]
        %v573 = vld [vmem:[%s439 + $0x1c] sm:$0xf]
        %v574 = vunpack.c.l.bf16 %v566
        %v575 = vunpack.c.l.bf16 %v567
        %v576 = vunpack.c.l.bf16 %v568
        %v577 = vunpack.c.l.bf16 %v569
        %v578 = vunpack.c.l.bf16 %v570
        %v579 = vunpack.c.l.bf16 %v571
        %v580 = vunpack.c.l.bf16 %v572
        %v581 = vunpack.c.l.bf16 %v573
        %v583 = vlaneseq
        %v584 = vshrl.u32 %v583, 7
        %v585 = vsub.s32 0, %v584
        %v586 = vrot.slane %v539, %v585
        %v588 = vmul.f32 %v574, %v586
        %v589 = vmul.f32 %v575, %v586
        %v590 = vmul.f32 %v576, %v586
        %v591 = vmul.f32 %v577, %v586
        %v592 = vmul.f32 %v578, %v586
        %v593 = vmul.f32 %v579, %v586
        %v594 = vmul.f32 %v580, %v586
        %v595 = vmul.f32 %v581, %v586
        %v597 = vlaneseq
        %v598 = vshrl.u32 %v597, 7
        %v599 = vsub.s32 0, %v598
        %v600 = vrot.slane %v541, %v599
        %v602 = vadd.f32 %v588, %v600
        %v603 = vadd.f32 %v589, %v600
        %v604 = vadd.f32 %v590, %v600
        %v605 = vadd.f32 %v591, %v600
        %v606 = vadd.f32 %v592, %v600
        %v607 = vadd.f32 %v593, %v600
        %v608 = vadd.f32 %v594, %v600
        %v609 = vadd.f32 %v595, %v600
        %v610 = vmax.f32 %v602, 0.0
        %v611 = vmax.f32 %v603, 0.0
        %v612 = vmax.f32 %v604, 0.0
        %v613 = vmax.f32 %v605, 0.0
        %v614 = vmax.f32 %v606, 0.0
        %v615 = vmax.f32 %v607, 0.0
        %v616 = vmax.f32 %v608, 0.0
        %v617 = vmax.f32 %v609, 0.0
        %v618 = vpack.c.bf16 %v611, %v610
        %v619 = vpack.c.bf16 %v613, %v612
        %v620 = vpack.c.bf16 %v615, %v614
        %v621 = vpack.c.bf16 %v617, %v616
        %622 = vst [vmem:[#allocation2 + $0x8] sm:$0xff] %v618
        %623 = vst [vmem:[#allocation2 + $0x10] sm:$0xff] %v619
        %624 = vst [vmem:[#allocation2 + $0x18] sm:$0xff] %v620
        %625 = vst [vmem:[#allocation2 + $0x20] sm:$0xff] %v621
        %v626 = vld [vmem:[%s439 + $0x20] sm:$0xf]
        %v627 = vld [vmem:[%s439 + $0x24] sm:$0xf]
        %v628 = vld [vmem:[%s439 + $0x28] sm:$0xf]
        %v629 = vld [vmem:[%s439 + $0x2c] sm:$0xf]
        %v630 = vld [vmem:[%s439 + $0x30] sm:$0xf]
        %v631 = vld [vmem:[%s439 + $0x34] sm:$0xf]
        %v632 = vld [vmem:[%s439 + $0x38] sm:$0xf]
        %v633 = vld [vmem:[%s439 + $0x3c] sm:$0xf]
        %v634 = vunpack.c.l.bf16 %v626
        %v635 = vunpack.c.l.bf16 %v627
        %v636 = vunpack.c.l.bf16 %v628
        %v637 = vunpack.c.l.bf16 %v629
        %v638 = vunpack.c.l.bf16 %v630
        %v639 = vunpack.c.l.bf16 %v631
        %v640 = vunpack.c.l.bf16 %v632
        %v641 = vunpack.c.l.bf16 %v633
        %v642 = vmul.f32 %v634, %v586
        %v643 = vmul.f32 %v635, %v586
        %v644 = vmul.f32 %v636, %v586
        %v645 = vmul.f32 %v637, %v586
        %v646 = vmul.f32 %v638, %v586
        %v647 = vmul.f32 %v639, %v586
        %v648 = vmul.f32 %v640, %v586
        %v649 = vmul.f32 %v641, %v586
        %v650 = vadd.f32 %v642, %v600
        %v651 = vadd.f32 %v643, %v600
        %v652 = vadd.f32 %v644, %v600
        %v653 = vadd.f32 %v645, %v600
        %v654 = vadd.f32 %v646, %v600
        %v655 = vadd.f32 %v647, %v600
        %v656 = vadd.f32 %v648, %v600
        %v657 = vadd.f32 %v649, %v600
        %v658 = vmax.f32 %v650, 0.0
        %v659 = vmax.f32 %v651, 0.0
        %v660 = vmax.f32 %v652, 0.0
        %v661 = vmax.f32 %v653, 0.0
        %v662 = vmax.f32 %v654, 0.0
        %v663 = vmax.f32 %v655, 0.0
        %v664 = vmax.f32 %v656, 0.0
        %v665 = vmax.f32 %v657, 0.0
        %v666 = vpack.c.bf16 %v659, %v658
        %v667 = vpack.c.bf16 %v661, %v660
        %v668 = vpack.c.bf16 %v663, %v662
        %v669 = vpack.c.bf16 %v665, %v664
        %s670 = scalar_lea.vmem [#allocation2], 48
        %671 = vst [vmem:[%s670 + $0x8] sm:$0xff] %v666
        %672 = vst [vmem:[%s670 + $0x10] sm:$0xff] %v667
        %673 = vst [vmem:[%s670 + $0x18] sm:$0xff] %v668
        %674 = vst [vmem:[%s670 + $0x20] sm:$0xff] %v669
        %v675 = vld [vmem:[%s439 + $0x40] sm:$0xf]
        %v676 = vld [vmem:[%s439 + $0x44] sm:$0xf]
        %v677 = vld [vmem:[%s439 + $0x48] sm:$0xf]
        %v678 = vld [vmem:[%s439 + $0x4c] sm:$0xf]
        %v679 = vld [vmem:[%s439 + $0x50] sm:$0xf]
        %v680 = vld [vmem:[%s439 + $0x54] sm:$0xf]
        %v681 = vld [vmem:[%s439 + $0x58] sm:$0xf]
        %v682 = vld [vmem:[%s439 + $0x5c] sm:$0xf]
        %v683 = vunpack.c.l.bf16 %v675
        %v684 = vunpack.c.l.bf16 %v676
        %v685 = vunpack.c.l.bf16 %v677
        %v686 = vunpack.c.l.bf16 %v678
        %v687 = vunpack.c.l.bf16 %v679
        %v688 = vunpack.c.l.bf16 %v680
        %v689 = vunpack.c.l.bf16 %v681
        %v690 = vunpack.c.l.bf16 %v682
        %v691 = vmul.f32 %v683, %v586
        %v692 = vmul.f32 %v684, %v586
        %v693 = vmul.f32 %v685, %v586
        %v694 = vmul.f32 %v686, %v586
        %v695 = vmul.f32 %v687, %v586
        %v696 = vmul.f32 %v688, %v586
        %v697 = vmul.f32 %v689, %v586
        %v698 = vmul.f32 %v690, %v586
        %v699 = vadd.f32 %v691, %v600
        %v700 = vadd.f32 %v692, %v600
        %v701 = vadd.f32 %v693, %v600
        %v702 = vadd.f32 %v694, %v600
        %v703 = vadd.f32 %v695, %v600
        %v704 = vadd.f32 %v696, %v600
        %v705 = vadd.f32 %v697, %v600
        %v706 = vadd.f32 %v698, %v600
        %v707 = vmax.f32 %v699, 0.0
        %v708 = vmax.f32 %v700, 0.0
        %v709 = vmax.f32 %v701, 0.0
        %v710 = vmax.f32 %v702, 0.0
        %v711 = vmax.f32 %v703, 0.0
        %v712 = vmax.f32 %v704, 0.0
        %v713 = vmax.f32 %v705, 0.0
        %v714 = vmax.f32 %v706, 0.0
        %v715 = vpack.c.bf16 %v708, %v707
        %v716 = vpack.c.bf16 %v710, %v709
        %v717 = vpack.c.bf16 %v712, %v711
        %v718 = vpack.c.bf16 %v714, %v713
        %s719 = scalar_lea.vmem [#allocation2], 96
        %720 = vst [vmem:[%s719 + $0x8] sm:$0xff] %v715
        %721 = vst [vmem:[%s719 + $0x10] sm:$0xff] %v716
        %722 = vst [vmem:[%s719 + $0x18] sm:$0xff] %v717
        %723 = vst [vmem:[%s719 + $0x20] sm:$0xff] %v718
        %v724 = vld [vmem:[%s439 + $0x60] sm:$0xf]
        %v725 = vld [vmem:[%s439 + $0x64] sm:$0xf]
        %v726 = vld [vmem:[%s439 + $0x68] sm:$0xf]
        %v727 = vld [vmem:[%s439 + $0x6c] sm:$0xf]
        %v728 = vld [vmem:[%s439 + $0x70] sm:$0xf]
        %v729 = vld [vmem:[%s439 + $0x74] sm:$0xf]
        %v730 = vld [vmem:[%s439 + $0x78] sm:$0xf]
        %v731 = vld [vmem:[%s439 + $0x7c] sm:$0xf]
        %v732 = vunpack.c.l.bf16 %v724
        %v733 = vunpack.c.l.bf16 %v725
        %v734 = vunpack.c.l.bf16 %v726
        %v735 = vunpack.c.l.bf16 %v727
        %v736 = vunpack.c.l.bf16 %v728
        %v737 = vunpack.c.l.bf16 %v729
        %v738 = vunpack.c.l.bf16 %v730
        %v739 = vunpack.c.l.bf16 %v731
        %v740 = vmul.f32 %v732, %v586
        %v741 = vmul.f32 %v733, %v586
        %v742 = vmul.f32 %v734, %v586
        %v743 = vmul.f32 %v735, %v586
        %v744 = vmul.f32 %v736, %v586
        %v745 = vmul.f32 %v737, %v586
        %v746 = vmul.f32 %v738, %v586
        %v747 = vmul.f32 %v739, %v586
        %v748 = vadd.f32 %v740, %v600
        %v749 = vadd.f32 %v741, %v600
        %v750 = vadd.f32 %v742, %v600
        %v751 = vadd.f32 %v743, %v600
        %v752 = vadd.f32 %v744, %v600
        %v753 = vadd.f32 %v745, %v600
        %v754 = vadd.f32 %v746, %v600
        %v755 = vadd.f32 %v747, %v600
        %v756 = vmax.f32 %v748, 0.0
        %v757 = vmax.f32 %v749, 0.0
        %v758 = vmax.f32 %v750, 0.0
        %v759 = vmax.f32 %v751, 0.0
        %v760 = vmax.f32 %v752, 0.0
        %v761 = vmax.f32 %v753, 0.0
        %v762 = vmax.f32 %v754, 0.0
        %v763 = vmax.f32 %v755, 0.0
        %v764 = vpack.c.bf16 %v757, %v756
        %v765 = vpack.c.bf16 %v759, %v758
        %v766 = vpack.c.bf16 %v761, %v760
        %v767 = vpack.c.bf16 %v763, %v762
        %s768 = scalar_lea.vmem [#allocation2], 144
        %769 = vst [vmem:[%s768 + $0x8] sm:$0xff] %v764
        %770 = vst [vmem:[%s768 + $0x10] sm:$0xff] %v765
        %771 = vst [vmem:[%s768 + $0x18] sm:$0xff] %v766
        %772 = vst [vmem:[%s768 + $0x20] sm:$0xff] %v767
        %v773 = vld [vmem:[%s768] sm:$0xf8]
        %v774 = vld [vmem:[%s768 + $0x8] sm:$0xff]
        %v775 = vld [vmem:[%s768 + $0x10] sm:$0xff]
        %v776 = vld [vmem:[%s768 + $0x18] sm:$0xff]
        %v777 = vld [vmem:[%s768 + $0x20] sm:$0xf]
        %v778 = vld [vmem:[#allocation15] sm:$0xf]
        %v779 = vld [vmem:[#allocation15 + $0x4] sm:$0xf]
        %v780 = vld [vmem:[#allocation15 + $0x8] sm:$0xf]
        %v781 = vld [vmem:[#allocation15 + $0xc] sm:$0xf]
        %v782 = vld [vmem:[#allocation15 + $0x10] sm:$0xf]
        %v783 = vld [vmem:[#allocation15 + $0x14] sm:$0xf]
        %v784 = vld [vmem:[#allocation15 + $0x18] sm:$0xf]
        %v785 = vld [vmem:[#allocation15 + $0x1c] sm:$0xf]
        %787 = vset.pattern.permute.xlu0 0
        %788 = vperm.xlu0 %787, %v778
        %v789 = vpop.permute.xlu0 %788
        %v792 = vunpack.c.l.s4 839922192
        %v793 = vunpack.c.0.s8 %v792
        %v794 = vlaneseq
        %v795 = vshrl.u32 %v794, 7
        %v796 = vsub.s32 %v793, %v795
        %v797 = vrot.slane %v789, %v796
        %799 = vset.pattern.permute.xlu0 0
        %800 = vperm.xlu0 %799, %v779
        %v801 = vpop.permute.xlu0 %800
        %v804 = vunpack.c.l.s4 839922192
        %v805 = vunpack.c.0.s8 %v804
        %v806 = vlaneseq
        %v807 = vshrl.u32 %v806, 7
        %v808 = vsub.s32 %v805, %v807
        %v809 = vrot.slane %v801, %v808
        %811 = vset.pattern.permute.xlu0 0
        %812 = vperm.xlu0 %811, %v780
        %v813 = vpop.permute.xlu0 %812
        %v816 = vunpack.c.l.s4 839922192
        %v817 = vunpack.c.0.s8 %v816
        %v818 = vlaneseq
        %v819 = vshrl.u32 %v818, 7
        %v820 = vsub.s32 %v817, %v819
        %v821 = vrot.slane %v813, %v820
        %823 = vset.pattern.permute.xlu0 0
        %824 = vperm.xlu0 %823, %v781
        %v825 = vpop.permute.xlu0 %824
        %v828 = vunpack.c.l.s4 839922192
        %v829 = vunpack.c.0.s8 %v828
        %v830 = vlaneseq
        %v831 = vshrl.u32 %v830, 7
        %v832 = vsub.s32 %v829, %v831
        %v833 = vrot.slane %v825, %v832
        %835 = vset.pattern.permute.xlu0 0
        %836 = vperm.xlu0 %835, %v782
        %v837 = vpop.permute.xlu0 %836
        %v840 = vunpack.c.l.s4 839922192
        %v841 = vunpack.c.0.s8 %v840
        %v842 = vlaneseq
        %v843 = vshrl.u32 %v842, 7
        %v844 = vsub.s32 %v841, %v843
        %v845 = vrot.slane %v837, %v844
        %847 = vset.pattern.permute.xlu0 0
        %848 = vperm.xlu0 %847, %v783
        %v849 = vpop.permute.xlu0 %848
        %v852 = vunpack.c.l.s4 839922192
        %v853 = vunpack.c.0.s8 %v852
        %v854 = vlaneseq
        %v855 = vshrl.u32 %v854, 7
        %v856 = vsub.s32 %v853, %v855
        %v857 = vrot.slane %v849, %v856
        %859 = vset.pattern.permute.xlu0 0
        %860 = vperm.xlu0 %859, %v784
        %v861 = vpop.permute.xlu0 %860
        %v864 = vunpack.c.l.s4 839922192
        %v865 = vunpack.c.0.s8 %v864
        %v866 = vlaneseq
        %v867 = vshrl.u32 %v866, 7
        %v868 = vsub.s32 %v865, %v867
        %v869 = vrot.slane %v861, %v868
        %871 = vset.pattern.permute.xlu0 0
        %872 = vperm.xlu0 %871, %v785
        %v873 = vpop.permute.xlu0 %872
        %v876 = vunpack.c.l.s4 839922192
        %v877 = vunpack.c.0.s8 %v876
        %v878 = vlaneseq
        %v879 = vshrl.u32 %v878, 7
        %v880 = vsub.s32 %v877, %v879
        %v881 = vrot.slane %v873, %v880
        %v890 = vunpack.c.l.b16 %v797
        %v891 = vunpack.c.l.b16 %v809
        %v892 = vunpack.c.l.b16 %v821
        %v893 = vunpack.c.l.b16 %v833
        %v894 = vunpack.c.l.b16 %v845
        %v895 = vunpack.c.l.b16 %v857
        %v896 = vunpack.c.l.b16 %v869
        %v897 = vunpack.c.l.b16 %v881
        %v898 = vpack.c.b16 %v891, %v890
        %v899 = vpack.c.b16 %v893, %v892
        %v900 = vpack.c.b16 %v895, %v894
        %v901 = vpack.c.b16 %v897, %v896
        %vm902 = vsmask.f32 3328
        %v904 = vshrl.u32 %v898, 16
        %v906 = vrot.slane %v904, 4
        %v907 = vshll.u32 %v898, 16
        %v909 = vrot.slane %v907, 5
        %v910 = vor.u32 %v906, %v909
        %v912 = vshrl.u32 %v899, 16
        %v914 = vrot.slane %v912, 4
        %v915 = vshll.u32 %v899, 16
        %v917 = vrot.slane %v915, 5
        %v918 = vor.u32 %v914, %v917
        %v919 = vsel %vm902, %v910, %v918
        %v921 = vshrl.u32 %v900, 16
        %v923 = vrot.slane %v921, 4
        %v924 = vshll.u32 %v900, 16
        %v926 = vrot.slane %v924, 5
        %v927 = vor.u32 %v923, %v926
        %v928 = vsel %vm902, %v918, %v927
        %v930 = vshrl.u32 %v901, 16
        %v932 = vrot.slane %v930, 4
        %v933 = vshll.u32 %v901, 16
        %v935 = vrot.slane %v933, 5
        %v936 = vor.u32 %v932, %v935
        %v937 = vsel %vm902, %v927, %v936
        %v943 = vmul.bf16 %v773, %v910
        %v944 = vmul.bf16 %v774, %v919
        %v945 = vmul.bf16 %v775, %v928
        %v946 = vmul.bf16 %v776, %v937
        %v947 = vmul.bf16 %v777, %v936
        %vm948 = vsmask.f32 4352
        %v950 = vshrl.u32 %v943, 16
        %v952 = vrot.slane %v950, 3
        %v953 = vshll.u32 %v943, 16
        %v955 = vrot.slane %v953, 4
        %v956 = vor.u32 %v952, %v955
        %v958 = vshrl.u32 %v944, 16
        %v960 = vrot.slane %v958, 3
        %v961 = vshll.u32 %v944, 16
        %v963 = vrot.slane %v961, 4
        %v964 = vor.u32 %v960, %v963
        %v965 = vsel %vm948, %v956, %v964
        %v967 = vshrl.u32 %v945, 16
        %v969 = vrot.slane %v967, 3
        %v970 = vshll.u32 %v945, 16
        %v972 = vrot.slane %v970, 4
        %v973 = vor.u32 %v969, %v972
        %v974 = vsel %vm948, %v964, %v973
        %v976 = vshrl.u32 %v946, 16
        %v978 = vrot.slane %v976, 3
        %v979 = vshll.u32 %v946, 16
        %v981 = vrot.slane %v979, 4
        %v982 = vor.u32 %v978, %v981
        %v983 = vsel %vm948, %v973, %v982
        %v985 = vshrl.u32 %v947, 16
        %v987 = vrot.slane %v985, 3
        %v988 = vshll.u32 %v947, 16
        %v990 = vrot.slane %v988, 4
        %v991 = vor.u32 %v987, %v990
        %v992 = vsel %vm948, %v982, %v991
        %997 = vst [vmem:[#allocation3] sm:$0xff] %v965
        %998 = vst [vmem:[#allocation3 + $0x48] sm:$0xff] %v974
        %999 = vst [vmem:[#allocation3 + $0x90] sm:$0xff] %v983
        %1000 = vst [vmem:[#allocation3 + $0xd8] sm:$0xff] %v992
        %v1001 = vld [vmem:[%s719] sm:$0xf0]
        %v1002 = vld [vmem:[%s719 + $0x8] sm:$0xff]
        %v1003 = vld [vmem:[%s719 + $0x10] sm:$0xff]
        %v1004 = vld [vmem:[%s719 + $0x18] sm:$0xff]
        %v1005 = vld [vmem:[%s719 + $0x20] sm:$0xf]
        %vm1011 = vcmask 1043456
        %v1012 = vrot.slane %v1001, 4
        %v1013 = vrot.slane %v1002, 4
        %v1014 = vsel %vm1011, %v1012, %v1013
        %v1015 = vrot.slane %v1003, 4
        %v1016 = vsel %vm1011, %v1013, %v1015
        %v1017 = vrot.slane %v1004, 4
        %v1018 = vsel %vm1011, %v1015, %v1017
        %v1019 = vrot.slane %v1005, 4
        %v1020 = vsel %vm1011, %v1017, %v1019
        %1025 = vst [vmem:[#allocation3 + $0x8] sm:$0xff] %v1014
        %1026 = vst [vmem:[#allocation3 + $0x50] sm:$0xff] %v1016
        %1027 = vst [vmem:[#allocation3 + $0x98] sm:$0xff] %v1018
        %1028 = vst [vmem:[#allocation3 + $0xe0] sm:$0xff] %v1020
        %v1029 = vld [vmem:[%s768] sm:$0xf0]
        %v1030 = vld [vmem:[%s768 + $0x8] sm:$0xff]
        %v1031 = vld [vmem:[%s768 + $0x10] sm:$0xff]
        %v1032 = vld [vmem:[%s768 + $0x18] sm:$0xff]
        %v1033 = vld [vmem:[%s768 + $0x20] sm:$0xf]
        %v1039 = vrot.slane %v1029, 4
        %v1040 = vrot.slane %v1030, 4
        %v1041 = vsel %vm1011, %v1039, %v1040
        %v1042 = vrot.slane %v1031, 4
        %v1043 = vsel %vm1011, %v1040, %v1042
        %v1044 = vrot.slane %v1032, 4
        %v1045 = vsel %vm1011, %v1042, %v1044
        %v1046 = vrot.slane %v1033, 4
        %v1047 = vsel %vm1011, %v1044, %v1046
        %1052 = vst [vmem:[#allocation3 + $0x10] sm:$0xff] %v1041
        %1053 = vst [vmem:[#allocation3 + $0x58] sm:$0xff] %v1043
        %1054 = vst [vmem:[#allocation3 + $0xa0] sm:$0xff] %v1045
        %1055 = vst [vmem:[#allocation3 + $0xe8] sm:$0xff] %v1047
        %v1056 = vld [vmem:[%s670] sm:$0x80]
        %v1057 = vld [vmem:[%s670 + $0x8] sm:$0xff]
        %v1058 = vld [vmem:[%s670 + $0x10] sm:$0xff]
        %v1059 = vld [vmem:[%s670 + $0x18] sm:$0xff]
        %v1060 = vld [vmem:[%s670 + $0x20] sm:$0xff]
        %v1061 = vld [vmem:[#allocation15] sm:$0xf]
        %v1062 = vld [vmem:[#allocation15 + $0x4] sm:$0xf]
        %v1063 = vld [vmem:[#allocation15 + $0x8] sm:$0xf]
        %v1064 = vld [vmem:[#allocation15 + $0xc] sm:$0xf]
        %v1065 = vld [vmem:[#allocation15 + $0x10] sm:$0xf]
        %v1066 = vld [vmem:[#allocation15 + $0x14] sm:$0xf]
        %v1067 = vld [vmem:[#allocation15 + $0x18] sm:$0xf]
        %v1068 = vld [vmem:[#allocation15 + $0x1c] sm:$0xf]
        %1070 = vset.pattern.permute.xlu0 0
        %1071 = vperm.xlu0 %1070, %v1061
        %v1072 = vpop.permute.xlu0 %1071
        %v1075 = vunpack.c.l.s4 839922192
        %v1076 = vunpack.c.0.s8 %v1075
        %v1077 = vlaneseq
        %v1078 = vshrl.u32 %v1077, 7
        %v1079 = vsub.s32 %v1076, %v1078
        %v1080 = vrot.slane %v1072, %v1079
        %1082 = vset.pattern.permute.xlu0 0
        %1083 = vperm.xlu0 %1082, %v1062
        %v1084 = vpop.permute.xlu0 %1083
        %v1087 = vunpack.c.l.s4 839922192
        %v1088 = vunpack.c.0.s8 %v1087
        %v1089 = vlaneseq
        %v1090 = vshrl.u32 %v1089, 7
        %v1091 = vsub.s32 %v1088, %v1090
        %v1092 = vrot.slane %v1084, %v1091
        %1094 = vset.pattern.permute.xlu0 0
        %1095 = vperm.xlu0 %1094, %v1063
        %v1096 = vpop.permute.xlu0 %1095
        %v1099 = vunpack.c.l.s4 839922192
        %v1100 = vunpack.c.0.s8 %v1099
        %v1101 = vlaneseq
        %v1102 = vshrl.u32 %v1101, 7
        %v1103 = vsub.s32 %v1100, %v1102
        %v1104 = vrot.slane %v1096, %v1103
        %1106 = vset.pattern.permute.xlu0 0
        %1107 = vperm.xlu0 %1106, %v1064
        %v1108 = vpop.permute.xlu0 %1107
        %v1111 = vunpack.c.l.s4 839922192
        %v1112 = vunpack.c.0.s8 %v1111
        %v1113 = vlaneseq
        %v1114 = vshrl.u32 %v1113, 7
        %v1115 = vsub.s32 %v1112, %v1114
        %v1116 = vrot.slane %v1108, %v1115
        %1118 = vset.pattern.permute.xlu0 0
        %1119 = vperm.xlu0 %1118, %v1065
        %v1120 = vpop.permute.xlu0 %1119
        %v1123 = vunpack.c.l.s4 839922192
        %v1124 = vunpack.c.0.s8 %v1123
        %v1125 = vlaneseq
        %v1126 = vshrl.u32 %v1125, 7
        %v1127 = vsub.s32 %v1124, %v1126
        %v1128 = vrot.slane %v1120, %v1127
        %1130 = vset.pattern.permute.xlu0 0
        %1131 = vperm.xlu0 %1130, %v1066
        %v1132 = vpop.permute.xlu0 %1131
        %v1135 = vunpack.c.l.s4 839922192
        %v1136 = vunpack.c.0.s8 %v1135
        %v1137 = vlaneseq
        %v1138 = vshrl.u32 %v1137, 7
        %v1139 = vsub.s32 %v1136, %v1138
        %v1140 = vrot.slane %v1132, %v1139
        %1142 = vset.pattern.permute.xlu0 0
        %1143 = vperm.xlu0 %1142, %v1067
        %v1144 = vpop.permute.xlu0 %1143
        %v1147 = vunpack.c.l.s4 839922192
        %v1148 = vunpack.c.0.s8 %v1147
        %v1149 = vlaneseq
        %v1150 = vshrl.u32 %v1149, 7
        %v1151 = vsub.s32 %v1148, %v1150
        %v1152 = vrot.slane %v1144, %v1151
        %1154 = vset.pattern.permute.xlu0 0
        %1155 = vperm.xlu0 %1154, %v1068
        %v1156 = vpop.permute.xlu0 %1155
        %v1159 = vunpack.c.l.s4 839922192
        %v1160 = vunpack.c.0.s8 %v1159
        %v1161 = vlaneseq
        %v1162 = vshrl.u32 %v1161, 7
        %v1163 = vsub.s32 %v1160, %v1162
        %v1164 = vrot.slane %v1156, %v1163
        %v1173 = vunpack.c.l.b16 %v1080
        %v1174 = vunpack.c.l.b16 %v1092
        %v1175 = vunpack.c.l.b16 %v1104
        %v1176 = vunpack.c.l.b16 %v1116
        %v1177 = vunpack.c.l.b16 %v1128
        %v1178 = vunpack.c.l.b16 %v1140
        %v1179 = vunpack.c.l.b16 %v1152
        %v1180 = vunpack.c.l.b16 %v1164
        %v1181 = vpack.c.b16 %v1174, %v1173
        %v1182 = vpack.c.b16 %v1176, %v1175
        %v1183 = vpack.c.b16 %v1178, %v1177
        %v1184 = vpack.c.b16 %v1180, %v1179
        %vm1185 = vsmask.f32 7424
        %v1187 = vshll.u32 %v1181, 16
        %v1189 = vrot.slane %v1187, 1
        %v1190 = vshrl.u32 %v1181, 16
        %v1192 = vor.u32 %v1190, %v1189
        %v1194 = vshll.u32 %v1182, 16
        %v1196 = vrot.slane %v1194, 1
        %v1197 = vsel %vm1185, %v1192, %v1196
        %v1198 = vshrl.u32 %v1182, 16
        %v1200 = vor.u32 %v1198, %v1196
        %v1202 = vshll.u32 %v1183, 16
        %v1204 = vrot.slane %v1202, 1
        %v1205 = vsel %vm1185, %v1200, %v1204
        %v1206 = vshrl.u32 %v1183, 16
        %v1208 = vor.u32 %v1206, %v1204
        %v1210 = vshll.u32 %v1184, 16
        %v1212 = vrot.slane %v1210, 1
        %v1213 = vsel %vm1185, %v1208, %v1212
        %v1214 = vshrl.u32 %v1184, 16
        %v1216 = vor.u32 %v1214, %v1212
        %v1222 = vmul.bf16 %v1056, %v1189
        %v1223 = vmul.bf16 %v1057, %v1197
        %v1224 = vmul.bf16 %v1058, %v1205
        %v1225 = vmul.bf16 %v1059, %v1213
        %v1226 = vmul.bf16 %v1060, %v1216
        %vm1227 = vsmask.f32 256
        %v1229 = vshrl.u32 %v1222, 16
        %v1231 = vrot.slane %v1229, 7
        %v1233 = vshrl.u32 %v1223, 16
        %v1235 = vrot.slane %v1233, 7
        %v1236 = vshll.u32 %v1223, 16
        %v1238 = vor.u32 %v1235, %v1236
        %v1239 = vsel %vm1227, %v1231, %v1238
        %v1241 = vshrl.u32 %v1224, 16
        %v1243 = vrot.slane %v1241, 7
        %v1244 = vshll.u32 %v1224, 16
        %v1246 = vor.u32 %v1243, %v1244
        %v1247 = vsel %vm1227, %v1235, %v1246
        %v1249 = vshrl.u32 %v1225, 16
        %v1251 = vrot.slane %v1249, 7
        %v1252 = vshll.u32 %v1225, 16
        %v1254 = vor.u32 %v1251, %v1252
        %v1255 = vsel %vm1227, %v1243, %v1254
        %v1257 = vshrl.u32 %v1226, 16
        %v1259 = vrot.slane %v1257, 7
        %v1260 = vshll.u32 %v1226, 16
        %v1262 = vor.u32 %v1259, %v1260
        %v1263 = vsel %vm1227, %v1251, %v1262
        %1268 = vst [vmem:[#allocation3 + $0x18] sm:$0xff] %v1239
        %1269 = vst [vmem:[#allocation3 + $0x60] sm:$0xff] %v1247
        %1270 = vst [vmem:[#allocation3 + $0xa8] sm:$0xff] %v1255
        %1271 = vst [vmem:[#allocation3 + $0xf0] sm:$0xff] %v1263
        %v1272 = vld [vmem:[#allocation2 + $0x8] sm:$0xff]
        %v1273 = vld [vmem:[#allocation2 + $0x10] sm:$0xff]
        %v1274 = vld [vmem:[#allocation2 + $0x18] sm:$0xff]
        %v1275 = vld [vmem:[#allocation2 + $0x20] sm:$0xff]
        %1276 = vst [vmem:[#allocation3 + $0x20] sm:$0xff] %v1272
        %1277 = vst [vmem:[#allocation3 + $0x68] sm:$0xff] %v1273
        %1278 = vst [vmem:[#allocation3 + $0xb0] sm:$0xff] %v1274
        %1279 = vst [vmem:[#allocation3 + $0xf8] sm:$0xff] %v1275
        %v1280 = vld [vmem:[%s670 + $0x8] sm:$0xff]
        %v1281 = vld [vmem:[%s670 + $0x10] sm:$0xff]
        %v1282 = vld [vmem:[%s670 + $0x18] sm:$0xff]
        %v1283 = vld [vmem:[%s670 + $0x20] sm:$0xff]
        %1284 = vst [vmem:[#allocation3 + $0x28] sm:$0xff] %v1280
        %1285 = vst [vmem:[#allocation3 + $0x70] sm:$0xff] %v1281
        %1286 = vst [vmem:[#allocation3 + $0xb8] sm:$0xff] %v1282
        %1287 = vst [vmem:[#allocation3 + $0x100] sm:$0xff] %v1283
        %v1288 = vld [vmem:[%s768] sm:$0x80]
        %v1289 = vld [vmem:[%s768 + $0x8] sm:$0xff]
        %v1290 = vld [vmem:[%s768 + $0x10] sm:$0xff]
        %v1291 = vld [vmem:[%s768 + $0x18] sm:$0xff]
        %v1292 = vld [vmem:[%s768 + $0x20] sm:$0xff]
        %v1293 = vld [vmem:[#allocation15] sm:$0xf]
        %v1294 = vld [vmem:[#allocation15 + $0x4] sm:$0xf]
        %v1295 = vld [vmem:[#allocation15 + $0x8] sm:$0xf]
        %v1296 = vld [vmem:[#allocation15 + $0xc] sm:$0xf]
        %v1297 = vld [vmem:[#allocation15 + $0x10] sm:$0xf]
        %v1298 = vld [vmem:[#allocation15 + $0x14] sm:$0xf]
        %v1299 = vld [vmem:[#allocation15 + $0x18] sm:$0xf]
        %v1300 = vld [vmem:[#allocation15 + $0x1c] sm:$0xf]
        %1302 = vset.pattern.permute.xlu0 0
        %1303 = vperm.xlu0 %1302, %v1293
        %v1304 = vpop.permute.xlu0 %1303
        %v1307 = vunpack.c.l.s4 839922192
        %v1308 = vunpack.c.0.s8 %v1307
        %v1309 = vlaneseq
        %v1310 = vshrl.u32 %v1309, 7
        %v1311 = vsub.s32 %v1308, %v1310
        %v1312 = vrot.slane %v1304, %v1311
        %1314 = vset.pattern.permute.xlu0 0
        %1315 = vperm.xlu0 %1314, %v1294
        %v1316 = vpop.permute.xlu0 %1315
        %v1319 = vunpack.c.l.s4 839922192
        %v1320 = vunpack.c.0.s8 %v1319
        %v1321 = vlaneseq
        %v1322 = vshrl.u32 %v1321, 7
        %v1323 = vsub.s32 %v1320, %v1322
        %v1324 = vrot.slane %v1316, %v1323
        %1326 = vset.pattern.permute.xlu0 0
        %1327 = vperm.xlu0 %1326, %v1295
        %v1328 = vpop.permute.xlu0 %1327
        %v1331 = vunpack.c.l.s4 839922192
        %v1332 = vunpack.c.0.s8 %v1331
        %v1333 = vlaneseq
        %v1334 = vshrl.u32 %v1333, 7
        %v1335 = vsub.s32 %v1332, %v1334
        %v1336 = vrot.slane %v1328, %v1335
        %1338 = vset.pattern.permute.xlu0 0
        %1339 = vperm.xlu0 %1338, %v1296
        %v1340 = vpop.permute.xlu0 %1339
        %v1343 = vunpack.c.l.s4 839922192
        %v1344 = vunpack.c.0.s8 %v1343
        %v1345 = vlaneseq
        %v1346 = vshrl.u32 %v1345, 7
        %v1347 = vsub.s32 %v1344, %v1346
        %v1348 = vrot.slane %v1340, %v1347
        %1350 = vset.pattern.permute.xlu0 0
        %1351 = vperm.xlu0 %1350, %v1297
        %v1352 = vpop.permute.xlu0 %1351
        %v1355 = vunpack.c.l.s4 839922192
        %v1356 = vunpack.c.0.s8 %v1355
        %v1357 = vlaneseq
        %v1358 = vshrl.u32 %v1357, 7
        %v1359 = vsub.s32 %v1356, %v1358
        %v1360 = vrot.slane %v1352, %v1359
        %1362 = vset.pattern.permute.xlu0 0
        %1363 = vperm.xlu0 %1362, %v1298
        %v1364 = vpop.permute.xlu0 %1363
        %v1367 = vunpack.c.l.s4 839922192
        %v1368 = vunpack.c.0.s8 %v1367
        %v1369 = vlaneseq
        %v1370 = vshrl.u32 %v1369, 7
        %v1371 = vsub.s32 %v1368, %v1370
        %v1372 = vrot.slane %v1364, %v1371
        %1374 = vset.pattern.permute.xlu0 0
        %1375 = vperm.xlu0 %1374, %v1299
        %v1376 = vpop.permute.xlu0 %1375
        %v1379 = vunpack.c.l.s4 839922192
        %v1380 = vunpack.c.0.s8 %v1379
        %v1381 = vlaneseq
        %v1382 = vshrl.u32 %v1381, 7
        %v1383 = vsub.s32 %v1380, %v1382
        %v1384 = vrot.slane %v1376, %v1383
        %1386 = vset.pattern.permute.xlu0 0
        %1387 = vperm.xlu0 %1386, %v1300
        %v1388 = vpop.permute.xlu0 %1387
        %v1391 = vunpack.c.l.s4 839922192
        %v1392 = vunpack.c.0.s8 %v1391
        %v1393 = vlaneseq
        %v1394 = vshrl.u32 %v1393, 7
        %v1395 = vsub.s32 %v1392, %v1394
        %v1396 = vrot.slane %v1388, %v1395
        %v1405 = vunpack.c.l.b16 %v1312
        %v1406 = vunpack.c.l.b16 %v1324
        %v1407 = vunpack.c.l.b16 %v1336
        %v1408 = vunpack.c.l.b16 %v1348
        %v1409 = vunpack.c.l.b16 %v1360
        %v1410 = vunpack.c.l.b16 %v1372
        %v1411 = vunpack.c.l.b16 %v1384
        %v1412 = vunpack.c.l.b16 %v1396
        %v1413 = vpack.c.b16 %v1406, %v1405
        %v1414 = vpack.c.b16 %v1408, %v1407
        %v1415 = vpack.c.b16 %v1410, %v1409
        %v1416 = vpack.c.b16 %v1412, %v1411
        %v1418 = vshll.u32 %v1413, 16
        %v1420 = vrot.slane %v1418, 1
        %v1421 = vshrl.u32 %v1413, 16
        %v1423 = vor.u32 %v1421, %v1420
        %v1425 = vshll.u32 %v1414, 16
        %v1427 = vrot.slane %v1425, 1
        %v1428 = vsel %vm1185, %v1423, %v1427
        %v1429 = vshrl.u32 %v1414, 16
        %v1431 = vor.u32 %v1429, %v1427
        %v1433 = vshll.u32 %v1415, 16
        %v1435 = vrot.slane %v1433, 1
        %v1436 = vsel %vm1185, %v1431, %v1435
        %v1437 = vshrl.u32 %v1415, 16
        %v1439 = vor.u32 %v1437, %v1435
        %v1441 = vshll.u32 %v1416, 16
        %v1443 = vrot.slane %v1441, 1
        %v1444 = vsel %vm1185, %v1439, %v1443
        %v1445 = vshrl.u32 %v1416, 16
        %v1447 = vor.u32 %v1445, %v1443
        %v1453 = vmul.bf16 %v1288, %v1420
        %v1454 = vmul.bf16 %v1289, %v1428
        %v1455 = vmul.bf16 %v1290, %v1436
        %v1456 = vmul.bf16 %v1291, %v1444
        %v1457 = vmul.bf16 %v1292, %v1447
        %v1459 = vshrl.u32 %v1453, 16
        %v1461 = vrot.slane %v1459, 7
        %v1463 = vshrl.u32 %v1454, 16
        %v1465 = vrot.slane %v1463, 7
        %v1466 = vshll.u32 %v1454, 16
        %v1468 = vor.u32 %v1465, %v1466
        %v1469 = vsel %vm1227, %v1461, %v1468
        %v1471 = vshrl.u32 %v1455, 16
        %v1473 = vrot.slane %v1471, 7
        %v1474 = vshll.u32 %v1455, 16
        %v1476 = vor.u32 %v1473, %v1474
        %v1477 = vsel %vm1227, %v1465, %v1476
        %v1479 = vshrl.u32 %v1456, 16
        %v1481 = vrot.slane %v1479, 7
        %v1482 = vshll.u32 %v1456, 16
        %v1484 = vor.u32 %v1481, %v1482
        %v1485 = vsel %vm1227, %v1473, %v1484
        %v1487 = vshrl.u32 %v1457, 16
        %v1489 = vrot.slane %v1487, 7
        %v1490 = vshll.u32 %v1457, 16
        %v1492 = vor.u32 %v1489, %v1490
        %v1493 = vsel %vm1227, %v1481, %v1492
        %1498 = vst [vmem:[#allocation3 + $0x30] sm:$0xff] %v1469
        %1499 = vst [vmem:[#allocation3 + $0x78] sm:$0xff] %v1477
        %1500 = vst [vmem:[#allocation3 + $0xc0] sm:$0xff] %v1485
        %1501 = vst [vmem:[#allocation3 + $0x108] sm:$0xff] %v1493
        %v1502 = vld [vmem:[%s719 + $0x8] sm:$0xff]
        %v1503 = vld [vmem:[%s719 + $0x10] sm:$0xff]
        %v1504 = vld [vmem:[%s719 + $0x18] sm:$0xff]
        %v1505 = vld [vmem:[%s719 + $0x20] sm:$0xff]
        %1506 = vst [vmem:[#allocation3 + $0x38] sm:$0xff] %v1502
        %1507 = vst [vmem:[#allocation3 + $0x80] sm:$0xff] %v1503
        %1508 = vst [vmem:[#allocation3 + $0xc8] sm:$0xff] %v1504
        %1509 = vst [vmem:[#allocation3 + $0x110] sm:$0xff] %v1505
        %v1510 = vld [vmem:[%s768 + $0x8] sm:$0xff]
        %v1511 = vld [vmem:[%s768 + $0x10] sm:$0xff]
        %v1512 = vld [vmem:[%s768 + $0x18] sm:$0xff]
        %v1513 = vld [vmem:[%s768 + $0x20] sm:$0xff]
        %1514 = vst [vmem:[#allocation3 + $0x40] sm:$0xff] %v1510
        %1515 = vst [vmem:[#allocation3 + $0x88] sm:$0xff] %v1511
        %1516 = vst [vmem:[#allocation3 + $0xd0] sm:$0xff] %v1512
        %1517 = vst [vmem:[#allocation3 + $0x118] sm:$0xff] %v1513
        %v1518 = vld [vmem:[#allocation3] sm:$0xff]
        %v1519 = vld [vmem:[#allocation3 + $0x8] sm:$0xff]
        %v1520 = vld [vmem:[#allocation3 + $0x10] sm:$0xff]
        %v1521 = vld [vmem:[#allocation3 + $0x18] sm:$0xff]
        %v1522 = vld [vmem:[#allocation3 + $0x20] sm:$0xff]
        %v1523 = vld [vmem:[#allocation3 + $0x28] sm:$0xff]
        %v1524 = vld [vmem:[#allocation3 + $0x30] sm:$0xff]
        %v1525 = vld [vmem:[#allocation3 + $0x38] sm:$0xff]
        %v1526 = vld [vmem:[#allocation3 + $0x40] sm:$0xff]
        %v1527 = vld [vmem:[#allocation3 + $0x48] sm:$0xff]
        %v1528 = vld [vmem:[#allocation3 + $0x50] sm:$0xff]
        %v1529 = vld [vmem:[#allocation3 + $0x58] sm:$0xff]
        %v1530 = vld [vmem:[#allocation3 + $0x60] sm:$0xff]
        %v1531 = vld [vmem:[#allocation3 + $0x68] sm:$0xff]
        %v1532 = vld [vmem:[#allocation3 + $0x70] sm:$0xff]
        %v1533 = vld [vmem:[#allocation3 + $0x78] sm:$0xff]
        %v1534 = vld [vmem:[#allocation3 + $0x80] sm:$0xff]
        %v1535 = vld [vmem:[#allocation3 + $0x88] sm:$0xff]
        %v1536 = vld [vmem:[#allocation3 + $0x90] sm:$0xff]
        %v1537 = vld [vmem:[#allocation3 + $0x98] sm:$0xff]
        %v1538 = vld [vmem:[#allocation3 + $0xa0] sm:$0xff]
        %v1539 = vld [vmem:[#allocation3 + $0xa8] sm:$0xff]
        %v1540 = vld [vmem:[#allocation3 + $0xb0] sm:$0xff]
        %v1541 = vld [vmem:[#allocation3 + $0xb8] sm:$0xff]
        %v1542 = vld [vmem:[#allocation3 + $0xc0] sm:$0xff]
        %v1543 = vld [vmem:[#allocation3 + $0xc8] sm:$0xff]
        %v1544 = vld [vmem:[#allocation3 + $0xd0] sm:$0xff]
        %v1545 = vld [vmem:[#allocation3 + $0xd8] sm:$0xff]
        %v1546 = vld [vmem:[#allocation3 + $0xe0] sm:$0xff]
        %v1547 = vld [vmem:[#allocation3 + $0xe8] sm:$0xff]
        %v1548 = vld [vmem:[#allocation3 + $0xf0] sm:$0xff]
        %v1549 = vld [vmem:[#allocation3 + $0xf8] sm:$0xff]
        %v1550 = vld [vmem:[#allocation3 + $0x100] sm:$0xff]
        %v1551 = vld [vmem:[#allocation3 + $0x108] sm:$0xff]
        %v1552 = vld [vmem:[#allocation3 + $0x110] sm:$0xff]
        %v1553 = vld [vmem:[#allocation3 + $0x118] sm:$0xff]
        %v1554 = vld [vmem:[#allocation13] sm:$0xf]
        %v1555 = vld [vmem:[#allocation13 + $0x4] sm:$0xf]
        %v1556 = vld [vmem:[#allocation13 + $0x8] sm:$0xf]
        %v1557 = vld [vmem:[#allocation13 + $0xc] sm:$0xf]
        %v1558 = vld [vmem:[#allocation13 + $0x10] sm:$0xf]
        %v1559 = vld [vmem:[#allocation13 + $0x14] sm:$0xf]
        %v1560 = vld [vmem:[#allocation13 + $0x18] sm:$0xf]
        %v1561 = vld [vmem:[#allocation13 + $0x1c] sm:$0xf]
        %v1562 = vld [vmem:[#allocation13 + $0x20] sm:$0xf]
        %v1563 = vld [vmem:[#allocation13 + $0x24] sm:$0xf]
        %v1564 = vld [vmem:[#allocation13 + $0x28] sm:$0xf]
        %v1565 = vld [vmem:[#allocation13 + $0x2c] sm:$0xf]
        %v1566 = vld [vmem:[#allocation13 + $0x30] sm:$0xf]
        %v1567 = vld [vmem:[#allocation13 + $0x34] sm:$0xf]
        %v1568 = vld [vmem:[#allocation13 + $0x38] sm:$0xf]
        %v1569 = vld [vmem:[#allocation13 + $0x3c] sm:$0xf]
        %v1570 = vld [vmem:[#allocation13 + $0x40] sm:$0xf]
        %v1571 = vld [vmem:[#allocation13 + $0x44] sm:$0xf]
        %v1572 = vld [vmem:[#allocation13 + $0x48] sm:$0xf]
        %v1573 = vld [vmem:[#allocation13 + $0x4c] sm:$0xf]
        %v1574 = vld [vmem:[#allocation13 + $0x50] sm:$0xf]
        %v1575 = vld [vmem:[#allocation13 + $0x54] sm:$0xf]
        %v1576 = vld [vmem:[#allocation13 + $0x58] sm:$0xf]
        %v1577 = vld [vmem:[#allocation13 + $0x5c] sm:$0xf]
        %v1578 = vld [vmem:[#allocation13 + $0x60] sm:$0xf]
        %v1579 = vld [vmem:[#allocation13 + $0x64] sm:$0xf]
        %v1580 = vld [vmem:[#allocation13 + $0x68] sm:$0xf]
        %v1581 = vld [vmem:[#allocation13 + $0x6c] sm:$0xf]
        %v1582 = vld [vmem:[#allocation13 + $0x70] sm:$0xf]
        %v1583 = vld [vmem:[#allocation13 + $0x74] sm:$0xf]
        %v1584 = vld [vmem:[#allocation13 + $0x78] sm:$0xf]
        %v1585 = vld [vmem:[#allocation13 + $0x7c] sm:$0xf]
        %v1586 = vld [vmem:[#allocation13 + $0x80] sm:$0xf]
        %v1587 = vld [vmem:[#allocation13 + $0x84] sm:$0xf]
        %v1588 = vld [vmem:[#allocation13 + $0x88] sm:$0xf]
        %v1589 = vld [vmem:[#allocation13 + $0x8c] sm:$0xf]
        %v1590 = vld [vmem:[#allocation13 + $0x90] sm:$0xf]
        %v1591 = vld [vmem:[#allocation13 + $0x94] sm:$0xf]
        %v1592 = vld [vmem:[#allocation13 + $0x98] sm:$0xf]
        %v1593 = vld [vmem:[#allocation13 + $0x9c] sm:$0xf]
        %v1594 = vld [vmem:[#allocation13 + $0xa0] sm:$0xf]
        %v1595 = vld [vmem:[#allocation13 + $0xa4] sm:$0xf]
        %v1596 = vld [vmem:[#allocation13 + $0xa8] sm:$0xf]
        %v1597 = vld [vmem:[#allocation13 + $0xac] sm:$0xf]
        %v1598 = vld [vmem:[#allocation13 + $0xb0] sm:$0xf]
        %v1599 = vld [vmem:[#allocation13 + $0xb4] sm:$0xf]
        %v1600 = vld [vmem:[#allocation13 + $0xb8] sm:$0xf]
        %v1601 = vld [vmem:[#allocation13 + $0xbc] sm:$0xf]
        %v1602 = vld [vmem:[#allocation13 + $0xc0] sm:$0xf]
        %v1603 = vld [vmem:[#allocation13 + $0xc4] sm:$0xf]
        %v1604 = vld [vmem:[#allocation13 + $0xc8] sm:$0xf]
        %v1605 = vld [vmem:[#allocation13 + $0xcc] sm:$0xf]
        %v1606 = vld [vmem:[#allocation13 + $0xd0] sm:$0xf]
        %v1607 = vld [vmem:[#allocation13 + $0xd4] sm:$0xf]
        %v1608 = vld [vmem:[#allocation13 + $0xd8] sm:$0xf]
        %v1609 = vld [vmem:[#allocation13 + $0xdc] sm:$0xf]
        %v1610 = vld [vmem:[#allocation13 + $0xe0] sm:$0xf]
        %v1611 = vld [vmem:[#allocation13 + $0xe4] sm:$0xf]
        %v1612 = vld [vmem:[#allocation13 + $0xe8] sm:$0xf]
        %v1613 = vld [vmem:[#allocation13 + $0xec] sm:$0xf]
        %v1614 = vld [vmem:[#allocation13 + $0xf0] sm:$0xf]
        %v1615 = vld [vmem:[#allocation13 + $0xf4] sm:$0xf]
        %v1616 = vld [vmem:[#allocation13 + $0xf8] sm:$0xf]
        %v1617 = vld [vmem:[#allocation13 + $0xfc] sm:$0xf]
        %v1618 = vld [vmem:[#allocation13 + $0x100] sm:$0xf]
        %v1619 = vld [vmem:[#allocation13 + $0x104] sm:$0xf]
        %v1620 = vld [vmem:[#allocation13 + $0x108] sm:$0xf]
        %v1621 = vld [vmem:[#allocation13 + $0x10c] sm:$0xf]
        %v1622 = vld [vmem:[#allocation13 + $0x110] sm:$0xf]
        %v1623 = vld [vmem:[#allocation13 + $0x114] sm:$0xf]
        %v1624 = vld [vmem:[#allocation13 + $0x118] sm:$0xf]
        %v1625 = vld [vmem:[#allocation13 + $0x11c] sm:$0xf]
        %v1626 = vld [vmem:[#allocation13 + $0x120] sm:$0xf]
        %v1627 = vld [vmem:[#allocation13 + $0x124] sm:$0xf]
        %v1628 = vld [vmem:[#allocation13 + $0x128] sm:$0xf]
        %v1629 = vld [vmem:[#allocation13 + $0x12c] sm:$0xf]
        %v1630 = vld [vmem:[#allocation13 + $0x130] sm:$0xf]
        %v1631 = vld [vmem:[#allocation13 + $0x134] sm:$0xf]
        %v1632 = vld [vmem:[#allocation13 + $0x138] sm:$0xf]
        %v1633 = vld [vmem:[#allocation13 + $0x13c] sm:$0xf]
        %v1634 = vld [vmem:[#allocation13 + $0x140] sm:$0xf]
        %v1635 = vld [vmem:[#allocation13 + $0x144] sm:$0xf]
        %v1636 = vld [vmem:[#allocation13 + $0x148] sm:$0xf]
        %v1637 = vld [vmem:[#allocation13 + $0x14c] sm:$0xf]
        %v1638 = vld [vmem:[#allocation13 + $0x150] sm:$0xf]
        %v1639 = vld [vmem:[#allocation13 + $0x154] sm:$0xf]
        %v1640 = vld [vmem:[#allocation13 + $0x158] sm:$0xf]
        %v1641 = vld [vmem:[#allocation13 + $0x15c] sm:$0xf]
        %v1642 = vld [vmem:[#allocation13 + $0x160] sm:$0xf]
        %v1643 = vld [vmem:[#allocation13 + $0x164] sm:$0xf]
        %v1644 = vld [vmem:[#allocation13 + $0x168] sm:$0xf]
        %v1645 = vld [vmem:[#allocation13 + $0x16c] sm:$0xf]
        %v1646 = vld [vmem:[#allocation13 + $0x170] sm:$0xf]
        %v1647 = vld [vmem:[#allocation13 + $0x174] sm:$0xf]
        %v1648 = vld [vmem:[#allocation13 + $0x178] sm:$0xf]
        %v1649 = vld [vmem:[#allocation13 + $0x17c] sm:$0xf]
        %v1650 = vld [vmem:[#allocation13 + $0x180] sm:$0xf]
        %v1651 = vld [vmem:[#allocation13 + $0x184] sm:$0xf]
        %v1652 = vld [vmem:[#allocation13 + $0x188] sm:$0xf]
        %v1653 = vld [vmem:[#allocation13 + $0x18c] sm:$0xf]
        %v1654 = vld [vmem:[#allocation13 + $0x190] sm:$0xf]
        %v1655 = vld [vmem:[#allocation13 + $0x194] sm:$0xf]
        %v1656 = vld [vmem:[#allocation13 + $0x198] sm:$0xf]
        %v1657 = vld [vmem:[#allocation13 + $0x19c] sm:$0xf]
        %v1658 = vld [vmem:[#allocation13 + $0x1a0] sm:$0xf]
        %v1659 = vld [vmem:[#allocation13 + $0x1a4] sm:$0xf]
        %v1660 = vld [vmem:[#allocation13 + $0x1a8] sm:$0xf]
        %v1661 = vld [vmem:[#allocation13 + $0x1ac] sm:$0xf]
        %v1662 = vld [vmem:[#allocation13 + $0x1b0] sm:$0xf]
        %v1663 = vld [vmem:[#allocation13 + $0x1b4] sm:$0xf]
        %v1664 = vld [vmem:[#allocation13 + $0x1b8] sm:$0xf]
        %v1665 = vld [vmem:[#allocation13 + $0x1bc] sm:$0xf]
        %v1666 = vld [vmem:[#allocation13 + $0x1c0] sm:$0xf]
        %v1667 = vld [vmem:[#allocation13 + $0x1c4] sm:$0xf]
        %v1668 = vld [vmem:[#allocation13 + $0x1c8] sm:$0xf]
        %v1669 = vld [vmem:[#allocation13 + $0x1cc] sm:$0xf]
        %v1670 = vld [vmem:[#allocation13 + $0x1d0] sm:$0xf]
        %v1671 = vld [vmem:[#allocation13 + $0x1d4] sm:$0xf]
        %v1672 = vld [vmem:[#allocation13 + $0x1d8] sm:$0xf]
        %v1673 = vld [vmem:[#allocation13 + $0x1dc] sm:$0xf]
        %v1674 = vld [vmem:[#allocation13 + $0x1e0] sm:$0xf]
        %v1675 = vld [vmem:[#allocation13 + $0x1e4] sm:$0xf]
        %v1676 = vld [vmem:[#allocation13 + $0x1e8] sm:$0xf]
        %v1677 = vld [vmem:[#allocation13 + $0x1ec] sm:$0xf]
        %v1678 = vld [vmem:[#allocation13 + $0x1f0] sm:$0xf]
        %v1679 = vld [vmem:[#allocation13 + $0x1f4] sm:$0xf]
        %v1680 = vld [vmem:[#allocation13 + $0x1f8] sm:$0xf]
        %v1681 = vld [vmem:[#allocation13 + $0x1fc] sm:$0xf]
        %v1682 = vld [vmem:[#allocation13 + $0x200] sm:$0xf]
        %v1683 = vld [vmem:[#allocation13 + $0x204] sm:$0xf]
        %v1684 = vld [vmem:[#allocation13 + $0x208] sm:$0xf]
        %v1685 = vld [vmem:[#allocation13 + $0x20c] sm:$0xf]
        %v1686 = vld [vmem:[#allocation13 + $0x210] sm:$0xf]
        %v1687 = vld [vmem:[#allocation13 + $0x214] sm:$0xf]
        %v1688 = vld [vmem:[#allocation13 + $0x218] sm:$0xf]
        %v1689 = vld [vmem:[#allocation13 + $0x21c] sm:$0xf]
        %v1690 = vld [vmem:[#allocation13 + $0x220] sm:$0xf]
        %v1691 = vld [vmem:[#allocation13 + $0x224] sm:$0xf]
        %v1692 = vld [vmem:[#allocation13 + $0x228] sm:$0xf]
        %v1693 = vld [vmem:[#allocation13 + $0x22c] sm:$0xf]
        %v1694 = vld [vmem:[#allocation13 + $0x230] sm:$0xf]
        %v1695 = vld [vmem:[#allocation13 + $0x234] sm:$0xf]
        %v1696 = vld [vmem:[#allocation13 + $0x238] sm:$0xf]
        %v1697 = vld [vmem:[#allocation13 + $0x23c] sm:$0xf]
        %v1842 = vunpack.c.l.b16 %v1554
        %v1843 = vunpack.c.l.b16 %v1555
        %v1844 = vunpack.c.l.b16 %v1556
        %v1845 = vunpack.c.l.b16 %v1557
        %v1846 = vunpack.c.l.b16 %v1558
        %v1847 = vunpack.c.l.b16 %v1559
        %v1848 = vunpack.c.l.b16 %v1560
        %v1849 = vunpack.c.l.b16 %v1561
        %v1850 = vunpack.c.l.b16 %v1562
        %v1851 = vunpack.c.l.b16 %v1563
        %v1852 = vunpack.c.l.b16 %v1564
        %v1853 = vunpack.c.l.b16 %v1565
        %v1854 = vunpack.c.l.b16 %v1566
        %v1855 = vunpack.c.l.b16 %v1567
        %v1856 = vunpack.c.l.b16 %v1568
        %v1857 = vunpack.c.l.b16 %v1569
        %v1858 = vunpack.c.l.b16 %v1570
        %v1859 = vunpack.c.l.b16 %v1571
        %v1860 = vunpack.c.l.b16 %v1572
        %v1861 = vunpack.c.l.b16 %v1573
        %v1862 = vunpack.c.l.b16 %v1574
        %v1863 = vunpack.c.l.b16 %v1575
        %v1864 = vunpack.c.l.b16 %v1576
        %v1865 = vunpack.c.l.b16 %v1577
        %v1866 = vunpack.c.l.b16 %v1578
        %v1867 = vunpack.c.l.b16 %v1579
        %v1868 = vunpack.c.l.b16 %v1580
        %v1869 = vunpack.c.l.b16 %v1581
        %v1870 = vunpack.c.l.b16 %v1582
        %v1871 = vunpack.c.l.b16 %v1583
        %v1872 = vunpack.c.l.b16 %v1584
        %v1873 = vunpack.c.l.b16 %v1585
        %v1874 = vunpack.c.l.b16 %v1586
        %v1875 = vunpack.c.l.b16 %v1587
        %v1876 = vunpack.c.l.b16 %v1588
        %v1877 = vunpack.c.l.b16 %v1589
        %v1878 = vunpack.c.l.b16 %v1590
        %v1879 = vunpack.c.l.b16 %v1591
        %v1880 = vunpack.c.l.b16 %v1592
        %v1881 = vunpack.c.l.b16 %v1593
        %v1882 = vunpack.c.l.b16 %v1594
        %v1883 = vunpack.c.l.b16 %v1595
        %v1884 = vunpack.c.l.b16 %v1596
        %v1885 = vunpack.c.l.b16 %v1597
        %v1886 = vunpack.c.l.b16 %v1598
        %v1887 = vunpack.c.l.b16 %v1599
        %v1888 = vunpack.c.l.b16 %v1600
        %v1889 = vunpack.c.l.b16 %v1601
        %v1890 = vunpack.c.l.b16 %v1602
        %v1891 = vunpack.c.l.b16 %v1603
        %v1892 = vunpack.c.l.b16 %v1604
        %v1893 = vunpack.c.l.b16 %v1605
        %v1894 = vunpack.c.l.b16 %v1606
        %v1895 = vunpack.c.l.b16 %v1607
        %v1896 = vunpack.c.l.b16 %v1608
        %v1897 = vunpack.c.l.b16 %v1609
        %v1898 = vunpack.c.l.b16 %v1610
        %v1899 = vunpack.c.l.b16 %v1611
        %v1900 = vunpack.c.l.b16 %v1612
        %v1901 = vunpack.c.l.b16 %v1613
        %v1902 = vunpack.c.l.b16 %v1614
        %v1903 = vunpack.c.l.b16 %v1615
        %v1904 = vunpack.c.l.b16 %v1616
        %v1905 = vunpack.c.l.b16 %v1617
        %v1906 = vunpack.c.l.b16 %v1618
        %v1907 = vunpack.c.l.b16 %v1619
        %v1908 = vunpack.c.l.b16 %v1620
        %v1909 = vunpack.c.l.b16 %v1621
        %v1910 = vunpack.c.l.b16 %v1622
        %v1911 = vunpack.c.l.b16 %v1623
        %v1912 = vunpack.c.l.b16 %v1624
        %v1913 = vunpack.c.l.b16 %v1625
        %v1914 = vunpack.c.l.b16 %v1626
        %v1915 = vunpack.c.l.b16 %v1627
        %v1916 = vunpack.c.l.b16 %v1628
        %v1917 = vunpack.c.l.b16 %v1629
        %v1918 = vunpack.c.l.b16 %v1630
        %v1919 = vunpack.c.l.b16 %v1631
        %v1920 = vunpack.c.l.b16 %v1632
        %v1921 = vunpack.c.l.b16 %v1633
        %v1922 = vunpack.c.l.b16 %v1634
        %v1923 = vunpack.c.l.b16 %v1635
        %v1924 = vunpack.c.l.b16 %v1636
        %v1925 = vunpack.c.l.b16 %v1637
        %v1926 = vunpack.c.l.b16 %v1638
        %v1927 = vunpack.c.l.b16 %v1639
        %v1928 = vunpack.c.l.b16 %v1640
        %v1929 = vunpack.c.l.b16 %v1641
        %v1930 = vunpack.c.l.b16 %v1642
        %v1931 = vunpack.c.l.b16 %v1643
        %v1932 = vunpack.c.l.b16 %v1644
        %v1933 = vunpack.c.l.b16 %v1645
        %v1934 = vunpack.c.l.b16 %v1646
        %v1935 = vunpack.c.l.b16 %v1647
        %v1936 = vunpack.c.l.b16 %v1648
        %v1937 = vunpack.c.l.b16 %v1649
        %v1938 = vunpack.c.l.b16 %v1650
        %v1939 = vunpack.c.l.b16 %v1651
        %v1940 = vunpack.c.l.b16 %v1652
        %v1941 = vunpack.c.l.b16 %v1653
        %v1942 = vunpack.c.l.b16 %v1654
        %v1943 = vunpack.c.l.b16 %v1655
        %v1944 = vunpack.c.l.b16 %v1656
        %v1945 = vunpack.c.l.b16 %v1657
        %v1946 = vunpack.c.l.b16 %v1658
        %v1947 = vunpack.c.l.b16 %v1659
        %v1948 = vunpack.c.l.b16 %v1660
        %v1949 = vunpack.c.l.b16 %v1661
        %v1950 = vunpack.c.l.b16 %v1662
        %v1951 = vunpack.c.l.b16 %v1663
        %v1952 = vunpack.c.l.b16 %v1664
        %v1953 = vunpack.c.l.b16 %v1665
        %v1954 = vunpack.c.l.b16 %v1666
        %v1955 = vunpack.c.l.b16 %v1667
        %v1956 = vunpack.c.l.b16 %v1668
        %v1957 = vunpack.c.l.b16 %v1669
        %v1958 = vunpack.c.l.b16 %v1670
        %v1959 = vunpack.c.l.b16 %v1671
        %v1960 = vunpack.c.l.b16 %v1672
        %v1961 = vunpack.c.l.b16 %v1673
        %v1962 = vunpack.c.l.b16 %v1674
        %v1963 = vunpack.c.l.b16 %v1675
        %v1964 = vunpack.c.l.b16 %v1676
        %v1965 = vunpack.c.l.b16 %v1677
        %v1966 = vunpack.c.l.b16 %v1678
        %v1967 = vunpack.c.l.b16 %v1679
        %v1968 = vunpack.c.l.b16 %v1680
        %v1969 = vunpack.c.l.b16 %v1681
        %v1970 = vunpack.c.l.b16 %v1682
        %v1971 = vunpack.c.l.b16 %v1683
        %v1972 = vunpack.c.l.b16 %v1684
        %v1973 = vunpack.c.l.b16 %v1685
        %v1974 = vunpack.c.l.b16 %v1686
        %v1975 = vunpack.c.l.b16 %v1687
        %v1976 = vunpack.c.l.b16 %v1688
        %v1977 = vunpack.c.l.b16 %v1689
        %v1978 = vunpack.c.l.b16 %v1690
        %v1979 = vunpack.c.l.b16 %v1691
        %v1980 = vunpack.c.l.b16 %v1692
        %v1981 = vunpack.c.l.b16 %v1693
        %v1982 = vunpack.c.l.b16 %v1694
        %v1983 = vunpack.c.l.b16 %v1695
        %v1984 = vunpack.c.l.b16 %v1696
        %v1985 = vunpack.c.l.b16 %v1697
        %v1986 = vpack.c.b16 %v1843, %v1842
        %v1987 = vpack.c.b16 %v1845, %v1844
        %v1988 = vpack.c.b16 %v1847, %v1846
        %v1989 = vpack.c.b16 %v1849, %v1848
        %v1990 = vpack.c.b16 %v1851, %v1850
        %v1991 = vpack.c.b16 %v1853, %v1852
        %v1992 = vpack.c.b16 %v1855, %v1854
        %v1993 = vpack.c.b16 %v1857, %v1856
        %v1994 = vpack.c.b16 %v1859, %v1858
        %v1995 = vpack.c.b16 %v1861, %v1860
        %v1996 = vpack.c.b16 %v1863, %v1862
        %v1997 = vpack.c.b16 %v1865, %v1864
        %v1998 = vpack.c.b16 %v1867, %v1866
        %v1999 = vpack.c.b16 %v1869, %v1868
        %v2000 = vpack.c.b16 %v1871, %v1870
        %v2001 = vpack.c.b16 %v1873, %v1872
        %v2002 = vpack.c.b16 %v1875, %v1874
        %v2003 = vpack.c.b16 %v1877, %v1876
        %v2004 = vpack.c.b16 %v1879, %v1878
        %v2005 = vpack.c.b16 %v1881, %v1880
        %v2006 = vpack.c.b16 %v1883, %v1882
        %v2007 = vpack.c.b16 %v1885, %v1884
        %v2008 = vpack.c.b16 %v1887, %v1886
        %v2009 = vpack.c.b16 %v1889, %v1888
        %v2010 = vpack.c.b16 %v1891, %v1890
        %v2011 = vpack.c.b16 %v1893, %v1892
        %v2012 = vpack.c.b16 %v1895, %v1894
        %v2013 = vpack.c.b16 %v1897, %v1896
        %v2014 = vpack.c.b16 %v1899, %v1898
        %v2015 = vpack.c.b16 %v1901, %v1900
        %v2016 = vpack.c.b16 %v1903, %v1902
        %v2017 = vpack.c.b16 %v1905, %v1904
        %v2018 = vpack.c.b16 %v1907, %v1906
        %v2019 = vpack.c.b16 %v1909, %v1908
        %v2020 = vpack.c.b16 %v1911, %v1910
        %v2021 = vpack.c.b16 %v1913, %v1912
        %v2022 = vpack.c.b16 %v1915, %v1914
        %v2023 = vpack.c.b16 %v1917, %v1916
        %v2024 = vpack.c.b16 %v1919, %v1918
        %v2025 = vpack.c.b16 %v1921, %v1920
        %v2026 = vpack.c.b16 %v1923, %v1922
        %v2027 = vpack.c.b16 %v1925, %v1924
        %v2028 = vpack.c.b16 %v1927, %v1926
        %v2029 = vpack.c.b16 %v1929, %v1928
        %v2030 = vpack.c.b16 %v1931, %v1930
        %v2031 = vpack.c.b16 %v1933, %v1932
        %v2032 = vpack.c.b16 %v1935, %v1934
        %v2033 = vpack.c.b16 %v1937, %v1936
        %v2034 = vpack.c.b16 %v1939, %v1938
        %v2035 = vpack.c.b16 %v1941, %v1940
        %v2036 = vpack.c.b16 %v1943, %v1942
        %v2037 = vpack.c.b16 %v1945, %v1944
        %v2038 = vpack.c.b16 %v1947, %v1946
        %v2039 = vpack.c.b16 %v1949, %v1948
        %v2040 = vpack.c.b16 %v1951, %v1950
        %v2041 = vpack.c.b16 %v1953, %v1952
        %v2042 = vpack.c.b16 %v1955, %v1954
        %v2043 = vpack.c.b16 %v1957, %v1956
        %v2044 = vpack.c.b16 %v1959, %v1958
        %v2045 = vpack.c.b16 %v1961, %v1960
        %v2046 = vpack.c.b16 %v1963, %v1962
        %v2047 = vpack.c.b16 %v1965, %v1964
        %v2048 = vpack.c.b16 %v1967, %v1966
        %v2049 = vpack.c.b16 %v1969, %v1968
        %v2050 = vpack.c.b16 %v1971, %v1970
        %v2051 = vpack.c.b16 %v1973, %v1972
        %v2052 = vpack.c.b16 %v1975, %v1974
        %v2053 = vpack.c.b16 %v1977, %v1976
        %v2054 = vpack.c.b16 %v1979, %v1978
        %v2055 = vpack.c.b16 %v1981, %v1980
        %v2056 = vpack.c.b16 %v1983, %v1982
        %v2057 = vpack.c.b16 %v1985, %v1984
        %2130 = vmatprep.subr.bf16.mxu0 0
        %2131 = vmatpush1.bf16.msra.mxu0 %v1986
        %2132 = vmatprep.subr.bf16.mxu0 0
        %2133 = vmatpush1.bf16.msra.mxu0 %v1987
        %2134 = vmatprep.subr.bf16.mxu0 0
        %2135 = vmatpush1.bf16.msra.mxu0 %v1988
        %2136 = vmatprep.subr.bf16.mxu0 0
        %2137 = vmatpush1.bf16.msra.mxu0 %v1989
        %2138 = vmatprep.subr.bf16.mxu0 0
        %2139 = vmatpush1.bf16.msra.mxu0 %v1990
        %2140 = vmatprep.subr.bf16.mxu0 0
        %2141 = vmatpush1.bf16.msra.mxu0 %v1991
        %2142 = vmatprep.subr.bf16.mxu0 0
        %2143 = vmatpush1.bf16.msra.mxu0 %v1992
        %2144 = vmatprep.subr.bf16.mxu0 0
        %2145 = vmatpush1.bf16.msra.mxu0 %v1993
        %2146 = vmatprep.subr.bf16.mxu0 0
        %2147 = vmatpush1.bf16.msra.mxu0 %v1994
        %2148 = vmatprep.subr.bf16.mxu0 0
        %2149 = vmatpush1.bf16.msra.mxu0 %v1995
        %2150 = vmatprep.subr.bf16.mxu0 0
        %2151 = vmatpush1.bf16.msra.mxu0 %v1996
        %2152 = vmatprep.subr.bf16.mxu0 0
        %2153 = vmatpush1.bf16.msra.mxu0 %v1997
        %2154 = vmatprep.subr.bf16.mxu0 0
        %2155 = vmatpush1.bf16.msra.mxu0 %v1998
        %2156 = vmatprep.subr.bf16.mxu0 0
        %2157 = vmatpush1.bf16.msra.mxu0 %v1999
        %2158 = vmatprep.subr.bf16.mxu0 0
        %2159 = vmatpush1.bf16.msra.mxu0 %v2000
        %2160 = vmatprep.subr.bf16.mxu0 0
        %2161 = vmatpush1.bf16.msra.mxu0 %v2001
        %2162 = vmatprep.mubr.bf16.mxu0 %v1519
        %2163 = vmatmul.mubr.bf16.gmra.mrb[0].mxu0 %v1518
        %v2164 = vpop.f32.mrb[0].mxu0
        %v2165 = vadd.f32 0.0, %v2164
        %v2166 = vpop.f32.mrb[0].mxu0
        %v2167 = vpop.f32.mrb[0].mxu0
        %v2168 = vadd.f32 0.0, %v2167
        %v2169 = vpop.f32.mrb[0].mxu0
        %2170 = vmatprep.mubr.bf16.mxu0 %v1528
        %2171 = vmatmul.mubr.bf16.gmra.mrb[0].mxu0 %v1527
        %v2172 = vpop.f32.mrb[0].mxu0
        %v2173 = vadd.f32 0.0, %v2172
        %v2174 = vpop.f32.mrb[0].mxu0
        %v2175 = vpop.f32.mrb[0].mxu0
        %v2176 = vadd.f32 0.0, %v2175
        %v2177 = vpop.f32.mrb[0].mxu0
        %2178 = vmatprep.mubr.bf16.mxu0 %v1537
        %2179 = vmatmul.mubr.bf16.gmra.mrb[0].mxu0 %v1536
        %v2180 = vpop.f32.mrb[0].mxu0
        %v2181 = vadd.f32 0.0, %v2180
        %v2182 = vpop.f32.mrb[0].mxu0
        %v2183 = vpop.f32.mrb[0].mxu0
        %v2184 = vadd.f32 0.0, %v2183
        %v2185 = vpop.f32.mrb[0].mxu0
        %2186 = vmatprep.mubr.bf16.mxu0 %v1546
        %2187 = vmatmul.mubr.bf16.gmra.mrb[0].mxu0 %v1545
        %v2188 = vpop.f32.mrb[0].mxu0
        %v2189 = vadd.f32 0.0, %v2188
        %v2190 = vpop.f32.mrb[0].mxu0
        %v2191 = vpop.f32.mrb[0].mxu0
        %v2192 = vadd.f32 0.0, %v2191
        %v2193 = vpop.f32.mrb[0].mxu0
        %2194 = vdwg.mxu0
        %2195 = vmatprep.subr.bf16.mxu0 0
        %2196 = vmatpush1.bf16.msra.mxu0 %v2002
        %2197 = vmatprep.subr.bf16.mxu0 0
        %2198 = vmatpush1.bf16.msra.mxu0 %v2003
        %2199 = vmatprep.subr.bf16.mxu0 0
        %2200 = vmatpush1.bf16.msra.mxu0 %v2004
        %2201 = vmatprep.subr.bf16.mxu0 0
        %2202 = vmatpush1.bf16.msra.mxu0 %v2005
        %2203 = vmatprep.subr.bf16.mxu0 0
        %2204 = vmatpush1.bf16.msra.mxu0 %v2006
        %2205 = vmatprep.subr.bf16.mxu0 0
        %2206 = vmatpush1.bf16.msra.mxu0 %v2007
        %2207 = vmatprep.subr.bf16.mxu0 0
        %2208 = vmatpush1.bf16.msra.mxu0 %v2008
        %2209 = vmatprep.subr.bf16.mxu0 0
        %2210 = vmatpush1.bf16.msra.mxu0 %v2009
        %2211 = vmatprep.subr.bf16.mxu0 0
        %2212 = vmatpush1.bf16.msra.mxu0 %v2010
        %2213 = vmatprep.subr.bf16.mxu0 0
        %2214 = vmatpush1.bf16.msra.mxu0 %v2011
        %2215 = vmatprep.subr.bf16.mxu0 0
        %2216 = vmatpush1.bf16.msra.mxu0 %v2012
        %2217 = vmatprep.subr.bf16.mxu0 0
        %2218 = vmatpush1.bf16.msra.mxu0 %v2013
        %2219 = vmatprep.subr.bf16.mxu0 0
        %2220 = vmatpush1.bf16.msra.mxu0 %v2014
        %2221 = vmatprep.subr.bf16.mxu0 0
        %2222 = vmatpush1.bf16.msra.mxu0 %v2015
        %2223 = vmatprep.subr.bf16.mxu0 0
        %2224 = vmatpush1.bf16.msra.mxu0 %v2016
        %2225 = vmatprep.subr.bf16.mxu0 0
        %2226 = vmatpush1.bf16.msra.mxu0 %v2017
        %2227 = vmatprep.mubr.bf16.mxu0 %v1521
        %2228 = vmatmul.mubr.bf16.gmra.mrb[0].mxu0 %v1520
        %v2229 = vpop.f32.mrb[0].mxu0
        %v2230 = vadd.f32 %v2165, %v2229
        %v2231 = vpop.f32.mrb[0].mxu0
        %v2232 = vpop.f32.mrb[0].mxu0
        %v2233 = vadd.f32 %v2168, %v2232
        %v2234 = vpop.f32.mrb[0].mxu0
        %2235 = vmatprep.mubr.bf16.mxu0 %v1530
        %2236 = vmatmul.mubr.bf16.gmra.mrb[0].mxu0 %v1529
        %v2237 = vpop.f32.mrb[0].mxu0
        %v2238 = vadd.f32 %v2173, %v2237
        %v2239 = vpop.f32.mrb[0].mxu0
        %v2240 = vpop.f32.mrb[0].mxu0
        %v2241 = vadd.f32 %v2176, %v2240
        %v2242 = vpop.f32.mrb[0].mxu0
        %2243 = vmatprep.mubr.bf16.mxu0 %v1539
        %2244 = vmatmul.mubr.bf16.gmra.mrb[0].mxu0 %v1538
        %v2245 = vpop.f32.mrb[0].mxu0
        %v2246 = vadd.f32 %v2181, %v2245
        %v2247 = vpop.f32.mrb[0].mxu0
        %v2248 = vpop.f32.mrb[0].mxu0
        %v2249 = vadd.f32 %v2184, %v2248
        %v2250 = vpop.f32.mrb[0].mxu0
        %2251 = vmatprep.mubr.bf16.mxu0 %v1548
        %2252 = vmatmul.mubr.bf16.gmra.mrb[0].mxu0 %v1547
        %v2253 = vpop.f32.mrb[0].mxu0
        %v2254 = vadd.f32 %v2189, %v2253
        %v2255 = vpop.f32.mrb[0].mxu0
        %v2256 = vpop.f32.mrb[0].mxu0
        %v2257 = vadd.f32 %v2192, %v2256
        %v2258 = vpop.f32.mrb[0].mxu0
        %2259 = vdwg.mxu0
        %2260 = vmatprep.subr.bf16.mxu0 0
        %2261 = vmatpush1.bf16.msra.mxu0 %v2018
        %2262 = vmatprep.subr.bf16.mxu0 0
        %2263 = vmatpush1.bf16.msra.mxu0 %v2019
        %2264 = vmatprep.subr.bf16.mxu0 0
        %2265 = vmatpush1.bf16.msra.mxu0 %v2020
        %2266 = vmatprep.subr.bf16.mxu0 0
        %2267 = vmatpush1.bf16.msra.mxu0 %v2021
        %2268 = vmatprep.subr.bf16.mxu0 0
        %2269 = vmatpush1.bf16.msra.mxu0 %v2022
        %2270 = vmatprep.subr.bf16.mxu0 0
        %2271 = vmatpush1.bf16.msra.mxu0 %v2023
        %2272 = vmatprep.subr.bf16.mxu0 0
        %2273 = vmatpush1.bf16.msra.mxu0 %v2024
        %2274 = vmatprep.subr.bf16.mxu0 0
        %2275 = vmatpush1.bf16.msra.mxu0 %v2025
        %2276 = vmatprep.subr.bf16.mxu0 0
        %2277 = vmatpush1.bf16.msra.mxu0 %v2026
        %2278 = vmatprep.subr.bf16.mxu0 0
        %2279 = vmatpush1.bf16.msra.mxu0 %v2027
        %2280 = vmatprep.subr.bf16.mxu0 0
        %2281 = vmatpush1.bf16.msra.mxu0 %v2028
        %2282 = vmatprep.subr.bf16.mxu0 0
        %2283 = vmatpush1.bf16.msra.mxu0 %v2029
        %2284 = vmatprep.subr.bf16.mxu0 0
        %2285 = vmatpush1.bf16.msra.mxu0 %v2030
        %2286 = vmatprep.subr.bf16.mxu0 0
        %2287 = vmatpush1.bf16.msra.mxu0 %v2031
        %2288 = vmatprep.subr.bf16.mxu0 0
        %2289 = vmatpush1.bf16.msra.mxu0 %v2032
        %2290 = vmatprep.subr.bf16.mxu0 0
        %2291 = vmatpush1.bf16.msra.mxu0 %v2033
        %2292 = vmatprep.mubr.bf16.mxu0 %v1523
        %2293 = vmatmul.mubr.bf16.gmra.mrb[0].mxu0 %v1522
        %v2294 = vpop.f32.mrb[0].mxu0
        %v2295 = vadd.f32 %v2230, %v2294
        %v2296 = vpop.f32.mrb[0].mxu0
        %v2297 = vpop.f32.mrb[0].mxu0
        %v2298 = vadd.f32 %v2233, %v2297
        %v2299 = vpop.f32.mrb[0].mxu0
        %2300 = vmatprep.mubr.bf16.mxu0 %v1532
        %2301 = vmatmul.mubr.bf16.gmra.mrb[0].mxu0 %v1531
        %v2302 = vpop.f32.mrb[0].mxu0
        %v2303 = vadd.f32 %v2238, %v2302
        %v2304 = vpop.f32.mrb[0].mxu0
        %v2305 = vpop.f32.mrb[0].mxu0
        %v2306 = vadd.f32 %v2241, %v2305
        %v2307 = vpop.f32.mrb[0].mxu0
        %2308 = vmatprep.mubr.bf16.mxu0 %v1541
        %2309 = vmatmul.mubr.bf16.gmra.mrb[0].mxu0 %v1540
        %v2310 = vpop.f32.mrb[0].mxu0
        %v2311 = vadd.f32 %v2246, %v2310
        %v2312 = vpop.f32.mrb[0].mxu0
        %v2313 = vpop.f32.mrb[0].mxu0
        %v2314 = vadd.f32 %v2249, %v2313
        %v2315 = vpop.f32.mrb[0].mxu0
        %2316 = vmatprep.mubr.bf16.mxu0 %v1550
        %2317 = vmatmul.mubr.bf16.gmra.mrb[0].mxu0 %v1549
        %v2318 = vpop.f32.mrb[0].mxu0
        %v2319 = vadd.f32 %v2254, %v2318
        %v2320 = vpop.f32.mrb[0].mxu0
        %v2321 = vpop.f32.mrb[0].mxu0
        %v2322 = vadd.f32 %v2257, %v2321
        %v2323 = vpop.f32.mrb[0].mxu0
        %2324 = vdwg.mxu0
        %2325 = vmatprep.subr.bf16.mxu0 0
        %2326 = vmatpush1.bf16.msra.mxu0 %v2034
        %2327 = vmatprep.subr.bf16.mxu0 0
        %2328 = vmatpush1.bf16.msra.mxu0 %v2035
        %2329 = vmatprep.subr.bf16.mxu0 0
        %2330 = vmatpush1.bf16.msra.mxu0 %v2036
        %2331 = vmatprep.subr.bf16.mxu0 0
        %2332 = vmatpush1.bf16.msra.mxu0 %v2037
        %2333 = vmatprep.subr.bf16.mxu0 0
        %2334 = vmatpush1.bf16.msra.mxu0 %v2038
        %2335 = vmatprep.subr.bf16.mxu0 0
        %2336 = vmatpush1.bf16.msra.mxu0 %v2039
        %2337 = vmatprep.subr.bf16.mxu0 0
        %2338 = vmatpush1.bf16.msra.mxu0 %v2040
        %2339 = vmatprep.subr.bf16.mxu0 0
        %2340 = vmatpush1.bf16.msra.mxu0 %v2041
        %2341 = vmatprep.subr.bf16.mxu0 0
        %2342 = vmatpush1.bf16.msra.mxu0 %v2042
        %2343 = vmatprep.subr.bf16.mxu0 0
        %2344 = vmatpush1.bf16.msra.mxu0 %v2043
        %2345 = vmatprep.subr.bf16.mxu0 0
        %2346 = vmatpush1.bf16.msra.mxu0 %v2044
        %2347 = vmatprep.subr.bf16.mxu0 0
        %2348 = vmatpush1.bf16.msra.mxu0 %v2045
        %2349 = vmatprep.subr.bf16.mxu0 0
        %2350 = vmatpush1.bf16.msra.mxu0 %v2046
        %2351 = vmatprep.subr.bf16.mxu0 0
        %2352 = vmatpush1.bf16.msra.mxu0 %v2047
        %2353 = vmatprep.subr.bf16.mxu0 0
        %2354 = vmatpush1.bf16.msra.mxu0 %v2048
        %2355 = vmatprep.subr.bf16.mxu0 0
        %2356 = vmatpush1.bf16.msra.mxu0 %v2049
        %2357 = vmatprep.mubr.bf16.mxu0 %v1525
        %2358 = vmatmul.mubr.bf16.gmra.mrb[0].mxu0 %v1524
        %v2359 = vpop.f32.mrb[0].mxu0
        %v2360 = vadd.f32 %v2295, %v2359
        %v2361 = vpop.f32.mrb[0].mxu0
        %v2362 = vpop.f32.mrb[0].mxu0
        %v2363 = vadd.f32 %v2298, %v2362
        %v2364 = vpop.f32.mrb[0].mxu0
        %2365 = vmatprep.mubr.bf16.mxu0 %v1534
        %2366 = vmatmul.mubr.bf16.gmra.mrb[0].mxu0 %v1533
        %v2367 = vpop.f32.mrb[0].mxu0
        %v2368 = vadd.f32 %v2303, %v2367
        %v2369 = vpop.f32.mrb[0].mxu0
        %v2370 = vpop.f32.mrb[0].mxu0
        %v2371 = vadd.f32 %v2306, %v2370
        %v2372 = vpop.f32.mrb[0].mxu0
        %2373 = vmatprep.mubr.bf16.mxu0 %v1543
        %2374 = vmatmul.mubr.bf16.gmra.mrb[0].mxu0 %v1542
        %v2375 = vpop.f32.mrb[0].mxu0
        %v2376 = vadd.f32 %v2311, %v2375
        %v2377 = vpop.f32.mrb[0].mxu0
        %v2378 = vpop.f32.mrb[0].mxu0
        %v2379 = vadd.f32 %v2314, %v2378
        %v2380 = vpop.f32.mrb[0].mxu0
        %2381 = vmatprep.mubr.bf16.mxu0 %v1552
        %2382 = vmatmul.mubr.bf16.gmra.mrb[0].mxu0 %v1551
        %v2383 = vpop.f32.mrb[0].mxu0
        %v2384 = vadd.f32 %v2319, %v2383
        %v2385 = vpop.f32.mrb[0].mxu0
        %v2386 = vpop.f32.mrb[0].mxu0
        %v2387 = vadd.f32 %v2322, %v2386
        %v2388 = vpop.f32.mrb[0].mxu0
        %2389 = vdwg.mxu0
        %2390 = vmatprep.subr.bf16.mxu0 0
        %2391 = vmatpush1.bf16.msra.mxu0 %v2050
        %2392 = vmatprep.subr.bf16.mxu0 0
        %2393 = vmatpush1.bf16.msra.mxu0 %v2051
        %2394 = vmatprep.subr.bf16.mxu0 0
        %2395 = vmatpush1.bf16.msra.mxu0 %v2052
        %2396 = vmatprep.subr.bf16.mxu0 0
        %2397 = vmatpush1.bf16.msra.mxu0 %v2053
        %2398 = vmatprep.subr.bf16.mxu0 0
        %2399 = vmatpush1.bf16.msra.mxu0 %v2054
        %2400 = vmatprep.subr.bf16.mxu0 0
        %2401 = vmatpush1.bf16.msra.mxu0 %v2055
        %2402 = vmatprep.subr.bf16.mxu0 0
        %2403 = vmatpush1.bf16.msra.mxu0 %v2056
        %2404 = vmatprep.subr.bf16.mxu0 0
        %2405 = vmatpush1.bf16.msra.mxu0 %v2057
        %2406 = vmatprep.subr.bf16.mxu0 0
        %2407 = vmatpush1.bf16.msra.mxu0 0
        %2408 = vmatprep.subr.bf16.mxu0 0
        %2409 = vmatpush1.bf16.msra.mxu0 0
        %2410 = vmatprep.subr.bf16.mxu0 0
        %2411 = vmatpush1.bf16.msra.mxu0 0
        %2412 = vmatprep.subr.bf16.mxu0 0
        %2413 = vmatpush1.bf16.msra.mxu0 0
        %2414 = vmatprep.subr.bf16.mxu0 0
        %2415 = vmatpush1.bf16.msra.mxu0 0
        %2416 = vmatprep.subr.bf16.mxu0 0
        %2417 = vmatpush1.bf16.msra.mxu0 0
        %2418 = vmatprep.subr.bf16.mxu0 0
        %2419 = vmatpush1.bf16.msra.mxu0 0
        %2420 = vmatprep.subr.bf16.mxu0 0
        %2421 = vmatpush1.bf16.msra.mxu0 0
        %2422 = vmatprep.mubr.bf16.mxu0 0
        %2423 = vmatmul.mubr.bf16.gmra.mrb[0].mxu0 %v1526
        %v2424 = vpop.f32.mrb[0].mxu0
        %v2425 = vadd.f32 %v2360, %v2424
        %v2426 = vpop.f32.mrb[0].mxu0
        %v2427 = vpop.f32.mrb[0].mxu0
        %v2428 = vadd.f32 %v2363, %v2427
        %v2429 = vpop.f32.mrb[0].mxu0
        %2430 = vmatprep.mubr.bf16.mxu0 0
        %2431 = vmatmul.mubr.bf16.gmra.mrb[0].mxu0 %v1535
        %v2432 = vpop.f32.mrb[0].mxu0
        %v2433 = vadd.f32 %v2368, %v2432
        %v2434 = vpop.f32.mrb[0].mxu0
        %v2435 = vpop.f32.mrb[0].mxu0
        %v2436 = vadd.f32 %v2371, %v2435
        %v2437 = vpop.f32.mrb[0].mxu0
        %2438 = vmatprep.mubr.bf16.mxu0 0
        %2439 = vmatmul.mubr.bf16.gmra.mrb[0].mxu0 %v1544
        %v2440 = vpop.f32.mrb[0].mxu0
        %v2441 = vadd.f32 %v2376, %v2440
        %v2442 = vpop.f32.mrb[0].mxu0
        %v2443 = vpop.f32.mrb[0].mxu0
        %v2444 = vadd.f32 %v2379, %v2443
        %v2445 = vpop.f32.mrb[0].mxu0
        %2446 = vmatprep.mubr.bf16.mxu0 0
        %2447 = vmatmul.mubr.bf16.gmra.mrb[0].mxu0 %v1553
        %v2448 = vpop.f32.mrb[0].mxu0
        %v2449 = vadd.f32 %v2384, %v2448
        %v2450 = vpop.f32.mrb[0].mxu0
        %v2451 = vpop.f32.mrb[0].mxu0
        %v2452 = vadd.f32 %v2387, %v2451
        %v2453 = vpop.f32.mrb[0].mxu0
        %2454 = vdwg.mxu0
        %v2455 = vpack.c.bf16 %v2428, %v2425
        %v2456 = vpack.c.bf16 %v2436, %v2433
        %v2457 = vpack.c.bf16 %v2444, %v2441
        %v2458 = vpack.c.bf16 %v2452, %v2449
        %v2463 = vunpack.c.l.b16 %v2455
        %v2464 = vunpack.c.h.b16 %v2455
        %v2465 = vunpack.c.l.b16 %v2456
        %v2466 = vunpack.c.h.b16 %v2456
        %v2467 = vunpack.c.l.b16 %v2457
        %v2468 = vunpack.c.h.b16 %v2457
        %v2469 = vunpack.c.l.b16 %v2458
        %v2470 = vunpack.c.h.b16 %v2458
        %v2471 = vpack.c.b16 %v2463, %v2463
        %v2472 = vpack.c.b16 %v2464, %v2464
        %v2473 = vpack.c.b16 %v2465, %v2465
        %v2474 = vpack.c.b16 %v2466, %v2466
        %v2475 = vpack.c.b16 %v2467, %v2467
        %v2476 = vpack.c.b16 %v2468, %v2468
        %v2477 = vpack.c.b16 %v2469, %v2469
        %v2478 = vpack.c.b16 %v2470, %v2470
        %2487 = vst [vmem:[%s515] sm:$0xf] %v2471
        %2488 = vst [vmem:[%s515 + $0x4] sm:$0xf] %v2472
        %2489 = vst [vmem:[%s515 + $0x8] sm:$0xf] %v2473
        %2490 = vst [vmem:[%s515 + $0xc] sm:$0xf] %v2474
        %2491 = vst [vmem:[%s515 + $0x10] sm:$0xf] %v2475
        %2492 = vst [vmem:[%s515 + $0x14] sm:$0xf] %v2476
        %2493 = vst [vmem:[%s515 + $0x18] sm:$0xf] %v2477
        %2494 = vst [vmem:[%s515 + $0x1c] sm:$0xf] %v2478
        %v2495 = vunpack.c.l.bf16 %v2455
        %v2496 = vunpack.c.h.bf16 %v2455
        %v2497 = vunpack.c.l.bf16 %v2456
        %v2498 = vunpack.c.h.bf16 %v2456
        %v2499 = vunpack.c.l.bf16 %v2457
        %v2500 = vunpack.c.h.bf16 %v2457
        %v2501 = vunpack.c.l.bf16 %v2458
        %v2502 = vunpack.c.h.bf16 %v2458
        %v2503 = vadd.f32 %v2495, %v2496
        %v2504 = vadd.f32 %v2503, %v2497
        %v2505 = vadd.f32 %v2504, %v2498
        %v2506 = vadd.f32 %v2505, %v2499
        %v2507 = vadd.f32 %v2506, %v2500
        %v2508 = vadd.f32 %v2507, %v2501
        %v2509 = vadd.f32 %v2508, %v2502
        %v2510 = vrot.slane %v2509, 4
        %v2511 = vadd.f32 %v2509, %v2510
        %v2512 = vrot.slane %v2511, 2
        %v2513 = vadd.f32 %v2511, %v2512
        %v2514 = vrot.slane %v2513, 1
        %v2515 = vadd.f32 %v2513, %v2514
        %2516 = vst [vmem:[%s521] sm:$0x1] %v2515
        %v2517 = vmul.f32 %v2495, %v2495
        %v2518 = vmul.f32 %v2496, %v2496
        %v2519 = vmul.f32 %v2497, %v2497
        %v2520 = vmul.f32 %v2498, %v2498
        %v2521 = vmul.f32 %v2499, %v2499
        %v2522 = vmul.f32 %v2500, %v2500
        %v2523 = vmul.f32 %v2501, %v2501
        %v2524 = vmul.f32 %v2502, %v2502
        %v2525 = vadd.f32 %v2517, %v2518
        %v2526 = vadd.f32 %v2525, %v2519
        %v2527 = vadd.f32 %v2526, %v2520
        %v2528 = vadd.f32 %v2527, %v2521
        %v2529 = vadd.f32 %v2528, %v2522
        %v2530 = vadd.f32 %v2529, %v2523
        %v2531 = vadd.f32 %v2530, %v2524
        %v2532 = vrot.slane %v2531, 4
        %v2533 = vadd.f32 %v2531, %v2532
        %v2534 = vrot.slane %v2533, 2
        %v2535 = vadd.f32 %v2533, %v2534
        %v2536 = vrot.slane %v2535, 1
        %v2537 = vadd.f32 %v2535, %v2536
        %2538 = vst [vmem:[%s527] sm:$0x1] %v2537
        %s2539 = sand.u32 %s228, 1
        %s2540 = scalar_lea.sflag [#allocation6], %s2539
        %s2541 = sand.u32 %s228, 1
        %s2542 = smul.addr %s2541, 32
        %s2543 = scalar_lea.vmem [#allocation18], %s2542
        %s2544 = sand.u32 %s37, 1
        %s2545 = scalar_lea.sflag [#allocation20], %s2544
        %s2546 = sand.u32 %s254, 1
        %s2547 = scalar_lea.vmem [#allocation19], %s2546
        %s2548 = sand.u32 %s37, 1
        %s2549 = scalar_lea.sflag [#allocation20], %s2548
        %s2550 = sand.u32 %s280, 1
        %s2551 = scalar_lea.vmem [#allocation21], %s2550
        // Predicated region
        $region85: #{_bottleneck_forward.6} parent=51 // pred_check
          %p2552 = pneg %p238
        $region86: #{_bottleneck_forward.6} parent=51 // pred_check_branch
          %2554 = sbr.rel (%p2552) target = $region88
        $region87: #{_bottleneck_forward.6} parent=51 // pred_region
          %s2556 = ssub.s32 512, 512
          %2557 = vsyncadd %s2540, %s2556
          %s2558 = smul.addr %s37, 8
          %s2559 = smul.addr %s2558, 64
          %s2560 = scalar_lea.hbm %s8, %s2559
          %s2561 = sshll.u32 %s2543, 4
          %s2562 = int_to_ptr.vmem [resolvable:$true] %s2561
          %2567 = dma.vmem_to_hbm [thread:$0]  %s2562, 512, %s2560, %s2540, 64, 64, 4
        $region88: #{_bottleneck_forward.6} parent=51 // pred_fallthru
          _
        // Predicated region
        $region89: #{_bottleneck_forward.6} parent=51 // pred_check
          %p2568 = pneg %p264
        $region90: #{_bottleneck_forward.6} parent=51 // pred_check_branch
          %2570 = sbr.rel (%p2568) target = $region92
        $region91: #{_bottleneck_forward.6} parent=51 // pred_region
          %s2572 = ssub.s32 16, 16
          %2573 = vsyncadd %s2545, %s2572
          %s2574 = smul.addr %s37, 16
          %s2575 = scalar_lea.hbm %s9, %s2574
          %s2577 = sshll.u32 %s2547, 4
          %s2578 = int_to_ptr.vmem [resolvable:$true] %s2577
          %2580 = dma.vmem_to_hbm [thread:$0]  %s2578, 16, %s2575, %s2545
        $region92: #{_bottleneck_forward.6} parent=51 // pred_fallthru
          _
        // Predicated region
        $region93: #{_bottleneck_forward.6} parent=51 // pred_check
          %p2581 = pneg %p290
        $region94: #{_bottleneck_forward.6} parent=51 // pred_check_branch
          %2583 = sbr.rel (%p2581) target = $region96
        $region95: #{_bottleneck_forward.6} parent=51 // pred_region
          %s2585 = ssub.s32 16, 16
          %2586 = vsyncadd %s2549, %s2585
          %s2587 = smul.addr %s37, 16
          %s2588 = scalar_lea.hbm %s10, %s2587
          %s2590 = sshll.u32 %s2551, 4
          %s2591 = int_to_ptr.vmem [resolvable:$true] %s2590
          %2593 = dma.vmem_to_hbm [thread:$0]  %s2591, 16, %s2588, %s2549
        $region96: #{_bottleneck_forward.6} parent=51 // pred_fallthru
          _
      $region52: #{_bottleneck_forward.6} parent=5 // pred_fallthru
        _
      %p2594 = scmp.le.s32.totalorder 2, %s32
      // Predicated region
      $region97: #{_bottleneck_forward.6} parent=5 // pred_check
        %p2595 = pneg %p2594
      $region98: #{_bottleneck_forward.6} parent=5 // pred_check_branch
        %2597 = sbr.rel (%p2595) target = $region100
      $region99: #{_bottleneck_forward.6} parent=5 // pred_region
        %s2598 = ssub.s32 %s32, 2
        // Predicated region
        $region101: #{_bottleneck_forward.6} parent=99 // pred_check
          %p2599 = pneg %p244
        $region102: #{_bottleneck_forward.6} parent=99 // pred_check_branch
          %2601 = sbr.rel (%p2599) target = $region104
        $region103: #{_bottleneck_forward.6} parent=99 // pred_region
          %s2602 = sand.u32 %s229, 1
          %s2603 = scalar_lea.sflag [#allocation6], %s2602
          %s2604 = sand.u32 %s229, 1
          %s2605 = smul.addr %s2604, 32
          %s2606 = scalar_lea.vmem [#allocation18], %s2605
          %2607 = dma.done %s2603, 512
        $region104: #{_bottleneck_forward.6} parent=99 // pred_fallthru
          _
        // Predicated region
        $region105: #{_bottleneck_forward.6} parent=99 // pred_check
          %p2608 = pneg %p270
        $region106: #{_bottleneck_forward.6} parent=99 // pred_check_branch
          %2610 = sbr.rel (%p2608) target = $region108
        $region107: #{_bottleneck_forward.6} parent=99 // pred_region
          %s2611 = sand.u32 %s38, 1
          %s2612 = scalar_lea.sflag [#allocation20], %s2611
          %s2613 = sand.u32 %s255, 1
          %s2614 = scalar_lea.vmem [#allocation19], %s2613
          %2615 = dma.done %s2612, 16
        $region108: #{_bottleneck_forward.6} parent=99 // pred_fallthru
          _
        // Predicated region
        $region109: #{_bottleneck_forward.6} parent=99 // pred_check
          %p2616 = pneg %p296
        $region110: #{_bottleneck_forward.6} parent=99 // pred_check_branch
          %2618 = sbr.rel (%p2616) target = $region112
        $region111: #{_bottleneck_forward.6} parent=99 // pred_region
          %s2619 = sand.u32 %s38, 1
          %s2620 = scalar_lea.sflag [#allocation20], %s2619
          %s2621 = sand.u32 %s281, 1
          %s2622 = scalar_lea.vmem [#allocation21], %s2621
          %2623 = dma.done %s2620, 16
        $region112: #{_bottleneck_forward.6} parent=99 // pred_fallthru
          _
      $region100: #{_bottleneck_forward.6} parent=5 // pred_fallthru
        _
    $region6: #{_bottleneck_forward.6} parent=1 // loop_footer
      %s36 = sadd.s32 1, %s32
    $region7: #{_bottleneck_forward.6} parent=1 // loop_footer_branch
      %31 = sbr.rel target = $region3
    $region8: #{_bottleneck_forward.6} parent=1 // loop_exit
      _
    %2624 = vsyncpa [#allocation5], 1
    %s2625 = scalar_lea.sflag [#allocation5], 1
    %2626 = vsyncpa %s2625, 1
    %2627 = vsyncpa [#allocation8], 1
    %s2628 = scalar_lea.sflag [#allocation8], 1
    %2629 = vsyncpa %s2628, 1
    %2630 = vsyncpa [#allocation11], 1
    %2631 = vsyncpa [#allocation14], 1
    %2632 = vsyncpa [#allocation17], 1
    %2633 = vsyncpa [#allocation6], 1
    %s2634 = scalar_lea.sflag [#allocation6], 1
    %2635 = vsyncpa %s2634, 1
    %2636 = vsyncpa [#allocation20], 1
    %s2637 = scalar_lea.sflag [#allocation20], 1
    %2638 = vsyncpa %s2637, 1

</llo_original>
